<compile_context>
chip_gen: v6e
topology: v6e:2x2x1
jax: 0.10.0
libtpu: 0.0.40
codegen_flags: <defaults>
</compile_context>

<pallas_src>
import numpy as np
import jax
import jax.numpy as jnp
from jax.experimental import pallas as pl
from jax.experimental.pallas import tpu as pltpu

CP = 128  # channel padding for block 2-4 activations (keeps everything 128-lane aligned)


# ------------------------------- fused kernel --------------------------------

def _make_cnn_kernel(n):
    # Static geometry for a 16x16 input (spatial 16 -> 8 -> 4 -> 2 -> 1).
    M1, MZ1 = n * 256, n * 256 - 17                   # block-1 conv rows (valid 16x16 grid)
    B2 = dict(wp=10, m=n * 100, mz=n * 100 - 11)      # block-2 input zero-padded to 10x10
    B3 = dict(wp=6,  m=n * 36,  mz=n * 36 - 7)        # block-3 input zero-padded to 6x6
    B4 = dict(wp=4,  m=n * 16,  mz=n * 16 - 5)        # block-4 input zero-padded to 4x4

    def kernel(cols1_ref,
               w1_ref, s1_ref, b1_ref, g1_ref,
               w2_ref, s2_ref, b2_ref, g2_ref,
               w3_ref, s3_ref, b3_ref, g3_ref,
               w4_ref, s4_ref, b4_ref, g4_ref,
               wh1_ref, bh1_ref, wh2_ref, bh2_ref,
               out_ref,
               a1_ref, a2_ref, a3_ref, y1_ref, y2_ref, y3_ref, y4_ref):
        f32 = jnp.float32

        def bn_relu(y, s_ref, bb_ref, y_ref):
            # folded BatchNorm (inference) + ReLU, kept in f32
            y_ref[...] = jnp.maximum(y * s_ref[...] + bb_ref[...], 0.0)

        def pool_scatter(y_ref, stride, mz, g_ref):
            # MaxPool2d(2): elementwise max of 4 row-shifted windows of the conv output,
            # then a 0/1 matmul that gathers the pool centres and scatters them into the
            # next block's flat zero-padded layout (borders stay zero automatically).
            z = jnp.maximum(
                jnp.maximum(y_ref[pl.ds(0, mz), :], y_ref[pl.ds(1, mz), :]),
                jnp.maximum(y_ref[pl.ds(stride, mz), :], y_ref[pl.ds(stride + 1, mz), :]))
            return jnp.dot(g_ref[...], z, preferred_element_type=f32)

        def taps(src_ref, wp, m):
            # in-kernel 3x3 im2col: 9 row-shifted slices of the flat zero-padded activation,
            # concatenated on the (128-lane aligned) channel axis -> one (m, 9*128) matrix.
            base = wp + 1
            return jnp.concatenate(
                [src_ref[pl.ds(base + (dh - 1) * wp + (dw - 1), m), :].astype(jnp.bfloat16)
                 for dh in range(3) for dw in range(3)],
                axis=-1)

        # ---- block 1: Conv2d(2,32)+BN+ReLU+MaxPool  (im2col of the raw input done in glue)
        y = jnp.dot(cols1_ref[...], w1_ref[...], preferred_element_type=f32)   # (M1, 128)
        bn_relu(y, s1_ref, b1_ref, y1_ref)
        a1_ref[...] = pool_scatter(y1_ref, 16, MZ1, g1_ref)

        # ---- block 2: Conv2d(32,64)+BN+ReLU+MaxPool
        y = jnp.dot(taps(a1_ref, B2['wp'], B2['m']), w2_ref[...], preferred_element_type=f32)
        bn_relu(y, s2_ref, b2_ref, y2_ref)
        a2_ref[...] = pool_scatter(y2_ref, B2['wp'], B2['mz'], g2_ref)

        # ---- block 3: Conv2d(64,128)+BN+ReLU+MaxPool
        y = jnp.dot(taps(a2_ref, B3['wp'], B3['m']), w3_ref[...], preferred_element_type=f32)
        bn_relu(y, s3_ref, b3_ref, y3_ref)
        a3_ref[...] = pool_scatter(y3_ref, B3['wp'], B3['mz'], g3_ref)

        # ---- block 4: Conv2d(128,256)+BN+ReLU+MaxPool -> (n, 256)
        y = jnp.dot(taps(a3_ref, B4['wp'], B4['m']), w4_ref[...], preferred_element_type=f32)
        bn_relu(y, s4_ref, b4_ref, y4_ref)
        feat = pool_scatter(y4_ref, B4['wp'], B4['mz'], g4_ref)  # 1x1 map => avg-pool is identity

        # ---- head: Linear(256,64)+ReLU+Dropout(eval=id)+Linear(64,1)+Sigmoid, all f32
        h = jnp.maximum(jnp.dot(feat, wh1_ref[...], preferred_element_type=f32) + bh1_ref[...], 0.0)
        logits = jnp.dot(h, wh2_ref[...], preferred_element_type=f32) + bh2_ref[...]
        out_ref[...] = jax.nn.sigmoid(logits)

    return kernel


# ------------------------------- glue helpers --------------------------------

def _pad_conv_weight(w, cin_pad, cout_pad):
    # (3,3,Cin,Cout) -> (9*cin_pad, cout_pad), tap-major rows, zero padded.
    kh, kw, cin, cout = w.shape
    wp = jnp.zeros((kh, kw, cin_pad, cout_pad), jnp.float32)
    wp = wp.at[:, :, :cin, :cout].set(w.astype(jnp.float32))
    return wp.reshape(kh * kw * cin_pad, cout_pad)


def _pad_row(v, width):
    return jnp.zeros((1, width), jnp.float32).at[0, :v.shape[0]].set(v.astype(jnp.float32))


def _pool_scatter_mats(n):
    """0/1 matrices mapping pool centres to the next block's flat zero-padded layout."""
    def scatter(entries, rows, cols):
        g = np.zeros((rows, cols), np.float32)
        for t, r in entries:
            g[t, r] = 1.0
        return jnp.asarray(g)

    # block 1: conv output rows live on the valid 16x16 grid.
    e1 = [(11 + b * 100 + (i + 1) * 10 + (j + 1), b * 256 + 2 * i * 16 + 2 * j)
          for b in range(n) for i in range(8) for j in range(8)]
    g1 = scatter(e1, n * 100 + 22, n * 256 - 17)

    # blocks 2-4: conv output rows live on that block's zero-padded input grid.
    def mid(wp_src, hw_out, wp_dst):
        ent = []
        for b in range(n):
            for i in range(hw_out):
                for j in range(hw_out):
                    r = b * wp_src * wp_src + (2 * i + 1) * wp_src + (2 * j + 1)
                    if wp_dst is None:
                        t = b
                    else:
                        t = (wp_dst + 1) + b * wp_dst * wp_dst + (i + 1) * wp_dst + (j + 1)
                    ent.append((t, r))
        rows = n if wp_dst is None else n * wp_dst * wp_dst + 2 * (wp_dst + 1)
        return scatter(ent, rows, n * wp_src * wp_src - wp_src - 1)

    return g1, mid(10, 4, 6), mid(6, 2, 4), mid(4, 1, None)


# ---------------------------- params & forward pass ---------------------------

def init_params(key):
    chans = [(2, 32), (32, 64), (64, 128), (128, 256)]
    params = {"blocks": []}
    for cin, cout in chans:
        key, k1, k2, k3, k4, k5, k6 = jax.random.split(key, 7)
        params["blocks"].append(dict(
            w=jax.random.normal(k1, (3, 3, cin, cout), jnp.float32) / (3.0 * float(cin) ** 0.5),
            b=0.05 * jax.random.normal(k2, (cout,), jnp.float32),
            gamma=1.0 + 0.1 * jax.random.normal(k3, (cout,), jnp.float32),
            beta=0.05 * jax.random.normal(k4, (cout,), jnp.float32),
            mean=0.05 * jax.random.normal(k5, (cout,), jnp.float32),
            var=1.0 + 0.1 * jax.random.uniform(k6, (cout,), jnp.float32),
        ))
    key, k1, k2, k3, k4 = jax.random.split(key, 5)
    params["fc"] = dict(
        w1=jax.random.normal(k1, (256, 64), jnp.float32) / 16.0,
        b1=0.05 * jax.random.normal(k2, (64,), jnp.float32),
        w2=jax.random.normal(k3, (64, 1), jnp.float32) / 8.0,
        b2=0.05 * jax.random.normal(k4, (1,), jnp.float32),
    )
    return params


def cnn_forward(params, x_nchw):
    n = x_nchw.shape[0]

    # glue: NCHW -> NHWC, im2col of the raw 2-channel input only (46 KB, no 9x activation blow-up)
    x = jnp.transpose(x_nchw, (0, 2, 3, 1)).astype(jnp.float32)          # (n, 16, 16, 2)
    xp = jnp.pad(x, ((0, 0), (1, 1), (1, 1), (0, 0)))
    cols1 = jnp.concatenate(
        [xp[:, dh:dh + 16, dw:dw + 16, :] for dh in range(3) for dw in range(3)],
        axis=-1).reshape(n * 256, 18).astype(jnp.bfloat16)

    # fold conv bias + BatchNorm (eval / running stats) into per-channel scale & bias,
    # pad channels so every in-kernel tensor is 128-lane aligned.
    cin_pad = [2, CP, CP, CP]
    cout_pad = [CP, CP, CP, 256]
    w_in, s_in, b_in = [], [], []
    for k, blk in enumerate(params["blocks"]):
        scale = blk["gamma"] / jnp.sqrt(blk["var"] + 1e-5)
        bias = blk["beta"] + (blk["b"] - blk["mean"]) * scale
        w_in.append(_pad_conv_weight(blk["w"], cin_pad[k], cout_pad[k]).astype(jnp.bfloat16))
        s_in.append(_pad_row(scale, cout_pad[k]))
        b_in.append(_pad_row(bias, cout_pad[k]))

    g1, g2, g3, g4 = _pool_scatter_mats(n)
    fc = params["fc"]

    scratch = [
        pltpu.VMEM((n * 100 + 22, CP), jnp.float32),   # a1: block-2 input (flat, zero-padded)
        pltpu.VMEM((n * 36 + 14, CP), jnp.float32),    # a2: block-3 input
        pltpu.VMEM((n * 16 + 10, CP), jnp.float32),    # a3: block-4 input
        pltpu.VMEM((n * 256, CP), jnp.float32),        # y1: post-BN/ReLU conv outputs
        pltpu.VMEM((n * 100, CP), jnp.float32),        # y2
        pltpu.VMEM((n * 36, CP), jnp.float32),         # y3
        pltpu.VMEM((n * 16, 256), jnp.float32),        # y4
    ]

    return pl.pallas_call(
        _make_cnn_kernel(n),
        out_shape=jax.ShapeDtypeStruct((n, 1), jnp.float32),
        scratch_shapes=scratch,
    )(cols1,
      w_in[0], s_in[0], b_in[0], g1,
      w_in[1], s_in[1], b_in[1], g2,
      w_in[2], s_in[2], b_in[2], g3,
      w_in[3], s_in[3], b_in[3], g4,
      fc["w1"], fc["b1"].reshape(1, -1), fc["w2"], fc["b2"].reshape(1, -1))


if __name__ == "__main__":
    key = jax.random.PRNGKey(0)
    kp, kx = jax.random.split(key)
    params = init_params(kp)
    # PyTorch-style NCHW input: batch=2, in_channels=2 (Conv2d(2, 32, ...)), spatial 16x16 so
    # the four MaxPool2d(2) stages reduce 16 -> 8 -> 4 -> 2 -> 1.
    x = jax.random.normal(kx, (2, 2, 16, 16), jnp.float32)
    out = jax.jit(cnn_forward)(params, x)
    out = jax.block_until_ready(out)
    assert out.shape == (2, 1)
    assert bool(jnp.all(jnp.isfinite(out)))
    print("KERNEL_OK")
</pallas_src>

<mosaic_0001>
module attributes {stable_mosaic.version = 11 : i64} {
  func.func @kernel(%arg0: memref<512x18xbf16, #tpu.memory_space<vmem>>, %arg1: memref<18x128xbf16, #tpu.memory_space<vmem>>, %arg2: memref<1x128xf32, #tpu.memory_space<vmem>>, %arg3: memref<1x128xf32, #tpu.memory_space<vmem>>, %arg4: memref<222x495xf32, #tpu.memory_space<vmem>>, %arg5: memref<1152x128xbf16, #tpu.memory_space<vmem>>, %arg6: memref<1x128xf32, #tpu.memory_space<vmem>>, %arg7: memref<1x128xf32, #tpu.memory_space<vmem>>, %arg8: memref<86x189xf32, #tpu.memory_space<vmem>>, %arg9: memref<1152x128xbf16, #tpu.memory_space<vmem>>, %arg10: memref<1x128xf32, #tpu.memory_space<vmem>>, %arg11: memref<1x128xf32, #tpu.memory_space<vmem>>, %arg12: memref<42x65xf32, #tpu.memory_space<vmem>>, %arg13: memref<1152x256xbf16, #tpu.memory_space<vmem>>, %arg14: memref<1x256xf32, #tpu.memory_space<vmem>>, %arg15: memref<1x256xf32, #tpu.memory_space<vmem>>, %arg16: memref<2x27xf32, #tpu.memory_space<vmem>>, %arg17: memref<256x64xf32, #tpu.memory_space<vmem>>, %arg18: memref<1x64xf32, #tpu.memory_space<vmem>>, %arg19: memref<64x1xf32, #tpu.memory_space<vmem>>, %arg20: memref<1x1xf32, #tpu.memory_space<vmem>>, %arg21: memref<2x1xf32, #tpu.memory_space<vmem>>, %arg22: memref<222x128xf32, #tpu.memory_space<vmem>>, %arg23: memref<86x128xf32, #tpu.memory_space<vmem>>, %arg24: memref<42x128xf32, #tpu.memory_space<vmem>>, %arg25: memref<512x128xf32, #tpu.memory_space<vmem>>, %arg26: memref<200x128xf32, #tpu.memory_space<vmem>>, %arg27: memref<72x128xf32, #tpu.memory_space<vmem>>, %arg28: memref<32x256xf32, #tpu.memory_space<vmem>>) attributes {dimension_semantics = [], scalar_prefetch = 0 : i64, scratch_operands = 7 : i64, tpu.core_type = #tpu.core_type<tc>} {
    %c0 = arith.constant 0 : index
    %c0_0 = arith.constant 0 : index
    %0 = vector.load %arg0[%c0, %c0_0] : memref<512x18xbf16, #tpu.memory_space<vmem>>, vector<512x18xbf16>
    %c0_1 = arith.constant 0 : index
    %c0_2 = arith.constant 0 : index
    %1 = vector.load %arg1[%c0_1, %c0_2] : memref<18x128xbf16, #tpu.memory_space<vmem>>, vector<18x128xbf16>
    %cst = arith.constant dense<0.000000e+00> : vector<512x128xf32>
    %2 = tpu.matmul %0, %1, %cst {dimension_numbers = #tpu.dot_dimension_numbers<[1], [0], [0], [1], [0, 0, 1, 1], [], []>} : vector<512x18xbf16>, vector<18x128xbf16>, vector<512x128xf32> -> vector<512x128xf32>
    %c0_3 = arith.constant 0 : index
    %c0_4 = arith.constant 0 : index
    %3 = vector.load %arg2[%c0_3, %c0_4] : memref<1x128xf32, #tpu.memory_space<vmem>>, vector<1x128xf32>
    %4 = vector.broadcast %3 : vector<1x128xf32> to vector<512x128xf32>
    %5 = arith.mulf %2, %4 : vector<512x128xf32>
    %c0_5 = arith.constant 0 : index
    %c0_6 = arith.constant 0 : index
    %6 = vector.load %arg3[%c0_5, %c0_6] : memref<1x128xf32, #tpu.memory_space<vmem>>, vector<1x128xf32>
    %7 = vector.broadcast %6 : vector<1x128xf32> to vector<512x128xf32>
    %8 = arith.addf %5, %7 : vector<512x128xf32>
    %cst_7 = arith.constant 0.000000e+00 : f32
    %9 = vector.broadcast %cst_7 : f32 to vector<512x128xf32>
    %10 = arith.maximumf %8, %9 : vector<512x128xf32>
    %c0_8 = arith.constant 0 : index
    %c0_9 = arith.constant 0 : index
    %11 = vector.load %arg25[%c0_8, %c0_9] : memref<512x128xf32, #tpu.memory_space<vmem>>, vector<512x128xf32>
    tpu.vector_store %arg25[%c0_8, %c0_9], %10 {strides = array<i32>} : memref<512x128xf32, #tpu.memory_space<vmem>>, vector<512x128xf32>,
    %c0_10 = arith.constant 0 : index
    %c0_11 = arith.constant 0 : index
    %12 = vector.load %arg25[%c0_10, %c0_11] : memref<512x128xf32, #tpu.memory_space<vmem>>, vector<495x128xf32>
    %c1 = arith.constant 1 : index
    %c0_12 = arith.constant 0 : index
    %13 = vector.load %arg25[%c1, %c0_12] : memref<512x128xf32, #tpu.memory_space<vmem>>, vector<495x128xf32>
    %14 = arith.maximumf %12, %13 : vector<495x128xf32>
    %c16 = arith.constant 16 : index
    %c0_13 = arith.constant 0 : index
    %15 = vector.load %arg25[%c16, %c0_13] : memref<512x128xf32, #tpu.memory_space<vmem>>, vector<495x128xf32>
    %c17 = arith.constant 17 : index
    %c0_14 = arith.constant 0 : index
    %16 = vector.load %arg25[%c17, %c0_14] : memref<512x128xf32, #tpu.memory_space<vmem>>, vector<495x128xf32>
    %17 = arith.maximumf %15, %16 : vector<495x128xf32>
    %18 = arith.maximumf %14, %17 : vector<495x128xf32>
    %c0_15 = arith.constant 0 : index
    %c0_16 = arith.constant 0 : index
    %19 = vector.load %arg4[%c0_15, %c0_16] : memref<222x495xf32, #tpu.memory_space<vmem>>, vector<222x495xf32>
    %cst_17 = arith.constant dense<0.000000e+00> : vector<222x128xf32>
    %20 = tpu.matmul %19, %18, %cst_17 {dimension_numbers = #tpu.dot_dimension_numbers<[1], [0], [0], [1], [0, 0, 1, 1], [], []>} : vector<222x495xf32>, vector<495x128xf32>, vector<222x128xf32> -> vector<222x128xf32>
    %c0_18 = arith.constant 0 : index
    %c0_19 = arith.constant 0 : index
    %21 = vector.load %arg22[%c0_18, %c0_19] : memref<222x128xf32, #tpu.memory_space<vmem>>, vector<222x128xf32>
    tpu.vector_store %arg22[%c0_18, %c0_19], %20 {strides = array<i32>} : memref<222x128xf32, #tpu.memory_space<vmem>>, vector<222x128xf32>,
    %c0_20 = arith.constant 0 : index
    %c0_21 = arith.constant 0 : index
    %22 = vector.load %arg22[%c0_20, %c0_21] : memref<222x128xf32, #tpu.memory_space<vmem>>, vector<200x128xf32>
    %23 = arith.truncf %22 : vector<200x128xf32> to vector<200x128xbf16>
    %c1_22 = arith.constant 1 : index
    %c0_23 = arith.constant 0 : index
    %24 = vector.load %arg22[%c1_22, %c0_23] : memref<222x128xf32, #tpu.memory_space<vmem>>, vector<200x128xf32>
    %25 = arith.truncf %24 : vector<200x128xf32> to vector<200x128xbf16>
    %c2 = arith.constant 2 : index
    %c0_24 = arith.constant 0 : index
    %26 = vector.load %arg22[%c2, %c0_24] : memref<222x128xf32, #tpu.memory_space<vmem>>, vector<200x128xf32>
    %27 = arith.truncf %26 : vector<200x128xf32> to vector<200x128xbf16>
    %c10 = arith.constant 10 : index
    %c0_25 = arith.constant 0 : index
    %28 = vector.load %arg22[%c10, %c0_25] : memref<222x128xf32, #tpu.memory_space<vmem>>, vector<200x128xf32>
    %29 = arith.truncf %28 : vector<200x128xf32> to vector<200x128xbf16>
    %c11 = arith.constant 11 : index
    %c0_26 = arith.constant 0 : index
    %30 = vector.load %arg22[%c11, %c0_26] : memref<222x128xf32, #tpu.memory_space<vmem>>, vector<200x128xf32>
    %31 = arith.truncf %30 : vector<200x128xf32> to vector<200x128xbf16>
    %c12 = arith.constant 12 : index
    %c0_27 = arith.constant 0 : index
    %32 = vector.load %arg22[%c12, %c0_27] : memref<222x128xf32, #tpu.memory_space<vmem>>, vector<200x128xf32>
    %33 = arith.truncf %32 : vector<200x128xf32> to vector<200x128xbf16>
    %c20 = arith.constant 20 : index
    %c0_28 = arith.constant 0 : index
    %34 = vector.load %arg22[%c20, %c0_28] : memref<222x128xf32, #tpu.memory_space<vmem>>, vector<200x128xf32>
    %35 = arith.truncf %34 : vector<200x128xf32> to vector<200x128xbf16>
    %c21 = arith.constant 21 : index
    %c0_29 = arith.constant 0 : index
    %36 = vector.load %arg22[%c21, %c0_29] : memref<222x128xf32, #tpu.memory_space<vmem>>, vector<200x128xf32>
    %37 = arith.truncf %36 : vector<200x128xf32> to vector<200x128xbf16>
    %c22 = arith.constant 22 : index
    %c0_30 = arith.constant 0 : index
    %38 = vector.load %arg22[%c22, %c0_30] : memref<222x128xf32, #tpu.memory_space<vmem>>, vector<200x128xf32>
    %39 = arith.truncf %38 : vector<200x128xf32> to vector<200x128xbf16>
    %40 = tpu.concatenate %23, %25, %27, %29, %31, %33, %35, %37, %39 in 1 : vector<200x128xbf16>, vector<200x128xbf16>, vector<200x128xbf16>, vector<200x128xbf16>, vector<200x128xbf16>, vector<200x128xbf16>, vector<200x128xbf16>, vector<200x128xbf16>, vector<200x128xbf16> -> vector<200x1152xbf16>
    %c0_31 = arith.constant 0 : index
    %c0_32 = arith.constant 0 : index
    %41 = vector.load %arg5[%c0_31, %c0_32] : memref<1152x128xbf16, #tpu.memory_space<vmem>>, vector<1152x128xbf16>
    %cst_33 = arith.constant dense<0.000000e+00> : vector<200x128xf32>
    %42 = tpu.matmul %40, %41, %cst_33 {dimension_numbers = #tpu.dot_dimension_numbers<[1], [0], [0], [1], [0, 0, 1, 1], [], []>} : vector<200x1152xbf16>, vector<1152x128xbf16>, vector<200x128xf32> -> vector<200x128xf32>
    %c0_34 = arith.constant 0 : index
    %c0_35 = arith.constant 0 : index
    %43 = vector.load %arg6[%c0_34, %c0_35] : memref<1x128xf32, #tpu.memory_space<vmem>>, vector<1x128xf32>
    %44 = vector.broadcast %43 : vector<1x128xf32> to vector<200x128xf32>
    %45 = arith.mulf %42, %44 : vector<200x128xf32>
    %c0_36 = arith.constant 0 : index
    %c0_37 = arith.constant 0 : index
    %46 = vector.load %arg7[%c0_36, %c0_37] : memref<1x128xf32, #tpu.memory_space<vmem>>, vector<1x128xf32>
    %47 = vector.broadcast %46 : vector<1x128xf32> to vector<200x128xf32>
    %48 = arith.addf %45, %47 : vector<200x128xf32>
    %cst_38 = arith.constant 0.000000e+00 : f32
    %49 = vector.broadcast %cst_38 : f32 to vector<200x128xf32>
    %50 = arith.maximumf %48, %49 : vector<200x128xf32>
    %c0_39 = arith.constant 0 : index
    %c0_40 = arith.constant 0 : index
    %51 = vector.load %arg26[%c0_39, %c0_40] : memref<200x128xf32, #tpu.memory_space<vmem>>, vector<200x128xf32>
    tpu.vector_store %arg26[%c0_39, %c0_40], %50 {strides = array<i32>} : memref<200x128xf32, #tpu.memory_space<vmem>>, vector<200x128xf32>,
    %c0_41 = arith.constant 0 : index
    %c0_42 = arith.constant 0 : index
    %52 = vector.load %arg26[%c0_41, %c0_42] : memref<200x128xf32, #tpu.memory_space<vmem>>, vector<189x128xf32>
    %c1_43 = arith.constant 1 : index
    %c0_44 = arith.constant 0 : index
    %53 = vector.load %arg26[%c1_43, %c0_44] : memref<200x128xf32, #tpu.memory_space<vmem>>, vector<189x128xf32>
    %54 = arith.maximumf %52, %53 : vector<189x128xf32>
    %c10_45 = arith.constant 10 : index
    %c0_46 = arith.constant 0 : index
    %55 = vector.load %arg26[%c10_45, %c0_46] : memref<200x128xf32, #tpu.memory_space<vmem>>, vector<189x128xf32>
    %c11_47 = arith.constant 11 : index
    %c0_48 = arith.constant 0 : index
    %56 = vector.load %arg26[%c11_47, %c0_48] : memref<200x128xf32, #tpu.memory_space<vmem>>, vector<189x128xf32>
    %57 = arith.maximumf %55, %56 : vector<189x128xf32>
    %58 = arith.maximumf %54, %57 : vector<189x128xf32>
    %c0_49 = arith.constant 0 : index
    %c0_50 = arith.constant 0 : index
    %59 = vector.load %arg8[%c0_49, %c0_50] : memref<86x189xf32, #tpu.memory_space<vmem>>, vector<86x189xf32>
    %cst_51 = arith.constant dense<0.000000e+00> : vector<86x128xf32>
    %60 = tpu.matmul %59, %58, %cst_51 {dimension_numbers = #tpu.dot_dimension_numbers<[1], [0], [0], [1], [0, 0, 1, 1], [], []>} : vector<86x189xf32>, vector<189x128xf32>, vector<86x128xf32> -> vector<86x128xf32>
    %c0_52 = arith.constant 0 : index
    %c0_53 = arith.constant 0 : index
    %61 = vector.load %arg23[%c0_52, %c0_53] : memref<86x128xf32, #tpu.memory_space<vmem>>, vector<86x128xf32>
    tpu.vector_store %arg23[%c0_52, %c0_53], %60 {strides = array<i32>} : memref<86x128xf32, #tpu.memory_space<vmem>>, vector<86x128xf32>,
    %c0_54 = arith.constant 0 : index
    %c0_55 = arith.constant 0 : index
    %62 = vector.load %arg23[%c0_54, %c0_55] : memref<86x128xf32, #tpu.memory_space<vmem>>, vector<72x128xf32>
    %63 = arith.truncf %62 : vector<72x128xf32> to vector<72x128xbf16>
    %c1_56 = arith.constant 1 : index
    %c0_57 = arith.constant 0 : index
    %64 = vector.load %arg23[%c1_56, %c0_57] : memref<86x128xf32, #tpu.memory_space<vmem>>, vector<72x128xf32>
    %65 = arith.truncf %64 : vector<72x128xf32> to vector<72x128xbf16>
    %c2_58 = arith.constant 2 : index
    %c0_59 = arith.constant 0 : index
    %66 = vector.load %arg23[%c2_58, %c0_59] : memref<86x128xf32, #tpu.memory_space<vmem>>, vector<72x128xf32>
    %67 = arith.truncf %66 : vector<72x128xf32> to vector<72x128xbf16>
    %c6 = arith.constant 6 : index
    %c0_60 = arith.constant 0 : index
    %68 = vector.load %arg23[%c6, %c0_60] : memref<86x128xf32, #tpu.memory_space<vmem>>, vector<72x128xf32>
    %69 = arith.truncf %68 : vector<72x128xf32> to vector<72x128xbf16>
    %c7 = arith.constant 7 : index
    %c0_61 = arith.constant 0 : index
    %70 = vector.load %arg23[%c7, %c0_61] : memref<86x128xf32, #tpu.memory_space<vmem>>, vector<72x128xf32>
    %71 = arith.truncf %70 : vector<72x128xf32> to vector<72x128xbf16>
    %c8 = arith.constant 8 : index
    %c0_62 = arith.constant 0 : index
    %72 = vector.load %arg23[%c8, %c0_62] : memref<86x128xf32, #tpu.memory_space<vmem>>, vector<72x128xf32>
    %73 = arith.truncf %72 : vector<72x128xf32> to vector<72x128xbf16>
    %c12_63 = arith.constant 12 : index
    %c0_64 = arith.constant 0 : index
    %74 = vector.load %arg23[%c12_63, %c0_64] : memref<86x128xf32, #tpu.memory_space<vmem>>, vector<72x128xf32>
    %75 = arith.truncf %74 : vector<72x128xf32> to vector<72x128xbf16>
    %c13 = arith.constant 13 : index
    %c0_65 = arith.constant 0 : index
    %76 = vector.load %arg23[%c13, %c0_65] : memref<86x128xf32, #tpu.memory_space<vmem>>, vector<72x128xf32>
    %77 = arith.truncf %76 : vector<72x128xf32> to vector<72x128xbf16>
    %c14 = arith.constant 14 : index
    %c0_66 = arith.constant 0 : index
    %78 = vector.load %arg23[%c14, %c0_66] : memref<86x128xf32, #tpu.memory_space<vmem>>, vector<72x128xf32>
    %79 = arith.truncf %78 : vector<72x128xf32> to vector<72x128xbf16>
    %80 = tpu.concatenate %63, %65, %67, %69, %71, %73, %75, %77, %79 in 1 : vector<72x128xbf16>, vector<72x128xbf16>, vector<72x128xbf16>, vector<72x128xbf16>, vector<72x128xbf16>, vector<72x128xbf16>, vector<72x128xbf16>, vector<72x128xbf16>, vector<72x128xbf16> -> vector<72x1152xbf16>
    %c0_67 = arith.constant 0 : index
    %c0_68 = arith.constant 0 : index
    %81 = vector.load %arg9[%c0_67, %c0_68] : memref<1152x128xbf16, #tpu.memory_space<vmem>>, vector<1152x128xbf16>
    %cst_69 = arith.constant dense<0.000000e+00> : vector<72x128xf32>
    %82 = tpu.matmul %80, %81, %cst_69 {dimension_numbers = #tpu.dot_dimension_numbers<[1], [0], [0], [1], [0, 0, 1, 1], [], []>} : vector<72x1152xbf16>, vector<1152x128xbf16>, vector<72x128xf32> -> vector<72x128xf32>
    %c0_70 = arith.constant 0 : index
    %c0_71 = arith.constant 0 : index
    %83 = vector.load %arg10[%c0_70, %c0_71] : memref<1x128xf32, #tpu.memory_space<vmem>>, vector<1x128xf32>
    %84 = vector.broadcast %83 : vector<1x128xf32> to vector<72x128xf32>
    %85 = arith.mulf %82, %84 : vector<72x128xf32>
    %c0_72 = arith.constant 0 : index
    %c0_73 = arith.constant 0 : index
    %86 = vector.load %arg11[%c0_72, %c0_73] : memref<1x128xf32, #tpu.memory_space<vmem>>, vector<1x128xf32>
    %87 = vector.broadcast %86 : vector<1x128xf32> to vector<72x128xf32>
    %88 = arith.addf %85, %87 : vector<72x128xf32>
    %cst_74 = arith.constant 0.000000e+00 : f32
    %89 = vector.broadcast %cst_74 : f32 to vector<72x128xf32>
    %90 = arith.maximumf %88, %89 : vector<72x128xf32>
    %c0_75 = arith.constant 0 : index
    %c0_76 = arith.constant 0 : index
    %91 = vector.load %arg27[%c0_75, %c0_76] : memref<72x128xf32, #tpu.memory_space<vmem>>, vector<72x128xf32>
    tpu.vector_store %arg27[%c0_75, %c0_76], %90 {strides = array<i32>} : memref<72x128xf32, #tpu.memory_space<vmem>>, vector<72x128xf32>,
    %c0_77 = arith.constant 0 : index
    %c0_78 = arith.constant 0 : index
    %92 = vector.load %arg27[%c0_77, %c0_78] : memref<72x128xf32, #tpu.memory_space<vmem>>, vector<65x128xf32>
    %c1_79 = arith.constant 1 : index
    %c0_80 = arith.constant 0 : index
    %93 = vector.load %arg27[%c1_79, %c0_80] : memref<72x128xf32, #tpu.memory_space<vmem>>, vector<65x128xf32>
    %94 = arith.maximumf %92, %93 : vector<65x128xf32>
    %c6_81 = arith.constant 6 : index
    %c0_82 = arith.constant 0 : index
    %95 = vector.load %arg27[%c6_81, %c0_82] : memref<72x128xf32, #tpu.memory_space<vmem>>, vector<65x128xf32>
    %c7_83 = arith.constant 7 : index
    %c0_84 = arith.constant 0 : index
    %96 = vector.load %arg27[%c7_83, %c0_84] : memref<72x128xf32, #tpu.memory_space<vmem>>, vector<65x128xf32>
    %97 = arith.maximumf %95, %96 : vector<65x128xf32>
    %98 = arith.maximumf %94, %97 : vector<65x128xf32>
    %c0_85 = arith.constant 0 : index
    %c0_86 = arith.constant 0 : index
    %99 = vector.load %arg12[%c0_85, %c0_86] : memref<42x65xf32, #tpu.memory_space<vmem>>, vector<42x65xf32>
    %cst_87 = arith.constant dense<0.000000e+00> : vector<42x128xf32>
    %100 = tpu.matmul %99, %98, %cst_87 {dimension_numbers = #tpu.dot_dimension_numbers<[1], [0], [0], [1], [0, 0, 1, 1], [], []>} : vector<42x65xf32>, vector<65x128xf32>, vector<42x128xf32> -> vector<42x128xf32>
    %c0_88 = arith.constant 0 : index
    %c0_89 = arith.constant 0 : index
    %101 = vector.load %arg24[%c0_88, %c0_89] : memref<42x128xf32, #tpu.memory_space<vmem>>, vector<42x128xf32>
    tpu.vector_store %arg24[%c0_88, %c0_89], %100 {strides = array<i32>} : memref<42x128xf32, #tpu.memory_space<vmem>>, vector<42x128xf32>,
    %c0_90 = arith.constant 0 : index
    %c0_91 = arith.constant 0 : index
    %102 = vector.load %arg24[%c0_90, %c0_91] : memref<42x128xf32, #tpu.memory_space<vmem>>, vector<32x128xf32>
    %103 = arith.truncf %102 : vector<32x128xf32> to vector<32x128xbf16>
    %c1_92 = arith.constant 1 : index
    %c0_93 = arith.constant 0 : index
    %104 = vector.load %arg24[%c1_92, %c0_93] : memref<42x128xf32, #tpu.memory_space<vmem>>, vector<32x128xf32>
    %105 = arith.truncf %104 : vector<32x128xf32> to vector<32x128xbf16>
    %c2_94 = arith.constant 2 : index
    %c0_95 = arith.constant 0 : index
    %106 = vector.load %arg24[%c2_94, %c0_95] : memref<42x128xf32, #tpu.memory_space<vmem>>, vector<32x128xf32>
    %107 = arith.truncf %106 : vector<32x128xf32> to vector<32x128xbf16>
    %c4 = arith.constant 4 : index
    %c0_96 = arith.constant 0 : index
    %108 = vector.load %arg24[%c4, %c0_96] : memref<42x128xf32, #tpu.memory_space<vmem>>, vector<32x128xf32>
    %109 = arith.truncf %108 : vector<32x128xf32> to vector<32x128xbf16>
    %c5 = arith.constant 5 : index
    %c0_97 = arith.constant 0 : index
    %110 = vector.load %arg24[%c5, %c0_97] : memref<42x128xf32, #tpu.memory_space<vmem>>, vector<32x128xf32>
    %111 = arith.truncf %110 : vector<32x128xf32> to vector<32x128xbf16>
    %c6_98 = arith.constant 6 : index
    %c0_99 = arith.constant 0 : index
    %112 = vector.load %arg24[%c6_98, %c0_99] : memref<42x128xf32, #tpu.memory_space<vmem>>, vector<32x128xf32>
    %113 = arith.truncf %112 : vector<32x128xf32> to vector<32x128xbf16>
    %c8_100 = arith.constant 8 : index
    %c0_101 = arith.constant 0 : index
    %114 = vector.load %arg24[%c8_100, %c0_101] : memref<42x128xf32, #tpu.memory_space<vmem>>, vector<32x128xf32>
    %115 = arith.truncf %114 : vector<32x128xf32> to vector<32x128xbf16>
    %c9 = arith.constant 9 : index
    %c0_102 = arith.constant 0 : index
    %116 = vector.load %arg24[%c9, %c0_102] : memref<42x128xf32, #tpu.memory_space<vmem>>, vector<32x128xf32>
    %117 = arith.truncf %116 : vector<32x128xf32> to vector<32x128xbf16>
    %c10_103 = arith.constant 10 : index
    %c0_104 = arith.constant 0 : index
    %118 = vector.load %arg24[%c10_103, %c0_104] : memref<42x128xf32, #tpu.memory_space<vmem>>, vector<32x128xf32>
    %119 = arith.truncf %118 : vector<32x128xf32> to vector<32x128xbf16>
    %120 = tpu.concatenate %103, %105, %107, %109, %111, %113, %115, %117, %119 in 1 : vector<32x128xbf16>, vector<32x128xbf16>, vector<32x128xbf16>, vector<32x128xbf16>, vector<32x128xbf16>, vector<32x128xbf16>, vector<32x128xbf16>, vector<32x128xbf16>, vector<32x128xbf16> -> vector<32x1152xbf16>
    %c0_105 = arith.constant 0 : index
    %c0_106 = arith.constant 0 : index
    %121 = vector.load %arg13[%c0_105, %c0_106] : memref<1152x256xbf16, #tpu.memory_space<vmem>>, vector<1152x256xbf16>
    %cst_107 = arith.constant dense<0.000000e+00> : vector<32x256xf32>
    %122 = tpu.matmul %120, %121, %cst_107 {dimension_numbers = #tpu.dot_dimension_numbers<[1], [0], [0], [1], [0, 0, 1, 1], [], []>} : vector<32x1152xbf16>, vector<1152x256xbf16>, vector<32x256xf32> -> vector<32x256xf32>
    %c0_108 = arith.constant 0 : index
    %c0_109 = arith.constant 0 : index
    %123 = vector.load %arg14[%c0_108, %c0_109] : memref<1x256xf32, #tpu.memory_space<vmem>>, vector<1x256xf32>
    %124 = vector.broadcast %123 : vector<1x256xf32> to vector<32x256xf32>
    %125 = arith.mulf %122, %124 : vector<32x256xf32>
    %c0_110 = arith.constant 0 : index
    %c0_111 = arith.constant 0 : index
    %126 = vector.load %arg15[%c0_110, %c0_111] : memref<1x256xf32, #tpu.memory_space<vmem>>, vector<1x256xf32>
    %127 = vector.broadcast %126 : vector<1x256xf32> to vector<32x256xf32>
    %128 = arith.addf %125, %127 : vector<32x256xf32>
    %cst_112 = arith.constant 0.000000e+00 : f32
    %129 = vector.broadcast %cst_112 : f32 to vector<32x256xf32>
    %130 = arith.maximumf %128, %129 : vector<32x256xf32>
    %c0_113 = arith.constant 0 : index
    %c0_114 = arith.constant 0 : index
    %131 = vector.load %arg28[%c0_113, %c0_114] : memref<32x256xf32, #tpu.memory_space<vmem>>, vector<32x256xf32>
    tpu.vector_store %arg28[%c0_113, %c0_114], %130 {strides = array<i32>} : memref<32x256xf32, #tpu.memory_space<vmem>>, vector<32x256xf32>,
    %c0_115 = arith.constant 0 : index
    %c0_116 = arith.constant 0 : index
    %132 = vector.load %arg28[%c0_115, %c0_116] : memref<32x256xf32, #tpu.memory_space<vmem>>, vector<27x256xf32>
    %c1_117 = arith.constant 1 : index
    %c0_118 = arith.constant 0 : index
    %133 = vector.load %arg28[%c1_117, %c0_118] : memref<32x256xf32, #tpu.memory_space<vmem>>, vector<27x256xf32>
    %134 = arith.maximumf %132, %133 : vector<27x256xf32>
    %c4_119 = arith.constant 4 : index
    %c0_120 = arith.constant 0 : index
    %135 = vector.load %arg28[%c4_119, %c0_120] : memref<32x256xf32, #tpu.memory_space<vmem>>, vector<27x256xf32>
    %c5_121 = arith.constant 5 : index
    %c0_122 = arith.constant 0 : index
    %136 = vector.load %arg28[%c5_121, %c0_122] : memref<32x256xf32, #tpu.memory_space<vmem>>, vector<27x256xf32>
    %137 = arith.maximumf %135, %136 : vector<27x256xf32>
    %138 = arith.maximumf %134, %137 : vector<27x256xf32>
    %c0_123 = arith.constant 0 : index
    %c0_124 = arith.constant 0 : index
    %139 = vector.load %arg16[%c0_123, %c0_124] : memref<2x27xf32, #tpu.memory_space<vmem>>, vector<2x27xf32>
    %cst_125 = arith.constant dense<0.000000e+00> : vector<2x256xf32>
    %140 = tpu.matmul %139, %138, %cst_125 {dimension_numbers = #tpu.dot_dimension_numbers<[1], [0], [0], [1], [0, 0, 1, 1], [], []>} : vector<2x27xf32>, vector<27x256xf32>, vector<2x256xf32> -> vector<2x256xf32>
    %c0_126 = arith.constant 0 : index
    %c0_127 = arith.constant 0 : index
    %141 = vector.load %arg17[%c0_126, %c0_127] : memref<256x64xf32, #tpu.memory_space<vmem>>, vector<256x64xf32>
    %cst_128 = arith.constant dense<0.000000e+00> : vector<2x64xf32>
    %142 = tpu.matmul %140, %141, %cst_128 {dimension_numbers = #tpu.dot_dimension_numbers<[1], [0], [0], [1], [0, 0, 1, 1], [], []>} : vector<2x256xf32>, vector<256x64xf32>, vector<2x64xf32> -> vector<2x64xf32>
    %c0_129 = arith.constant 0 : index
    %c0_130 = arith.constant 0 : index
    %143 = vector.load %arg18[%c0_129, %c0_130] : memref<1x64xf32, #tpu.memory_space<vmem>>, vector<1x64xf32>
    %144 = vector.broadcast %143 : vector<1x64xf32> to vector<2x64xf32>
    %145 = arith.addf %142, %144 : vector<2x64xf32>
    %cst_131 = arith.constant 0.000000e+00 : f32
    %146 = vector.broadcast %cst_131 : f32 to vector<2x64xf32>
    %147 = arith.maximumf %145, %146 : vector<2x64xf32>
    %c0_132 = arith.constant 0 : index
    %c0_133 = arith.constant 0 : index
    %148 = vector.load %arg19[%c0_132, %c0_133] : memref<64x1xf32, #tpu.memory_space<vmem>>, vector<64x1xf32>
    %cst_134 = arith.constant dense<0.000000e+00> : vector<2x1xf32>
    %149 = tpu.matmul %147, %148, %cst_134 {dimension_numbers = #tpu.dot_dimension_numbers<[1], [0], [0], [1], [0, 0, 1, 1], [], []>} : vector<2x64xf32>, vector<64x1xf32>, vector<2x1xf32> -> vector<2x1xf32>
    %c0_135 = arith.constant 0 : index
    %c0_136 = arith.constant 0 : index
    %150 = vector.load %arg20[%c0_135, %c0_136] : memref<1x1xf32, #tpu.memory_space<vmem>>, vector<1x1xf32>
    %151 = vector.broadcast %150 : vector<1x1xf32> to vector<2x1xf32>
    %152 = arith.addf %149, %151 : vector<2x1xf32>
    %153 = arith.negf %152 : vector<2x1xf32>
    %154 = math.exp %153 : vector<2x1xf32>
    %cst_137 = arith.constant 1.000000e+00 : f32
    %155 = vector.broadcast %cst_137 : f32 to vector<2x1xf32>
    %156 = arith.addf %155, %154 : vector<2x1xf32>
    %157 = arith.divf %155, %156 : vector<2x1xf32>
    %c0_138 = arith.constant 0 : index
    %c0_139 = arith.constant 0 : index
    %158 = vector.load %arg21[%c0_138, %c0_139] : memref<2x1xf32, #tpu.memory_space<vmem>>, vector<2x1xf32>
    tpu.vector_store %arg21[%c0_138, %c0_139], %157 {strides = array<i32>} : memref<2x1xf32, #tpu.memory_space<vmem>>, vector<2x1xf32>,
    return
  }
}

</mosaic_0001>

<llo_original>
// kernel: cnn_forward.1
$region0: #{cnn_forward.1}
  #allocation0 [shape = 'u32[]', space=smem, size = 0x4, offset = 0x4, fixed_abs, tag = 'smem constant byte address 0x4 - core index']
  #allocation1 [shape = 'u32[144,128]{1,0:T(1,128)}', space=vmem, size = 0x12000, scoped, tag = 'internal scratch']
  #allocation2 [shape = 'f32[222,128]{1,0:T(8,128)}', space=vmem, size = 0x1c000, scoped, tag = 'scratch operand']
  #allocation3 [shape = 'f32[86,128]{1,0:T(8,128)}', space=vmem, size = 0xb000, scoped, tag = 'scratch operand']
  #allocation4 [shape = 'f32[42,128]{1,0:T(8,128)}', space=vmem, size = 0x6000, scoped, tag = 'scratch operand']
  #allocation5 [shape = 'f32[512,128]{1,0:T(8,128)}', space=vmem, size = 0x40000, scoped, tag = 'scratch operand']
  #allocation6 [shape = 'f32[200,128]{1,0:T(8,128)}', space=vmem, size = 0x19000, scoped, tag = 'scratch operand']
  #allocation7 [shape = 'f32[72,128]{1,0:T(8,128)}', space=vmem, size = 0x9000, scoped, tag = 'scratch operand']
  #allocation8 [shape = 'f32[32,256]{1,0:T(8,128)}', space=vmem, size = 0x8000, scoped, tag = 'scratch operand']
  #allocation9 [shape = 'f32[1,1]{1,0:T(1,128)S(1)}', space=vmem, size = 0x200, scoped, tag = 'scoped memory for cnn_forward.1']
  %s0 = inlined_call_operand.vmem [shape: bf16[512,18], index: 0, kind: input, shape index: {}]
  %s1 = inlined_call_operand.vmem [shape: bf16[18,128], index: 1, kind: input, shape index: {}]
  %s2 = inlined_call_operand.vmem [shape: f32[1,128], index: 2, kind: input, shape index: {}]
  %s3 = inlined_call_operand.vmem [shape: f32[1,128], index: 3, kind: input, shape index: {}]
  %s4 = inlined_call_operand.vmem [shape: f32[222,495], index: 4, kind: input, shape index: {}]
  %s5 = inlined_call_operand.vmem [shape: bf16[1152,128], index: 5, kind: input, shape index: {}]
  %s6 = inlined_call_operand.vmem [shape: f32[1,128], index: 6, kind: input, shape index: {}]
  %s7 = inlined_call_operand.vmem [shape: f32[1,128], index: 7, kind: input, shape index: {}]
  %s8 = inlined_call_operand.vmem [shape: f32[86,189], index: 8, kind: input, shape index: {}]
  %s9 = inlined_call_operand.vmem [shape: bf16[1152,128], index: 9, kind: input, shape index: {}]
  %s10 = inlined_call_operand.vmem [shape: f32[1,128], index: 10, kind: input, shape index: {}]
  %s11 = inlined_call_operand.vmem [shape: f32[1,128], index: 11, kind: input, shape index: {}]
  %s12 = inlined_call_operand.vmem [shape: f32[42,65], index: 12, kind: input, shape index: {}]
  %s13 = inlined_call_operand.vmem [shape: bf16[1152,256], index: 13, kind: input, shape index: {}]
  %s14 = inlined_call_operand.vmem [shape: f32[1,256], index: 14, kind: input, shape index: {}]
  %s15 = inlined_call_operand.vmem [shape: f32[1,256], index: 15, kind: input, shape index: {}]
  %s16 = inlined_call_operand.vmem [shape: f32[2,27], index: 16, kind: input, shape index: {}]
  %s17 = inlined_call_operand.vmem [shape: f32[256,64], index: 17, kind: input, shape index: {}]
  %s18 = inlined_call_operand.vmem [shape: f32[1,64], index: 18, kind: input, shape index: {}]
  %s19 = inlined_call_operand.vmem [shape: f32[64,1], index: 19, kind: input, shape index: {}]
  %s20 = inlined_call_operand.<no memory space> [shape: f32[1,1], index: 20, kind: input, shape index: {}]
  %s21 = inlined_call_operand.vmem [shape: f32[2,1], index: 21, kind: output, shape index: {}]
  %s22 = sld [smem:[#allocation0]]
  $region94: #{cnn_forward.1} parent=0
    _
  %s24 = ssub.s32 1, %s22
  %s25 = scalar_select 0, %s24, %s22
  %v26 = vstv %s20
  %27 = vst [vmem:[#allocation9] sm:$0x1] %v26
  // Predicated region
  $region2: #{cnn_forward.1} parent=0 // pred_check
    _
  $region3: #{cnn_forward.1} parent=0 // pred_check_branch
    %29 = sbr.rel (0) target = $region5
  $region4: #{cnn_forward.1} parent=0 // pred_region
    _
  $region5: #{cnn_forward.1} parent=0 // pred_fallthru
    _
  // Predicated region
  $region6: #{cnn_forward.1} parent=0 // pred_check
    _
  $region7: #{cnn_forward.1} parent=0 // pred_check_branch
    %31 = sbr.rel (0) target = $region9
  $region8: #{cnn_forward.1} parent=0 // pred_region
    _
  $region9: #{cnn_forward.1} parent=0 // pred_fallthru
    _
  // Predicated region
  $region10: #{cnn_forward.1} parent=0 // pred_check
    _
  $region11: #{cnn_forward.1} parent=0 // pred_check_branch
    %33 = sbr.rel (0) target = $region13
  $region12: #{cnn_forward.1} parent=0 // pred_region
    _
  $region13: #{cnn_forward.1} parent=0 // pred_fallthru
    _
  // Predicated region
  $region14: #{cnn_forward.1} parent=0 // pred_check
    _
  $region15: #{cnn_forward.1} parent=0 // pred_check_branch
    %35 = sbr.rel (0) target = $region17
  $region16: #{cnn_forward.1} parent=0 // pred_region
    _
  $region17: #{cnn_forward.1} parent=0 // pred_fallthru
    _
  // Predicated region
  $region18: #{cnn_forward.1} parent=0 // pred_check
    _
  $region19: #{cnn_forward.1} parent=0 // pred_check_branch
    %37 = sbr.rel (0) target = $region21
  $region20: #{cnn_forward.1} parent=0 // pred_region
    _
  $region21: #{cnn_forward.1} parent=0 // pred_fallthru
    _
  // Predicated region
  $region22: #{cnn_forward.1} parent=0 // pred_check
    _
  $region23: #{cnn_forward.1} parent=0 // pred_check_branch
    %39 = sbr.rel (0) target = $region25
  $region24: #{cnn_forward.1} parent=0 // pred_region
    _
  $region25: #{cnn_forward.1} parent=0 // pred_fallthru
    _
  // Predicated region
  $region26: #{cnn_forward.1} parent=0 // pred_check
    _
  $region27: #{cnn_forward.1} parent=0 // pred_check_branch
    %41 = sbr.rel (0) target = $region29
  $region28: #{cnn_forward.1} parent=0 // pred_region
    _
  $region29: #{cnn_forward.1} parent=0 // pred_fallthru
    _
  // Predicated region
  $region30: #{cnn_forward.1} parent=0 // pred_check
    _
  $region31: #{cnn_forward.1} parent=0 // pred_check_branch
    %43 = sbr.rel (0) target = $region33
  $region32: #{cnn_forward.1} parent=0 // pred_region
    _
  $region33: #{cnn_forward.1} parent=0 // pred_fallthru
    _
  // Predicated region
  $region34: #{cnn_forward.1} parent=0 // pred_check
    _
  $region35: #{cnn_forward.1} parent=0 // pred_check_branch
    %45 = sbr.rel (0) target = $region37
  $region36: #{cnn_forward.1} parent=0 // pred_region
    _
  $region37: #{cnn_forward.1} parent=0 // pred_fallthru
    _
  // Predicated region
  $region38: #{cnn_forward.1} parent=0 // pred_check
    _
  $region39: #{cnn_forward.1} parent=0 // pred_check_branch
    %47 = sbr.rel (0) target = $region41
  $region40: #{cnn_forward.1} parent=0 // pred_region
    _
  $region41: #{cnn_forward.1} parent=0 // pred_fallthru
    _
  // Predicated region
  $region42: #{cnn_forward.1} parent=0 // pred_check
    _
  $region43: #{cnn_forward.1} parent=0 // pred_check_branch
    %49 = sbr.rel (0) target = $region45
  $region44: #{cnn_forward.1} parent=0 // pred_region
    _
  $region45: #{cnn_forward.1} parent=0 // pred_fallthru
    _
  // Predicated region
  $region46: #{cnn_forward.1} parent=0 // pred_check
    _
  $region47: #{cnn_forward.1} parent=0 // pred_check_branch
    %51 = sbr.rel (0) target = $region49
  $region48: #{cnn_forward.1} parent=0 // pred_region
    _
  $region49: #{cnn_forward.1} parent=0 // pred_fallthru
    _
  // Predicated region
  $region50: #{cnn_forward.1} parent=0 // pred_check
    _
  $region51: #{cnn_forward.1} parent=0 // pred_check_branch
    %53 = sbr.rel (0) target = $region53
  $region52: #{cnn_forward.1} parent=0 // pred_region
    _
  $region53: #{cnn_forward.1} parent=0 // pred_fallthru
    _
  // Predicated region
  $region54: #{cnn_forward.1} parent=0 // pred_check
    _
  $region55: #{cnn_forward.1} parent=0 // pred_check_branch
    %55 = sbr.rel (0) target = $region57
  $region56: #{cnn_forward.1} parent=0 // pred_region
    _
  $region57: #{cnn_forward.1} parent=0 // pred_fallthru
    _
  // Predicated region
  $region58: #{cnn_forward.1} parent=0 // pred_check
    _
  $region59: #{cnn_forward.1} parent=0 // pred_check_branch
    %57 = sbr.rel (0) target = $region61
  $region60: #{cnn_forward.1} parent=0 // pred_region
    _
  $region61: #{cnn_forward.1} parent=0 // pred_fallthru
    _
  // Predicated region
  $region62: #{cnn_forward.1} parent=0 // pred_check
    _
  $region63: #{cnn_forward.1} parent=0 // pred_check_branch
    %59 = sbr.rel (0) target = $region65
  $region64: #{cnn_forward.1} parent=0 // pred_region
    _
  $region65: #{cnn_forward.1} parent=0 // pred_fallthru
    _
  // Predicated region
  $region66: #{cnn_forward.1} parent=0 // pred_check
    _
  $region67: #{cnn_forward.1} parent=0 // pred_check_branch
    %61 = sbr.rel (0) target = $region69
  $region68: #{cnn_forward.1} parent=0 // pred_region
    _
  $region69: #{cnn_forward.1} parent=0 // pred_fallthru
    _
  // Predicated region
  $region70: #{cnn_forward.1} parent=0 // pred_check
    _
  $region71: #{cnn_forward.1} parent=0 // pred_check_branch
    %63 = sbr.rel (0) target = $region73
  $region72: #{cnn_forward.1} parent=0 // pred_region
    _
  $region73: #{cnn_forward.1} parent=0 // pred_fallthru
    _
  // Predicated region
  $region74: #{cnn_forward.1} parent=0 // pred_check
    _
  $region75: #{cnn_forward.1} parent=0 // pred_check_branch
    %65 = sbr.rel (0) target = $region77
  $region76: #{cnn_forward.1} parent=0 // pred_region
    _
  $region77: #{cnn_forward.1} parent=0 // pred_fallthru
    _
  // Predicated region
  $region78: #{cnn_forward.1} parent=0 // pred_check
    _
  $region79: #{cnn_forward.1} parent=0 // pred_check_branch
    %67 = sbr.rel (0) target = $region81
  $region80: #{cnn_forward.1} parent=0 // pred_region
    _
  $region81: #{cnn_forward.1} parent=0 // pred_fallthru
    _
  // Predicated region
  $region82: #{cnn_forward.1} parent=0 // pred_check
    _
  $region83: #{cnn_forward.1} parent=0 // pred_check_branch
    %69 = sbr.rel (0) target = $region85
  $region84: #{cnn_forward.1} parent=0 // pred_region
    _
  $region85: #{cnn_forward.1} parent=0 // pred_fallthru
    _
  %v71 = vld [vmem:[%s0] sm:$0xf]
  %v72 = vld [vmem:[%s0 + $0x4] sm:$0xf]
  %v73 = vld [vmem:[%s0 + $0x8] sm:$0xf]
  %v74 = vld [vmem:[%s0 + $0xc] sm:$0xf]
  %v75 = vld [vmem:[%s0 + $0x10] sm:$0xf]
  %v76 = vld [vmem:[%s0 + $0x14] sm:$0xf]
  %v77 = vld [vmem:[%s0 + $0x18] sm:$0xf]
  %v78 = vld [vmem:[%s0 + $0x1c] sm:$0xf]
  %v79 = vld [vmem:[%s0 + $0x20] sm:$0xf]
  %v80 = vld [vmem:[%s0 + $0x24] sm:$0xf]
  %v81 = vld [vmem:[%s0 + $0x28] sm:$0xf]
  %v82 = vld [vmem:[%s0 + $0x2c] sm:$0xf]
  %v83 = vld [vmem:[%s0 + $0x30] sm:$0xf]
  %v84 = vld [vmem:[%s0 + $0x34] sm:$0xf]
  %v85 = vld [vmem:[%s0 + $0x38] sm:$0xf]
  %v86 = vld [vmem:[%s0 + $0x3c] sm:$0xf]
  %v87 = vld [vmem:[%s0 + $0x40] sm:$0xf]
  %v88 = vld [vmem:[%s0 + $0x44] sm:$0xf]
  %v89 = vld [vmem:[%s0 + $0x48] sm:$0xf]
  %v90 = vld [vmem:[%s0 + $0x4c] sm:$0xf]
  %v91 = vld [vmem:[%s0 + $0x50] sm:$0xf]
  %v92 = vld [vmem:[%s0 + $0x54] sm:$0xf]
  %v93 = vld [vmem:[%s0 + $0x58] sm:$0xf]
  %v94 = vld [vmem:[%s0 + $0x5c] sm:$0xf]
  %v95 = vld [vmem:[%s0 + $0x60] sm:$0xf]
  %v96 = vld [vmem:[%s0 + $0x64] sm:$0xf]
  %v97 = vld [vmem:[%s0 + $0x68] sm:$0xf]
  %v98 = vld [vmem:[%s0 + $0x6c] sm:$0xf]
  %v99 = vld [vmem:[%s0 + $0x70] sm:$0xf]
  %v100 = vld [vmem:[%s0 + $0x74] sm:$0xf]
  %v101 = vld [vmem:[%s0 + $0x78] sm:$0xf]
  %v102 = vld [vmem:[%s0 + $0x7c] sm:$0xf]
  %v103 = vld [vmem:[%s0 + $0x80] sm:$0xf]
  %v104 = vld [vmem:[%s0 + $0x84] sm:$0xf]
  %v105 = vld [vmem:[%s0 + $0x88] sm:$0xf]
  %v106 = vld [vmem:[%s0 + $0x8c] sm:$0xf]
  %v107 = vld [vmem:[%s0 + $0x90] sm:$0xf]
  %v108 = vld [vmem:[%s0 + $0x94] sm:$0xf]
  %v109 = vld [vmem:[%s0 + $0x98] sm:$0xf]
  %v110 = vld [vmem:[%s0 + $0x9c] sm:$0xf]
  %v111 = vld [vmem:[%s0 + $0xa0] sm:$0xf]
  %v112 = vld [vmem:[%s0 + $0xa4] sm:$0xf]
  %v113 = vld [vmem:[%s0 + $0xa8] sm:$0xf]
  %v114 = vld [vmem:[%s0 + $0xac] sm:$0xf]
  %v115 = vld [vmem:[%s0 + $0xb0] sm:$0xf]
  %v116 = vld [vmem:[%s0 + $0xb4] sm:$0xf]
  %v117 = vld [vmem:[%s0 + $0xb8] sm:$0xf]
  %v118 = vld [vmem:[%s0 + $0xbc] sm:$0xf]
  %v119 = vld [vmem:[%s0 + $0xc0] sm:$0xf]
  %v120 = vld [vmem:[%s0 + $0xc4] sm:$0xf]
  %v121 = vld [vmem:[%s0 + $0xc8] sm:$0xf]
  %v122 = vld [vmem:[%s0 + $0xcc] sm:$0xf]
  %v123 = vld [vmem:[%s0 + $0xd0] sm:$0xf]
  %v124 = vld [vmem:[%s0 + $0xd4] sm:$0xf]
  %v125 = vld [vmem:[%s0 + $0xd8] sm:$0xf]
  %v126 = vld [vmem:[%s0 + $0xdc] sm:$0xf]
  %v127 = vld [vmem:[%s0 + $0xe0] sm:$0xf]
  %v128 = vld [vmem:[%s0 + $0xe4] sm:$0xf]
  %v129 = vld [vmem:[%s0 + $0xe8] sm:$0xf]
  %v130 = vld [vmem:[%s0 + $0xec] sm:$0xf]
  %v131 = vld [vmem:[%s0 + $0xf0] sm:$0xf]
  %v132 = vld [vmem:[%s0 + $0xf4] sm:$0xf]
  %v133 = vld [vmem:[%s0 + $0xf8] sm:$0xf]
  %v134 = vld [vmem:[%s0 + $0xfc] sm:$0xf]
  %v135 = vld [vmem:[%s1] sm:$0xf]
  %v136 = vld [vmem:[%s1 + $0x4] sm:$0xf]
  %v137 = vld [vmem:[%s1 + $0x8] sm:$0x1]
  %v202 = vunpack.c.l.b16 %v71
  %v203 = vunpack.c.l.b16 %v72
  %v204 = vunpack.c.l.b16 %v73
  %v205 = vunpack.c.l.b16 %v74
  %v206 = vunpack.c.l.b16 %v75
  %v207 = vunpack.c.l.b16 %v76
  %v208 = vunpack.c.l.b16 %v77
  %v209 = vunpack.c.l.b16 %v78
  %v210 = vunpack.c.l.b16 %v79
  %v211 = vunpack.c.l.b16 %v80
  %v212 = vunpack.c.l.b16 %v81
  %v213 = vunpack.c.l.b16 %v82
  %v214 = vunpack.c.l.b16 %v83
  %v215 = vunpack.c.l.b16 %v84
  %v216 = vunpack.c.l.b16 %v85
  %v217 = vunpack.c.l.b16 %v86
  %v218 = vunpack.c.l.b16 %v87
  %v219 = vunpack.c.l.b16 %v88
  %v220 = vunpack.c.l.b16 %v89
  %v221 = vunpack.c.l.b16 %v90
  %v222 = vunpack.c.l.b16 %v91
  %v223 = vunpack.c.l.b16 %v92
  %v224 = vunpack.c.l.b16 %v93
  %v225 = vunpack.c.l.b16 %v94
  %v226 = vunpack.c.l.b16 %v95
  %v227 = vunpack.c.l.b16 %v96
  %v228 = vunpack.c.l.b16 %v97
  %v229 = vunpack.c.l.b16 %v98
  %v230 = vunpack.c.l.b16 %v99
  %v231 = vunpack.c.l.b16 %v100
  %v232 = vunpack.c.l.b16 %v101
  %v233 = vunpack.c.l.b16 %v102
  %v234 = vunpack.c.l.b16 %v103
  %v235 = vunpack.c.l.b16 %v104
  %v236 = vunpack.c.l.b16 %v105
  %v237 = vunpack.c.l.b16 %v106
  %v238 = vunpack.c.l.b16 %v107
  %v239 = vunpack.c.l.b16 %v108
  %v240 = vunpack.c.l.b16 %v109
  %v241 = vunpack.c.l.b16 %v110
  %v242 = vunpack.c.l.b16 %v111
  %v243 = vunpack.c.l.b16 %v112
  %v244 = vunpack.c.l.b16 %v113
  %v245 = vunpack.c.l.b16 %v114
  %v246 = vunpack.c.l.b16 %v115
  %v247 = vunpack.c.l.b16 %v116
  %v248 = vunpack.c.l.b16 %v117
  %v249 = vunpack.c.l.b16 %v118
  %v250 = vunpack.c.l.b16 %v119
  %v251 = vunpack.c.l.b16 %v120
  %v252 = vunpack.c.l.b16 %v121
  %v253 = vunpack.c.l.b16 %v122
  %v254 = vunpack.c.l.b16 %v123
  %v255 = vunpack.c.l.b16 %v124
  %v256 = vunpack.c.l.b16 %v125
  %v257 = vunpack.c.l.b16 %v126
  %v258 = vunpack.c.l.b16 %v127
  %v259 = vunpack.c.l.b16 %v128
  %v260 = vunpack.c.l.b16 %v129
  %v261 = vunpack.c.l.b16 %v130
  %v262 = vunpack.c.l.b16 %v131
  %v263 = vunpack.c.l.b16 %v132
  %v264 = vunpack.c.l.b16 %v133
  %v265 = vunpack.c.l.b16 %v134
  %v266 = vpack.c.b16 %v203, %v202
  %v267 = vpack.c.b16 %v205, %v204
  %v268 = vpack.c.b16 %v207, %v206
  %v269 = vpack.c.b16 %v209, %v208
  %v270 = vpack.c.b16 %v211, %v210
  %v271 = vpack.c.b16 %v213, %v212
  %v272 = vpack.c.b16 %v215, %v214
  %v273 = vpack.c.b16 %v217, %v216
  %v274 = vpack.c.b16 %v219, %v218
  %v275 = vpack.c.b16 %v221, %v220
  %v276 = vpack.c.b16 %v223, %v222
  %v277 = vpack.c.b16 %v225, %v224
  %v278 = vpack.c.b16 %v227, %v226
  %v279 = vpack.c.b16 %v229, %v228
  %v280 = vpack.c.b16 %v231, %v230
  %v281 = vpack.c.b16 %v233, %v232
  %v282 = vpack.c.b16 %v235, %v234
  %v283 = vpack.c.b16 %v237, %v236
  %v284 = vpack.c.b16 %v239, %v238
  %v285 = vpack.c.b16 %v241, %v240
  %v286 = vpack.c.b16 %v243, %v242
  %v287 = vpack.c.b16 %v245, %v244
  %v288 = vpack.c.b16 %v247, %v246
  %v289 = vpack.c.b16 %v249, %v248
  %v290 = vpack.c.b16 %v251, %v250
  %v291 = vpack.c.b16 %v253, %v252
  %v292 = vpack.c.b16 %v255, %v254
  %v293 = vpack.c.b16 %v257, %v256
  %v294 = vpack.c.b16 %v259, %v258
  %v295 = vpack.c.b16 %v261, %v260
  %v296 = vpack.c.b16 %v263, %v262
  %v297 = vpack.c.b16 %v265, %v264
  %v301 = vunpack.c.l.b16 %v135
  %v302 = vunpack.c.l.b16 %v136
  %v303 = vunpack.c.l.b16 %v137
  %v304 = vpack.c.b16 %v302, %v301
  %v305 = vpack.c.b16 %v303, %v303
  %vm307 = vcmask 146432
  %v309 = vsel %vm307, %v266, 0
  %v312 = vsel %vm307, %v267, 0
  %v315 = vsel %vm307, %v268, 0
  %v318 = vsel %vm307, %v269, 0
  %v321 = vsel %vm307, %v270, 0
  %v324 = vsel %vm307, %v271, 0
  %v327 = vsel %vm307, %v272, 0
  %v330 = vsel %vm307, %v273, 0
  %v333 = vsel %vm307, %v274, 0
  %v336 = vsel %vm307, %v275, 0
  %v339 = vsel %vm307, %v276, 0
  %v342 = vsel %vm307, %v277, 0
  %v345 = vsel %vm307, %v278, 0
  %v348 = vsel %vm307, %v279, 0
  %v351 = vsel %vm307, %v280, 0
  %v354 = vsel %vm307, %v281, 0
  %v357 = vsel %vm307, %v282, 0
  %v360 = vsel %vm307, %v283, 0
  %v363 = vsel %vm307, %v284, 0
  %v366 = vsel %vm307, %v285, 0
  %v369 = vsel %vm307, %v286, 0
  %v372 = vsel %vm307, %v287, 0
  %v375 = vsel %vm307, %v288, 0
  %v378 = vsel %vm307, %v289, 0
  %v381 = vsel %vm307, %v290, 0
  %v384 = vsel %vm307, %v291, 0
  %v387 = vsel %vm307, %v292, 0
  %v390 = vsel %vm307, %v293, 0
  %v393 = vsel %vm307, %v294, 0
  %v396 = vsel %vm307, %v295, 0
  %v399 = vsel %vm307, %v296, 0
  %v402 = vsel %vm307, %v297, 0
  %vm404 = vcmask 1040384
  %v406 = vsel %vm404, %v305, 0
  %408 = vmatprep.subr.bf16.mxu0 0
  %409 = vmatpush1.bf16.msra.mxu0 0
  %410 = vmatprep.subr.bf16.mxu0 0
  %411 = vmatpush1.bf16.msra.mxu0 0
  %412 = vmatprep.subr.bf16.mxu0 0
  %413 = vmatpush1.bf16.msra.mxu0 0
  %414 = vmatprep.subr.bf16.mxu0 0
  %415 = vmatpush1.bf16.msra.mxu0 0
  %416 = vmatprep.subr.bf16.mxu0 0
  %417 = vmatpush1.bf16.msra.mxu0 0
  %418 = vmatprep.subr.bf16.mxu0 0
  %419 = vmatpush1.bf16.msra.mxu0 0
  %420 = vmatprep.subr.bf16.mxu0 0
  %421 = vmatpush1.bf16.msra.mxu0 %v406
  %422 = vmatprep.subr.bf16.mxu0 0
  %423 = vmatpush1.bf16.msra.mxu0 %v304
  %424 = vmatprep.subr.bf16.mxu0 0
  %425 = vmatpush2.bf16.msra.mxu0 0
  %426 = vmatprep.subr.bf16.mxu0 0
  %427 = vmatpush2.bf16.msra.mxu0 0
  %428 = vmatprep.subr.bf16.mxu0 0
  %429 = vmatpush2.bf16.msra.mxu0 0
  %430 = vmatprep.subr.bf16.mxu0 0
  %431 = vmatpush2.bf16.msra.mxu0 0
  %432 = vmatprep.subr.bf16.mxu0 0
  %433 = vmatpush2.bf16.msra.mxu0 0
  %434 = vmatprep.subr.bf16.mxu0 0
  %435 = vmatpush2.bf16.msra.mxu0 0
  %436 = vmatprep.subr.bf16.mxu0 0
  %437 = vmatpush2.bf16.msra.mxu0 0
  %438 = vmatprep.subr.bf16.mxu0 0
  %439 = vmatpush2.bf16.msra.mxu0 0
  %440 = vmatprep.mubr.bf16.mxu0 0
  %441 = vmatmul.mubr.bf16.gmra.mxu0 %v309
  %v442 = vpop.f32.mrf.mxu0
  %v443 = vadd.f32 0.0, %v442
  %v444 = vpop.f32.mrf.mxu0
  %v445 = vpop.f32.mrf.mxu0
  %v446 = vadd.f32 0.0, %v445
  %v447 = vpop.f32.mrf.mxu0
  %448 = vmatprep.mubr.bf16.mxu0 0
  %449 = vmatmul.mubr.bf16.gmra.mxu0 %v312
  %v450 = vpop.f32.mrf.mxu0
  %v451 = vadd.f32 0.0, %v450
  %v452 = vpop.f32.mrf.mxu0
  %v453 = vpop.f32.mrf.mxu0
  %v454 = vadd.f32 0.0, %v453
  %v455 = vpop.f32.mrf.mxu0
  %456 = vmatprep.mubr.bf16.mxu0 0
  %457 = vmatmul.mubr.bf16.gmra.mxu0 %v315
  %v458 = vpop.f32.mrf.mxu0
  %v459 = vadd.f32 0.0, %v458
  %v460 = vpop.f32.mrf.mxu0
  %v461 = vpop.f32.mrf.mxu0
  %v462 = vadd.f32 0.0, %v461
  %v463 = vpop.f32.mrf.mxu0
  %464 = vmatprep.mubr.bf16.mxu0 0
  %465 = vmatmul.mubr.bf16.gmra.mxu0 %v318
  %v466 = vpop.f32.mrf.mxu0
  %v467 = vadd.f32 0.0, %v466
  %v468 = vpop.f32.mrf.mxu0
  %v469 = vpop.f32.mrf.mxu0
  %v470 = vadd.f32 0.0, %v469
  %v471 = vpop.f32.mrf.mxu0
  %472 = vmatprep.mubr.bf16.mxu0 0
  %473 = vmatmul.mubr.bf16.gmra.mxu0 %v321
  %v474 = vpop.f32.mrf.mxu0
  %v475 = vadd.f32 0.0, %v474
  %v476 = vpop.f32.mrf.mxu0
  %v477 = vpop.f32.mrf.mxu0
  %v478 = vadd.f32 0.0, %v477
  %v479 = vpop.f32.mrf.mxu0
  %480 = vmatprep.mubr.bf16.mxu0 0
  %481 = vmatmul.mubr.bf16.gmra.mxu0 %v324
  %v482 = vpop.f32.mrf.mxu0
  %v483 = vadd.f32 0.0, %v482
  %v484 = vpop.f32.mrf.mxu0
  %v485 = vpop.f32.mrf.mxu0
  %v486 = vadd.f32 0.0, %v485
  %v487 = vpop.f32.mrf.mxu0
  %488 = vmatprep.mubr.bf16.mxu0 0
  %489 = vmatmul.mubr.bf16.gmra.mxu0 %v327
  %v490 = vpop.f32.mrf.mxu0
  %v491 = vadd.f32 0.0, %v490
  %v492 = vpop.f32.mrf.mxu0
  %v493 = vpop.f32.mrf.mxu0
  %v494 = vadd.f32 0.0, %v493
  %v495 = vpop.f32.mrf.mxu0
  %496 = vmatprep.mubr.bf16.mxu0 0
  %497 = vmatmul.mubr.bf16.gmra.mxu0 %v330
  %v498 = vpop.f32.mrf.mxu0
  %v499 = vadd.f32 0.0, %v498
  %v500 = vpop.f32.mrf.mxu0
  %v501 = vpop.f32.mrf.mxu0
  %v502 = vadd.f32 0.0, %v501
  %v503 = vpop.f32.mrf.mxu0
  %504 = vmatprep.mubr.bf16.mxu0 0
  %505 = vmatmul.mubr.bf16.gmra.mxu0 %v333
  %v506 = vpop.f32.mrf.mxu0
  %v507 = vadd.f32 0.0, %v506
  %v508 = vpop.f32.mrf.mxu0
  %v509 = vpop.f32.mrf.mxu0
  %v510 = vadd.f32 0.0, %v509
  %v511 = vpop.f32.mrf.mxu0
  %512 = vmatprep.mubr.bf16.mxu0 0
  %513 = vmatmul.mubr.bf16.gmra.mxu0 %v336
  %v514 = vpop.f32.mrf.mxu0
  %v515 = vadd.f32 0.0, %v514
  %v516 = vpop.f32.mrf.mxu0
  %v517 = vpop.f32.mrf.mxu0
  %v518 = vadd.f32 0.0, %v517
  %v519 = vpop.f32.mrf.mxu0
  %520 = vmatprep.mubr.bf16.mxu0 0
  %521 = vmatmul.mubr.bf16.gmra.mxu0 %v339
  %v522 = vpop.f32.mrf.mxu0
  %v523 = vadd.f32 0.0, %v522
  %v524 = vpop.f32.mrf.mxu0
  %v525 = vpop.f32.mrf.mxu0
  %v526 = vadd.f32 0.0, %v525
  %v527 = vpop.f32.mrf.mxu0
  %528 = vmatprep.mubr.bf16.mxu0 0
  %529 = vmatmul.mubr.bf16.gmra.mxu0 %v342
  %v530 = vpop.f32.mrf.mxu0
  %v531 = vadd.f32 0.0, %v530
  %v532 = vpop.f32.mrf.mxu0
  %v533 = vpop.f32.mrf.mxu0
  %v534 = vadd.f32 0.0, %v533
  %v535 = vpop.f32.mrf.mxu0
  %536 = vmatprep.mubr.bf16.mxu0 0
  %537 = vmatmul.mubr.bf16.gmra.mxu0 %v345
  %v538 = vpop.f32.mrf.mxu0
  %v539 = vadd.f32 0.0, %v538
  %v540 = vpop.f32.mrf.mxu0
  %v541 = vpop.f32.mrf.mxu0
  %v542 = vadd.f32 0.0, %v541
  %v543 = vpop.f32.mrf.mxu0
  %544 = vmatprep.mubr.bf16.mxu0 0
  %545 = vmatmul.mubr.bf16.gmra.mxu0 %v348
  %v546 = vpop.f32.mrf.mxu0
  %v547 = vadd.f32 0.0, %v546
  %v548 = vpop.f32.mrf.mxu0
  %v549 = vpop.f32.mrf.mxu0
  %v550 = vadd.f32 0.0, %v549
  %v551 = vpop.f32.mrf.mxu0
  %552 = vmatprep.mubr.bf16.mxu0 0
  %553 = vmatmul.mubr.bf16.gmra.mxu0 %v351
  %v554 = vpop.f32.mrf.mxu0
  %v555 = vadd.f32 0.0, %v554
  %v556 = vpop.f32.mrf.mxu0
  %v557 = vpop.f32.mrf.mxu0
  %v558 = vadd.f32 0.0, %v557
  %v559 = vpop.f32.mrf.mxu0
  %560 = vmatprep.mubr.bf16.mxu0 0
  %561 = vmatmul.mubr.bf16.gmra.mxu0 %v354
  %v562 = vpop.f32.mrf.mxu0
  %v563 = vadd.f32 0.0, %v562
  %v564 = vpop.f32.mrf.mxu0
  %v565 = vpop.f32.mrf.mxu0
  %v566 = vadd.f32 0.0, %v565
  %v567 = vpop.f32.mrf.mxu0
  %568 = vmatprep.mubr.bf16.mxu0 0
  %569 = vmatmul.mubr.bf16.gmra.mxu0 %v357
  %v570 = vpop.f32.mrf.mxu0
  %v571 = vadd.f32 0.0, %v570
  %v572 = vpop.f32.mrf.mxu0
  %v573 = vpop.f32.mrf.mxu0
  %v574 = vadd.f32 0.0, %v573
  %v575 = vpop.f32.mrf.mxu0
  %576 = vmatprep.mubr.bf16.mxu0 0
  %577 = vmatmul.mubr.bf16.gmra.mxu0 %v360
  %v578 = vpop.f32.mrf.mxu0
  %v579 = vadd.f32 0.0, %v578
  %v580 = vpop.f32.mrf.mxu0
  %v581 = vpop.f32.mrf.mxu0
  %v582 = vadd.f32 0.0, %v581
  %v583 = vpop.f32.mrf.mxu0
  %584 = vmatprep.mubr.bf16.mxu0 0
  %585 = vmatmul.mubr.bf16.gmra.mxu0 %v363
  %v586 = vpop.f32.mrf.mxu0
  %v587 = vadd.f32 0.0, %v586
  %v588 = vpop.f32.mrf.mxu0
  %v589 = vpop.f32.mrf.mxu0
  %v590 = vadd.f32 0.0, %v589
  %v591 = vpop.f32.mrf.mxu0
  %592 = vmatprep.mubr.bf16.mxu0 0
  %593 = vmatmul.mubr.bf16.gmra.mxu0 %v366
  %v594 = vpop.f32.mrf.mxu0
  %v595 = vadd.f32 0.0, %v594
  %v596 = vpop.f32.mrf.mxu0
  %v597 = vpop.f32.mrf.mxu0
  %v598 = vadd.f32 0.0, %v597
  %v599 = vpop.f32.mrf.mxu0
  %600 = vmatprep.mubr.bf16.mxu0 0
  %601 = vmatmul.mubr.bf16.gmra.mxu0 %v369
  %v602 = vpop.f32.mrf.mxu0
  %v603 = vadd.f32 0.0, %v602
  %v604 = vpop.f32.mrf.mxu0
  %v605 = vpop.f32.mrf.mxu0
  %v606 = vadd.f32 0.0, %v605
  %v607 = vpop.f32.mrf.mxu0
  %608 = vmatprep.mubr.bf16.mxu0 0
  %609 = vmatmul.mubr.bf16.gmra.mxu0 %v372
  %v610 = vpop.f32.mrf.mxu0
  %v611 = vadd.f32 0.0, %v610
  %v612 = vpop.f32.mrf.mxu0
  %v613 = vpop.f32.mrf.mxu0
  %v614 = vadd.f32 0.0, %v613
  %v615 = vpop.f32.mrf.mxu0
  %616 = vmatprep.mubr.bf16.mxu0 0
  %617 = vmatmul.mubr.bf16.gmra.mxu0 %v375
  %v618 = vpop.f32.mrf.mxu0
  %v619 = vadd.f32 0.0, %v618
  %v620 = vpop.f32.mrf.mxu0
  %v621 = vpop.f32.mrf.mxu0
  %v622 = vadd.f32 0.0, %v621
  %v623 = vpop.f32.mrf.mxu0
  %624 = vmatprep.mubr.bf16.mxu0 0
  %625 = vmatmul.mubr.bf16.gmra.mxu0 %v378
  %v626 = vpop.f32.mrf.mxu0
  %v627 = vadd.f32 0.0, %v626
  %v628 = vpop.f32.mrf.mxu0
  %v629 = vpop.f32.mrf.mxu0
  %v630 = vadd.f32 0.0, %v629
  %v631 = vpop.f32.mrf.mxu0
  %632 = vmatprep.mubr.bf16.mxu0 0
  %633 = vmatmul.mubr.bf16.gmra.mxu0 %v381
  %v634 = vpop.f32.mrf.mxu0
  %v635 = vadd.f32 0.0, %v634
  %v636 = vpop.f32.mrf.mxu0
  %v637 = vpop.f32.mrf.mxu0
  %v638 = vadd.f32 0.0, %v637
  %v639 = vpop.f32.mrf.mxu0
  %640 = vmatprep.mubr.bf16.mxu0 0
  %641 = vmatmul.mubr.bf16.gmra.mxu0 %v384
  %v642 = vpop.f32.mrf.mxu0
  %v643 = vadd.f32 0.0, %v642
  %v644 = vpop.f32.mrf.mxu0
  %v645 = vpop.f32.mrf.mxu0
  %v646 = vadd.f32 0.0, %v645
  %v647 = vpop.f32.mrf.mxu0
  %648 = vmatprep.mubr.bf16.mxu0 0
  %649 = vmatmul.mubr.bf16.gmra.mxu0 %v387
  %v650 = vpop.f32.mrf.mxu0
  %v651 = vadd.f32 0.0, %v650
  %v652 = vpop.f32.mrf.mxu0
  %v653 = vpop.f32.mrf.mxu0
  %v654 = vadd.f32 0.0, %v653
  %v655 = vpop.f32.mrf.mxu0
  %656 = vmatprep.mubr.bf16.mxu0 0
  %657 = vmatmul.mubr.bf16.gmra.mxu0 %v390
  %v658 = vpop.f32.mrf.mxu0
  %v659 = vadd.f32 0.0, %v658
  %v660 = vpop.f32.mrf.mxu0
  %v661 = vpop.f32.mrf.mxu0
  %v662 = vadd.f32 0.0, %v661
  %v663 = vpop.f32.mrf.mxu0
  %664 = vmatprep.mubr.bf16.mxu0 0
  %665 = vmatmul.mubr.bf16.gmra.mxu0 %v393
  %v666 = vpop.f32.mrf.mxu0
  %v667 = vadd.f32 0.0, %v666
  %v668 = vpop.f32.mrf.mxu0
  %v669 = vpop.f32.mrf.mxu0
  %v670 = vadd.f32 0.0, %v669
  %v671 = vpop.f32.mrf.mxu0
  %672 = vmatprep.mubr.bf16.mxu0 0
  %673 = vmatmul.mubr.bf16.gmra.mxu0 %v396
  %v674 = vpop.f32.mrf.mxu0
  %v675 = vadd.f32 0.0, %v674
  %v676 = vpop.f32.mrf.mxu0
  %v677 = vpop.f32.mrf.mxu0
  %v678 = vadd.f32 0.0, %v677
  %v679 = vpop.f32.mrf.mxu0
  %680 = vmatprep.mubr.bf16.mxu0 0
  %681 = vmatmul.mubr.bf16.gmra.mxu0 %v399
  %v682 = vpop.f32.mrf.mxu0
  %v683 = vadd.f32 0.0, %v682
  %v684 = vpop.f32.mrf.mxu0
  %v685 = vpop.f32.mrf.mxu0
  %v686 = vadd.f32 0.0, %v685
  %v687 = vpop.f32.mrf.mxu0
  %688 = vmatprep.mubr.bf16.mxu0 0
  %689 = vmatmul.mubr.bf16.gmra.mxu0 %v402
  %v690 = vpop.f32.mrf.mxu0
  %v691 = vadd.f32 0.0, %v690
  %v692 = vpop.f32.mrf.mxu0
  %v693 = vpop.f32.mrf.mxu0
  %v694 = vadd.f32 0.0, %v693
  %v695 = vpop.f32.mrf.mxu0
  %696 = vdwg.mxu0
  %v697 = vld [vmem:[%s2] sm:$0x1]
  %v699 = vlaneseq
  %v700 = vshrl.u32 %v699, 7
  %v701 = vsub.s32 0, %v700
  %v702 = vrot.slane %v697, %v701
  %v704 = vmul.f32 %v443, %v702
  %v705 = vmul.f32 %v446, %v702
  %v706 = vmul.f32 %v451, %v702
  %v707 = vmul.f32 %v454, %v702
  %v708 = vmul.f32 %v459, %v702
  %v709 = vmul.f32 %v462, %v702
  %v710 = vmul.f32 %v467, %v702
  %v711 = vmul.f32 %v470, %v702
  %v712 = vmul.f32 %v475, %v702
  %v713 = vmul.f32 %v478, %v702
  %v714 = vmul.f32 %v483, %v702
  %v715 = vmul.f32 %v486, %v702
  %v716 = vmul.f32 %v491, %v702
  %v717 = vmul.f32 %v494, %v702
  %v718 = vmul.f32 %v499, %v702
  %v719 = vmul.f32 %v502, %v702
  %v720 = vmul.f32 %v507, %v702
  %v721 = vmul.f32 %v510, %v702
  %v722 = vmul.f32 %v515, %v702
  %v723 = vmul.f32 %v518, %v702
  %v724 = vmul.f32 %v523, %v702
  %v725 = vmul.f32 %v526, %v702
  %v726 = vmul.f32 %v531, %v702
  %v727 = vmul.f32 %v534, %v702
  %v728 = vmul.f32 %v539, %v702
  %v729 = vmul.f32 %v542, %v702
  %v730 = vmul.f32 %v547, %v702
  %v731 = vmul.f32 %v550, %v702
  %v732 = vmul.f32 %v555, %v702
  %v733 = vmul.f32 %v558, %v702
  %v734 = vmul.f32 %v563, %v702
  %v735 = vmul.f32 %v566, %v702
  %v736 = vmul.f32 %v571, %v702
  %v737 = vmul.f32 %v574, %v702
  %v738 = vmul.f32 %v579, %v702
  %v739 = vmul.f32 %v582, %v702
  %v740 = vmul.f32 %v587, %v702
  %v741 = vmul.f32 %v590, %v702
  %v742 = vmul.f32 %v595, %v702
  %v743 = vmul.f32 %v598, %v702
  %v744 = vmul.f32 %v603, %v702
  %v745 = vmul.f32 %v606, %v702
  %v746 = vmul.f32 %v611, %v702
  %v747 = vmul.f32 %v614, %v702
  %v748 = vmul.f32 %v619, %v702
  %v749 = vmul.f32 %v622, %v702
  %v750 = vmul.f32 %v627, %v702
  %v751 = vmul.f32 %v630, %v702
  %v752 = vmul.f32 %v635, %v702
  %v753 = vmul.f32 %v638, %v702
  %v754 = vmul.f32 %v643, %v702
  %v755 = vmul.f32 %v646, %v702
  %v756 = vmul.f32 %v651, %v702
  %v757 = vmul.f32 %v654, %v702
  %v758 = vmul.f32 %v659, %v702
  %v759 = vmul.f32 %v662, %v702
  %v760 = vmul.f32 %v667, %v702
  %v761 = vmul.f32 %v670, %v702
  %v762 = vmul.f32 %v675, %v702
  %v763 = vmul.f32 %v678, %v702
  %v764 = vmul.f32 %v683, %v702
  %v765 = vmul.f32 %v686, %v702
  %v766 = vmul.f32 %v691, %v702
  %v767 = vmul.f32 %v694, %v702
  %v768 = vld [vmem:[%s3] sm:$0x1]
  %v770 = vlaneseq
  %v771 = vshrl.u32 %v770, 7
  %v772 = vsub.s32 0, %v771
  %v773 = vrot.slane %v768, %v772
  %v775 = vadd.f32 %v704, %v773
  %v776 = vadd.f32 %v705, %v773
  %v777 = vadd.f32 %v706, %v773
  %v778 = vadd.f32 %v707, %v773
  %v779 = vadd.f32 %v708, %v773
  %v780 = vadd.f32 %v709, %v773
  %v781 = vadd.f32 %v710, %v773
  %v782 = vadd.f32 %v711, %v773
  %v783 = vadd.f32 %v712, %v773
  %v784 = vadd.f32 %v713, %v773
  %v785 = vadd.f32 %v714, %v773
  %v786 = vadd.f32 %v715, %v773
  %v787 = vadd.f32 %v716, %v773
  %v788 = vadd.f32 %v717, %v773
  %v789 = vadd.f32 %v718, %v773
  %v790 = vadd.f32 %v719, %v773
  %v791 = vadd.f32 %v720, %v773
  %v792 = vadd.f32 %v721, %v773
  %v793 = vadd.f32 %v722, %v773
  %v794 = vadd.f32 %v723, %v773
  %v795 = vadd.f32 %v724, %v773
  %v796 = vadd.f32 %v725, %v773
  %v797 = vadd.f32 %v726, %v773
  %v798 = vadd.f32 %v727, %v773
  %v799 = vadd.f32 %v728, %v773
  %v800 = vadd.f32 %v729, %v773
  %v801 = vadd.f32 %v730, %v773
  %v802 = vadd.f32 %v731, %v773
  %v803 = vadd.f32 %v732, %v773
  %v804 = vadd.f32 %v733, %v773
  %v805 = vadd.f32 %v734, %v773
  %v806 = vadd.f32 %v735, %v773
  %v807 = vadd.f32 %v736, %v773
  %v808 = vadd.f32 %v737, %v773
  %v809 = vadd.f32 %v738, %v773
  %v810 = vadd.f32 %v739, %v773
  %v811 = vadd.f32 %v740, %v773
  %v812 = vadd.f32 %v741, %v773
  %v813 = vadd.f32 %v742, %v773
  %v814 = vadd.f32 %v743, %v773
  %v815 = vadd.f32 %v744, %v773
  %v816 = vadd.f32 %v745, %v773
  %v817 = vadd.f32 %v746, %v773
  %v818 = vadd.f32 %v747, %v773
  %v819 = vadd.f32 %v748, %v773
  %v820 = vadd.f32 %v749, %v773
  %v821 = vadd.f32 %v750, %v773
  %v822 = vadd.f32 %v751, %v773
  %v823 = vadd.f32 %v752, %v773
  %v824 = vadd.f32 %v753, %v773
  %v825 = vadd.f32 %v754, %v773
  %v826 = vadd.f32 %v755, %v773
  %v827 = vadd.f32 %v756, %v773
  %v828 = vadd.f32 %v757, %v773
  %v829 = vadd.f32 %v758, %v773
  %v830 = vadd.f32 %v759, %v773
  %v831 = vadd.f32 %v760, %v773
  %v832 = vadd.f32 %v761, %v773
  %v833 = vadd.f32 %v762, %v773
  %v834 = vadd.f32 %v763, %v773
  %v835 = vadd.f32 %v764, %v773
  %v836 = vadd.f32 %v765, %v773
  %v837 = vadd.f32 %v766, %v773
  %v838 = vadd.f32 %v767, %v773
  %v839 = vmax.f32 %v775, 0.0
  %v840 = vmax.f32 %v776, 0.0
  %v841 = vmax.f32 %v777, 0.0
  %v842 = vmax.f32 %v778, 0.0
  %v843 = vmax.f32 %v779, 0.0
  %v844 = vmax.f32 %v780, 0.0
  %v845 = vmax.f32 %v781, 0.0
  %v846 = vmax.f32 %v782, 0.0
  %v847 = vmax.f32 %v783, 0.0
  %v848 = vmax.f32 %v784, 0.0
  %v849 = vmax.f32 %v785, 0.0
  %v850 = vmax.f32 %v786, 0.0
  %v851 = vmax.f32 %v787, 0.0
  %v852 = vmax.f32 %v788, 0.0
  %v853 = vmax.f32 %v789, 0.0
  %v854 = vmax.f32 %v790, 0.0
  %v855 = vmax.f32 %v791, 0.0
  %v856 = vmax.f32 %v792, 0.0
  %v857 = vmax.f32 %v793, 0.0
  %v858 = vmax.f32 %v794, 0.0
  %v859 = vmax.f32 %v795, 0.0
  %v860 = vmax.f32 %v796, 0.0
  %v861 = vmax.f32 %v797, 0.0
  %v862 = vmax.f32 %v798, 0.0
  %v863 = vmax.f32 %v799, 0.0
  %v864 = vmax.f32 %v800, 0.0
  %v865 = vmax.f32 %v801, 0.0
  %v866 = vmax.f32 %v802, 0.0
  %v867 = vmax.f32 %v803, 0.0
  %v868 = vmax.f32 %v804, 0.0
  %v869 = vmax.f32 %v805, 0.0
  %v870 = vmax.f32 %v806, 0.0
  %v871 = vmax.f32 %v807, 0.0
  %v872 = vmax.f32 %v808, 0.0
  %v873 = vmax.f32 %v809, 0.0
  %v874 = vmax.f32 %v810, 0.0
  %v875 = vmax.f32 %v811, 0.0
  %v876 = vmax.f32 %v812, 0.0
  %v877 = vmax.f32 %v813, 0.0
  %v878 = vmax.f32 %v814, 0.0
  %v879 = vmax.f32 %v815, 0.0
  %v880 = vmax.f32 %v816, 0.0
  %v881 = vmax.f32 %v817, 0.0
  %v882 = vmax.f32 %v818, 0.0
  %v883 = vmax.f32 %v819, 0.0
  %v884 = vmax.f32 %v820, 0.0
  %v885 = vmax.f32 %v821, 0.0
  %v886 = vmax.f32 %v822, 0.0
  %v887 = vmax.f32 %v823, 0.0
  %v888 = vmax.f32 %v824, 0.0
  %v889 = vmax.f32 %v825, 0.0
  %v890 = vmax.f32 %v826, 0.0
  %v891 = vmax.f32 %v827, 0.0
  %v892 = vmax.f32 %v828, 0.0
  %v893 = vmax.f32 %v829, 0.0
  %v894 = vmax.f32 %v830, 0.0
  %v895 = vmax.f32 %v831, 0.0
  %v896 = vmax.f32 %v832, 0.0
  %v897 = vmax.f32 %v833, 0.0
  %v898 = vmax.f32 %v834, 0.0
  %v899 = vmax.f32 %v835, 0.0
  %v900 = vmax.f32 %v836, 0.0
  %v901 = vmax.f32 %v837, 0.0
  %v902 = vmax.f32 %v838, 0.0
  %903 = vst [vmem:[#allocation5] sm:$0xff] %v839
  %904 = vst [vmem:[#allocation5 + $0x8] sm:$0xff] %v840
  %905 = vst [vmem:[#allocation5 + $0x10] sm:$0xff] %v841
  %906 = vst [vmem:[#allocation5 + $0x18] sm:$0xff] %v842
  %907 = vst [vmem:[#allocation5 + $0x20] sm:$0xff] %v843
  %908 = vst [vmem:[#allocation5 + $0x28] sm:$0xff] %v844
  %909 = vst [vmem:[#allocation5 + $0x30] sm:$0xff] %v845
  %910 = vst [vmem:[#allocation5 + $0x38] sm:$0xff] %v846
  %911 = vst [vmem:[#allocation5 + $0x40] sm:$0xff] %v847
  %912 = vst [vmem:[#allocation5 + $0x48] sm:$0xff] %v848
  %913 = vst [vmem:[#allocation5 + $0x50] sm:$0xff] %v849
  %914 = vst [vmem:[#allocation5 + $0x58] sm:$0xff] %v850
  %915 = vst [vmem:[#allocation5 + $0x60] sm:$0xff] %v851
  %916 = vst [vmem:[#allocation5 + $0x68] sm:$0xff] %v852
  %917 = vst [vmem:[#allocation5 + $0x70] sm:$0xff] %v853
  %918 = vst [vmem:[#allocation5 + $0x78] sm:$0xff] %v854
  %919 = vst [vmem:[#allocation5 + $0x80] sm:$0xff] %v855
  %920 = vst [vmem:[#allocation5 + $0x88] sm:$0xff] %v856
  %921 = vst [vmem:[#allocation5 + $0x90] sm:$0xff] %v857
  %922 = vst [vmem:[#allocation5 + $0x98] sm:$0xff] %v858
  %923 = vst [vmem:[#allocation5 + $0xa0] sm:$0xff] %v859
  %924 = vst [vmem:[#allocation5 + $0xa8] sm:$0xff] %v860
  %925 = vst [vmem:[#allocation5 + $0xb0] sm:$0xff] %v861
  %926 = vst [vmem:[#allocation5 + $0xb8] sm:$0xff] %v862
  %927 = vst [vmem:[#allocation5 + $0xc0] sm:$0xff] %v863
  %928 = vst [vmem:[#allocation5 + $0xc8] sm:$0xff] %v864
  %929 = vst [vmem:[#allocation5 + $0xd0] sm:$0xff] %v865
  %930 = vst [vmem:[#allocation5 + $0xd8] sm:$0xff] %v866
  %931 = vst [vmem:[#allocation5 + $0xe0] sm:$0xff] %v867
  %932 = vst [vmem:[#allocation5 + $0xe8] sm:$0xff] %v868
  %933 = vst [vmem:[#allocation5 + $0xf0] sm:$0xff] %v869
  %934 = vst [vmem:[#allocation5 + $0xf8] sm:$0xff] %v870
  %935 = vst [vmem:[#allocation5 + $0x100] sm:$0xff] %v871
  %936 = vst [vmem:[#allocation5 + $0x108] sm:$0xff] %v872
  %937 = vst [vmem:[#allocation5 + $0x110] sm:$0xff] %v873
  %938 = vst [vmem:[#allocation5 + $0x118] sm:$0xff] %v874
  %939 = vst [vmem:[#allocation5 + $0x120] sm:$0xff] %v875
  %940 = vst [vmem:[#allocation5 + $0x128] sm:$0xff] %v876
  %941 = vst [vmem:[#allocation5 + $0x130] sm:$0xff] %v877
  %942 = vst [vmem:[#allocation5 + $0x138] sm:$0xff] %v878
  %943 = vst [vmem:[#allocation5 + $0x140] sm:$0xff] %v879
  %944 = vst [vmem:[#allocation5 + $0x148] sm:$0xff] %v880
  %945 = vst [vmem:[#allocation5 + $0x150] sm:$0xff] %v881
  %946 = vst [vmem:[#allocation5 + $0x158] sm:$0xff] %v882
  %947 = vst [vmem:[#allocation5 + $0x160] sm:$0xff] %v883
  %948 = vst [vmem:[#allocation5 + $0x168] sm:$0xff] %v884
  %949 = vst [vmem:[#allocation5 + $0x170] sm:$0xff] %v885
  %950 = vst [vmem:[#allocation5 + $0x178] sm:$0xff] %v886
  %951 = vst [vmem:[#allocation5 + $0x180] sm:$0xff] %v887
  %952 = vst [vmem:[#allocation5 + $0x188] sm:$0xff] %v888
  %953 = vst [vmem:[#allocation5 + $0x190] sm:$0xff] %v889
  %954 = vst [vmem:[#allocation5 + $0x198] sm:$0xff] %v890
  %955 = vst [vmem:[#allocation5 + $0x1a0] sm:$0xff] %v891
  %956 = vst [vmem:[#allocation5 + $0x1a8] sm:$0xff] %v892
  %957 = vst [vmem:[#allocation5 + $0x1b0] sm:$0xff] %v893
  %958 = vst [vmem:[#allocation5 + $0x1b8] sm:$0xff] %v894
  %959 = vst [vmem:[#allocation5 + $0x1c0] sm:$0xff] %v895
  %960 = vst [vmem:[#allocation5 + $0x1c8] sm:$0xff] %v896
  %961 = vst [vmem:[#allocation5 + $0x1d0] sm:$0xff] %v897
  %962 = vst [vmem:[#allocation5 + $0x1d8] sm:$0xff] %v898
  %963 = vst [vmem:[#allocation5 + $0x1e0] sm:$0xff] %v899
  %964 = vst [vmem:[#allocation5 + $0x1e8] sm:$0xff] %v900
  %965 = vst [vmem:[#allocation5 + $0x1f0] sm:$0xff] %v901
  %966 = vst [vmem:[#allocation5 + $0x1f8] sm:$0xff] %v902
  %v967 = vld [vmem:[#allocation5] sm:$0xff]
  %v968 = vld [vmem:[#allocation5 + $0x8] sm:$0xff]
  %v969 = vld [vmem:[#allocation5 + $0x10] sm:$0xff]
  %v970 = vld [vmem:[#allocation5 + $0x18] sm:$0xff]
  %v971 = vld [vmem:[#allocation5 + $0x20] sm:$0xff]
  %v972 = vld [vmem:[#allocation5 + $0x28] sm:$0xff]
  %v973 = vld [vmem:[#allocation5 + $0x30] sm:$0xff]
  %v974 = vld [vmem:[#allocation5 + $0x38] sm:$0xff]
  %v975 = vld [vmem:[#allocation5 + $0x40] sm:$0xff]
  %v976 = vld [vmem:[#allocation5 + $0x48] sm:$0xff]
  %v977 = vld [vmem:[#allocation5 + $0x50] sm:$0xff]
  %v978 = vld [vmem:[#allocation5 + $0x58] sm:$0xff]
  %v979 = vld [vmem:[#allocation5 + $0x60] sm:$0xff]
  %v980 = vld [vmem:[#allocation5 + $0x68] sm:$0xff]
  %v981 = vld [vmem:[#allocation5 + $0x70] sm:$0xff]
  %v982 = vld [vmem:[#allocation5 + $0x78] sm:$0xff]
  %v983 = vld [vmem:[#allocation5 + $0x80] sm:$0xff]
  %v984 = vld [vmem:[#allocation5 + $0x88] sm:$0xff]
  %v985 = vld [vmem:[#allocation5 + $0x90] sm:$0xff]
  %v986 = vld [vmem:[#allocation5 + $0x98] sm:$0xff]
  %v987 = vld [vmem:[#allocation5 + $0xa0] sm:$0xff]
  %v988 = vld [vmem:[#allocation5 + $0xa8] sm:$0xff]
  %v989 = vld [vmem:[#allocation5 + $0xb0] sm:$0xff]
  %v990 = vld [vmem:[#allocation5 + $0xb8] sm:$0xff]
  %v991 = vld [vmem:[#allocation5 + $0xc0] sm:$0xff]
  %v992 = vld [vmem:[#allocation5 + $0xc8] sm:$0xff]
  %v993 = vld [vmem:[#allocation5 + $0xd0] sm:$0xff]
  %v994 = vld [vmem:[#allocation5 + $0xd8] sm:$0xff]
  %v995 = vld [vmem:[#allocation5 + $0xe0] sm:$0xff]
  %v996 = vld [vmem:[#allocation5 + $0xe8] sm:$0xff]
  %v997 = vld [vmem:[#allocation5 + $0xf0] sm:$0xff]
  %v998 = vld [vmem:[#allocation5 + $0xf8] sm:$0xff]
  %v999 = vld [vmem:[#allocation5 + $0x100] sm:$0xff]
  %v1000 = vld [vmem:[#allocation5 + $0x108] sm:$0xff]
  %v1001 = vld [vmem:[#allocation5 + $0x110] sm:$0xff]
  %v1002 = vld [vmem:[#allocation5 + $0x118] sm:$0xff]
  %v1003 = vld [vmem:[#allocation5 + $0x120] sm:$0xff]
  %v1004 = vld [vmem:[#allocation5 + $0x128] sm:$0xff]
  %v1005 = vld [vmem:[#allocation5 + $0x130] sm:$0xff]
  %v1006 = vld [vmem:[#allocation5 + $0x138] sm:$0xff]
  %v1007 = vld [vmem:[#allocation5 + $0x140] sm:$0xff]
  %v1008 = vld [vmem:[#allocation5 + $0x148] sm:$0xff]
  %v1009 = vld [vmem:[#allocation5 + $0x150] sm:$0xff]
  %v1010 = vld [vmem:[#allocation5 + $0x158] sm:$0xff]
  %v1011 = vld [vmem:[#allocation5 + $0x160] sm:$0xff]
  %v1012 = vld [vmem:[#allocation5 + $0x168] sm:$0xff]
  %v1013 = vld [vmem:[#allocation5 + $0x170] sm:$0xff]
  %v1014 = vld [vmem:[#allocation5 + $0x178] sm:$0xff]
  %v1015 = vld [vmem:[#allocation5 + $0x180] sm:$0xff]
  %v1016 = vld [vmem:[#allocation5 + $0x188] sm:$0xff]
  %v1017 = vld [vmem:[#allocation5 + $0x190] sm:$0xff]
  %v1018 = vld [vmem:[#allocation5 + $0x198] sm:$0xff]
  %v1019 = vld [vmem:[#allocation5 + $0x1a0] sm:$0xff]
  %v1020 = vld [vmem:[#allocation5 + $0x1a8] sm:$0xff]
  %v1021 = vld [vmem:[#allocation5 + $0x1b0] sm:$0xff]
  %v1022 = vld [vmem:[#allocation5 + $0x1b8] sm:$0xff]
  %v1023 = vld [vmem:[#allocation5 + $0x1c0] sm:$0xff]
  %v1024 = vld [vmem:[#allocation5 + $0x1c8] sm:$0xff]
  %v1025 = vld [vmem:[#allocation5 + $0x1d0] sm:$0xff]
  %v1026 = vld [vmem:[#allocation5 + $0x1d8] sm:$0xff]
  %v1027 = vld [vmem:[#allocation5 + $0x1e0] sm:$0xff]
  %v1028 = vld [vmem:[#allocation5 + $0x1e8] sm:$0x7f]
  %v1029 = vld [vmem:[#allocation5 + $0x1] sm:$0xff]
  %v1030 = vld [vmem:[#allocation5 + $0x9] sm:$0xff]
  %v1031 = vld [vmem:[#allocation5 + $0x11] sm:$0xff]
  %v1032 = vld [vmem:[#allocation5 + $0x19] sm:$0xff]
  %v1033 = vld [vmem:[#allocation5 + $0x21] sm:$0xff]
  %v1034 = vld [vmem:[#allocation5 + $0x29] sm:$0xff]
  %v1035 = vld [vmem:[#allocation5 + $0x31] sm:$0xff]
  %v1036 = vld [vmem:[#allocation5 + $0x39] sm:$0xff]
  %v1037 = vld [vmem:[#allocation5 + $0x41] sm:$0xff]
  %v1038 = vld [vmem:[#allocation5 + $0x49] sm:$0xff]
  %v1039 = vld [vmem:[#allocation5 + $0x51] sm:$0xff]
  %v1040 = vld [vmem:[#allocation5 + $0x59] sm:$0xff]
  %v1041 = vld [vmem:[#allocation5 + $0x61] sm:$0xff]
  %v1042 = vld [vmem:[#allocation5 + $0x69] sm:$0xff]
  %v1043 = vld [vmem:[#allocation5 + $0x71] sm:$0xff]
  %v1044 = vld [vmem:[#allocation5 + $0x79] sm:$0xff]
  %v1045 = vld [vmem:[#allocation5 + $0x81] sm:$0xff]
  %v1046 = vld [vmem:[#allocation5 + $0x89] sm:$0xff]
  %v1047 = vld [vmem:[#allocation5 + $0x91] sm:$0xff]
  %v1048 = vld [vmem:[#allocation5 + $0x99] sm:$0xff]
  %v1049 = vld [vmem:[#allocation5 + $0xa1] sm:$0xff]
  %v1050 = vld [vmem:[#allocation5 + $0xa9] sm:$0xff]
  %v1051 = vld [vmem:[#allocation5 + $0xb1] sm:$0xff]
  %v1052 = vld [vmem:[#allocation5 + $0xb9] sm:$0xff]
  %v1053 = vld [vmem:[#allocation5 + $0xc1] sm:$0xff]
  %v1054 = vld [vmem:[#allocation5 + $0xc9] sm:$0xff]
  %v1055 = vld [vmem:[#allocation5 + $0xd1] sm:$0xff]
  %v1056 = vld [vmem:[#allocation5 + $0xd9] sm:$0xff]
  %v1057 = vld [vmem:[#allocation5 + $0xe1] sm:$0xff]
  %v1058 = vld [vmem:[#allocation5 + $0xe9] sm:$0xff]
  %v1059 = vld [vmem:[#allocation5 + $0xf1] sm:$0xff]
  %v1060 = vld [vmem:[#allocation5 + $0xf9] sm:$0xff]
  %v1061 = vld [vmem:[#allocation5 + $0x101] sm:$0xff]
  %v1062 = vld [vmem:[#allocation5 + $0x109] sm:$0xff]
  %v1063 = vld [vmem:[#allocation5 + $0x111] sm:$0xff]
  %v1064 = vld [vmem:[#allocation5 + $0x119] sm:$0xff]
  %v1065 = vld [vmem:[#allocation5 + $0x121] sm:$0xff]
  %v1066 = vld [vmem:[#allocation5 + $0x129] sm:$0xff]
  %v1067 = vld [vmem:[#allocation5 + $0x131] sm:$0xff]
  %v1068 = vld [vmem:[#allocation5 + $0x139] sm:$0xff]
  %v1069 = vld [vmem:[#allocation5 + $0x141] sm:$0xff]
  %v1070 = vld [vmem:[#allocation5 + $0x149] sm:$0xff]
  %v1071 = vld [vmem:[#allocation5 + $0x151] sm:$0xff]
  %v1072 = vld [vmem:[#allocation5 + $0x159] sm:$0xff]
  %v1073 = vld [vmem:[#allocation5 + $0x161] sm:$0xff]
  %v1074 = vld [vmem:[#allocation5 + $0x169] sm:$0xff]
  %v1075 = vld [vmem:[#allocation5 + $0x171] sm:$0xff]
  %v1076 = vld [vmem:[#allocation5 + $0x179] sm:$0xff]
  %v1077 = vld [vmem:[#allocation5 + $0x181] sm:$0xff]
  %v1078 = vld [vmem:[#allocation5 + $0x189] sm:$0xff]
  %v1079 = vld [vmem:[#allocation5 + $0x191] sm:$0xff]
  %v1080 = vld [vmem:[#allocation5 + $0x199] sm:$0xff]
  %v1081 = vld [vmem:[#allocation5 + $0x1a1] sm:$0xff]
  %v1082 = vld [vmem:[#allocation5 + $0x1a9] sm:$0xff]
  %v1083 = vld [vmem:[#allocation5 + $0x1b1] sm:$0xff]
  %v1084 = vld [vmem:[#allocation5 + $0x1b9] sm:$0xff]
  %v1085 = vld [vmem:[#allocation5 + $0x1c1] sm:$0xff]
  %v1086 = vld [vmem:[#allocation5 + $0x1c9] sm:$0xff]
  %v1087 = vld [vmem:[#allocation5 + $0x1d1] sm:$0xff]
  %v1088 = vld [vmem:[#allocation5 + $0x1d9] sm:$0xff]
  %v1089 = vld [vmem:[#allocation5 + $0x1e1] sm:$0xff]
  %v1090 = vld [vmem:[#allocation5 + $0x1e9] sm:$0x7f]
  %v1091 = vmax.f32 %v967, %v1029
  %v1092 = vmax.f32 %v968, %v1030
  %v1093 = vmax.f32 %v969, %v1031
  %v1094 = vmax.f32 %v970, %v1032
  %v1095 = vmax.f32 %v971, %v1033
  %v1096 = vmax.f32 %v972, %v1034
  %v1097 = vmax.f32 %v973, %v1035
  %v1098 = vmax.f32 %v974, %v1036
  %v1099 = vmax.f32 %v975, %v1037
  %v1100 = vmax.f32 %v976, %v1038
  %v1101 = vmax.f32 %v977, %v1039
  %v1102 = vmax.f32 %v978, %v1040
  %v1103 = vmax.f32 %v979, %v1041
  %v1104 = vmax.f32 %v980, %v1042
  %v1105 = vmax.f32 %v981, %v1043
  %v1106 = vmax.f32 %v982, %v1044
  %v1107 = vmax.f32 %v983, %v1045
  %v1108 = vmax.f32 %v984, %v1046
  %v1109 = vmax.f32 %v985, %v1047
  %v1110 = vmax.f32 %v986, %v1048
  %v1111 = vmax.f32 %v987, %v1049
  %v1112 = vmax.f32 %v988, %v1050
  %v1113 = vmax.f32 %v989, %v1051
  %v1114 = vmax.f32 %v990, %v1052
  %v1115 = vmax.f32 %v991, %v1053
  %v1116 = vmax.f32 %v992, %v1054
  %v1117 = vmax.f32 %v993, %v1055
  %v1118 = vmax.f32 %v994, %v1056
  %v1119 = vmax.f32 %v995, %v1057
  %v1120 = vmax.f32 %v996, %v1058
  %v1121 = vmax.f32 %v997, %v1059
  %v1122 = vmax.f32 %v998, %v1060
  %v1123 = vmax.f32 %v999, %v1061
  %v1124 = vmax.f32 %v1000, %v1062
  %v1125 = vmax.f32 %v1001, %v1063
  %v1126 = vmax.f32 %v1002, %v1064
  %v1127 = vmax.f32 %v1003, %v1065
  %v1128 = vmax.f32 %v1004, %v1066
  %v1129 = vmax.f32 %v1005, %v1067
  %v1130 = vmax.f32 %v1006, %v1068
  %v1131 = vmax.f32 %v1007, %v1069
  %v1132 = vmax.f32 %v1008, %v1070
  %v1133 = vmax.f32 %v1009, %v1071
  %v1134 = vmax.f32 %v1010, %v1072
  %v1135 = vmax.f32 %v1011, %v1073
  %v1136 = vmax.f32 %v1012, %v1074
  %v1137 = vmax.f32 %v1013, %v1075
  %v1138 = vmax.f32 %v1014, %v1076
  %v1139 = vmax.f32 %v1015, %v1077
  %v1140 = vmax.f32 %v1016, %v1078
  %v1141 = vmax.f32 %v1017, %v1079
  %v1142 = vmax.f32 %v1018, %v1080
  %v1143 = vmax.f32 %v1019, %v1081
  %v1144 = vmax.f32 %v1020, %v1082
  %v1145 = vmax.f32 %v1021, %v1083
  %v1146 = vmax.f32 %v1022, %v1084
  %v1147 = vmax.f32 %v1023, %v1085
  %v1148 = vmax.f32 %v1024, %v1086
  %v1149 = vmax.f32 %v1025, %v1087
  %v1150 = vmax.f32 %v1026, %v1088
  %v1151 = vmax.f32 %v1027, %v1089
  %v1152 = vmax.f32 %v1028, %v1090
  %v1153 = vld [vmem:[#allocation5 + $0x1e8] sm:$0xff]
  %v1154 = vld [vmem:[#allocation5 + $0x1f0] sm:$0xff]
  %v1155 = vld [vmem:[#allocation5 + $0x1f8] sm:$0x7f]
  %v1156 = vld [vmem:[#allocation5 + $0x11] sm:$0xff]
  %v1157 = vld [vmem:[#allocation5 + $0x19] sm:$0xff]
  %v1158 = vld [vmem:[#allocation5 + $0x21] sm:$0xff]
  %v1159 = vld [vmem:[#allocation5 + $0x29] sm:$0xff]
  %v1160 = vld [vmem:[#allocation5 + $0x31] sm:$0xff]
  %v1161 = vld [vmem:[#allocation5 + $0x39] sm:$0xff]
  %v1162 = vld [vmem:[#allocation5 + $0x41] sm:$0xff]
  %v1163 = vld [vmem:[#allocation5 + $0x49] sm:$0xff]
  %v1164 = vld [vmem:[#allocation5 + $0x51] sm:$0xff]
  %v1165 = vld [vmem:[#allocation5 + $0x59] sm:$0xff]
  %v1166 = vld [vmem:[#allocation5 + $0x61] sm:$0xff]
  %v1167 = vld [vmem:[#allocation5 + $0x69] sm:$0xff]
  %v1168 = vld [vmem:[#allocation5 + $0x71] sm:$0xff]
  %v1169 = vld [vmem:[#allocation5 + $0x79] sm:$0xff]
  %v1170 = vld [vmem:[#allocation5 + $0x81] sm:$0xff]
  %v1171 = vld [vmem:[#allocation5 + $0x89] sm:$0xff]
  %v1172 = vld [vmem:[#allocation5 + $0x91] sm:$0xff]
  %v1173 = vld [vmem:[#allocation5 + $0x99] sm:$0xff]
  %v1174 = vld [vmem:[#allocation5 + $0xa1] sm:$0xff]
  %v1175 = vld [vmem:[#allocation5 + $0xa9] sm:$0xff]
  %v1176 = vld [vmem:[#allocation5 + $0xb1] sm:$0xff]
  %v1177 = vld [vmem:[#allocation5 + $0xb9] sm:$0xff]
  %v1178 = vld [vmem:[#allocation5 + $0xc1] sm:$0xff]
  %v1179 = vld [vmem:[#allocation5 + $0xc9] sm:$0xff]
  %v1180 = vld [vmem:[#allocation5 + $0xd1] sm:$0xff]
  %v1181 = vld [vmem:[#allocation5 + $0xd9] sm:$0xff]
  %v1182 = vld [vmem:[#allocation5 + $0xe1] sm:$0xff]
  %v1183 = vld [vmem:[#allocation5 + $0xe9] sm:$0xff]
  %v1184 = vld [vmem:[#allocation5 + $0xf1] sm:$0xff]
  %v1185 = vld [vmem:[#allocation5 + $0xf9] sm:$0xff]
  %v1186 = vld [vmem:[#allocation5 + $0x101] sm:$0xff]
  %v1187 = vld [vmem:[#allocation5 + $0x109] sm:$0xff]
  %v1188 = vld [vmem:[#allocation5 + $0x111] sm:$0xff]
  %v1189 = vld [vmem:[#allocation5 + $0x119] sm:$0xff]
  %v1190 = vld [vmem:[#allocation5 + $0x121] sm:$0xff]
  %v1191 = vld [vmem:[#allocation5 + $0x129] sm:$0xff]
  %v1192 = vld [vmem:[#allocation5 + $0x131] sm:$0xff]
  %v1193 = vld [vmem:[#allocation5 + $0x139] sm:$0xff]
  %v1194 = vld [vmem:[#allocation5 + $0x141] sm:$0xff]
  %v1195 = vld [vmem:[#allocation5 + $0x149] sm:$0xff]
  %v1196 = vld [vmem:[#allocation5 + $0x151] sm:$0xff]
  %v1197 = vld [vmem:[#allocation5 + $0x159] sm:$0xff]
  %v1198 = vld [vmem:[#allocation5 + $0x161] sm:$0xff]
  %v1199 = vld [vmem:[#allocation5 + $0x169] sm:$0xff]
  %v1200 = vld [vmem:[#allocation5 + $0x171] sm:$0xff]
  %v1201 = vld [vmem:[#allocation5 + $0x179] sm:$0xff]
  %v1202 = vld [vmem:[#allocation5 + $0x181] sm:$0xff]
  %v1203 = vld [vmem:[#allocation5 + $0x189] sm:$0xff]
  %v1204 = vld [vmem:[#allocation5 + $0x191] sm:$0xff]
  %v1205 = vld [vmem:[#allocation5 + $0x199] sm:$0xff]
  %v1206 = vld [vmem:[#allocation5 + $0x1a1] sm:$0xff]
  %v1207 = vld [vmem:[#allocation5 + $0x1a9] sm:$0xff]
  %v1208 = vld [vmem:[#allocation5 + $0x1b1] sm:$0xff]
  %v1209 = vld [vmem:[#allocation5 + $0x1b9] sm:$0xff]
  %v1210 = vld [vmem:[#allocation5 + $0x1c1] sm:$0xff]
  %v1211 = vld [vmem:[#allocation5 + $0x1c9] sm:$0xff]
  %v1212 = vld [vmem:[#allocation5 + $0x1d1] sm:$0xff]
  %v1213 = vld [vmem:[#allocation5 + $0x1d9] sm:$0xff]
  %v1214 = vld [vmem:[#allocation5 + $0x1e1] sm:$0xff]
  %v1215 = vld [vmem:[#allocation5 + $0x1e9] sm:$0xff]
  %v1216 = vld [vmem:[#allocation5 + $0x1f1] sm:$0xff]
  %v1217 = vld [vmem:[#allocation5 + $0x1f9] sm:$0x7f]
  %v1218 = vmax.f32 %v969, %v1156
  %v1219 = vmax.f32 %v970, %v1157
  %v1220 = vmax.f32 %v971, %v1158
  %v1221 = vmax.f32 %v972, %v1159
  %v1222 = vmax.f32 %v973, %v1160
  %v1223 = vmax.f32 %v974, %v1161
  %v1224 = vmax.f32 %v975, %v1162
  %v1225 = vmax.f32 %v976, %v1163
  %v1226 = vmax.f32 %v977, %v1164
  %v1227 = vmax.f32 %v978, %v1165
  %v1228 = vmax.f32 %v979, %v1166
  %v1229 = vmax.f32 %v980, %v1167
  %v1230 = vmax.f32 %v981, %v1168
  %v1231 = vmax.f32 %v982, %v1169
  %v1232 = vmax.f32 %v983, %v1170
  %v1233 = vmax.f32 %v984, %v1171
  %v1234 = vmax.f32 %v985, %v1172
  %v1235 = vmax.f32 %v986, %v1173
  %v1236 = vmax.f32 %v987, %v1174
  %v1237 = vmax.f32 %v988, %v1175
  %v1238 = vmax.f32 %v989, %v1176
  %v1239 = vmax.f32 %v990, %v1177
  %v1240 = vmax.f32 %v991, %v1178
  %v1241 = vmax.f32 %v992, %v1179
  %v1242 = vmax.f32 %v993, %v1180
  %v1243 = vmax.f32 %v994, %v1181
  %v1244 = vmax.f32 %v995, %v1182
  %v1245 = vmax.f32 %v996, %v1183
  %v1246 = vmax.f32 %v997, %v1184
  %v1247 = vmax.f32 %v998, %v1185
  %v1248 = vmax.f32 %v999, %v1186
  %v1249 = vmax.f32 %v1000, %v1187
  %v1250 = vmax.f32 %v1001, %v1188
  %v1251 = vmax.f32 %v1002, %v1189
  %v1252 = vmax.f32 %v1003, %v1190
  %v1253 = vmax.f32 %v1004, %v1191
  %v1254 = vmax.f32 %v1005, %v1192
  %v1255 = vmax.f32 %v1006, %v1193
  %v1256 = vmax.f32 %v1007, %v1194
  %v1257 = vmax.f32 %v1008, %v1195
  %v1258 = vmax.f32 %v1009, %v1196
  %v1259 = vmax.f32 %v1010, %v1197
  %v1260 = vmax.f32 %v1011, %v1198
  %v1261 = vmax.f32 %v1012, %v1199
  %v1262 = vmax.f32 %v1013, %v1200
  %v1263 = vmax.f32 %v1014, %v1201
  %v1264 = vmax.f32 %v1015, %v1202
  %v1265 = vmax.f32 %v1016, %v1203
  %v1266 = vmax.f32 %v1017, %v1204
  %v1267 = vmax.f32 %v1018, %v1205
  %v1268 = vmax.f32 %v1019, %v1206
  %v1269 = vmax.f32 %v1020, %v1207
  %v1270 = vmax.f32 %v1021, %v1208
  %v1271 = vmax.f32 %v1022, %v1209
  %v1272 = vmax.f32 %v1023, %v1210
  %v1273 = vmax.f32 %v1024, %v1211
  %v1274 = vmax.f32 %v1025, %v1212
  %v1275 = vmax.f32 %v1026, %v1213
  %v1276 = vmax.f32 %v1027, %v1214
  %v1277 = vmax.f32 %v1153, %v1215
  %v1278 = vmax.f32 %v1154, %v1216
  %v1279 = vmax.f32 %v1155, %v1217
  %v1280 = vmax.f32 %v1091, %v1218
  %v1281 = vmax.f32 %v1092, %v1219
  %v1282 = vmax.f32 %v1093, %v1220
  %v1283 = vmax.f32 %v1094, %v1221
  %v1284 = vmax.f32 %v1095, %v1222
  %v1285 = vmax.f32 %v1096, %v1223
  %v1286 = vmax.f32 %v1097, %v1224
  %v1287 = vmax.f32 %v1098, %v1225
  %v1288 = vmax.f32 %v1099, %v1226
  %v1289 = vmax.f32 %v1100, %v1227
  %v1290 = vmax.f32 %v1101, %v1228
  %v1291 = vmax.f32 %v1102, %v1229
  %v1292 = vmax.f32 %v1103, %v1230
  %v1293 = vmax.f32 %v1104, %v1231
  %v1294 = vmax.f32 %v1105, %v1232
  %v1295 = vmax.f32 %v1106, %v1233
  %v1296 = vmax.f32 %v1107, %v1234
  %v1297 = vmax.f32 %v1108, %v1235
  %v1298 = vmax.f32 %v1109, %v1236
  %v1299 = vmax.f32 %v1110, %v1237
  %v1300 = vmax.f32 %v1111, %v1238
  %v1301 = vmax.f32 %v1112, %v1239
  %v1302 = vmax.f32 %v1113, %v1240
  %v1303 = vmax.f32 %v1114, %v1241
  %v1304 = vmax.f32 %v1115, %v1242
  %v1305 = vmax.f32 %v1116, %v1243
  %v1306 = vmax.f32 %v1117, %v1244
  %v1307 = vmax.f32 %v1118, %v1245
  %v1308 = vmax.f32 %v1119, %v1246
  %v1309 = vmax.f32 %v1120, %v1247
  %v1310 = vmax.f32 %v1121, %v1248
  %v1311 = vmax.f32 %v1122, %v1249
  %v1312 = vmax.f32 %v1123, %v1250
  %v1313 = vmax.f32 %v1124, %v1251
  %v1314 = vmax.f32 %v1125, %v1252
  %v1315 = vmax.f32 %v1126, %v1253
  %v1316 = vmax.f32 %v1127, %v1254
  %v1317 = vmax.f32 %v1128, %v1255
  %v1318 = vmax.f32 %v1129, %v1256
  %v1319 = vmax.f32 %v1130, %v1257
  %v1320 = vmax.f32 %v1131, %v1258
  %v1321 = vmax.f32 %v1132, %v1259
  %v1322 = vmax.f32 %v1133, %v1260
  %v1323 = vmax.f32 %v1134, %v1261
  %v1324 = vmax.f32 %v1135, %v1262
  %v1325 = vmax.f32 %v1136, %v1263
  %v1326 = vmax.f32 %v1137, %v1264
  %v1327 = vmax.f32 %v1138, %v1265
  %v1328 = vmax.f32 %v1139, %v1266
  %v1329 = vmax.f32 %v1140, %v1267
  %v1330 = vmax.f32 %v1141, %v1268
  %v1331 = vmax.f32 %v1142, %v1269
  %v1332 = vmax.f32 %v1143, %v1270
  %v1333 = vmax.f32 %v1144, %v1271
  %v1334 = vmax.f32 %v1145, %v1272
  %v1335 = vmax.f32 %v1146, %v1273
  %v1336 = vmax.f32 %v1147, %v1274
  %v1337 = vmax.f32 %v1148, %v1275
  %v1338 = vmax.f32 %v1149, %v1276
  %v1339 = vmax.f32 %v1150, %v1277
  %v1340 = vmax.f32 %v1151, %v1278
  %v1341 = vmax.f32 %v1152, %v1279
  %v1342 = vld [vmem:[%s4] sm:$0xff]
  %v1343 = vld [vmem:[%s4 + $0x8] sm:$0xff]
  %v1344 = vld [vmem:[%s4 + $0x10] sm:$0xff]
  %v1345 = vld [vmem:[%s4 + $0x18] sm:$0xff]
  %v1346 = vld [vmem:[%s4 + $0x20] sm:$0xff]
  %v1347 = vld [vmem:[%s4 + $0x28] sm:$0xff]
  %v1348 = vld [vmem:[%s4 + $0x30] sm:$0xff]
  %v1349 = vld [vmem:[%s4 + $0x38] sm:$0xff]
  %v1350 = vld [vmem:[%s4 + $0x40] sm:$0xff]
  %v1351 = vld [vmem:[%s4 + $0x48] sm:$0xff]
  %v1352 = vld [vmem:[%s4 + $0x50] sm:$0xff]
  %v1353 = vld [vmem:[%s4 + $0x58] sm:$0xff]
  %v1354 = vld [vmem:[%s4 + $0x60] sm:$0xff]
  %v1355 = vld [vmem:[%s4 + $0x68] sm:$0xff]
  %v1356 = vld [vmem:[%s4 + $0x70] sm:$0xff]
  %v1357 = vld [vmem:[%s4 + $0x78] sm:$0xff]
  %v1358 = vld [vmem:[%s4 + $0x80] sm:$0xff]
  %v1359 = vld [vmem:[%s4 + $0x88] sm:$0xff]
  %v1360 = vld [vmem:[%s4 + $0x90] sm:$0xff]
  %v1361 = vld [vmem:[%s4 + $0x98] sm:$0xff]
  %v1362 = vld [vmem:[%s4 + $0xa0] sm:$0xff]
  %v1363 = vld [vmem:[%s4 + $0xa8] sm:$0xff]
  %v1364 = vld [vmem:[%s4 + $0xb0] sm:$0xff]
  %v1365 = vld [vmem:[%s4 + $0xb8] sm:$0xff]
  %v1366 = vld [vmem:[%s4 + $0xc0] sm:$0xff]
  %v1367 = vld [vmem:[%s4 + $0xc8] sm:$0xff]
  %v1368 = vld [vmem:[%s4 + $0xd0] sm:$0xff]
  %v1369 = vld [vmem:[%s4 + $0xd8] sm:$0xff]
  %v1370 = vld [vmem:[%s4 + $0xe0] sm:$0xff]
  %v1371 = vld [vmem:[%s4 + $0xe8] sm:$0xff]
  %v1372 = vld [vmem:[%s4 + $0xf0] sm:$0xff]
  %v1373 = vld [vmem:[%s4 + $0xf8] sm:$0xff]
  %v1374 = vld [vmem:[%s4 + $0x100] sm:$0xff]
  %v1375 = vld [vmem:[%s4 + $0x108] sm:$0xff]
  %v1376 = vld [vmem:[%s4 + $0x110] sm:$0xff]
  %v1377 = vld [vmem:[%s4 + $0x118] sm:$0xff]
  %v1378 = vld [vmem:[%s4 + $0x120] sm:$0xff]
  %v1379 = vld [vmem:[%s4 + $0x128] sm:$0xff]
  %v1380 = vld [vmem:[%s4 + $0x130] sm:$0xff]
  %v1381 = vld [vmem:[%s4 + $0x138] sm:$0xff]
  %v1382 = vld [vmem:[%s4 + $0x140] sm:$0xff]
  %v1383 = vld [vmem:[%s4 + $0x148] sm:$0xff]
  %v1384 = vld [vmem:[%s4 + $0x150] sm:$0xff]
  %v1385 = vld [vmem:[%s4 + $0x158] sm:$0xff]
  %v1386 = vld [vmem:[%s4 + $0x160] sm:$0xff]
  %v1387 = vld [vmem:[%s4 + $0x168] sm:$0xff]
  %v1388 = vld [vmem:[%s4 + $0x170] sm:$0xff]
  %v1389 = vld [vmem:[%s4 + $0x178] sm:$0xff]
  %v1390 = vld [vmem:[%s4 + $0x180] sm:$0xff]
  %v1391 = vld [vmem:[%s4 + $0x188] sm:$0xff]
  %v1392 = vld [vmem:[%s4 + $0x190] sm:$0xff]
  %v1393 = vld [vmem:[%s4 + $0x198] sm:$0xff]
  %v1394 = vld [vmem:[%s4 + $0x1a0] sm:$0xff]
  %v1395 = vld [vmem:[%s4 + $0x1a8] sm:$0xff]
  %v1396 = vld [vmem:[%s4 + $0x1b0] sm:$0xff]
  %v1397 = vld [vmem:[%s4 + $0x1b8] sm:$0xff]
  %v1398 = vld [vmem:[%s4 + $0x1c0] sm:$0xff]
  %v1399 = vld [vmem:[%s4 + $0x1c8] sm:$0xff]
  %v1400 = vld [vmem:[%s4 + $0x1d0] sm:$0xff]
  %v1401 = vld [vmem:[%s4 + $0x1d8] sm:$0xff]
  %v1402 = vld [vmem:[%s4 + $0x1e0] sm:$0xff]
  %v1403 = vld [vmem:[%s4 + $0x1e8] sm:$0xff]
  %v1404 = vld [vmem:[%s4 + $0x1f0] sm:$0xff]
  %v1405 = vld [vmem:[%s4 + $0x1f8] sm:$0xff]
  %v1406 = vld [vmem:[%s4 + $0x200] sm:$0xff]
  %v1407 = vld [vmem:[%s4 + $0x208] sm:$0xff]
  %v1408 = vld [vmem:[%s4 + $0x210] sm:$0xff]
  %v1409 = vld [vmem:[%s4 + $0x218] sm:$0xff]
  %v1410 = vld [vmem:[%s4 + $0x220] sm:$0xff]
  %v1411 = vld [vmem:[%s4 + $0x228] sm:$0xff]
  %v1412 = vld [vmem:[%s4 + $0x230] sm:$0xff]
  %v1413 = vld [vmem:[%s4 + $0x238] sm:$0xff]
  %v1414 = vld [vmem:[%s4 + $0x240] sm:$0xff]
  %v1415 = vld [vmem:[%s4 + $0x248] sm:$0xff]
  %v1416 = vld [vmem:[%s4 + $0x250] sm:$0xff]
  %v1417 = vld [vmem:[%s4 + $0x258] sm:$0xff]
  %v1418 = vld [vmem:[%s4 + $0x260] sm:$0xff]
  %v1419 = vld [vmem:[%s4 + $0x268] sm:$0xff]
  %v1420 = vld [vmem:[%s4 + $0x270] sm:$0xff]
  %v1421 = vld [vmem:[%s4 + $0x278] sm:$0xff]
  %v1422 = vld [vmem:[%s4 + $0x280] sm:$0xff]
  %v1423 = vld [vmem:[%s4 + $0x288] sm:$0xff]
  %v1424 = vld [vmem:[%s4 + $0x290] sm:$0xff]
  %v1425 = vld [vmem:[%s4 + $0x298] sm:$0xff]
  %v1426 = vld [vmem:[%s4 + $0x2a0] sm:$0xff]
  %v1427 = vld [vmem:[%s4 + $0x2a8] sm:$0xff]
  %v1428 = vld [vmem:[%s4 + $0x2b0] sm:$0xff]
  %v1429 = vld [vmem:[%s4 + $0x2b8] sm:$0xff]
  %v1430 = vld [vmem:[%s4 + $0x2c0] sm:$0xff]
  %v1431 = vld [vmem:[%s4 + $0x2c8] sm:$0xff]
  %v1432 = vld [vmem:[%s4 + $0x2d0] sm:$0xff]
  %v1433 = vld [vmem:[%s4 + $0x2d8] sm:$0xff]
  %v1434 = vld [vmem:[%s4 + $0x2e0] sm:$0xff]
  %v1435 = vld [vmem:[%s4 + $0x2e8] sm:$0xff]
  %v1436 = vld [vmem:[%s4 + $0x2f0] sm:$0xff]
  %v1437 = vld [vmem:[%s4 + $0x2f8] sm:$0xff]
  %v1438 = vld [vmem:[%s4 + $0x300] sm:$0xff]
  %v1439 = vld [vmem:[%s4 + $0x308] sm:$0xff]
  %v1440 = vld [vmem:[%s4 + $0x310] sm:$0xff]
  %v1441 = vld [vmem:[%s4 + $0x318] sm:$0xff]
  %v1442 = vld [vmem:[%s4 + $0x320] sm:$0xff]
  %v1443 = vld [vmem:[%s4 + $0x328] sm:$0xff]
  %v1444 = vld [vmem:[%s4 + $0x330] sm:$0xff]
  %v1445 = vld [vmem:[%s4 + $0x338] sm:$0xff]
  %v1446 = vld [vmem:[%s4 + $0x340] sm:$0xff]
  %v1447 = vld [vmem:[%s4 + $0x348] sm:$0xff]
  %v1448 = vld [vmem:[%s4 + $0x350] sm:$0xff]
  %v1449 = vld [vmem:[%s4 + $0x358] sm:$0xff]
  %v1450 = vld [vmem:[%s4 + $0x360] sm:$0x3f]
  %v1451 = vld [vmem:[%s4 + $0x368] sm:$0x3f]
  %v1452 = vld [vmem:[%s4 + $0x370] sm:$0x3f]
  %v1453 = vld [vmem:[%s4 + $0x378] sm:$0x3f]
  %vm1454 = vcmask 908288
  %v1456 = vsel %vm1454, %v1345, 0
  %v1459 = vsel %vm1454, %v1349, 0
  %v1462 = vsel %vm1454, %v1353, 0
  %v1465 = vsel %vm1454, %v1357, 0
  %v1468 = vsel %vm1454, %v1361, 0
  %v1471 = vsel %vm1454, %v1365, 0
  %v1474 = vsel %vm1454, %v1369, 0
  %v1477 = vsel %vm1454, %v1373, 0
  %v1480 = vsel %vm1454, %v1377, 0
  %v1483 = vsel %vm1454, %v1381, 0
  %v1486 = vsel %vm1454, %v1385, 0
  %v1489 = vsel %vm1454, %v1389, 0
  %v1492 = vsel %vm1454, %v1393, 0
  %v1495 = vsel %vm1454, %v1397, 0
  %v1498 = vsel %vm1454, %v1401, 0
  %v1501 = vsel %vm1454, %v1405, 0
  %v1504 = vsel %vm1454, %v1409, 0
  %v1507 = vsel %vm1454, %v1413, 0
  %v1510 = vsel %vm1454, %v1417, 0
  %v1513 = vsel %vm1454, %v1421, 0
  %v1516 = vsel %vm1454, %v1425, 0
  %v1519 = vsel %vm1454, %v1429, 0
  %v1522 = vsel %vm1454, %v1433, 0
  %v1525 = vsel %vm1454, %v1437, 0
  %v1528 = vsel %vm1454, %v1441, 0
  %v1531 = vsel %vm1454, %v1445, 0
  %v1534 = vsel %vm1454, %v1449, 0
  %v1537 = vsel %vm1454, %v1453, 0
  %vm1539 = vcmask 1046528
  %v1541 = vsel %vm1539, %v1341, 0
  %1543 = vmatprep.subr.mxu0 0.0
  %1544 = vmatpush1.msra.mxu0 %v1295
  %1545 = vmatprep.subr.mxu0 0.0
  %1546 = vmatpush1.msra.mxu0 %v1294
  %1547 = vmatprep.subr.mxu0 0.0
  %1548 = vmatpush1.msra.mxu0 %v1293
  %1549 = vmatprep.subr.mxu0 0.0
  %1550 = vmatpush1.msra.mxu0 %v1292
  %1551 = vmatprep.subr.mxu0 0.0
  %1552 = vmatpush1.msra.mxu0 %v1291
  %1553 = vmatprep.subr.mxu0 0.0
  %1554 = vmatpush1.msra.mxu0 %v1290
  %1555 = vmatprep.subr.mxu0 0.0
  %1556 = vmatpush1.msra.mxu0 %v1289
  %1557 = vmatprep.subr.mxu0 0.0
  %1558 = vmatpush1.msra.mxu0 %v1288
  %1559 = vmatprep.subr.mxu0 0.0
  %1560 = vmatpush1.msra.mxu0 %v1287
  %1561 = vmatprep.subr.mxu0 0.0
  %1562 = vmatpush1.msra.mxu0 %v1286
  %1563 = vmatprep.subr.mxu0 0.0
  %1564 = vmatpush1.msra.mxu0 %v1285
  %1565 = vmatprep.subr.mxu0 0.0
  %1566 = vmatpush1.msra.mxu0 %v1284
  %1567 = vmatprep.subr.mxu0 0.0
  %1568 = vmatpush1.msra.mxu0 %v1283
  %1569 = vmatprep.subr.mxu0 0.0
  %1570 = vmatpush1.msra.mxu0 %v1282
  %1571 = vmatprep.subr.mxu0 0.0
  %1572 = vmatpush1.msra.mxu0 %v1281
  %1573 = vmatprep.subr.mxu0 0.0
  %1574 = vmatpush1.msra.mxu0 %v1280
  %1575 = vmatprep.subr.mxu0 0.0
  %1576 = vmatpush2.msra.mxu0 %v1311
  %1577 = vmatprep.subr.mxu0 0.0
  %1578 = vmatpush2.msra.mxu0 %v1310
  %1579 = vmatprep.subr.mxu0 0.0
  %1580 = vmatpush2.msra.mxu0 %v1309
  %1581 = vmatprep.subr.mxu0 0.0
  %1582 = vmatpush2.msra.mxu0 %v1308
  %1583 = vmatprep.subr.mxu0 0.0
  %1584 = vmatpush2.msra.mxu0 %v1307
  %1585 = vmatprep.subr.mxu0 0.0
  %1586 = vmatpush2.msra.mxu0 %v1306
  %1587 = vmatprep.subr.mxu0 0.0
  %1588 = vmatpush2.msra.mxu0 %v1305
  %1589 = vmatprep.subr.mxu0 0.0
  %1590 = vmatpush2.msra.mxu0 %v1304
  %1591 = vmatprep.subr.mxu0 0.0
  %1592 = vmatpush2.msra.mxu0 %v1303
  %1593 = vmatprep.subr.mxu0 0.0
  %1594 = vmatpush2.msra.mxu0 %v1302
  %1595 = vmatprep.subr.mxu0 0.0
  %1596 = vmatpush2.msra.mxu0 %v1301
  %1597 = vmatprep.subr.mxu0 0.0
  %1598 = vmatpush2.msra.mxu0 %v1300
  %1599 = vmatprep.subr.mxu0 0.0
  %1600 = vmatpush2.msra.mxu0 %v1299
  %1601 = vmatprep.subr.mxu0 0.0
  %1602 = vmatpush2.msra.mxu0 %v1298
  %1603 = vmatprep.subr.mxu0 0.0
  %1604 = vmatpush2.msra.mxu0 %v1297
  %1605 = vmatprep.subr.mxu0 0.0
  %1606 = vmatpush2.msra.mxu0 %v1296
  %1607 = vmatprep.mubr.f32.mxu0 %v1343
  %1608 = vmatmul.mubr.f32.gmra.mxu0 %v1342
  %v1609 = vpop.f32.mrf.mxu0
  %v1610 = vadd.f32 0.0, %v1609
  %v1611 = vpop.f32.mrf.mxu0
  %1612 = vmatprep.mubr.f32.mxu0 %v1347
  %1613 = vmatmul.mubr.f32.gmra.mxu0 %v1346
  %v1614 = vpop.f32.mrf.mxu0
  %v1615 = vadd.f32 0.0, %v1614
  %v1616 = vpop.f32.mrf.mxu0
  %1617 = vmatprep.mubr.f32.mxu0 %v1351
  %1618 = vmatmul.mubr.f32.gmra.mxu0 %v1350
  %v1619 = vpop.f32.mrf.mxu0
  %v1620 = vadd.f32 0.0, %v1619
  %v1621 = vpop.f32.mrf.mxu0
  %1622 = vmatprep.mubr.f32.mxu0 %v1355
  %1623 = vmatmul.mubr.f32.gmra.mxu0 %v1354
  %v1624 = vpop.f32.mrf.mxu0
  %v1625 = vadd.f32 0.0, %v1624
  %v1626 = vpop.f32.mrf.mxu0
  %1627 = vmatprep.mubr.f32.mxu0 %v1359
  %1628 = vmatmul.mubr.f32.gmra.mxu0 %v1358
  %v1629 = vpop.f32.mrf.mxu0
  %v1630 = vadd.f32 0.0, %v1629
  %v1631 = vpop.f32.mrf.mxu0
  %1632 = vmatprep.mubr.f32.mxu0 %v1363
  %1633 = vmatmul.mubr.f32.gmra.mxu0 %v1362
  %v1634 = vpop.f32.mrf.mxu0
  %v1635 = vadd.f32 0.0, %v1634
  %v1636 = vpop.f32.mrf.mxu0
  %1637 = vmatprep.mubr.f32.mxu0 %v1367
  %1638 = vmatmul.mubr.f32.gmra.mxu0 %v1366
  %v1639 = vpop.f32.mrf.mxu0
  %v1640 = vadd.f32 0.0, %v1639
  %v1641 = vpop.f32.mrf.mxu0
  %1642 = vmatprep.mubr.f32.mxu0 %v1371
  %1643 = vmatmul.mubr.f32.gmra.mxu0 %v1370
  %v1644 = vpop.f32.mrf.mxu0
  %v1645 = vadd.f32 0.0, %v1644
  %v1646 = vpop.f32.mrf.mxu0
  %1647 = vmatprep.mubr.f32.mxu0 %v1375
  %1648 = vmatmul.mubr.f32.gmra.mxu0 %v1374
  %v1649 = vpop.f32.mrf.mxu0
  %v1650 = vadd.f32 0.0, %v1649
  %v1651 = vpop.f32.mrf.mxu0
  %1652 = vmatprep.mubr.f32.mxu0 %v1379
  %1653 = vmatmul.mubr.f32.gmra.mxu0 %v1378
  %v1654 = vpop.f32.mrf.mxu0
  %v1655 = vadd.f32 0.0, %v1654
  %v1656 = vpop.f32.mrf.mxu0
  %1657 = vmatprep.mubr.f32.mxu0 %v1383
  %1658 = vmatmul.mubr.f32.gmra.mxu0 %v1382
  %v1659 = vpop.f32.mrf.mxu0
  %v1660 = vadd.f32 0.0, %v1659
  %v1661 = vpop.f32.mrf.mxu0
  %1662 = vmatprep.mubr.f32.mxu0 %v1387
  %1663 = vmatmul.mubr.f32.gmra.mxu0 %v1386
  %v1664 = vpop.f32.mrf.mxu0
  %v1665 = vadd.f32 0.0, %v1664
  %v1666 = vpop.f32.mrf.mxu0
  %1667 = vmatprep.mubr.f32.mxu0 %v1391
  %1668 = vmatmul.mubr.f32.gmra.mxu0 %v1390
  %v1669 = vpop.f32.mrf.mxu0
  %v1670 = vadd.f32 0.0, %v1669
  %v1671 = vpop.f32.mrf.mxu0
  %1672 = vmatprep.mubr.f32.mxu0 %v1395
  %1673 = vmatmul.mubr.f32.gmra.mxu0 %v1394
  %v1674 = vpop.f32.mrf.mxu0
  %v1675 = vadd.f32 0.0, %v1674
  %v1676 = vpop.f32.mrf.mxu0
  %1677 = vmatprep.mubr.f32.mxu0 %v1399
  %1678 = vmatmul.mubr.f32.gmra.mxu0 %v1398
  %v1679 = vpop.f32.mrf.mxu0
  %v1680 = vadd.f32 0.0, %v1679
  %v1681 = vpop.f32.mrf.mxu0
  %1682 = vmatprep.mubr.f32.mxu0 %v1403
  %1683 = vmatmul.mubr.f32.gmra.mxu0 %v1402
  %v1684 = vpop.f32.mrf.mxu0
  %v1685 = vadd.f32 0.0, %v1684
  %v1686 = vpop.f32.mrf.mxu0
  %1687 = vmatprep.mubr.f32.mxu0 %v1407
  %1688 = vmatmul.mubr.f32.gmra.mxu0 %v1406
  %v1689 = vpop.f32.mrf.mxu0
  %v1690 = vadd.f32 0.0, %v1689
  %v1691 = vpop.f32.mrf.mxu0
  %1692 = vmatprep.mubr.f32.mxu0 %v1411
  %1693 = vmatmul.mubr.f32.gmra.mxu0 %v1410
  %v1694 = vpop.f32.mrf.mxu0
  %v1695 = vadd.f32 0.0, %v1694
  %v1696 = vpop.f32.mrf.mxu0
  %1697 = vmatprep.mubr.f32.mxu0 %v1415
  %1698 = vmatmul.mubr.f32.gmra.mxu0 %v1414
  %v1699 = vpop.f32.mrf.mxu0
  %v1700 = vadd.f32 0.0, %v1699
  %v1701 = vpop.f32.mrf.mxu0
  %1702 = vmatprep.mubr.f32.mxu0 %v1419
  %1703 = vmatmul.mubr.f32.gmra.mxu0 %v1418
  %v1704 = vpop.f32.mrf.mxu0
  %v1705 = vadd.f32 0.0, %v1704
  %v1706 = vpop.f32.mrf.mxu0
  %1707 = vmatprep.mubr.f32.mxu0 %v1423
  %1708 = vmatmul.mubr.f32.gmra.mxu0 %v1422
  %v1709 = vpop.f32.mrf.mxu0
  %v1710 = vadd.f32 0.0, %v1709
  %v1711 = vpop.f32.mrf.mxu0
  %1712 = vmatprep.mubr.f32.mxu0 %v1427
  %1713 = vmatmul.mubr.f32.gmra.mxu0 %v1426
  %v1714 = vpop.f32.mrf.mxu0
  %v1715 = vadd.f32 0.0, %v1714
  %v1716 = vpop.f32.mrf.mxu0
  %1717 = vmatprep.mubr.f32.mxu0 %v1431
  %1718 = vmatmul.mubr.f32.gmra.mxu0 %v1430
  %v1719 = vpop.f32.mrf.mxu0
  %v1720 = vadd.f32 0.0, %v1719
  %v1721 = vpop.f32.mrf.mxu0
  %1722 = vmatprep.mubr.f32.mxu0 %v1435
  %1723 = vmatmul.mubr.f32.gmra.mxu0 %v1434
  %v1724 = vpop.f32.mrf.mxu0
  %v1725 = vadd.f32 0.0, %v1724
  %v1726 = vpop.f32.mrf.mxu0
  %1727 = vmatprep.mubr.f32.mxu0 %v1439
  %1728 = vmatmul.mubr.f32.gmra.mxu0 %v1438
  %v1729 = vpop.f32.mrf.mxu0
  %v1730 = vadd.f32 0.0, %v1729
  %v1731 = vpop.f32.mrf.mxu0
  %1732 = vmatprep.mubr.f32.mxu0 %v1443
  %1733 = vmatmul.mubr.f32.gmra.mxu0 %v1442
  %v1734 = vpop.f32.mrf.mxu0
  %v1735 = vadd.f32 0.0, %v1734
  %v1736 = vpop.f32.mrf.mxu0
  %1737 = vmatprep.mubr.f32.mxu0 %v1447
  %1738 = vmatmul.mubr.f32.gmra.mxu0 %v1446
  %v1739 = vpop.f32.mrf.mxu0
  %v1740 = vadd.f32 0.0, %v1739
  %v1741 = vpop.f32.mrf.mxu0
  %1742 = vmatprep.mubr.f32.mxu0 %v1451
  %1743 = vmatmul.mubr.f32.gmra.mxu0 %v1450
  %v1744 = vpop.f32.mrf.mxu0
  %v1745 = vadd.f32 0.0, %v1744
  %v1746 = vpop.f32.mrf.mxu0
  %1747 = vdwg.mxu0
  %1748 = vmatprep.subr.mxu0 0.0
  %1749 = vmatpush1.msra.mxu0 %v1327
  %1750 = vmatprep.subr.mxu0 0.0
  %1751 = vmatpush1.msra.mxu0 %v1326
  %1752 = vmatprep.subr.mxu0 0.0
  %1753 = vmatpush1.msra.mxu0 %v1325
  %1754 = vmatprep.subr.mxu0 0.0
  %1755 = vmatpush1.msra.mxu0 %v1324
  %1756 = vmatprep.subr.mxu0 0.0
  %1757 = vmatpush1.msra.mxu0 %v1323
  %1758 = vmatprep.subr.mxu0 0.0
  %1759 = vmatpush1.msra.mxu0 %v1322
  %1760 = vmatprep.subr.mxu0 0.0
  %1761 = vmatpush1.msra.mxu0 %v1321
  %1762 = vmatprep.subr.mxu0 0.0
  %1763 = vmatpush1.msra.mxu0 %v1320
  %1764 = vmatprep.subr.mxu0 0.0
  %1765 = vmatpush1.msra.mxu0 %v1319
  %1766 = vmatprep.subr.mxu0 0.0
  %1767 = vmatpush1.msra.mxu0 %v1318
  %1768 = vmatprep.subr.mxu0 0.0
  %1769 = vmatpush1.msra.mxu0 %v1317
  %1770 = vmatprep.subr.mxu0 0.0
  %1771 = vmatpush1.msra.mxu0 %v1316
  %1772 = vmatprep.subr.mxu0 0.0
  %1773 = vmatpush1.msra.mxu0 %v1315
  %1774 = vmatprep.subr.mxu0 0.0
  %1775 = vmatpush1.msra.mxu0 %v1314
  %1776 = vmatprep.subr.mxu0 0.0
  %1777 = vmatpush1.msra.mxu0 %v1313
  %1778 = vmatprep.subr.mxu0 0.0
  %1779 = vmatpush1.msra.mxu0 %v1312
  %1780 = vmatprep.subr.mxu0 0.0
  %1781 = vmatpush2.msra.mxu0 0.0
  %1782 = vmatprep.subr.mxu0 0.0
  %1783 = vmatpush2.msra.mxu0 0.0
  %1784 = vmatprep.subr.mxu0 0.0
  %1785 = vmatpush2.msra.mxu0 %v1541
  %1786 = vmatprep.subr.mxu0 0.0
  %1787 = vmatpush2.msra.mxu0 %v1340
  %1788 = vmatprep.subr.mxu0 0.0
  %1789 = vmatpush2.msra.mxu0 %v1339
  %1790 = vmatprep.subr.mxu0 0.0
  %1791 = vmatpush2.msra.mxu0 %v1338
  %1792 = vmatprep.subr.mxu0 0.0
  %1793 = vmatpush2.msra.mxu0 %v1337
  %1794 = vmatprep.subr.mxu0 0.0
  %1795 = vmatpush2.msra.mxu0 %v1336
  %1796 = vmatprep.subr.mxu0 0.0
  %1797 = vmatpush2.msra.mxu0 %v1335
  %1798 = vmatprep.subr.mxu0 0.0
  %1799 = vmatpush2.msra.mxu0 %v1334
  %1800 = vmatprep.subr.mxu0 0.0
  %1801 = vmatpush2.msra.mxu0 %v1333
  %1802 = vmatprep.subr.mxu0 0.0
  %1803 = vmatpush2.msra.mxu0 %v1332
  %1804 = vmatprep.subr.mxu0 0.0
  %1805 = vmatpush2.msra.mxu0 %v1331
  %1806 = vmatprep.subr.mxu0 0.0
  %1807 = vmatpush2.msra.mxu0 %v1330
  %1808 = vmatprep.subr.mxu0 0.0
  %1809 = vmatpush2.msra.mxu0 %v1329
  %1810 = vmatprep.subr.mxu0 0.0
  %1811 = vmatpush2.msra.mxu0 %v1328
  %1812 = vmatprep.mubr.f32.mxu0 %v1456
  %1813 = vmatmul.mubr.f32.gmra.mxu0 %v1344
  %v1814 = vpop.f32.mrf.mxu0
  %v1815 = vadd.f32 %v1610, %v1814
  %v1816 = vpop.f32.mrf.mxu0
  %1817 = vmatprep.mubr.f32.mxu0 %v1459
  %1818 = vmatmul.mubr.f32.gmra.mxu0 %v1348
  %v1819 = vpop.f32.mrf.mxu0
  %v1820 = vadd.f32 %v1615, %v1819
  %v1821 = vpop.f32.mrf.mxu0
  %1822 = vmatprep.mubr.f32.mxu0 %v1462
  %1823 = vmatmul.mubr.f32.gmra.mxu0 %v1352
  %v1824 = vpop.f32.mrf.mxu0
  %v1825 = vadd.f32 %v1620, %v1824
  %v1826 = vpop.f32.mrf.mxu0
  %1827 = vmatprep.mubr.f32.mxu0 %v1465
  %1828 = vmatmul.mubr.f32.gmra.mxu0 %v1356
  %v1829 = vpop.f32.mrf.mxu0
  %v1830 = vadd.f32 %v1625, %v1829
  %v1831 = vpop.f32.mrf.mxu0
  %1832 = vmatprep.mubr.f32.mxu0 %v1468
  %1833 = vmatmul.mubr.f32.gmra.mxu0 %v1360
  %v1834 = vpop.f32.mrf.mxu0
  %v1835 = vadd.f32 %v1630, %v1834
  %v1836 = vpop.f32.mrf.mxu0
  %1837 = vmatprep.mubr.f32.mxu0 %v1471
  %1838 = vmatmul.mubr.f32.gmra.mxu0 %v1364
  %v1839 = vpop.f32.mrf.mxu0
  %v1840 = vadd.f32 %v1635, %v1839
  %v1841 = vpop.f32.mrf.mxu0
  %1842 = vmatprep.mubr.f32.mxu0 %v1474
  %1843 = vmatmul.mubr.f32.gmra.mxu0 %v1368
  %v1844 = vpop.f32.mrf.mxu0
  %v1845 = vadd.f32 %v1640, %v1844
  %v1846 = vpop.f32.mrf.mxu0
  %1847 = vmatprep.mubr.f32.mxu0 %v1477
  %1848 = vmatmul.mubr.f32.gmra.mxu0 %v1372
  %v1849 = vpop.f32.mrf.mxu0
  %v1850 = vadd.f32 %v1645, %v1849
  %v1851 = vpop.f32.mrf.mxu0
  %1852 = vmatprep.mubr.f32.mxu0 %v1480
  %1853 = vmatmul.mubr.f32.gmra.mxu0 %v1376
  %v1854 = vpop.f32.mrf.mxu0
  %v1855 = vadd.f32 %v1650, %v1854
  %v1856 = vpop.f32.mrf.mxu0
  %1857 = vmatprep.mubr.f32.mxu0 %v1483
  %1858 = vmatmul.mubr.f32.gmra.mxu0 %v1380
  %v1859 = vpop.f32.mrf.mxu0
  %v1860 = vadd.f32 %v1655, %v1859
  %v1861 = vpop.f32.mrf.mxu0
  %1862 = vmatprep.mubr.f32.mxu0 %v1486
  %1863 = vmatmul.mubr.f32.gmra.mxu0 %v1384
  %v1864 = vpop.f32.mrf.mxu0
  %v1865 = vadd.f32 %v1660, %v1864
  %v1866 = vpop.f32.mrf.mxu0
  %1867 = vmatprep.mubr.f32.mxu0 %v1489
  %1868 = vmatmul.mubr.f32.gmra.mxu0 %v1388
  %v1869 = vpop.f32.mrf.mxu0
  %v1870 = vadd.f32 %v1665, %v1869
  %v1871 = vpop.f32.mrf.mxu0
  %1872 = vmatprep.mubr.f32.mxu0 %v1492
  %1873 = vmatmul.mubr.f32.gmra.mxu0 %v1392
  %v1874 = vpop.f32.mrf.mxu0
  %v1875 = vadd.f32 %v1670, %v1874
  %v1876 = vpop.f32.mrf.mxu0
  %1877 = vmatprep.mubr.f32.mxu0 %v1495
  %1878 = vmatmul.mubr.f32.gmra.mxu0 %v1396
  %v1879 = vpop.f32.mrf.mxu0
  %v1880 = vadd.f32 %v1675, %v1879
  %v1881 = vpop.f32.mrf.mxu0
  %1882 = vmatprep.mubr.f32.mxu0 %v1498
  %1883 = vmatmul.mubr.f32.gmra.mxu0 %v1400
  %v1884 = vpop.f32.mrf.mxu0
  %v1885 = vadd.f32 %v1680, %v1884
  %v1886 = vpop.f32.mrf.mxu0
  %1887 = vmatprep.mubr.f32.mxu0 %v1501
  %1888 = vmatmul.mubr.f32.gmra.mxu0 %v1404
  %v1889 = vpop.f32.mrf.mxu0
  %v1890 = vadd.f32 %v1685, %v1889
  %v1891 = vpop.f32.mrf.mxu0
  %1892 = vmatprep.mubr.f32.mxu0 %v1504
  %1893 = vmatmul.mubr.f32.gmra.mxu0 %v1408
  %v1894 = vpop.f32.mrf.mxu0
  %v1895 = vadd.f32 %v1690, %v1894
  %v1896 = vpop.f32.mrf.mxu0
  %1897 = vmatprep.mubr.f32.mxu0 %v1507
  %1898 = vmatmul.mubr.f32.gmra.mxu0 %v1412
  %v1899 = vpop.f32.mrf.mxu0
  %v1900 = vadd.f32 %v1695, %v1899
  %v1901 = vpop.f32.mrf.mxu0
  %1902 = vmatprep.mubr.f32.mxu0 %v1510
  %1903 = vmatmul.mubr.f32.gmra.mxu0 %v1416
  %v1904 = vpop.f32.mrf.mxu0
  %v1905 = vadd.f32 %v1700, %v1904
  %v1906 = vpop.f32.mrf.mxu0
  %1907 = vmatprep.mubr.f32.mxu0 %v1513
  %1908 = vmatmul.mubr.f32.gmra.mxu0 %v1420
  %v1909 = vpop.f32.mrf.mxu0
  %v1910 = vadd.f32 %v1705, %v1909
  %v1911 = vpop.f32.mrf.mxu0
  %1912 = vmatprep.mubr.f32.mxu0 %v1516
  %1913 = vmatmul.mubr.f32.gmra.mxu0 %v1424
  %v1914 = vpop.f32.mrf.mxu0
  %v1915 = vadd.f32 %v1710, %v1914
  %v1916 = vpop.f32.mrf.mxu0
  %1917 = vmatprep.mubr.f32.mxu0 %v1519
  %1918 = vmatmul.mubr.f32.gmra.mxu0 %v1428
  %v1919 = vpop.f32.mrf.mxu0
  %v1920 = vadd.f32 %v1715, %v1919
  %v1921 = vpop.f32.mrf.mxu0
  %1922 = vmatprep.mubr.f32.mxu0 %v1522
  %1923 = vmatmul.mubr.f32.gmra.mxu0 %v1432
  %v1924 = vpop.f32.mrf.mxu0
  %v1925 = vadd.f32 %v1720, %v1924
  %v1926 = vpop.f32.mrf.mxu0
  %1927 = vmatprep.mubr.f32.mxu0 %v1525
  %1928 = vmatmul.mubr.f32.gmra.mxu0 %v1436
  %v1929 = vpop.f32.mrf.mxu0
  %v1930 = vadd.f32 %v1725, %v1929
  %v1931 = vpop.f32.mrf.mxu0
  %1932 = vmatprep.mubr.f32.mxu0 %v1528
  %1933 = vmatmul.mubr.f32.gmra.mxu0 %v1440
  %v1934 = vpop.f32.mrf.mxu0
  %v1935 = vadd.f32 %v1730, %v1934
  %v1936 = vpop.f32.mrf.mxu0
  %1937 = vmatprep.mubr.f32.mxu0 %v1531
  %1938 = vmatmul.mubr.f32.gmra.mxu0 %v1444
  %v1939 = vpop.f32.mrf.mxu0
  %v1940 = vadd.f32 %v1735, %v1939
  %v1941 = vpop.f32.mrf.mxu0
  %1942 = vmatprep.mubr.f32.mxu0 %v1534
  %1943 = vmatmul.mubr.f32.gmra.mxu0 %v1448
  %v1944 = vpop.f32.mrf.mxu0
  %v1945 = vadd.f32 %v1740, %v1944
  %v1946 = vpop.f32.mrf.mxu0
  %1947 = vmatprep.mubr.f32.mxu0 %v1537
  %1948 = vmatmul.mubr.f32.gmra.mxu0 %v1452
  %v1949 = vpop.f32.mrf.mxu0
  %v1950 = vadd.f32 %v1745, %v1949
  %v1951 = vpop.f32.mrf.mxu0
  %1952 = vdwg.mxu0
  %1953 = vst [vmem:[#allocation2] sm:$0xff] %v1815
  %1954 = vst [vmem:[#allocation2 + $0x8] sm:$0xff] %v1820
  %1955 = vst [vmem:[#allocation2 + $0x10] sm:$0xff] %v1825
  %1956 = vst [vmem:[#allocation2 + $0x18] sm:$0xff] %v1830
  %1957 = vst [vmem:[#allocation2 + $0x20] sm:$0xff] %v1835
  %1958 = vst [vmem:[#allocation2 + $0x28] sm:$0xff] %v1840
  %1959 = vst [vmem:[#allocation2 + $0x30] sm:$0xff] %v1845
  %1960 = vst [vmem:[#allocation2 + $0x38] sm:$0xff] %v1850
  %1961 = vst [vmem:[#allocation2 + $0x40] sm:$0xff] %v1855
  %1962 = vst [vmem:[#allocation2 + $0x48] sm:$0xff] %v1860
  %1963 = vst [vmem:[#allocation2 + $0x50] sm:$0xff] %v1865
  %1964 = vst [vmem:[#allocation2 + $0x58] sm:$0xff] %v1870
  %1965 = vst [vmem:[#allocation2 + $0x60] sm:$0xff] %v1875
  %1966 = vst [vmem:[#allocation2 + $0x68] sm:$0xff] %v1880
  %1967 = vst [vmem:[#allocation2 + $0x70] sm:$0xff] %v1885
  %1968 = vst [vmem:[#allocation2 + $0x78] sm:$0xff] %v1890
  %1969 = vst [vmem:[#allocation2 + $0x80] sm:$0xff] %v1895
  %1970 = vst [vmem:[#allocation2 + $0x88] sm:$0xff] %v1900
  %1971 = vst [vmem:[#allocation2 + $0x90] sm:$0xff] %v1905
  %1972 = vst [vmem:[#allocation2 + $0x98] sm:$0xff] %v1910
  %1973 = vst [vmem:[#allocation2 + $0xa0] sm:$0xff] %v1915
  %1974 = vst [vmem:[#allocation2 + $0xa8] sm:$0xff] %v1920
  %1975 = vst [vmem:[#allocation2 + $0xb0] sm:$0xff] %v1925
  %1976 = vst [vmem:[#allocation2 + $0xb8] sm:$0xff] %v1930
  %1977 = vst [vmem:[#allocation2 + $0xc0] sm:$0xff] %v1935
  %1978 = vst [vmem:[#allocation2 + $0xc8] sm:$0xff] %v1940
  %1979 = vst [vmem:[#allocation2 + $0xd0] sm:$0xff] %v1945
  %1980 = vst [vmem:[#allocation2 + $0xd8] sm:$0x3f] %v1950
  %v1981 = vld [vmem:[#allocation2] sm:$0xff]
  %v1982 = vld [vmem:[#allocation2 + $0x8] sm:$0xff]
  %v1983 = vld [vmem:[#allocation2 + $0x10] sm:$0xff]
  %v1984 = vld [vmem:[#allocation2 + $0x18] sm:$0xff]
  %v1985 = vld [vmem:[#allocation2 + $0x20] sm:$0xff]
  %v1986 = vld [vmem:[#allocation2 + $0x28] sm:$0xff]
  %v1987 = vld [vmem:[#allocation2 + $0x30] sm:$0xff]
  %v1988 = vld [vmem:[#allocation2 + $0x38] sm:$0xff]
  %v1989 = vld [vmem:[#allocation2 + $0x40] sm:$0xff]
  %v1990 = vld [vmem:[#allocation2 + $0x48] sm:$0xff]
  %v1991 = vld [vmem:[#allocation2 + $0x50] sm:$0xff]
  %v1992 = vld [vmem:[#allocation2 + $0x58] sm:$0xff]
  %v1993 = vld [vmem:[#allocation2 + $0x60] sm:$0xff]
  %v1994 = vld [vmem:[#allocation2 + $0x68] sm:$0xff]
  %v1995 = vld [vmem:[#allocation2 + $0x70] sm:$0xff]
  %v1996 = vld [vmem:[#allocation2 + $0x78] sm:$0xff]
  %v1997 = vld [vmem:[#allocation2 + $0x80] sm:$0xff]
  %v1998 = vld [vmem:[#allocation2 + $0x88] sm:$0xff]
  %v1999 = vld [vmem:[#allocation2 + $0x90] sm:$0xff]
  %v2000 = vld [vmem:[#allocation2 + $0x98] sm:$0xff]
  %v2001 = vld [vmem:[#allocation2 + $0xa0] sm:$0xff]
  %v2002 = vld [vmem:[#allocation2 + $0xa8] sm:$0xff]
  %v2003 = vld [vmem:[#allocation2 + $0xb0] sm:$0xff]
  %v2004 = vld [vmem:[#allocation2 + $0xb8] sm:$0xff]
  %v2005 = vld [vmem:[#allocation2 + $0xc0] sm:$0xff]
  %v2006 = vpack.c.bf16 %v1982, %v1981
  %v2007 = vpack.c.bf16 %v1984, %v1983
  %v2008 = vpack.c.bf16 %v1986, %v1985
  %v2009 = vpack.c.bf16 %v1988, %v1987
  %v2010 = vpack.c.bf16 %v1990, %v1989
  %v2011 = vpack.c.bf16 %v1992, %v1991
  %v2012 = vpack.c.bf16 %v1994, %v1993
  %v2013 = vpack.c.bf16 %v1996, %v1995
  %v2014 = vpack.c.bf16 %v1998, %v1997
  %v2015 = vpack.c.bf16 %v2000, %v1999
  %v2016 = vpack.c.bf16 %v2002, %v2001
  %v2017 = vpack.c.bf16 %v2004, %v2003
  %v2018 = vpack.c.bf16 %v2005, %v2005
  %v2019 = vld [vmem:[#allocation2 + $0x1] sm:$0xff]
  %v2020 = vld [vmem:[#allocation2 + $0x9] sm:$0xff]
  %v2021 = vld [vmem:[#allocation2 + $0x11] sm:$0xff]
  %v2022 = vld [vmem:[#allocation2 + $0x19] sm:$0xff]
  %v2023 = vld [vmem:[#allocation2 + $0x21] sm:$0xff]
  %v2024 = vld [vmem:[#allocation2 + $0x29] sm:$0xff]
  %v2025 = vld [vmem:[#allocation2 + $0x31] sm:$0xff]
  %v2026 = vld [vmem:[#allocation2 + $0x39] sm:$0xff]
  %v2027 = vld [vmem:[#allocation2 + $0x41] sm:$0xff]
  %v2028 = vld [vmem:[#allocation2 + $0x49] sm:$0xff]
  %v2029 = vld [vmem:[#allocation2 + $0x51] sm:$0xff]
  %v2030 = vld [vmem:[#allocation2 + $0x59] sm:$0xff]
  %v2031 = vld [vmem:[#allocation2 + $0x61] sm:$0xff]
  %v2032 = vld [vmem:[#allocation2 + $0x69] sm:$0xff]
  %v2033 = vld [vmem:[#allocation2 + $0x71] sm:$0xff]
  %v2034 = vld [vmem:[#allocation2 + $0x79] sm:$0xff]
  %v2035 = vld [vmem:[#allocation2 + $0x81] sm:$0xff]
  %v2036 = vld [vmem:[#allocation2 + $0x89] sm:$0xff]
  %v2037 = vld [vmem:[#allocation2 + $0x91] sm:$0xff]
  %v2038 = vld [vmem:[#allocation2 + $0x99] sm:$0xff]
  %v2039 = vld [vmem:[#allocation2 + $0xa1] sm:$0xff]
  %v2040 = vld [vmem:[#allocation2 + $0xa9] sm:$0xff]
  %v2041 = vld [vmem:[#allocation2 + $0xb1] sm:$0xff]
  %v2042 = vld [vmem:[#allocation2 + $0xb9] sm:$0xff]
  %v2043 = vld [vmem:[#allocation2 + $0xc1] sm:$0xff]
  %v2044 = vpack.c.bf16 %v2020, %v2019
  %v2045 = vpack.c.bf16 %v2022, %v2021
  %v2046 = vpack.c.bf16 %v2024, %v2023
  %v2047 = vpack.c.bf16 %v2026, %v2025
  %v2048 = vpack.c.bf16 %v2028, %v2027
  %v2049 = vpack.c.bf16 %v2030, %v2029
  %v2050 = vpack.c.bf16 %v2032, %v2031
  %v2051 = vpack.c.bf16 %v2034, %v2033
  %v2052 = vpack.c.bf16 %v2036, %v2035
  %v2053 = vpack.c.bf16 %v2038, %v2037
  %v2054 = vpack.c.bf16 %v2040, %v2039
  %v2055 = vpack.c.bf16 %v2042, %v2041
  %v2056 = vpack.c.bf16 %v2043, %v2043
  %v2057 = vld [vmem:[#allocation2 + $0x2] sm:$0xff]
  %v2058 = vld [vmem:[#allocation2 + $0xa] sm:$0xff]
  %v2059 = vld [vmem:[#allocation2 + $0x12] sm:$0xff]
  %v2060 = vld [vmem:[#allocation2 + $0x1a] sm:$0xff]
  %v2061 = vld [vmem:[#allocation2 + $0x22] sm:$0xff]
  %v2062 = vld [vmem:[#allocation2 + $0x2a] sm:$0xff]
  %v2063 = vld [vmem:[#allocation2 + $0x32] sm:$0xff]
  %v2064 = vld [vmem:[#allocation2 + $0x3a] sm:$0xff]
  %v2065 = vld [vmem:[#allocation2 + $0x42] sm:$0xff]
  %v2066 = vld [vmem:[#allocation2 + $0x4a] sm:$0xff]
  %v2067 = vld [vmem:[#allocation2 + $0x52] sm:$0xff]
  %v2068 = vld [vmem:[#allocation2 + $0x5a] sm:$0xff]
  %v2069 = vld [vmem:[#allocation2 + $0x62] sm:$0xff]
  %v2070 = vld [vmem:[#allocation2 + $0x6a] sm:$0xff]
  %v2071 = vld [vmem:[#allocation2 + $0x72] sm:$0xff]
  %v2072 = vld [vmem:[#allocation2 + $0x7a] sm:$0xff]
  %v2073 = vld [vmem:[#allocation2 + $0x82] sm:$0xff]
  %v2074 = vld [vmem:[#allocation2 + $0x8a] sm:$0xff]
  %v2075 = vld [vmem:[#allocation2 + $0x92] sm:$0xff]
  %v2076 = vld [vmem:[#allocation2 + $0x9a] sm:$0xff]
  %v2077 = vld [vmem:[#allocation2 + $0xa2] sm:$0xff]
  %v2078 = vld [vmem:[#allocation2 + $0xaa] sm:$0xff]
  %v2079 = vld [vmem:[#allocation2 + $0xb2] sm:$0xff]
  %v2080 = vld [vmem:[#allocation2 + $0xba] sm:$0xff]
  %v2081 = vld [vmem:[#allocation2 + $0xc2] sm:$0xff]
  %v2082 = vpack.c.bf16 %v2058, %v2057
  %v2083 = vpack.c.bf16 %v2060, %v2059
  %v2084 = vpack.c.bf16 %v2062, %v2061
  %v2085 = vpack.c.bf16 %v2064, %v2063
  %v2086 = vpack.c.bf16 %v2066, %v2065
  %v2087 = vpack.c.bf16 %v2068, %v2067
  %v2088 = vpack.c.bf16 %v2070, %v2069
  %v2089 = vpack.c.bf16 %v2072, %v2071
  %v2090 = vpack.c.bf16 %v2074, %v2073
  %v2091 = vpack.c.bf16 %v2076, %v2075
  %v2092 = vpack.c.bf16 %v2078, %v2077
  %v2093 = vpack.c.bf16 %v2080, %v2079
  %v2094 = vpack.c.bf16 %v2081, %v2081
  %v2095 = vld [vmem:[#allocation2 + $0xca] sm:$0xff]
  %v2096 = vpack.c.bf16 %v2059, %v2058
  %v2097 = vpack.c.bf16 %v2061, %v2060
  %v2098 = vpack.c.bf16 %v2063, %v2062
  %v2099 = vpack.c.bf16 %v2065, %v2064
  %v2100 = vpack.c.bf16 %v2067, %v2066
  %v2101 = vpack.c.bf16 %v2069, %v2068
  %v2102 = vpack.c.bf16 %v2071, %v2070
  %v2103 = vpack.c.bf16 %v2073, %v2072
  %v2104 = vpack.c.bf16 %v2075, %v2074
  %v2105 = vpack.c.bf16 %v2077, %v2076
  %v2106 = vpack.c.bf16 %v2079, %v2078
  %v2107 = vpack.c.bf16 %v2081, %v2080
  %v2108 = vpack.c.bf16 %v2095, %v2095
  %v2109 = vld [vmem:[#allocation2 + $0xb] sm:$0xff]
  %v2110 = vld [vmem:[#allocation2 + $0x13] sm:$0xff]
  %v2111 = vld [vmem:[#allocation2 + $0x1b] sm:$0xff]
  %v2112 = vld [vmem:[#allocation2 + $0x23] sm:$0xff]
  %v2113 = vld [vmem:[#allocation2 + $0x2b] sm:$0xff]
  %v2114 = vld [vmem:[#allocation2 + $0x33] sm:$0xff]
  %v2115 = vld [vmem:[#allocation2 + $0x3b] sm:$0xff]
  %v2116 = vld [vmem:[#allocation2 + $0x43] sm:$0xff]
  %v2117 = vld [vmem:[#allocation2 + $0x4b] sm:$0xff]
  %v2118 = vld [vmem:[#allocation2 + $0x53] sm:$0xff]
  %v2119 = vld [vmem:[#allocation2 + $0x5b] sm:$0xff]
  %v2120 = vld [vmem:[#allocation2 + $0x63] sm:$0xff]
  %v2121 = vld [vmem:[#allocation2 + $0x6b] sm:$0xff]
  %v2122 = vld [vmem:[#allocation2 + $0x73] sm:$0xff]
  %v2123 = vld [vmem:[#allocation2 + $0x7b] sm:$0xff]
  %v2124 = vld [vmem:[#allocation2 + $0x83] sm:$0xff]
  %v2125 = vld [vmem:[#allocation2 + $0x8b] sm:$0xff]
  %v2126 = vld [vmem:[#allocation2 + $0x93] sm:$0xff]
  %v2127 = vld [vmem:[#allocation2 + $0x9b] sm:$0xff]
  %v2128 = vld [vmem:[#allocation2 + $0xa3] sm:$0xff]
  %v2129 = vld [vmem:[#allocation2 + $0xab] sm:$0xff]
  %v2130 = vld [vmem:[#allocation2 + $0xb3] sm:$0xff]
  %v2131 = vld [vmem:[#allocation2 + $0xbb] sm:$0xff]
  %v2132 = vld [vmem:[#allocation2 + $0xc3] sm:$0xff]
  %v2133 = vld [vmem:[#allocation2 + $0xcb] sm:$0xff]
  %v2134 = vpack.c.bf16 %v2110, %v2109
  %v2135 = vpack.c.bf16 %v2112, %v2111
  %v2136 = vpack.c.bf16 %v2114, %v2113
  %v2137 = vpack.c.bf16 %v2116, %v2115
  %v2138 = vpack.c.bf16 %v2118, %v2117
  %v2139 = vpack.c.bf16 %v2120, %v2119
  %v2140 = vpack.c.bf16 %v2122, %v2121
  %v2141 = vpack.c.bf16 %v2124, %v2123
  %v2142 = vpack.c.bf16 %v2126, %v2125
  %v2143 = vpack.c.bf16 %v2128, %v2127
  %v2144 = vpack.c.bf16 %v2130, %v2129
  %v2145 = vpack.c.bf16 %v2132, %v2131
  %v2146 = vpack.c.bf16 %v2133, %v2133
  %v2147 = vld [vmem:[#allocation2 + $0xc] sm:$0xff]
  %v2148 = vld [vmem:[#allocation2 + $0x14] sm:$0xff]
  %v2149 = vld [vmem:[#allocation2 + $0x1c] sm:$0xff]
  %v2150 = vld [vmem:[#allocation2 + $0x24] sm:$0xff]
  %v2151 = vld [vmem:[#allocation2 + $0x2c] sm:$0xff]
  %v2152 = vld [vmem:[#allocation2 + $0x34] sm:$0xff]
  %v2153 = vld [vmem:[#allocation2 + $0x3c] sm:$0xff]
  %v2154 = vld [vmem:[#allocation2 + $0x44] sm:$0xff]
  %v2155 = vld [vmem:[#allocation2 + $0x4c] sm:$0xff]
  %v2156 = vld [vmem:[#allocation2 + $0x54] sm:$0xff]
  %v2157 = vld [vmem:[#allocation2 + $0x5c] sm:$0xff]
  %v2158 = vld [vmem:[#allocation2 + $0x64] sm:$0xff]
  %v2159 = vld [vmem:[#allocation2 + $0x6c] sm:$0xff]
  %v2160 = vld [vmem:[#allocation2 + $0x74] sm:$0xff]
  %v2161 = vld [vmem:[#allocation2 + $0x7c] sm:$0xff]
  %v2162 = vld [vmem:[#allocation2 + $0x84] sm:$0xff]
  %v2163 = vld [vmem:[#allocation2 + $0x8c] sm:$0xff]
  %v2164 = vld [vmem:[#allocation2 + $0x94] sm:$0xff]
  %v2165 = vld [vmem:[#allocation2 + $0x9c] sm:$0xff]
  %v2166 = vld [vmem:[#allocation2 + $0xa4] sm:$0xff]
  %v2167 = vld [vmem:[#allocation2 + $0xac] sm:$0xff]
  %v2168 = vld [vmem:[#allocation2 + $0xb4] sm:$0xff]
  %v2169 = vld [vmem:[#allocation2 + $0xbc] sm:$0xff]
  %v2170 = vld [vmem:[#allocation2 + $0xc4] sm:$0xff]
  %v2171 = vld [vmem:[#allocation2 + $0xcc] sm:$0xff]
  %v2172 = vpack.c.bf16 %v2148, %v2147
  %v2173 = vpack.c.bf16 %v2150, %v2149
  %v2174 = vpack.c.bf16 %v2152, %v2151
  %v2175 = vpack.c.bf16 %v2154, %v2153
  %v2176 = vpack.c.bf16 %v2156, %v2155
  %v2177 = vpack.c.bf16 %v2158, %v2157
  %v2178 = vpack.c.bf16 %v2160, %v2159
  %v2179 = vpack.c.bf16 %v2162, %v2161
  %v2180 = vpack.c.bf16 %v2164, %v2163
  %v2181 = vpack.c.bf16 %v2166, %v2165
  %v2182 = vpack.c.bf16 %v2168, %v2167
  %v2183 = vpack.c.bf16 %v2170, %v2169
  %v2184 = vpack.c.bf16 %v2171, %v2171
  %v2185 = vld [vmem:[#allocation2 + $0xd4] sm:$0xff]
  %v2186 = vpack.c.bf16 %v2149, %v2148
  %v2187 = vpack.c.bf16 %v2151, %v2150
  %v2188 = vpack.c.bf16 %v2153, %v2152
  %v2189 = vpack.c.bf16 %v2155, %v2154
  %v2190 = vpack.c.bf16 %v2157, %v2156
  %v2191 = vpack.c.bf16 %v2159, %v2158
  %v2192 = vpack.c.bf16 %v2161, %v2160
  %v2193 = vpack.c.bf16 %v2163, %v2162
  %v2194 = vpack.c.bf16 %v2165, %v2164
  %v2195 = vpack.c.bf16 %v2167, %v2166
  %v2196 = vpack.c.bf16 %v2169, %v2168
  %v2197 = vpack.c.bf16 %v2171, %v2170
  %v2198 = vpack.c.bf16 %v2185, %v2185
  %v2199 = vld [vmem:[#allocation2 + $0x15] sm:$0xff]
  %v2200 = vld [vmem:[#allocation2 + $0x1d] sm:$0xff]
  %v2201 = vld [vmem:[#allocation2 + $0x25] sm:$0xff]
  %v2202 = vld [vmem:[#allocation2 + $0x2d] sm:$0xff]
  %v2203 = vld [vmem:[#allocation2 + $0x35] sm:$0xff]
  %v2204 = vld [vmem:[#allocation2 + $0x3d] sm:$0xff]
  %v2205 = vld [vmem:[#allocation2 + $0x45] sm:$0xff]
  %v2206 = vld [vmem:[#allocation2 + $0x4d] sm:$0xff]
  %v2207 = vld [vmem:[#allocation2 + $0x55] sm:$0xff]
  %v2208 = vld [vmem:[#allocation2 + $0x5d] sm:$0xff]
  %v2209 = vld [vmem:[#allocation2 + $0x65] sm:$0xff]
  %v2210 = vld [vmem:[#allocation2 + $0x6d] sm:$0xff]
  %v2211 = vld [vmem:[#allocation2 + $0x75] sm:$0xff]
  %v2212 = vld [vmem:[#allocation2 + $0x7d] sm:$0xff]
  %v2213 = vld [vmem:[#allocation2 + $0x85] sm:$0xff]
  %v2214 = vld [vmem:[#allocation2 + $0x8d] sm:$0xff]
  %v2215 = vld [vmem:[#allocation2 + $0x95] sm:$0xff]
  %v2216 = vld [vmem:[#allocation2 + $0x9d] sm:$0xff]
  %v2217 = vld [vmem:[#allocation2 + $0xa5] sm:$0xff]
  %v2218 = vld [vmem:[#allocation2 + $0xad] sm:$0xff]
  %v2219 = vld [vmem:[#allocation2 + $0xb5] sm:$0xff]
  %v2220 = vld [vmem:[#allocation2 + $0xbd] sm:$0xff]
  %v2221 = vld [vmem:[#allocation2 + $0xc5] sm:$0xff]
  %v2222 = vld [vmem:[#allocation2 + $0xcd] sm:$0xff]
  %v2223 = vld [vmem:[#allocation2 + $0xd5] sm:$0xff]
  %v2224 = vpack.c.bf16 %v2200, %v2199
  %v2225 = vpack.c.bf16 %v2202, %v2201
  %v2226 = vpack.c.bf16 %v2204, %v2203
  %v2227 = vpack.c.bf16 %v2206, %v2205
  %v2228 = vpack.c.bf16 %v2208, %v2207
  %v2229 = vpack.c.bf16 %v2210, %v2209
  %v2230 = vpack.c.bf16 %v2212, %v2211
  %v2231 = vpack.c.bf16 %v2214, %v2213
  %v2232 = vpack.c.bf16 %v2216, %v2215
  %v2233 = vpack.c.bf16 %v2218, %v2217
  %v2234 = vpack.c.bf16 %v2220, %v2219
  %v2235 = vpack.c.bf16 %v2222, %v2221
  %v2236 = vpack.c.bf16 %v2223, %v2223
  %v2237 = vld [vmem:[#allocation2 + $0x16] sm:$0xff]
  %v2238 = vld [vmem:[#allocation2 + $0x1e] sm:$0xff]
  %v2239 = vld [vmem:[#allocation2 + $0x26] sm:$0xff]
  %v2240 = vld [vmem:[#allocation2 + $0x2e] sm:$0xff]
  %v2241 = vld [vmem:[#allocation2 + $0x36] sm:$0xff]
  %v2242 = vld [vmem:[#allocation2 + $0x3e] sm:$0xff]
  %v2243 = vld [vmem:[#allocation2 + $0x46] sm:$0xff]
  %v2244 = vld [vmem:[#allocation2 + $0x4e] sm:$0xff]
  %v2245 = vld [vmem:[#allocation2 + $0x56] sm:$0xff]
  %v2246 = vld [vmem:[#allocation2 + $0x5e] sm:$0xff]
  %v2247 = vld [vmem:[#allocation2 + $0x66] sm:$0xff]
  %v2248 = vld [vmem:[#allocation2 + $0x6e] sm:$0xff]
  %v2249 = vld [vmem:[#allocation2 + $0x76] sm:$0xff]
  %v2250 = vld [vmem:[#allocation2 + $0x7e] sm:$0xff]
  %v2251 = vld [vmem:[#allocation2 + $0x86] sm:$0xff]
  %v2252 = vld [vmem:[#allocation2 + $0x8e] sm:$0xff]
  %v2253 = vld [vmem:[#allocation2 + $0x96] sm:$0xff]
  %v2254 = vld [vmem:[#allocation2 + $0x9e] sm:$0xff]
  %v2255 = vld [vmem:[#allocation2 + $0xa6] sm:$0xff]
  %v2256 = vld [vmem:[#allocation2 + $0xae] sm:$0xff]
  %v2257 = vld [vmem:[#allocation2 + $0xb6] sm:$0xff]
  %v2258 = vld [vmem:[#allocation2 + $0xbe] sm:$0xff]
  %v2259 = vld [vmem:[#allocation2 + $0xc6] sm:$0xff]
  %v2260 = vld [vmem:[#allocation2 + $0xce] sm:$0xff]
  %v2261 = vld [vmem:[#allocation2 + $0xd6] sm:$0xff]
  %v2262 = vpack.c.bf16 %v2238, %v2237
  %v2263 = vpack.c.bf16 %v2240, %v2239
  %v2264 = vpack.c.bf16 %v2242, %v2241
  %v2265 = vpack.c.bf16 %v2244, %v2243
  %v2266 = vpack.c.bf16 %v2246, %v2245
  %v2267 = vpack.c.bf16 %v2248, %v2247
  %v2268 = vpack.c.bf16 %v2250, %v2249
  %v2269 = vpack.c.bf16 %v2252, %v2251
  %v2270 = vpack.c.bf16 %v2254, %v2253
  %v2271 = vpack.c.bf16 %v2256, %v2255
  %v2272 = vpack.c.bf16 %v2258, %v2257
  %v2273 = vpack.c.bf16 %v2260, %v2259
  %v2274 = vpack.c.bf16 %v2261, %v2261
  %v2275 = vld [vmem:[%s5] sm:$0xf]
  %v2276 = vld [vmem:[%s5 + $0x4] sm:$0xf]
  %v2277 = vld [vmem:[%s5 + $0x8] sm:$0xf]
  %v2278 = vld [vmem:[%s5 + $0xc] sm:$0xf]
  %v2279 = vld [vmem:[%s5 + $0x10] sm:$0xf]
  %v2280 = vld [vmem:[%s5 + $0x14] sm:$0xf]
  %v2281 = vld [vmem:[%s5 + $0x18] sm:$0xf]
  %v2282 = vld [vmem:[%s5 + $0x1c] sm:$0xf]
  %v2283 = vld [vmem:[%s5 + $0x20] sm:$0xf]
  %v2284 = vld [vmem:[%s5 + $0x24] sm:$0xf]
  %v2285 = vld [vmem:[%s5 + $0x28] sm:$0xf]
  %v2286 = vld [vmem:[%s5 + $0x2c] sm:$0xf]
  %v2287 = vld [vmem:[%s5 + $0x30] sm:$0xf]
  %v2288 = vld [vmem:[%s5 + $0x34] sm:$0xf]
  %v2289 = vld [vmem:[%s5 + $0x38] sm:$0xf]
  %v2290 = vld [vmem:[%s5 + $0x3c] sm:$0xf]
  %v2291 = vld [vmem:[%s5 + $0x40] sm:$0xf]
  %v2292 = vld [vmem:[%s5 + $0x44] sm:$0xf]
  %v2293 = vld [vmem:[%s5 + $0x48] sm:$0xf]
  %v2294 = vld [vmem:[%s5 + $0x4c] sm:$0xf]
  %v2295 = vld [vmem:[%s5 + $0x50] sm:$0xf]
  %v2296 = vld [vmem:[%s5 + $0x54] sm:$0xf]
  %v2297 = vld [vmem:[%s5 + $0x58] sm:$0xf]
  %v2298 = vld [vmem:[%s5 + $0x5c] sm:$0xf]
  %v2299 = vld [vmem:[%s5 + $0x60] sm:$0xf]
  %v2300 = vld [vmem:[%s5 + $0x64] sm:$0xf]
  %v2301 = vld [vmem:[%s5 + $0x68] sm:$0xf]
  %v2302 = vld [vmem:[%s5 + $0x6c] sm:$0xf]
  %v2303 = vld [vmem:[%s5 + $0x70] sm:$0xf]
  %v2304 = vld [vmem:[%s5 + $0x74] sm:$0xf]
  %v2305 = vld [vmem:[%s5 + $0x78] sm:$0xf]
  %v2306 = vld [vmem:[%s5 + $0x7c] sm:$0xf]
  %v2307 = vld [vmem:[%s5 + $0x80] sm:$0xf]
  %v2308 = vld [vmem:[%s5 + $0x84] sm:$0xf]
  %v2309 = vld [vmem:[%s5 + $0x88] sm:$0xf]
  %v2310 = vld [vmem:[%s5 + $0x8c] sm:$0xf]
  %v2311 = vld [vmem:[%s5 + $0x90] sm:$0xf]
  %v2312 = vld [vmem:[%s5 + $0x94] sm:$0xf]
  %v2313 = vld [vmem:[%s5 + $0x98] sm:$0xf]
  %v2314 = vld [vmem:[%s5 + $0x9c] sm:$0xf]
  %v2315 = vld [vmem:[%s5 + $0xa0] sm:$0xf]
  %v2316 = vld [vmem:[%s5 + $0xa4] sm:$0xf]
  %v2317 = vld [vmem:[%s5 + $0xa8] sm:$0xf]
  %v2318 = vld [vmem:[%s5 + $0xac] sm:$0xf]
  %v2319 = vld [vmem:[%s5 + $0xb0] sm:$0xf]
  %v2320 = vld [vmem:[%s5 + $0xb4] sm:$0xf]
  %v2321 = vld [vmem:[%s5 + $0xb8] sm:$0xf]
  %v2322 = vld [vmem:[%s5 + $0xbc] sm:$0xf]
  %v2323 = vld [vmem:[%s5 + $0xc0] sm:$0xf]
  %v2324 = vld [vmem:[%s5 + $0xc4] sm:$0xf]
  %v2325 = vld [vmem:[%s5 + $0xc8] sm:$0xf]
  %v2326 = vld [vmem:[%s5 + $0xcc] sm:$0xf]
  %v2327 = vld [vmem:[%s5 + $0xd0] sm:$0xf]
  %v2328 = vld [vmem:[%s5 + $0xd4] sm:$0xf]
  %v2329 = vld [vmem:[%s5 + $0xd8] sm:$0xf]
  %v2330 = vld [vmem:[%s5 + $0xdc] sm:$0xf]
  %v2331 = vld [vmem:[%s5 + $0xe0] sm:$0xf]
  %v2332 = vld [vmem:[%s5 + $0xe4] sm:$0xf]
  %v2333 = vld [vmem:[%s5 + $0xe8] sm:$0xf]
  %v2334 = vld [vmem:[%s5 + $0xec] sm:$0xf]
  %v2335 = vld [vmem:[%s5 + $0xf0] sm:$0xf]
  %v2336 = vld [vmem:[%s5 + $0xf4] sm:$0xf]
  %v2337 = vld [vmem:[%s5 + $0xf8] sm:$0xf]
  %v2338 = vld [vmem:[%s5 + $0xfc] sm:$0xf]
  %v2339 = vld [vmem:[%s5 + $0x100] sm:$0xf]
  %v2340 = vld [vmem:[%s5 + $0x104] sm:$0xf]
  %v2341 = vld [vmem:[%s5 + $0x108] sm:$0xf]
  %v2342 = vld [vmem:[%s5 + $0x10c] sm:$0xf]
  %v2343 = vld [vmem:[%s5 + $0x110] sm:$0xf]
  %v2344 = vld [vmem:[%s5 + $0x114] sm:$0xf]
  %v2345 = vld [vmem:[%s5 + $0x118] sm:$0xf]
  %v2346 = vld [vmem:[%s5 + $0x11c] sm:$0xf]
  %v2347 = vld [vmem:[%s5 + $0x120] sm:$0xf]
  %v2348 = vld [vmem:[%s5 + $0x124] sm:$0xf]
  %v2349 = vld [vmem:[%s5 + $0x128] sm:$0xf]
  %v2350 = vld [vmem:[%s5 + $0x12c] sm:$0xf]
  %v2351 = vld [vmem:[%s5 + $0x130] sm:$0xf]
  %v2352 = vld [vmem:[%s5 + $0x134] sm:$0xf]
  %v2353 = vld [vmem:[%s5 + $0x138] sm:$0xf]
  %v2354 = vld [vmem:[%s5 + $0x13c] sm:$0xf]
  %v2355 = vld [vmem:[%s5 + $0x140] sm:$0xf]
  %v2356 = vld [vmem:[%s5 + $0x144] sm:$0xf]
  %v2357 = vld [vmem:[%s5 + $0x148] sm:$0xf]
  %v2358 = vld [vmem:[%s5 + $0x14c] sm:$0xf]
  %v2359 = vld [vmem:[%s5 + $0x150] sm:$0xf]
  %v2360 = vld [vmem:[%s5 + $0x154] sm:$0xf]
  %v2361 = vld [vmem:[%s5 + $0x158] sm:$0xf]
  %v2362 = vld [vmem:[%s5 + $0x15c] sm:$0xf]
  %v2363 = vld [vmem:[%s5 + $0x160] sm:$0xf]
  %v2364 = vld [vmem:[%s5 + $0x164] sm:$0xf]
  %v2365 = vld [vmem:[%s5 + $0x168] sm:$0xf]
  %v2366 = vld [vmem:[%s5 + $0x16c] sm:$0xf]
  %v2367 = vld [vmem:[%s5 + $0x170] sm:$0xf]
  %v2368 = vld [vmem:[%s5 + $0x174] sm:$0xf]
  %v2369 = vld [vmem:[%s5 + $0x178] sm:$0xf]
  %v2370 = vld [vmem:[%s5 + $0x17c] sm:$0xf]
  %v2371 = vld [vmem:[%s5 + $0x180] sm:$0xf]
  %v2372 = vld [vmem:[%s5 + $0x184] sm:$0xf]
  %v2373 = vld [vmem:[%s5 + $0x188] sm:$0xf]
  %v2374 = vld [vmem:[%s5 + $0x18c] sm:$0xf]
  %v2375 = vld [vmem:[%s5 + $0x190] sm:$0xf]
  %v2376 = vld [vmem:[%s5 + $0x194] sm:$0xf]
  %v2377 = vld [vmem:[%s5 + $0x198] sm:$0xf]
  %v2378 = vld [vmem:[%s5 + $0x19c] sm:$0xf]
  %v2379 = vld [vmem:[%s5 + $0x1a0] sm:$0xf]
  %v2380 = vld [vmem:[%s5 + $0x1a4] sm:$0xf]
  %v2381 = vld [vmem:[%s5 + $0x1a8] sm:$0xf]
  %v2382 = vld [vmem:[%s5 + $0x1ac] sm:$0xf]
  %v2383 = vld [vmem:[%s5 + $0x1b0] sm:$0xf]
  %v2384 = vld [vmem:[%s5 + $0x1b4] sm:$0xf]
  %v2385 = vld [vmem:[%s5 + $0x1b8] sm:$0xf]
  %v2386 = vld [vmem:[%s5 + $0x1bc] sm:$0xf]
  %v2387 = vld [vmem:[%s5 + $0x1c0] sm:$0xf]
  %v2388 = vld [vmem:[%s5 + $0x1c4] sm:$0xf]
  %v2389 = vld [vmem:[%s5 + $0x1c8] sm:$0xf]
  %v2390 = vld [vmem:[%s5 + $0x1cc] sm:$0xf]
  %v2391 = vld [vmem:[%s5 + $0x1d0] sm:$0xf]
  %v2392 = vld [vmem:[%s5 + $0x1d4] sm:$0xf]
  %v2393 = vld [vmem:[%s5 + $0x1d8] sm:$0xf]
  %v2394 = vld [vmem:[%s5 + $0x1dc] sm:$0xf]
  %v2395 = vld [vmem:[%s5 + $0x1e0] sm:$0xf]
  %v2396 = vld [vmem:[%s5 + $0x1e4] sm:$0xf]
  %v2397 = vld [vmem:[%s5 + $0x1e8] sm:$0xf]
  %v2398 = vld [vmem:[%s5 + $0x1ec] sm:$0xf]
  %v2399 = vld [vmem:[%s5 + $0x1f0] sm:$0xf]
  %v2400 = vld [vmem:[%s5 + $0x1f4] sm:$0xf]
  %v2401 = vld [vmem:[%s5 + $0x1f8] sm:$0xf]
  %v2402 = vld [vmem:[%s5 + $0x1fc] sm:$0xf]
  %v2403 = vld [vmem:[%s5 + $0x200] sm:$0xf]
  %v2404 = vld [vmem:[%s5 + $0x204] sm:$0xf]
  %v2405 = vld [vmem:[%s5 + $0x208] sm:$0xf]
  %v2406 = vld [vmem:[%s5 + $0x20c] sm:$0xf]
  %v2407 = vld [vmem:[%s5 + $0x210] sm:$0xf]
  %v2408 = vld [vmem:[%s5 + $0x214] sm:$0xf]
  %v2409 = vld [vmem:[%s5 + $0x218] sm:$0xf]
  %v2410 = vld [vmem:[%s5 + $0x21c] sm:$0xf]
  %v2411 = vld [vmem:[%s5 + $0x220] sm:$0xf]
  %v2412 = vld [vmem:[%s5 + $0x224] sm:$0xf]
  %v2413 = vld [vmem:[%s5 + $0x228] sm:$0xf]
  %v2414 = vld [vmem:[%s5 + $0x22c] sm:$0xf]
  %v2415 = vld [vmem:[%s5 + $0x230] sm:$0xf]
  %v2416 = vld [vmem:[%s5 + $0x234] sm:$0xf]
  %v2417 = vld [vmem:[%s5 + $0x238] sm:$0xf]
  %v2418 = vld [vmem:[%s5 + $0x23c] sm:$0xf]
  %v2563 = vunpack.c.l.b16 %v2275
  %v2564 = vunpack.c.l.b16 %v2276
  %v2565 = vunpack.c.l.b16 %v2277
  %v2566 = vunpack.c.l.b16 %v2278
  %v2567 = vunpack.c.l.b16 %v2279
  %v2568 = vunpack.c.l.b16 %v2280
  %v2569 = vunpack.c.l.b16 %v2281
  %v2570 = vunpack.c.l.b16 %v2282
  %v2571 = vunpack.c.l.b16 %v2283
  %v2572 = vunpack.c.l.b16 %v2284
  %v2573 = vunpack.c.l.b16 %v2285
  %v2574 = vunpack.c.l.b16 %v2286
  %v2575 = vunpack.c.l.b16 %v2287
  %v2576 = vunpack.c.l.b16 %v2288
  %v2577 = vunpack.c.l.b16 %v2289
  %v2578 = vunpack.c.l.b16 %v2290
  %v2579 = vunpack.c.l.b16 %v2291
  %v2580 = vunpack.c.l.b16 %v2292
  %v2581 = vunpack.c.l.b16 %v2293
  %v2582 = vunpack.c.l.b16 %v2294
  %v2583 = vunpack.c.l.b16 %v2295
  %v2584 = vunpack.c.l.b16 %v2296
  %v2585 = vunpack.c.l.b16 %v2297
  %v2586 = vunpack.c.l.b16 %v2298
  %v2587 = vunpack.c.l.b16 %v2299
  %v2588 = vunpack.c.l.b16 %v2300
  %v2589 = vunpack.c.l.b16 %v2301
  %v2590 = vunpack.c.l.b16 %v2302
  %v2591 = vunpack.c.l.b16 %v2303
  %v2592 = vunpack.c.l.b16 %v2304
  %v2593 = vunpack.c.l.b16 %v2305
  %v2594 = vunpack.c.l.b16 %v2306
  %v2595 = vunpack.c.l.b16 %v2307
  %v2596 = vunpack.c.l.b16 %v2308
  %v2597 = vunpack.c.l.b16 %v2309
  %v2598 = vunpack.c.l.b16 %v2310
  %v2599 = vunpack.c.l.b16 %v2311
  %v2600 = vunpack.c.l.b16 %v2312
  %v2601 = vunpack.c.l.b16 %v2313
  %v2602 = vunpack.c.l.b16 %v2314
  %v2603 = vunpack.c.l.b16 %v2315
  %v2604 = vunpack.c.l.b16 %v2316
  %v2605 = vunpack.c.l.b16 %v2317
  %v2606 = vunpack.c.l.b16 %v2318
  %v2607 = vunpack.c.l.b16 %v2319
  %v2608 = vunpack.c.l.b16 %v2320
  %v2609 = vunpack.c.l.b16 %v2321
  %v2610 = vunpack.c.l.b16 %v2322
  %v2611 = vunpack.c.l.b16 %v2323
  %v2612 = vunpack.c.l.b16 %v2324
  %v2613 = vunpack.c.l.b16 %v2325
  %v2614 = vunpack.c.l.b16 %v2326
  %v2615 = vunpack.c.l.b16 %v2327
  %v2616 = vunpack.c.l.b16 %v2328
  %v2617 = vunpack.c.l.b16 %v2329
  %v2618 = vunpack.c.l.b16 %v2330
  %v2619 = vunpack.c.l.b16 %v2331
  %v2620 = vunpack.c.l.b16 %v2332
  %v2621 = vunpack.c.l.b16 %v2333
  %v2622 = vunpack.c.l.b16 %v2334
  %v2623 = vunpack.c.l.b16 %v2335
  %v2624 = vunpack.c.l.b16 %v2336
  %v2625 = vunpack.c.l.b16 %v2337
  %v2626 = vunpack.c.l.b16 %v2338
  %v2627 = vunpack.c.l.b16 %v2339
  %v2628 = vunpack.c.l.b16 %v2340
  %v2629 = vunpack.c.l.b16 %v2341
  %v2630 = vunpack.c.l.b16 %v2342
  %v2631 = vunpack.c.l.b16 %v2343
  %v2632 = vunpack.c.l.b16 %v2344
  %v2633 = vunpack.c.l.b16 %v2345
  %v2634 = vunpack.c.l.b16 %v2346
  %v2635 = vunpack.c.l.b16 %v2347
  %v2636 = vunpack.c.l.b16 %v2348
  %v2637 = vunpack.c.l.b16 %v2349
  %v2638 = vunpack.c.l.b16 %v2350
  %v2639 = vunpack.c.l.b16 %v2351
  %v2640 = vunpack.c.l.b16 %v2352
  %v2641 = vunpack.c.l.b16 %v2353
  %v2642 = vunpack.c.l.b16 %v2354
  %v2643 = vunpack.c.l.b16 %v2355
  %v2644 = vunpack.c.l.b16 %v2356
  %v2645 = vunpack.c.l.b16 %v2357
  %v2646 = vunpack.c.l.b16 %v2358
  %v2647 = vunpack.c.l.b16 %v2359
  %v2648 = vunpack.c.l.b16 %v2360
  %v2649 = vunpack.c.l.b16 %v2361
  %v2650 = vunpack.c.l.b16 %v2362
  %v2651 = vunpack.c.l.b16 %v2363
  %v2652 = vunpack.c.l.b16 %v2364
  %v2653 = vunpack.c.l.b16 %v2365
  %v2654 = vunpack.c.l.b16 %v2366
  %v2655 = vunpack.c.l.b16 %v2367
  %v2656 = vunpack.c.l.b16 %v2368
  %v2657 = vunpack.c.l.b16 %v2369
  %v2658 = vunpack.c.l.b16 %v2370
  %v2659 = vunpack.c.l.b16 %v2371
  %v2660 = vunpack.c.l.b16 %v2372
  %v2661 = vunpack.c.l.b16 %v2373
  %v2662 = vunpack.c.l.b16 %v2374
  %v2663 = vunpack.c.l.b16 %v2375
  %v2664 = vunpack.c.l.b16 %v2376
  %v2665 = vunpack.c.l.b16 %v2377
  %v2666 = vunpack.c.l.b16 %v2378
  %v2667 = vunpack.c.l.b16 %v2379
  %v2668 = vunpack.c.l.b16 %v2380
  %v2669 = vunpack.c.l.b16 %v2381
  %v2670 = vunpack.c.l.b16 %v2382
  %v2671 = vunpack.c.l.b16 %v2383
  %v2672 = vunpack.c.l.b16 %v2384
  %v2673 = vunpack.c.l.b16 %v2385
  %v2674 = vunpack.c.l.b16 %v2386
  %v2675 = vunpack.c.l.b16 %v2387
  %v2676 = vunpack.c.l.b16 %v2388
  %v2677 = vunpack.c.l.b16 %v2389
  %v2678 = vunpack.c.l.b16 %v2390
  %v2679 = vunpack.c.l.b16 %v2391
  %v2680 = vunpack.c.l.b16 %v2392
  %v2681 = vunpack.c.l.b16 %v2393
  %v2682 = vunpack.c.l.b16 %v2394
  %v2683 = vunpack.c.l.b16 %v2395
  %v2684 = vunpack.c.l.b16 %v2396
  %v2685 = vunpack.c.l.b16 %v2397
  %v2686 = vunpack.c.l.b16 %v2398
  %v2687 = vunpack.c.l.b16 %v2399
  %v2688 = vunpack.c.l.b16 %v2400
  %v2689 = vunpack.c.l.b16 %v2401
  %v2690 = vunpack.c.l.b16 %v2402
  %v2691 = vunpack.c.l.b16 %v2403
  %v2692 = vunpack.c.l.b16 %v2404
  %v2693 = vunpack.c.l.b16 %v2405
  %v2694 = vunpack.c.l.b16 %v2406
  %v2695 = vunpack.c.l.b16 %v2407
  %v2696 = vunpack.c.l.b16 %v2408
  %v2697 = vunpack.c.l.b16 %v2409
  %v2698 = vunpack.c.l.b16 %v2410
  %v2699 = vunpack.c.l.b16 %v2411
  %v2700 = vunpack.c.l.b16 %v2412
  %v2701 = vunpack.c.l.b16 %v2413
  %v2702 = vunpack.c.l.b16 %v2414
  %v2703 = vunpack.c.l.b16 %v2415
  %v2704 = vunpack.c.l.b16 %v2416
  %v2705 = vunpack.c.l.b16 %v2417
  %v2706 = vunpack.c.l.b16 %v2418
  %v2707 = vpack.c.b16 %v2564, %v2563
  %v2708 = vpack.c.b16 %v2566, %v2565
  %v2709 = vpack.c.b16 %v2568, %v2567
  %v2710 = vpack.c.b16 %v2570, %v2569
  %v2711 = vpack.c.b16 %v2572, %v2571
  %v2712 = vpack.c.b16 %v2574, %v2573
  %v2713 = vpack.c.b16 %v2576, %v2575
  %v2714 = vpack.c.b16 %v2578, %v2577
  %v2715 = vpack.c.b16 %v2580, %v2579
  %v2716 = vpack.c.b16 %v2582, %v2581
  %v2717 = vpack.c.b16 %v2584, %v2583
  %v2718 = vpack.c.b16 %v2586, %v2585
  %v2719 = vpack.c.b16 %v2588, %v2587
  %v2720 = vpack.c.b16 %v2590, %v2589
  %v2721 = vpack.c.b16 %v2592, %v2591
  %v2722 = vpack.c.b16 %v2594, %v2593
  %v2723 = vpack.c.b16 %v2596, %v2595
  %v2724 = vpack.c.b16 %v2598, %v2597
  %v2725 = vpack.c.b16 %v2600, %v2599
  %v2726 = vpack.c.b16 %v2602, %v2601
  %v2727 = vpack.c.b16 %v2604, %v2603
  %v2728 = vpack.c.b16 %v2606, %v2605
  %v2729 = vpack.c.b16 %v2608, %v2607
  %v2730 = vpack.c.b16 %v2610, %v2609
  %v2731 = vpack.c.b16 %v2612, %v2611
  %v2732 = vpack.c.b16 %v2614, %v2613
  %v2733 = vpack.c.b16 %v2616, %v2615
  %v2734 = vpack.c.b16 %v2618, %v2617
  %v2735 = vpack.c.b16 %v2620, %v2619
  %v2736 = vpack.c.b16 %v2622, %v2621
  %v2737 = vpack.c.b16 %v2624, %v2623
  %v2738 = vpack.c.b16 %v2626, %v2625
  %v2739 = vpack.c.b16 %v2628, %v2627
  %v2740 = vpack.c.b16 %v2630, %v2629
  %v2741 = vpack.c.b16 %v2632, %v2631
  %v2742 = vpack.c.b16 %v2634, %v2633
  %v2743 = vpack.c.b16 %v2636, %v2635
  %v2744 = vpack.c.b16 %v2638, %v2637
  %v2745 = vpack.c.b16 %v2640, %v2639
  %v2746 = vpack.c.b16 %v2642, %v2641
  %v2747 = vpack.c.b16 %v2644, %v2643
  %v2748 = vpack.c.b16 %v2646, %v2645
  %v2749 = vpack.c.b16 %v2648, %v2647
  %v2750 = vpack.c.b16 %v2650, %v2649
  %v2751 = vpack.c.b16 %v2652, %v2651
  %v2752 = vpack.c.b16 %v2654, %v2653
  %v2753 = vpack.c.b16 %v2656, %v2655
  %v2754 = vpack.c.b16 %v2658, %v2657
  %v2755 = vpack.c.b16 %v2660, %v2659
  %v2756 = vpack.c.b16 %v2662, %v2661
  %v2757 = vpack.c.b16 %v2664, %v2663
  %v2758 = vpack.c.b16 %v2666, %v2665
  %v2759 = vpack.c.b16 %v2668, %v2667
  %v2760 = vpack.c.b16 %v2670, %v2669
  %v2761 = vpack.c.b16 %v2672, %v2671
  %v2762 = vpack.c.b16 %v2674, %v2673
  %v2763 = vpack.c.b16 %v2676, %v2675
  %v2764 = vpack.c.b16 %v2678, %v2677
  %v2765 = vpack.c.b16 %v2680, %v2679
  %v2766 = vpack.c.b16 %v2682, %v2681
  %v2767 = vpack.c.b16 %v2684, %v2683
  %v2768 = vpack.c.b16 %v2686, %v2685
  %v2769 = vpack.c.b16 %v2688, %v2687
  %v2770 = vpack.c.b16 %v2690, %v2689
  %v2771 = vpack.c.b16 %v2692, %v2691
  %v2772 = vpack.c.b16 %v2694, %v2693
  %v2773 = vpack.c.b16 %v2696, %v2695
  %v2774 = vpack.c.b16 %v2698, %v2697
  %v2775 = vpack.c.b16 %v2700, %v2699
  %v2776 = vpack.c.b16 %v2702, %v2701
  %v2777 = vpack.c.b16 %v2704, %v2703
  %v2778 = vpack.c.b16 %v2706, %v2705
  %2851 = vmatprep.subr.bf16.mxu0 0
  %2852 = vmatpush1.bf16.msra.mxu0 %v2714
  %2853 = vmatprep.subr.bf16.mxu0 0
  %2854 = vmatpush1.bf16.msra.mxu0 %v2713
  %2855 = vmatprep.subr.bf16.mxu0 0
  %2856 = vmatpush1.bf16.msra.mxu0 %v2712
  %2857 = vmatprep.subr.bf16.mxu0 0
  %2858 = vmatpush1.bf16.msra.mxu0 %v2711
  %2859 = vmatprep.subr.bf16.mxu0 0
  %2860 = vmatpush1.bf16.msra.mxu0 %v2710
  %2861 = vmatprep.subr.bf16.mxu0 0
  %2862 = vmatpush1.bf16.msra.mxu0 %v2709
  %2863 = vmatprep.subr.bf16.mxu0 0
  %2864 = vmatpush1.bf16.msra.mxu0 %v2708
  %2865 = vmatprep.subr.bf16.mxu0 0
  %2866 = vmatpush1.bf16.msra.mxu0 %v2707
  %2867 = vmatprep.subr.bf16.mxu0 0
  %2868 = vmatpush2.bf16.msra.mxu0 %v2722
  %2869 = vmatprep.subr.bf16.mxu0 0
  %2870 = vmatpush2.bf16.msra.mxu0 %v2721
  %2871 = vmatprep.subr.bf16.mxu0 0
  %2872 = vmatpush2.bf16.msra.mxu0 %v2720
  %2873 = vmatprep.subr.bf16.mxu0 0
  %2874 = vmatpush2.bf16.msra.mxu0 %v2719
  %2875 = vmatprep.subr.bf16.mxu0 0
  %2876 = vmatpush2.bf16.msra.mxu0 %v2718
  %2877 = vmatprep.subr.bf16.mxu0 0
  %2878 = vmatpush2.bf16.msra.mxu0 %v2717
  %2879 = vmatprep.subr.bf16.mxu0 0
  %2880 = vmatpush2.bf16.msra.mxu0 %v2716
  %2881 = vmatprep.subr.bf16.mxu0 0
  %2882 = vmatpush2.bf16.msra.mxu0 %v2715
  %2883 = vmatprep.mubr.bf16.mxu0 %v2044
  %2884 = vmatmul.mubr.bf16.gmra.mxu0 %v2006
  %v2885 = vpop.f32.mrf.mxu0
  %v2886 = vadd.f32 0.0, %v2885
  %v2887 = vpop.f32.mrf.mxu0
  %v2888 = vpop.f32.mrf.mxu0
  %v2889 = vadd.f32 0.0, %v2888
  %v2890 = vpop.f32.mrf.mxu0
  %2891 = vmatprep.mubr.bf16.mxu0 %v2045
  %2892 = vmatmul.mubr.bf16.gmra.mxu0 %v2007
  %v2893 = vpop.f32.mrf.mxu0
  %v2894 = vadd.f32 0.0, %v2893
  %v2895 = vpop.f32.mrf.mxu0
  %v2896 = vpop.f32.mrf.mxu0
  %v2897 = vadd.f32 0.0, %v2896
  %v2898 = vpop.f32.mrf.mxu0
  %2899 = vmatprep.mubr.bf16.mxu0 %v2046
  %2900 = vmatmul.mubr.bf16.gmra.mxu0 %v2008
  %v2901 = vpop.f32.mrf.mxu0
  %v2902 = vadd.f32 0.0, %v2901
  %v2903 = vpop.f32.mrf.mxu0
  %v2904 = vpop.f32.mrf.mxu0
  %v2905 = vadd.f32 0.0, %v2904
  %v2906 = vpop.f32.mrf.mxu0
  %2907 = vmatprep.mubr.bf16.mxu0 %v2047
  %2908 = vmatmul.mubr.bf16.gmra.mxu0 %v2009
  %v2909 = vpop.f32.mrf.mxu0
  %v2910 = vadd.f32 0.0, %v2909
  %v2911 = vpop.f32.mrf.mxu0
  %v2912 = vpop.f32.mrf.mxu0
  %v2913 = vadd.f32 0.0, %v2912
  %v2914 = vpop.f32.mrf.mxu0
  %2915 = vmatprep.mubr.bf16.mxu0 %v2048
  %2916 = vmatmul.mubr.bf16.gmra.mxu0 %v2010
  %v2917 = vpop.f32.mrf.mxu0
  %v2918 = vadd.f32 0.0, %v2917
  %v2919 = vpop.f32.mrf.mxu0
  %v2920 = vpop.f32.mrf.mxu0
  %v2921 = vadd.f32 0.0, %v2920
  %v2922 = vpop.f32.mrf.mxu0
  %2923 = vmatprep.mubr.bf16.mxu0 %v2049
  %2924 = vmatmul.mubr.bf16.gmra.mxu0 %v2011
  %v2925 = vpop.f32.mrf.mxu0
  %v2926 = vadd.f32 0.0, %v2925
  %v2927 = vpop.f32.mrf.mxu0
  %v2928 = vpop.f32.mrf.mxu0
  %v2929 = vadd.f32 0.0, %v2928
  %v2930 = vpop.f32.mrf.mxu0
  %2931 = vmatprep.mubr.bf16.mxu0 %v2050
  %2932 = vmatmul.mubr.bf16.gmra.mxu0 %v2012
  %v2933 = vpop.f32.mrf.mxu0
  %v2934 = vadd.f32 0.0, %v2933
  %v2935 = vpop.f32.mrf.mxu0
  %v2936 = vpop.f32.mrf.mxu0
  %v2937 = vadd.f32 0.0, %v2936
  %v2938 = vpop.f32.mrf.mxu0
  %2939 = vmatprep.mubr.bf16.mxu0 %v2051
  %2940 = vmatmul.mubr.bf16.gmra.mxu0 %v2013
  %v2941 = vpop.f32.mrf.mxu0
  %v2942 = vadd.f32 0.0, %v2941
  %v2943 = vpop.f32.mrf.mxu0
  %v2944 = vpop.f32.mrf.mxu0
  %v2945 = vadd.f32 0.0, %v2944
  %v2946 = vpop.f32.mrf.mxu0
  %2947 = vmatprep.mubr.bf16.mxu0 %v2052
  %2948 = vmatmul.mubr.bf16.gmra.mxu0 %v2014
  %v2949 = vpop.f32.mrf.mxu0
  %v2950 = vadd.f32 0.0, %v2949
  %v2951 = vpop.f32.mrf.mxu0
  %v2952 = vpop.f32.mrf.mxu0
  %v2953 = vadd.f32 0.0, %v2952
  %v2954 = vpop.f32.mrf.mxu0
  %2955 = vmatprep.mubr.bf16.mxu0 %v2053
  %2956 = vmatmul.mubr.bf16.gmra.mxu0 %v2015
  %v2957 = vpop.f32.mrf.mxu0
  %v2958 = vadd.f32 0.0, %v2957
  %v2959 = vpop.f32.mrf.mxu0
  %v2960 = vpop.f32.mrf.mxu0
  %v2961 = vadd.f32 0.0, %v2960
  %v2962 = vpop.f32.mrf.mxu0
  %2963 = vmatprep.mubr.bf16.mxu0 %v2054
  %2964 = vmatmul.mubr.bf16.gmra.mxu0 %v2016
  %v2965 = vpop.f32.mrf.mxu0
  %v2966 = vadd.f32 0.0, %v2965
  %v2967 = vpop.f32.mrf.mxu0
  %v2968 = vpop.f32.mrf.mxu0
  %v2969 = vadd.f32 0.0, %v2968
  %v2970 = vpop.f32.mrf.mxu0
  %2971 = vmatprep.mubr.bf16.mxu0 %v2055
  %2972 = vmatmul.mubr.bf16.gmra.mxu0 %v2017
  %v2973 = vpop.f32.mrf.mxu0
  %v2974 = vadd.f32 0.0, %v2973
  %v2975 = vpop.f32.mrf.mxu0
  %v2976 = vpop.f32.mrf.mxu0
  %v2977 = vadd.f32 0.0, %v2976
  %v2978 = vpop.f32.mrf.mxu0
  %2979 = vmatprep.mubr.bf16.mxu0 %v2056
  %2980 = vmatmul.mubr.bf16.gmra.mxu0 %v2018
  %v2981 = vpop.f32.mrf.mxu0
  %v2982 = vadd.f32 0.0, %v2981
  %v2983 = vpop.f32.mrf.mxu0
  %v2984 = vpop.f32.mrf.mxu0
  %v2985 = vpop.f32.mrf.mxu0
  %2986 = vdwg.mxu0
  %2987 = vmatprep.subr.bf16.mxu0 0
  %2988 = vmatpush1.bf16.msra.mxu0 %v2730
  %2989 = vmatprep.subr.bf16.mxu0 0
  %2990 = vmatpush1.bf16.msra.mxu0 %v2729
  %2991 = vmatprep.subr.bf16.mxu0 0
  %2992 = vmatpush1.bf16.msra.mxu0 %v2728
  %2993 = vmatprep.subr.bf16.mxu0 0
  %2994 = vmatpush1.bf16.msra.mxu0 %v2727
  %2995 = vmatprep.subr.bf16.mxu0 0
  %2996 = vmatpush1.bf16.msra.mxu0 %v2726
  %2997 = vmatprep.subr.bf16.mxu0 0
  %2998 = vmatpush1.bf16.msra.mxu0 %v2725
  %2999 = vmatprep.subr.bf16.mxu0 0
  %3000 = vmatpush1.bf16.msra.mxu0 %v2724
  %3001 = vmatprep.subr.bf16.mxu0 0
  %3002 = vmatpush1.bf16.msra.mxu0 %v2723
  %3003 = vmatprep.subr.bf16.mxu0 0
  %3004 = vmatpush2.bf16.msra.mxu0 %v2738
  %3005 = vmatprep.subr.bf16.mxu0 0
  %3006 = vmatpush2.bf16.msra.mxu0 %v2737
  %3007 = vmatprep.subr.bf16.mxu0 0
  %3008 = vmatpush2.bf16.msra.mxu0 %v2736
  %3009 = vmatprep.subr.bf16.mxu0 0
  %3010 = vmatpush2.bf16.msra.mxu0 %v2735
  %3011 = vmatprep.subr.bf16.mxu0 0
  %3012 = vmatpush2.bf16.msra.mxu0 %v2734
  %3013 = vmatprep.subr.bf16.mxu0 0
  %3014 = vmatpush2.bf16.msra.mxu0 %v2733
  %3015 = vmatprep.subr.bf16.mxu0 0
  %3016 = vmatpush2.bf16.msra.mxu0 %v2732
  %3017 = vmatprep.subr.bf16.mxu0 0
  %3018 = vmatpush2.bf16.msra.mxu0 %v2731
  %3019 = vmatprep.mubr.bf16.mxu0 %v2096
  %3020 = vmatmul.mubr.bf16.gmra.mxu0 %v2082
  %v3021 = vpop.f32.mrf.mxu0
  %v3022 = vadd.f32 %v2886, %v3021
  %v3023 = vpop.f32.mrf.mxu0
  %v3024 = vpop.f32.mrf.mxu0
  %v3025 = vadd.f32 %v2889, %v3024
  %v3026 = vpop.f32.mrf.mxu0
  %3027 = vmatprep.mubr.bf16.mxu0 %v2097
  %3028 = vmatmul.mubr.bf16.gmra.mxu0 %v2083
  %v3029 = vpop.f32.mrf.mxu0
  %v3030 = vadd.f32 %v2894, %v3029
  %v3031 = vpop.f32.mrf.mxu0
  %v3032 = vpop.f32.mrf.mxu0
  %v3033 = vadd.f32 %v2897, %v3032
  %v3034 = vpop.f32.mrf.mxu0
  %3035 = vmatprep.mubr.bf16.mxu0 %v2098
  %3036 = vmatmul.mubr.bf16.gmra.mxu0 %v2084
  %v3037 = vpop.f32.mrf.mxu0
  %v3038 = vadd.f32 %v2902, %v3037
  %v3039 = vpop.f32.mrf.mxu0
  %v3040 = vpop.f32.mrf.mxu0
  %v3041 = vadd.f32 %v2905, %v3040
  %v3042 = vpop.f32.mrf.mxu0
  %3043 = vmatprep.mubr.bf16.mxu0 %v2099
  %3044 = vmatmul.mubr.bf16.gmra.mxu0 %v2085
  %v3045 = vpop.f32.mrf.mxu0
  %v3046 = vadd.f32 %v2910, %v3045
  %v3047 = vpop.f32.mrf.mxu0
  %v3048 = vpop.f32.mrf.mxu0
  %v3049 = vadd.f32 %v2913, %v3048
  %v3050 = vpop.f32.mrf.mxu0
  %3051 = vmatprep.mubr.bf16.mxu0 %v2100
  %3052 = vmatmul.mubr.bf16.gmra.mxu0 %v2086
  %v3053 = vpop.f32.mrf.mxu0
  %v3054 = vadd.f32 %v2918, %v3053
  %v3055 = vpop.f32.mrf.mxu0
  %v3056 = vpop.f32.mrf.mxu0
  %v3057 = vadd.f32 %v2921, %v3056
  %v3058 = vpop.f32.mrf.mxu0
  %3059 = vmatprep.mubr.bf16.mxu0 %v2101
  %3060 = vmatmul.mubr.bf16.gmra.mxu0 %v2087
  %v3061 = vpop.f32.mrf.mxu0
  %v3062 = vadd.f32 %v2926, %v3061
  %v3063 = vpop.f32.mrf.mxu0
  %v3064 = vpop.f32.mrf.mxu0
  %v3065 = vadd.f32 %v2929, %v3064
  %v3066 = vpop.f32.mrf.mxu0
  %3067 = vmatprep.mubr.bf16.mxu0 %v2102
  %3068 = vmatmul.mubr.bf16.gmra.mxu0 %v2088
  %v3069 = vpop.f32.mrf.mxu0
  %v3070 = vadd.f32 %v2934, %v3069
  %v3071 = vpop.f32.mrf.mxu0
  %v3072 = vpop.f32.mrf.mxu0
  %v3073 = vadd.f32 %v2937, %v3072
  %v3074 = vpop.f32.mrf.mxu0
  %3075 = vmatprep.mubr.bf16.mxu0 %v2103
  %3076 = vmatmul.mubr.bf16.gmra.mxu0 %v2089
  %v3077 = vpop.f32.mrf.mxu0
  %v3078 = vadd.f32 %v2942, %v3077
  %v3079 = vpop.f32.mrf.mxu0
  %v3080 = vpop.f32.mrf.mxu0
  %v3081 = vadd.f32 %v2945, %v3080
  %v3082 = vpop.f32.mrf.mxu0
  %3083 = vmatprep.mubr.bf16.mxu0 %v2104
  %3084 = vmatmul.mubr.bf16.gmra.mxu0 %v2090
  %v3085 = vpop.f32.mrf.mxu0
  %v3086 = vadd.f32 %v2950, %v3085
  %v3087 = vpop.f32.mrf.mxu0
  %v3088 = vpop.f32.mrf.mxu0
  %v3089 = vadd.f32 %v2953, %v3088
  %v3090 = vpop.f32.mrf.mxu0
  %3091 = vmatprep.mubr.bf16.mxu0 %v2105
  %3092 = vmatmul.mubr.bf16.gmra.mxu0 %v2091
  %v3093 = vpop.f32.mrf.mxu0
  %v3094 = vadd.f32 %v2958, %v3093
  %v3095 = vpop.f32.mrf.mxu0
  %v3096 = vpop.f32.mrf.mxu0
  %v3097 = vadd.f32 %v2961, %v3096
  %v3098 = vpop.f32.mrf.mxu0
  %3099 = vmatprep.mubr.bf16.mxu0 %v2106
  %3100 = vmatmul.mubr.bf16.gmra.mxu0 %v2092
  %v3101 = vpop.f32.mrf.mxu0
  %v3102 = vadd.f32 %v2966, %v3101
  %v3103 = vpop.f32.mrf.mxu0
  %v3104 = vpop.f32.mrf.mxu0
  %v3105 = vadd.f32 %v2969, %v3104
  %v3106 = vpop.f32.mrf.mxu0
  %3107 = vmatprep.mubr.bf16.mxu0 %v2107
  %3108 = vmatmul.mubr.bf16.gmra.mxu0 %v2093
  %v3109 = vpop.f32.mrf.mxu0
  %v3110 = vadd.f32 %v2974, %v3109
  %v3111 = vpop.f32.mrf.mxu0
  %v3112 = vpop.f32.mrf.mxu0
  %v3113 = vadd.f32 %v2977, %v3112
  %v3114 = vpop.f32.mrf.mxu0
  %3115 = vmatprep.mubr.bf16.mxu0 %v2108
  %3116 = vmatmul.mubr.bf16.gmra.mxu0 %v2094
  %v3117 = vpop.f32.mrf.mxu0
  %v3118 = vadd.f32 %v2982, %v3117
  %v3119 = vpop.f32.mrf.mxu0
  %v3120 = vpop.f32.mrf.mxu0
  %v3121 = vpop.f32.mrf.mxu0
  %3122 = vdwg.mxu0
  %3123 = vmatprep.subr.bf16.mxu0 0
  %3124 = vmatpush1.bf16.msra.mxu0 %v2746
  %3125 = vmatprep.subr.bf16.mxu0 0
  %3126 = vmatpush1.bf16.msra.mxu0 %v2745
  %3127 = vmatprep.subr.bf16.mxu0 0
  %3128 = vmatpush1.bf16.msra.mxu0 %v2744
  %3129 = vmatprep.subr.bf16.mxu0 0
  %3130 = vmatpush1.bf16.msra.mxu0 %v2743
  %3131 = vmatprep.subr.bf16.mxu0 0
  %3132 = vmatpush1.bf16.msra.mxu0 %v2742
  %3133 = vmatprep.subr.bf16.mxu0 0
  %3134 = vmatpush1.bf16.msra.mxu0 %v2741
  %3135 = vmatprep.subr.bf16.mxu0 0
  %3136 = vmatpush1.bf16.msra.mxu0 %v2740
  %3137 = vmatprep.subr.bf16.mxu0 0
  %3138 = vmatpush1.bf16.msra.mxu0 %v2739
  %3139 = vmatprep.subr.bf16.mxu0 0
  %3140 = vmatpush2.bf16.msra.mxu0 %v2754
  %3141 = vmatprep.subr.bf16.mxu0 0
  %3142 = vmatpush2.bf16.msra.mxu0 %v2753
  %3143 = vmatprep.subr.bf16.mxu0 0
  %3144 = vmatpush2.bf16.msra.mxu0 %v2752
  %3145 = vmatprep.subr.bf16.mxu0 0
  %3146 = vmatpush2.bf16.msra.mxu0 %v2751
  %3147 = vmatprep.subr.bf16.mxu0 0
  %3148 = vmatpush2.bf16.msra.mxu0 %v2750
  %3149 = vmatprep.subr.bf16.mxu0 0
  %3150 = vmatpush2.bf16.msra.mxu0 %v2749
  %3151 = vmatprep.subr.bf16.mxu0 0
  %3152 = vmatpush2.bf16.msra.mxu0 %v2748
  %3153 = vmatprep.subr.bf16.mxu0 0
  %3154 = vmatpush2.bf16.msra.mxu0 %v2747
  %3155 = vmatprep.mubr.bf16.mxu0 %v2172
  %3156 = vmatmul.mubr.bf16.gmra.mxu0 %v2134
  %v3157 = vpop.f32.mrf.mxu0
  %v3158 = vadd.f32 %v3022, %v3157
  %v3159 = vpop.f32.mrf.mxu0
  %v3160 = vpop.f32.mrf.mxu0
  %v3161 = vadd.f32 %v3025, %v3160
  %v3162 = vpop.f32.mrf.mxu0
  %3163 = vmatprep.mubr.bf16.mxu0 %v2173
  %3164 = vmatmul.mubr.bf16.gmra.mxu0 %v2135
  %v3165 = vpop.f32.mrf.mxu0
  %v3166 = vadd.f32 %v3030, %v3165
  %v3167 = vpop.f32.mrf.mxu0
  %v3168 = vpop.f32.mrf.mxu0
  %v3169 = vadd.f32 %v3033, %v3168
  %v3170 = vpop.f32.mrf.mxu0
  %3171 = vmatprep.mubr.bf16.mxu0 %v2174
  %3172 = vmatmul.mubr.bf16.gmra.mxu0 %v2136
  %v3173 = vpop.f32.mrf.mxu0
  %v3174 = vadd.f32 %v3038, %v3173
  %v3175 = vpop.f32.mrf.mxu0
  %v3176 = vpop.f32.mrf.mxu0
  %v3177 = vadd.f32 %v3041, %v3176
  %v3178 = vpop.f32.mrf.mxu0
  %3179 = vmatprep.mubr.bf16.mxu0 %v2175
  %3180 = vmatmul.mubr.bf16.gmra.mxu0 %v2137
  %v3181 = vpop.f32.mrf.mxu0
  %v3182 = vadd.f32 %v3046, %v3181
  %v3183 = vpop.f32.mrf.mxu0
  %v3184 = vpop.f32.mrf.mxu0
  %v3185 = vadd.f32 %v3049, %v3184
  %v3186 = vpop.f32.mrf.mxu0
  %3187 = vmatprep.mubr.bf16.mxu0 %v2176
  %3188 = vmatmul.mubr.bf16.gmra.mxu0 %v2138
  %v3189 = vpop.f32.mrf.mxu0
  %v3190 = vadd.f32 %v3054, %v3189
  %v3191 = vpop.f32.mrf.mxu0
  %v3192 = vpop.f32.mrf.mxu0
  %v3193 = vadd.f32 %v3057, %v3192
  %v3194 = vpop.f32.mrf.mxu0
  %3195 = vmatprep.mubr.bf16.mxu0 %v2177
  %3196 = vmatmul.mubr.bf16.gmra.mxu0 %v2139
  %v3197 = vpop.f32.mrf.mxu0
  %v3198 = vadd.f32 %v3062, %v3197
  %v3199 = vpop.f32.mrf.mxu0
  %v3200 = vpop.f32.mrf.mxu0
  %v3201 = vadd.f32 %v3065, %v3200
  %v3202 = vpop.f32.mrf.mxu0
  %3203 = vmatprep.mubr.bf16.mxu0 %v2178
  %3204 = vmatmul.mubr.bf16.gmra.mxu0 %v2140
  %v3205 = vpop.f32.mrf.mxu0
  %v3206 = vadd.f32 %v3070, %v3205
  %v3207 = vpop.f32.mrf.mxu0
  %v3208 = vpop.f32.mrf.mxu0
  %v3209 = vadd.f32 %v3073, %v3208
  %v3210 = vpop.f32.mrf.mxu0
  %3211 = vmatprep.mubr.bf16.mxu0 %v2179
  %3212 = vmatmul.mubr.bf16.gmra.mxu0 %v2141
  %v3213 = vpop.f32.mrf.mxu0
  %v3214 = vadd.f32 %v3078, %v3213
  %v3215 = vpop.f32.mrf.mxu0
  %v3216 = vpop.f32.mrf.mxu0
  %v3217 = vadd.f32 %v3081, %v3216
  %v3218 = vpop.f32.mrf.mxu0
  %3219 = vmatprep.mubr.bf16.mxu0 %v2180
  %3220 = vmatmul.mubr.bf16.gmra.mxu0 %v2142
  %v3221 = vpop.f32.mrf.mxu0
  %v3222 = vadd.f32 %v3086, %v3221
  %v3223 = vpop.f32.mrf.mxu0
  %v3224 = vpop.f32.mrf.mxu0
  %v3225 = vadd.f32 %v3089, %v3224
  %v3226 = vpop.f32.mrf.mxu0
  %3227 = vmatprep.mubr.bf16.mxu0 %v2181
  %3228 = vmatmul.mubr.bf16.gmra.mxu0 %v2143
  %v3229 = vpop.f32.mrf.mxu0
  %v3230 = vadd.f32 %v3094, %v3229
  %v3231 = vpop.f32.mrf.mxu0
  %v3232 = vpop.f32.mrf.mxu0
  %v3233 = vadd.f32 %v3097, %v3232
  %v3234 = vpop.f32.mrf.mxu0
  %3235 = vmatprep.mubr.bf16.mxu0 %v2182
  %3236 = vmatmul.mubr.bf16.gmra.mxu0 %v2144
  %v3237 = vpop.f32.mrf.mxu0
  %v3238 = vadd.f32 %v3102, %v3237
  %v3239 = vpop.f32.mrf.mxu0
  %v3240 = vpop.f32.mrf.mxu0
  %v3241 = vadd.f32 %v3105, %v3240
  %v3242 = vpop.f32.mrf.mxu0
  %3243 = vmatprep.mubr.bf16.mxu0 %v2183
  %3244 = vmatmul.mubr.bf16.gmra.mxu0 %v2145
  %v3245 = vpop.f32.mrf.mxu0
  %v3246 = vadd.f32 %v3110, %v3245
  %v3247 = vpop.f32.mrf.mxu0
  %v3248 = vpop.f32.mrf.mxu0
  %v3249 = vadd.f32 %v3113, %v3248
  %v3250 = vpop.f32.mrf.mxu0
  %3251 = vmatprep.mubr.bf16.mxu0 %v2184
  %3252 = vmatmul.mubr.bf16.gmra.mxu0 %v2146
  %v3253 = vpop.f32.mrf.mxu0
  %v3254 = vadd.f32 %v3118, %v3253
  %v3255 = vpop.f32.mrf.mxu0
  %v3256 = vpop.f32.mrf.mxu0
  %v3257 = vpop.f32.mrf.mxu0
  %3258 = vdwg.mxu0
  %3259 = vmatprep.subr.bf16.mxu0 0
  %3260 = vmatpush1.bf16.msra.mxu0 %v2762
  %3261 = vmatprep.subr.bf16.mxu0 0
  %3262 = vmatpush1.bf16.msra.mxu0 %v2761
  %3263 = vmatprep.subr.bf16.mxu0 0
  %3264 = vmatpush1.bf16.msra.mxu0 %v2760
  %3265 = vmatprep.subr.bf16.mxu0 0
  %3266 = vmatpush1.bf16.msra.mxu0 %v2759
  %3267 = vmatprep.subr.bf16.mxu0 0
  %3268 = vmatpush1.bf16.msra.mxu0 %v2758
  %3269 = vmatprep.subr.bf16.mxu0 0
  %3270 = vmatpush1.bf16.msra.mxu0 %v2757
  %3271 = vmatprep.subr.bf16.mxu0 0
  %3272 = vmatpush1.bf16.msra.mxu0 %v2756
  %3273 = vmatprep.subr.bf16.mxu0 0
  %3274 = vmatpush1.bf16.msra.mxu0 %v2755
  %3275 = vmatprep.subr.bf16.mxu0 0
  %3276 = vmatpush2.bf16.msra.mxu0 %v2770
  %3277 = vmatprep.subr.bf16.mxu0 0
  %3278 = vmatpush2.bf16.msra.mxu0 %v2769
  %3279 = vmatprep.subr.bf16.mxu0 0
  %3280 = vmatpush2.bf16.msra.mxu0 %v2768
  %3281 = vmatprep.subr.bf16.mxu0 0
  %3282 = vmatpush2.bf16.msra.mxu0 %v2767
  %3283 = vmatprep.subr.bf16.mxu0 0
  %3284 = vmatpush2.bf16.msra.mxu0 %v2766
  %3285 = vmatprep.subr.bf16.mxu0 0
  %3286 = vmatpush2.bf16.msra.mxu0 %v2765
  %3287 = vmatprep.subr.bf16.mxu0 0
  %3288 = vmatpush2.bf16.msra.mxu0 %v2764
  %3289 = vmatprep.subr.bf16.mxu0 0
  %3290 = vmatpush2.bf16.msra.mxu0 %v2763
  %3291 = vmatprep.mubr.bf16.mxu0 %v2224
  %3292 = vmatmul.mubr.bf16.gmra.mxu0 %v2186
  %v3293 = vpop.f32.mrf.mxu0
  %v3294 = vadd.f32 %v3158, %v3293
  %v3295 = vpop.f32.mrf.mxu0
  %v3296 = vpop.f32.mrf.mxu0
  %v3297 = vadd.f32 %v3161, %v3296
  %v3298 = vpop.f32.mrf.mxu0
  %3299 = vmatprep.mubr.bf16.mxu0 %v2225
  %3300 = vmatmul.mubr.bf16.gmra.mxu0 %v2187
  %v3301 = vpop.f32.mrf.mxu0
  %v3302 = vadd.f32 %v3166, %v3301
  %v3303 = vpop.f32.mrf.mxu0
  %v3304 = vpop.f32.mrf.mxu0
  %v3305 = vadd.f32 %v3169, %v3304
  %v3306 = vpop.f32.mrf.mxu0
  %3307 = vmatprep.mubr.bf16.mxu0 %v2226
  %3308 = vmatmul.mubr.bf16.gmra.mxu0 %v2188
  %v3309 = vpop.f32.mrf.mxu0
  %v3310 = vadd.f32 %v3174, %v3309
  %v3311 = vpop.f32.mrf.mxu0
  %v3312 = vpop.f32.mrf.mxu0
  %v3313 = vadd.f32 %v3177, %v3312
  %v3314 = vpop.f32.mrf.mxu0
  %3315 = vmatprep.mubr.bf16.mxu0 %v2227
  %3316 = vmatmul.mubr.bf16.gmra.mxu0 %v2189
  %v3317 = vpop.f32.mrf.mxu0
  %v3318 = vadd.f32 %v3182, %v3317
  %v3319 = vpop.f32.mrf.mxu0
  %v3320 = vpop.f32.mrf.mxu0
  %v3321 = vadd.f32 %v3185, %v3320
  %v3322 = vpop.f32.mrf.mxu0
  %3323 = vmatprep.mubr.bf16.mxu0 %v2228
  %3324 = vmatmul.mubr.bf16.gmra.mxu0 %v2190
  %v3325 = vpop.f32.mrf.mxu0
  %v3326 = vadd.f32 %v3190, %v3325
  %v3327 = vpop.f32.mrf.mxu0
  %v3328 = vpop.f32.mrf.mxu0
  %v3329 = vadd.f32 %v3193, %v3328
  %v3330 = vpop.f32.mrf.mxu0
  %3331 = vmatprep.mubr.bf16.mxu0 %v2229
  %3332 = vmatmul.mubr.bf16.gmra.mxu0 %v2191
  %v3333 = vpop.f32.mrf.mxu0
  %v3334 = vadd.f32 %v3198, %v3333
  %v3335 = vpop.f32.mrf.mxu0
  %v3336 = vpop.f32.mrf.mxu0
  %v3337 = vadd.f32 %v3201, %v3336
  %v3338 = vpop.f32.mrf.mxu0
  %3339 = vmatprep.mubr.bf16.mxu0 %v2230
  %3340 = vmatmul.mubr.bf16.gmra.mxu0 %v2192
  %v3341 = vpop.f32.mrf.mxu0
  %v3342 = vadd.f32 %v3206, %v3341
  %v3343 = vpop.f32.mrf.mxu0
  %v3344 = vpop.f32.mrf.mxu0
  %v3345 = vadd.f32 %v3209, %v3344
  %v3346 = vpop.f32.mrf.mxu0
  %3347 = vmatprep.mubr.bf16.mxu0 %v2231
  %3348 = vmatmul.mubr.bf16.gmra.mxu0 %v2193
  %v3349 = vpop.f32.mrf.mxu0
  %v3350 = vadd.f32 %v3214, %v3349
  %v3351 = vpop.f32.mrf.mxu0
  %v3352 = vpop.f32.mrf.mxu0
  %v3353 = vadd.f32 %v3217, %v3352
  %v3354 = vpop.f32.mrf.mxu0
  %3355 = vmatprep.mubr.bf16.mxu0 %v2232
  %3356 = vmatmul.mubr.bf16.gmra.mxu0 %v2194
  %v3357 = vpop.f32.mrf.mxu0
  %v3358 = vadd.f32 %v3222, %v3357
  %v3359 = vpop.f32.mrf.mxu0
  %v3360 = vpop.f32.mrf.mxu0
  %v3361 = vadd.f32 %v3225, %v3360
  %v3362 = vpop.f32.mrf.mxu0
  %3363 = vmatprep.mubr.bf16.mxu0 %v2233
  %3364 = vmatmul.mubr.bf16.gmra.mxu0 %v2195
  %v3365 = vpop.f32.mrf.mxu0
  %v3366 = vadd.f32 %v3230, %v3365
  %v3367 = vpop.f32.mrf.mxu0
  %v3368 = vpop.f32.mrf.mxu0
  %v3369 = vadd.f32 %v3233, %v3368
  %v3370 = vpop.f32.mrf.mxu0
  %3371 = vmatprep.mubr.bf16.mxu0 %v2234
  %3372 = vmatmul.mubr.bf16.gmra.mxu0 %v2196
  %v3373 = vpop.f32.mrf.mxu0
  %v3374 = vadd.f32 %v3238, %v3373
  %v3375 = vpop.f32.mrf.mxu0
  %v3376 = vpop.f32.mrf.mxu0
  %v3377 = vadd.f32 %v3241, %v3376
  %v3378 = vpop.f32.mrf.mxu0
  %3379 = vmatprep.mubr.bf16.mxu0 %v2235
  %3380 = vmatmul.mubr.bf16.gmra.mxu0 %v2197
  %v3381 = vpop.f32.mrf.mxu0
  %v3382 = vadd.f32 %v3246, %v3381
  %v3383 = vpop.f32.mrf.mxu0
  %v3384 = vpop.f32.mrf.mxu0
  %v3385 = vadd.f32 %v3249, %v3384
  %v3386 = vpop.f32.mrf.mxu0
  %3387 = vmatprep.mubr.bf16.mxu0 %v2236
  %3388 = vmatmul.mubr.bf16.gmra.mxu0 %v2198
  %v3389 = vpop.f32.mrf.mxu0
  %v3390 = vadd.f32 %v3254, %v3389
  %v3391 = vpop.f32.mrf.mxu0
  %v3392 = vpop.f32.mrf.mxu0
  %v3393 = vpop.f32.mrf.mxu0
  %3394 = vdwg.mxu0
  %3395 = vmatprep.subr.bf16.mxu0 0
  %3396 = vmatpush1.bf16.msra.mxu0 %v2778
  %3397 = vmatprep.subr.bf16.mxu0 0
  %3398 = vmatpush1.bf16.msra.mxu0 %v2777
  %3399 = vmatprep.subr.bf16.mxu0 0
  %3400 = vmatpush1.bf16.msra.mxu0 %v2776
  %3401 = vmatprep.subr.bf16.mxu0 0
  %3402 = vmatpush1.bf16.msra.mxu0 %v2775
  %3403 = vmatprep.subr.bf16.mxu0 0
  %3404 = vmatpush1.bf16.msra.mxu0 %v2774
  %3405 = vmatprep.subr.bf16.mxu0 0
  %3406 = vmatpush1.bf16.msra.mxu0 %v2773
  %3407 = vmatprep.subr.bf16.mxu0 0
  %3408 = vmatpush1.bf16.msra.mxu0 %v2772
  %3409 = vmatprep.subr.bf16.mxu0 0
  %3410 = vmatpush1.bf16.msra.mxu0 %v2771
  %3411 = vmatprep.subr.bf16.mxu0 0
  %3412 = vmatpush2.bf16.msra.mxu0 0
  %3413 = vmatprep.subr.bf16.mxu0 0
  %3414 = vmatpush2.bf16.msra.mxu0 0
  %3415 = vmatprep.subr.bf16.mxu0 0
  %3416 = vmatpush2.bf16.msra.mxu0 0
  %3417 = vmatprep.subr.bf16.mxu0 0
  %3418 = vmatpush2.bf16.msra.mxu0 0
  %3419 = vmatprep.subr.bf16.mxu0 0
  %3420 = vmatpush2.bf16.msra.mxu0 0
  %3421 = vmatprep.subr.bf16.mxu0 0
  %3422 = vmatpush2.bf16.msra.mxu0 0
  %3423 = vmatprep.subr.bf16.mxu0 0
  %3424 = vmatpush2.bf16.msra.mxu0 0
  %3425 = vmatprep.subr.bf16.mxu0 0
  %3426 = vmatpush2.bf16.msra.mxu0 0
  %3427 = vmatprep.mubr.bf16.mxu0 0
  %3428 = vmatmul.mubr.bf16.gmra.mxu0 %v2262
  %v3429 = vpop.f32.mrf.mxu0
  %v3430 = vadd.f32 %v3294, %v3429
  %v3431 = vpop.f32.mrf.mxu0
  %v3432 = vpop.f32.mrf.mxu0
  %v3433 = vadd.f32 %v3297, %v3432
  %v3434 = vpop.f32.mrf.mxu0
  %3435 = vmatprep.mubr.bf16.mxu0 0
  %3436 = vmatmul.mubr.bf16.gmra.mxu0 %v2263
  %v3437 = vpop.f32.mrf.mxu0
  %v3438 = vadd.f32 %v3302, %v3437
  %v3439 = vpop.f32.mrf.mxu0
  %v3440 = vpop.f32.mrf.mxu0
  %v3441 = vadd.f32 %v3305, %v3440
  %v3442 = vpop.f32.mrf.mxu0
  %3443 = vmatprep.mubr.bf16.mxu0 0
  %3444 = vmatmul.mubr.bf16.gmra.mxu0 %v2264
  %v3445 = vpop.f32.mrf.mxu0
  %v3446 = vadd.f32 %v3310, %v3445
  %v3447 = vpop.f32.mrf.mxu0
  %v3448 = vpop.f32.mrf.mxu0
  %v3449 = vadd.f32 %v3313, %v3448
  %v3450 = vpop.f32.mrf.mxu0
  %3451 = vmatprep.mubr.bf16.mxu0 0
  %3452 = vmatmul.mubr.bf16.gmra.mxu0 %v2265
  %v3453 = vpop.f32.mrf.mxu0
  %v3454 = vadd.f32 %v3318, %v3453
  %v3455 = vpop.f32.mrf.mxu0
  %v3456 = vpop.f32.mrf.mxu0
  %v3457 = vadd.f32 %v3321, %v3456
  %v3458 = vpop.f32.mrf.mxu0
  %3459 = vmatprep.mubr.bf16.mxu0 0
  %3460 = vmatmul.mubr.bf16.gmra.mxu0 %v2266
  %v3461 = vpop.f32.mrf.mxu0
  %v3462 = vadd.f32 %v3326, %v3461
  %v3463 = vpop.f32.mrf.mxu0
  %v3464 = vpop.f32.mrf.mxu0
  %v3465 = vadd.f32 %v3329, %v3464
  %v3466 = vpop.f32.mrf.mxu0
  %3467 = vmatprep.mubr.bf16.mxu0 0
  %3468 = vmatmul.mubr.bf16.gmra.mxu0 %v2267
  %v3469 = vpop.f32.mrf.mxu0
  %v3470 = vadd.f32 %v3334, %v3469
  %v3471 = vpop.f32.mrf.mxu0
  %v3472 = vpop.f32.mrf.mxu0
  %v3473 = vadd.f32 %v3337, %v3472
  %v3474 = vpop.f32.mrf.mxu0
  %3475 = vmatprep.mubr.bf16.mxu0 0
  %3476 = vmatmul.mubr.bf16.gmra.mxu0 %v2268
  %v3477 = vpop.f32.mrf.mxu0
  %v3478 = vadd.f32 %v3342, %v3477
  %v3479 = vpop.f32.mrf.mxu0
  %v3480 = vpop.f32.mrf.mxu0
  %v3481 = vadd.f32 %v3345, %v3480
  %v3482 = vpop.f32.mrf.mxu0
  %3483 = vmatprep.mubr.bf16.mxu0 0
  %3484 = vmatmul.mubr.bf16.gmra.mxu0 %v2269
  %v3485 = vpop.f32.mrf.mxu0
  %v3486 = vadd.f32 %v3350, %v3485
  %v3487 = vpop.f32.mrf.mxu0
  %v3488 = vpop.f32.mrf.mxu0
  %v3489 = vadd.f32 %v3353, %v3488
  %v3490 = vpop.f32.mrf.mxu0
  %3491 = vmatprep.mubr.bf16.mxu0 0
  %3492 = vmatmul.mubr.bf16.gmra.mxu0 %v2270
  %v3493 = vpop.f32.mrf.mxu0
  %v3494 = vadd.f32 %v3358, %v3493
  %v3495 = vpop.f32.mrf.mxu0
  %v3496 = vpop.f32.mrf.mxu0
  %v3497 = vadd.f32 %v3361, %v3496
  %v3498 = vpop.f32.mrf.mxu0
  %3499 = vmatprep.mubr.bf16.mxu0 0
  %3500 = vmatmul.mubr.bf16.gmra.mxu0 %v2271
  %v3501 = vpop.f32.mrf.mxu0
  %v3502 = vadd.f32 %v3366, %v3501
  %v3503 = vpop.f32.mrf.mxu0
  %v3504 = vpop.f32.mrf.mxu0
  %v3505 = vadd.f32 %v3369, %v3504
  %v3506 = vpop.f32.mrf.mxu0
  %3507 = vmatprep.mubr.bf16.mxu0 0
  %3508 = vmatmul.mubr.bf16.gmra.mxu0 %v2272
  %v3509 = vpop.f32.mrf.mxu0
  %v3510 = vadd.f32 %v3374, %v3509
  %v3511 = vpop.f32.mrf.mxu0
  %v3512 = vpop.f32.mrf.mxu0
  %v3513 = vadd.f32 %v3377, %v3512
  %v3514 = vpop.f32.mrf.mxu0
  %3515 = vmatprep.mubr.bf16.mxu0 0
  %3516 = vmatmul.mubr.bf16.gmra.mxu0 %v2273
  %v3517 = vpop.f32.mrf.mxu0
  %v3518 = vadd.f32 %v3382, %v3517
  %v3519 = vpop.f32.mrf.mxu0
  %v3520 = vpop.f32.mrf.mxu0
  %v3521 = vadd.f32 %v3385, %v3520
  %v3522 = vpop.f32.mrf.mxu0
  %3523 = vmatprep.mubr.bf16.mxu0 0
  %3524 = vmatmul.mubr.bf16.gmra.mxu0 %v2274
  %v3525 = vpop.f32.mrf.mxu0
  %v3526 = vadd.f32 %v3390, %v3525
  %v3527 = vpop.f32.mrf.mxu0
  %v3528 = vpop.f32.mrf.mxu0
  %v3529 = vpop.f32.mrf.mxu0
  %3530 = vdwg.mxu0
  %v3531 = vld [vmem:[%s6] sm:$0x1]
  %v3533 = vlaneseq
  %v3534 = vshrl.u32 %v3533, 7
  %v3535 = vsub.s32 0, %v3534
  %v3536 = vrot.slane %v3531, %v3535
  %v3538 = vmul.f32 %v3430, %v3536
  %v3539 = vmul.f32 %v3433, %v3536
  %v3540 = vmul.f32 %v3438, %v3536
  %v3541 = vmul.f32 %v3441, %v3536
  %v3542 = vmul.f32 %v3446, %v3536
  %v3543 = vmul.f32 %v3449, %v3536
  %v3544 = vmul.f32 %v3454, %v3536
  %v3545 = vmul.f32 %v3457, %v3536
  %v3546 = vmul.f32 %v3462, %v3536
  %v3547 = vmul.f32 %v3465, %v3536
  %v3548 = vmul.f32 %v3470, %v3536
  %v3549 = vmul.f32 %v3473, %v3536
  %v3550 = vmul.f32 %v3478, %v3536
  %v3551 = vmul.f32 %v3481, %v3536
  %v3552 = vmul.f32 %v3486, %v3536
  %v3553 = vmul.f32 %v3489, %v3536
  %v3554 = vmul.f32 %v3494, %v3536
  %v3555 = vmul.f32 %v3497, %v3536
  %v3556 = vmul.f32 %v3502, %v3536
  %v3557 = vmul.f32 %v3505, %v3536
  %v3558 = vmul.f32 %v3510, %v3536
  %v3559 = vmul.f32 %v3513, %v3536
  %v3560 = vmul.f32 %v3518, %v3536
  %v3561 = vmul.f32 %v3521, %v3536
  %v3562 = vmul.f32 %v3526, %v3536
  %v3563 = vld [vmem:[%s7] sm:$0x1]
  %v3565 = vlaneseq
  %v3566 = vshrl.u32 %v3565, 7
  %v3567 = vsub.s32 0, %v3566
  %v3568 = vrot.slane %v3563, %v3567
  %v3570 = vadd.f32 %v3538, %v3568
  %v3571 = vadd.f32 %v3539, %v3568
  %v3572 = vadd.f32 %v3540, %v3568
  %v3573 = vadd.f32 %v3541, %v3568
  %v3574 = vadd.f32 %v3542, %v3568
  %v3575 = vadd.f32 %v3543, %v3568
  %v3576 = vadd.f32 %v3544, %v3568
  %v3577 = vadd.f32 %v3545, %v3568
  %v3578 = vadd.f32 %v3546, %v3568
  %v3579 = vadd.f32 %v3547, %v3568
  %v3580 = vadd.f32 %v3548, %v3568
  %v3581 = vadd.f32 %v3549, %v3568
  %v3582 = vadd.f32 %v3550, %v3568
  %v3583 = vadd.f32 %v3551, %v3568
  %v3584 = vadd.f32 %v3552, %v3568
  %v3585 = vadd.f32 %v3553, %v3568
  %v3586 = vadd.f32 %v3554, %v3568
  %v3587 = vadd.f32 %v3555, %v3568
  %v3588 = vadd.f32 %v3556, %v3568
  %v3589 = vadd.f32 %v3557, %v3568
  %v3590 = vadd.f32 %v3558, %v3568
  %v3591 = vadd.f32 %v3559, %v3568
  %v3592 = vadd.f32 %v3560, %v3568
  %v3593 = vadd.f32 %v3561, %v3568
  %v3594 = vadd.f32 %v3562, %v3568
  %v3595 = vmax.f32 %v3570, 0.0
  %v3596 = vmax.f32 %v3571, 0.0
  %v3597 = vmax.f32 %v3572, 0.0
  %v3598 = vmax.f32 %v3573, 0.0
  %v3599 = vmax.f32 %v3574, 0.0
  %v3600 = vmax.f32 %v3575, 0.0
  %v3601 = vmax.f32 %v3576, 0.0
  %v3602 = vmax.f32 %v3577, 0.0
  %v3603 = vmax.f32 %v3578, 0.0
  %v3604 = vmax.f32 %v3579, 0.0
  %v3605 = vmax.f32 %v3580, 0.0
  %v3606 = vmax.f32 %v3581, 0.0
  %v3607 = vmax.f32 %v3582, 0.0
  %v3608 = vmax.f32 %v3583, 0.0
  %v3609 = vmax.f32 %v3584, 0.0
  %v3610 = vmax.f32 %v3585, 0.0
  %v3611 = vmax.f32 %v3586, 0.0
  %v3612 = vmax.f32 %v3587, 0.0
  %v3613 = vmax.f32 %v3588, 0.0
  %v3614 = vmax.f32 %v3589, 0.0
  %v3615 = vmax.f32 %v3590, 0.0
  %v3616 = vmax.f32 %v3591, 0.0
  %v3617 = vmax.f32 %v3592, 0.0
  %v3618 = vmax.f32 %v3593, 0.0
  %v3619 = vmax.f32 %v3594, 0.0
  %3620 = vst [vmem:[#allocation6] sm:$0xff] %v3595
  %3621 = vst [vmem:[#allocation6 + $0x8] sm:$0xff] %v3596
  %3622 = vst [vmem:[#allocation6 + $0x10] sm:$0xff] %v3597
  %3623 = vst [vmem:[#allocation6 + $0x18] sm:$0xff] %v3598
  %3624 = vst [vmem:[#allocation6 + $0x20] sm:$0xff] %v3599
  %3625 = vst [vmem:[#allocation6 + $0x28] sm:$0xff] %v3600
  %3626 = vst [vmem:[#allocation6 + $0x30] sm:$0xff] %v3601
  %3627 = vst [vmem:[#allocation6 + $0x38] sm:$0xff] %v3602
  %3628 = vst [vmem:[#allocation6 + $0x40] sm:$0xff] %v3603
  %3629 = vst [vmem:[#allocation6 + $0x48] sm:$0xff] %v3604
  %3630 = vst [vmem:[#allocation6 + $0x50] sm:$0xff] %v3605
  %3631 = vst [vmem:[#allocation6 + $0x58] sm:$0xff] %v3606
  %3632 = vst [vmem:[#allocation6 + $0x60] sm:$0xff] %v3607
  %3633 = vst [vmem:[#allocation6 + $0x68] sm:$0xff] %v3608
  %3634 = vst [vmem:[#allocation6 + $0x70] sm:$0xff] %v3609
  %3635 = vst [vmem:[#allocation6 + $0x78] sm:$0xff] %v3610
  %3636 = vst [vmem:[#allocation6 + $0x80] sm:$0xff] %v3611
  %3637 = vst [vmem:[#allocation6 + $0x88] sm:$0xff] %v3612
  %3638 = vst [vmem:[#allocation6 + $0x90] sm:$0xff] %v3613
  %3639 = vst [vmem:[#allocation6 + $0x98] sm:$0xff] %v3614
  %3640 = vst [vmem:[#allocation6 + $0xa0] sm:$0xff] %v3615
  %3641 = vst [vmem:[#allocation6 + $0xa8] sm:$0xff] %v3616
  %3642 = vst [vmem:[#allocation6 + $0xb0] sm:$0xff] %v3617
  %3643 = vst [vmem:[#allocation6 + $0xb8] sm:$0xff] %v3618
  %3644 = vst [vmem:[#allocation6 + $0xc0] sm:$0xff] %v3619
  %v3645 = vld [vmem:[#allocation6] sm:$0xff]
  %v3646 = vld [vmem:[#allocation6 + $0x8] sm:$0xff]
  %v3647 = vld [vmem:[#allocation6 + $0x10] sm:$0xff]
  %v3648 = vld [vmem:[#allocation6 + $0x18] sm:$0xff]
  %v3649 = vld [vmem:[#allocation6 + $0x20] sm:$0xff]
  %v3650 = vld [vmem:[#allocation6 + $0x28] sm:$0xff]
  %v3651 = vld [vmem:[#allocation6 + $0x30] sm:$0xff]
  %v3652 = vld [vmem:[#allocation6 + $0x38] sm:$0xff]
  %v3653 = vld [vmem:[#allocation6 + $0x40] sm:$0xff]
  %v3654 = vld [vmem:[#allocation6 + $0x48] sm:$0xff]
  %v3655 = vld [vmem:[#allocation6 + $0x50] sm:$0xff]
  %v3656 = vld [vmem:[#allocation6 + $0x58] sm:$0xff]
  %v3657 = vld [vmem:[#allocation6 + $0x60] sm:$0xff]
  %v3658 = vld [vmem:[#allocation6 + $0x68] sm:$0xff]
  %v3659 = vld [vmem:[#allocation6 + $0x70] sm:$0xff]
  %v3660 = vld [vmem:[#allocation6 + $0x78] sm:$0xff]
  %v3661 = vld [vmem:[#allocation6 + $0x80] sm:$0xff]
  %v3662 = vld [vmem:[#allocation6 + $0x88] sm:$0xff]
  %v3663 = vld [vmem:[#allocation6 + $0x90] sm:$0xff]
  %v3664 = vld [vmem:[#allocation6 + $0x98] sm:$0xff]
  %v3665 = vld [vmem:[#allocation6 + $0xa0] sm:$0xff]
  %v3666 = vld [vmem:[#allocation6 + $0xa8] sm:$0xff]
  %v3667 = vld [vmem:[#allocation6 + $0xb0] sm:$0xff]
  %v3668 = vld [vmem:[#allocation6 + $0xb8] sm:$0x1f]
  %v3669 = vld [vmem:[#allocation6 + $0x1] sm:$0xff]
  %v3670 = vld [vmem:[#allocation6 + $0x9] sm:$0xff]
  %v3671 = vld [vmem:[#allocation6 + $0x11] sm:$0xff]
  %v3672 = vld [vmem:[#allocation6 + $0x19] sm:$0xff]
  %v3673 = vld [vmem:[#allocation6 + $0x21] sm:$0xff]
  %v3674 = vld [vmem:[#allocation6 + $0x29] sm:$0xff]
  %v3675 = vld [vmem:[#allocation6 + $0x31] sm:$0xff]
  %v3676 = vld [vmem:[#allocation6 + $0x39] sm:$0xff]
  %v3677 = vld [vmem:[#allocation6 + $0x41] sm:$0xff]
  %v3678 = vld [vmem:[#allocation6 + $0x49] sm:$0xff]
  %v3679 = vld [vmem:[#allocation6 + $0x51] sm:$0xff]
  %v3680 = vld [vmem:[#allocation6 + $0x59] sm:$0xff]
  %v3681 = vld [vmem:[#allocation6 + $0x61] sm:$0xff]
  %v3682 = vld [vmem:[#allocation6 + $0x69] sm:$0xff]
  %v3683 = vld [vmem:[#allocation6 + $0x71] sm:$0xff]
  %v3684 = vld [vmem:[#allocation6 + $0x79] sm:$0xff]
  %v3685 = vld [vmem:[#allocation6 + $0x81] sm:$0xff]
  %v3686 = vld [vmem:[#allocation6 + $0x89] sm:$0xff]
  %v3687 = vld [vmem:[#allocation6 + $0x91] sm:$0xff]
  %v3688 = vld [vmem:[#allocation6 + $0x99] sm:$0xff]
  %v3689 = vld [vmem:[#allocation6 + $0xa1] sm:$0xff]
  %v3690 = vld [vmem:[#allocation6 + $0xa9] sm:$0xff]
  %v3691 = vld [vmem:[#allocation6 + $0xb1] sm:$0xff]
  %v3692 = vld [vmem:[#allocation6 + $0xb9] sm:$0x1f]
  %v3693 = vmax.f32 %v3645, %v3669
  %v3694 = vmax.f32 %v3646, %v3670
  %v3695 = vmax.f32 %v3647, %v3671
  %v3696 = vmax.f32 %v3648, %v3672
  %v3697 = vmax.f32 %v3649, %v3673
  %v3698 = vmax.f32 %v3650, %v3674
  %v3699 = vmax.f32 %v3651, %v3675
  %v3700 = vmax.f32 %v3652, %v3676
  %v3701 = vmax.f32 %v3653, %v3677
  %v3702 = vmax.f32 %v3654, %v3678
  %v3703 = vmax.f32 %v3655, %v3679
  %v3704 = vmax.f32 %v3656, %v3680
  %v3705 = vmax.f32 %v3657, %v3681
  %v3706 = vmax.f32 %v3658, %v3682
  %v3707 = vmax.f32 %v3659, %v3683
  %v3708 = vmax.f32 %v3660, %v3684
  %v3709 = vmax.f32 %v3661, %v3685
  %v3710 = vmax.f32 %v3662, %v3686
  %v3711 = vmax.f32 %v3663, %v3687
  %v3712 = vmax.f32 %v3664, %v3688
  %v3713 = vmax.f32 %v3665, %v3689
  %v3714 = vmax.f32 %v3666, %v3690
  %v3715 = vmax.f32 %v3667, %v3691
  %v3716 = vmax.f32 %v3668, %v3692
  %v3717 = vld [vmem:[#allocation6 + $0xa] sm:$0xff]
  %v3718 = vld [vmem:[#allocation6 + $0x12] sm:$0xff]
  %v3719 = vld [vmem:[#allocation6 + $0x1a] sm:$0xff]
  %v3720 = vld [vmem:[#allocation6 + $0x22] sm:$0xff]
  %v3721 = vld [vmem:[#allocation6 + $0x2a] sm:$0xff]
  %v3722 = vld [vmem:[#allocation6 + $0x32] sm:$0xff]
  %v3723 = vld [vmem:[#allocation6 + $0x3a] sm:$0xff]
  %v3724 = vld [vmem:[#allocation6 + $0x42] sm:$0xff]
  %v3725 = vld [vmem:[#allocation6 + $0x4a] sm:$0xff]
  %v3726 = vld [vmem:[#allocation6 + $0x52] sm:$0xff]
  %v3727 = vld [vmem:[#allocation6 + $0x5a] sm:$0xff]
  %v3728 = vld [vmem:[#allocation6 + $0x62] sm:$0xff]
  %v3729 = vld [vmem:[#allocation6 + $0x6a] sm:$0xff]
  %v3730 = vld [vmem:[#allocation6 + $0x72] sm:$0xff]
  %v3731 = vld [vmem:[#allocation6 + $0x7a] sm:$0xff]
  %v3732 = vld [vmem:[#allocation6 + $0x82] sm:$0xff]
  %v3733 = vld [vmem:[#allocation6 + $0x8a] sm:$0xff]
  %v3734 = vld [vmem:[#allocation6 + $0x92] sm:$0xff]
  %v3735 = vld [vmem:[#allocation6 + $0x9a] sm:$0xff]
  %v3736 = vld [vmem:[#allocation6 + $0xa2] sm:$0xff]
  %v3737 = vld [vmem:[#allocation6 + $0xaa] sm:$0xff]
  %v3738 = vld [vmem:[#allocation6 + $0xb2] sm:$0xff]
  %v3739 = vld [vmem:[#allocation6 + $0xba] sm:$0xff]
  %v3740 = vld [vmem:[#allocation6 + $0xc2] sm:$0x1f]
  %v3741 = vld [vmem:[#allocation6 + $0xb] sm:$0xff]
  %v3742 = vld [vmem:[#allocation6 + $0x13] sm:$0xff]
  %v3743 = vld [vmem:[#allocation6 + $0x1b] sm:$0xff]
  %v3744 = vld [vmem:[#allocation6 + $0x23] sm:$0xff]
  %v3745 = vld [vmem:[#allocation6 + $0x2b] sm:$0xff]
  %v3746 = vld [vmem:[#allocation6 + $0x33] sm:$0xff]
  %v3747 = vld [vmem:[#allocation6 + $0x3b] sm:$0xff]
  %v3748 = vld [vmem:[#allocation6 + $0x43] sm:$0xff]
  %v3749 = vld [vmem:[#allocation6 + $0x4b] sm:$0xff]
  %v3750 = vld [vmem:[#allocation6 + $0x53] sm:$0xff]
  %v3751 = vld [vmem:[#allocation6 + $0x5b] sm:$0xff]
  %v3752 = vld [vmem:[#allocation6 + $0x63] sm:$0xff]
  %v3753 = vld [vmem:[#allocation6 + $0x6b] sm:$0xff]
  %v3754 = vld [vmem:[#allocation6 + $0x73] sm:$0xff]
  %v3755 = vld [vmem:[#allocation6 + $0x7b] sm:$0xff]
  %v3756 = vld [vmem:[#allocation6 + $0x83] sm:$0xff]
  %v3757 = vld [vmem:[#allocation6 + $0x8b] sm:$0xff]
  %v3758 = vld [vmem:[#allocation6 + $0x93] sm:$0xff]
  %v3759 = vld [vmem:[#allocation6 + $0x9b] sm:$0xff]
  %v3760 = vld [vmem:[#allocation6 + $0xa3] sm:$0xff]
  %v3761 = vld [vmem:[#allocation6 + $0xab] sm:$0xff]
  %v3762 = vld [vmem:[#allocation6 + $0xb3] sm:$0xff]
  %v3763 = vld [vmem:[#allocation6 + $0xbb] sm:$0xff]
  %v3764 = vld [vmem:[#allocation6 + $0xc3] sm:$0x1f]
  %v3765 = vmax.f32 %v3717, %v3741
  %v3766 = vmax.f32 %v3718, %v3742
  %v3767 = vmax.f32 %v3719, %v3743
  %v3768 = vmax.f32 %v3720, %v3744
  %v3769 = vmax.f32 %v3721, %v3745
  %v3770 = vmax.f32 %v3722, %v3746
  %v3771 = vmax.f32 %v3723, %v3747
  %v3772 = vmax.f32 %v3724, %v3748
  %v3773 = vmax.f32 %v3725, %v3749
  %v3774 = vmax.f32 %v3726, %v3750
  %v3775 = vmax.f32 %v3727, %v3751
  %v3776 = vmax.f32 %v3728, %v3752
  %v3777 = vmax.f32 %v3729, %v3753
  %v3778 = vmax.f32 %v3730, %v3754
  %v3779 = vmax.f32 %v3731, %v3755
  %v3780 = vmax.f32 %v3732, %v3756
  %v3781 = vmax.f32 %v3733, %v3757
  %v3782 = vmax.f32 %v3734, %v3758
  %v3783 = vmax.f32 %v3735, %v3759
  %v3784 = vmax.f32 %v3736, %v3760
  %v3785 = vmax.f32 %v3737, %v3761
  %v3786 = vmax.f32 %v3738, %v3762
  %v3787 = vmax.f32 %v3739, %v3763
  %v3788 = vmax.f32 %v3740, %v3764
  %v3789 = vmax.f32 %v3693, %v3765
  %v3790 = vmax.f32 %v3694, %v3766
  %v3791 = vmax.f32 %v3695, %v3767
  %v3792 = vmax.f32 %v3696, %v3768
  %v3793 = vmax.f32 %v3697, %v3769
  %v3794 = vmax.f32 %v3698, %v3770
  %v3795 = vmax.f32 %v3699, %v3771
  %v3796 = vmax.f32 %v3700, %v3772
  %v3797 = vmax.f32 %v3701, %v3773
  %v3798 = vmax.f32 %v3702, %v3774
  %v3799 = vmax.f32 %v3703, %v3775
  %v3800 = vmax.f32 %v3704, %v3776
  %v3801 = vmax.f32 %v3705, %v3777
  %v3802 = vmax.f32 %v3706, %v3778
  %v3803 = vmax.f32 %v3707, %v3779
  %v3804 = vmax.f32 %v3708, %v3780
  %v3805 = vmax.f32 %v3709, %v3781
  %v3806 = vmax.f32 %v3710, %v3782
  %v3807 = vmax.f32 %v3711, %v3783
  %v3808 = vmax.f32 %v3712, %v3784
  %v3809 = vmax.f32 %v3713, %v3785
  %v3810 = vmax.f32 %v3714, %v3786
  %v3811 = vmax.f32 %v3715, %v3787
  %v3812 = vmax.f32 %v3716, %v3788
  %v3813 = vld [vmem:[%s8] sm:$0xff]
  %v3814 = vld [vmem:[%s8 + $0x8] sm:$0xff]
  %v3815 = vld [vmem:[%s8 + $0x10] sm:$0xff]
  %v3816 = vld [vmem:[%s8 + $0x18] sm:$0xff]
  %v3817 = vld [vmem:[%s8 + $0x20] sm:$0xff]
  %v3818 = vld [vmem:[%s8 + $0x28] sm:$0xff]
  %v3819 = vld [vmem:[%s8 + $0x30] sm:$0xff]
  %v3820 = vld [vmem:[%s8 + $0x38] sm:$0xff]
  %v3821 = vld [vmem:[%s8 + $0x40] sm:$0xff]
  %v3822 = vld [vmem:[%s8 + $0x48] sm:$0xff]
  %v3823 = vld [vmem:[%s8 + $0x50] sm:$0xff]
  %v3824 = vld [vmem:[%s8 + $0x58] sm:$0xff]
  %v3825 = vld [vmem:[%s8 + $0x60] sm:$0xff]
  %v3826 = vld [vmem:[%s8 + $0x68] sm:$0xff]
  %v3827 = vld [vmem:[%s8 + $0x70] sm:$0xff]
  %v3828 = vld [vmem:[%s8 + $0x78] sm:$0xff]
  %v3829 = vld [vmem:[%s8 + $0x80] sm:$0xff]
  %v3830 = vld [vmem:[%s8 + $0x88] sm:$0xff]
  %v3831 = vld [vmem:[%s8 + $0x90] sm:$0xff]
  %v3832 = vld [vmem:[%s8 + $0x98] sm:$0xff]
  %v3833 = vld [vmem:[%s8 + $0xa0] sm:$0x3f]
  %v3834 = vld [vmem:[%s8 + $0xa8] sm:$0x3f]
  %vm3835 = vcmask 498688
  %v3837 = vsel %vm3835, %v3814, 0
  %v3840 = vsel %vm3835, %v3816, 0
  %v3843 = vsel %vm3835, %v3818, 0
  %v3846 = vsel %vm3835, %v3820, 0
  %v3849 = vsel %vm3835, %v3822, 0
  %v3852 = vsel %vm3835, %v3824, 0
  %v3855 = vsel %vm3835, %v3826, 0
  %v3858 = vsel %vm3835, %v3828, 0
  %v3861 = vsel %vm3835, %v3830, 0
  %v3864 = vsel %vm3835, %v3832, 0
  %v3867 = vsel %vm3835, %v3834, 0
  %vm3869 = vcmask 1044480
  %v3871 = vsel %vm3869, %v3812, 0
  %3873 = vmatprep.subr.mxu0 0.0
  %3874 = vmatpush1.msra.mxu0 %v3804
  %3875 = vmatprep.subr.mxu0 0.0
  %3876 = vmatpush1.msra.mxu0 %v3803
  %3877 = vmatprep.subr.mxu0 0.0
  %3878 = vmatpush1.msra.mxu0 %v3802
  %3879 = vmatprep.subr.mxu0 0.0
  %3880 = vmatpush1.msra.mxu0 %v3801
  %3881 = vmatprep.subr.mxu0 0.0
  %3882 = vmatpush1.msra.mxu0 %v3800
  %3883 = vmatprep.subr.mxu0 0.0
  %3884 = vmatpush1.msra.mxu0 %v3799
  %3885 = vmatprep.subr.mxu0 0.0
  %3886 = vmatpush1.msra.mxu0 %v3798
  %3887 = vmatprep.subr.mxu0 0.0
  %3888 = vmatpush1.msra.mxu0 %v3797
  %3889 = vmatprep.subr.mxu0 0.0
  %3890 = vmatpush1.msra.mxu0 %v3796
  %3891 = vmatprep.subr.mxu0 0.0
  %3892 = vmatpush1.msra.mxu0 %v3795
  %3893 = vmatprep.subr.mxu0 0.0
  %3894 = vmatpush1.msra.mxu0 %v3794
  %3895 = vmatprep.subr.mxu0 0.0
  %3896 = vmatpush1.msra.mxu0 %v3793
  %3897 = vmatprep.subr.mxu0 0.0
  %3898 = vmatpush1.msra.mxu0 %v3792
  %3899 = vmatprep.subr.mxu0 0.0
  %3900 = vmatpush1.msra.mxu0 %v3791
  %3901 = vmatprep.subr.mxu0 0.0
  %3902 = vmatpush1.msra.mxu0 %v3790
  %3903 = vmatprep.subr.mxu0 0.0
  %3904 = vmatpush1.msra.mxu0 %v3789
  %3905 = vmatprep.subr.mxu0 0.0
  %3906 = vmatpush2.msra.mxu0 0.0
  %3907 = vmatprep.subr.mxu0 0.0
  %3908 = vmatpush2.msra.mxu0 0.0
  %3909 = vmatprep.subr.mxu0 0.0
  %3910 = vmatpush2.msra.mxu0 0.0
  %3911 = vmatprep.subr.mxu0 0.0
  %3912 = vmatpush2.msra.mxu0 0.0
  %3913 = vmatprep.subr.mxu0 0.0
  %3914 = vmatpush2.msra.mxu0 0.0
  %3915 = vmatprep.subr.mxu0 0.0
  %3916 = vmatpush2.msra.mxu0 0.0
  %3917 = vmatprep.subr.mxu0 0.0
  %3918 = vmatpush2.msra.mxu0 0.0
  %3919 = vmatprep.subr.mxu0 0.0
  %3920 = vmatpush2.msra.mxu0 0.0
  %3921 = vmatprep.subr.mxu0 0.0
  %3922 = vmatpush2.msra.mxu0 %v3871
  %3923 = vmatprep.subr.mxu0 0.0
  %3924 = vmatpush2.msra.mxu0 %v3811
  %3925 = vmatprep.subr.mxu0 0.0
  %3926 = vmatpush2.msra.mxu0 %v3810
  %3927 = vmatprep.subr.mxu0 0.0
  %3928 = vmatpush2.msra.mxu0 %v3809
  %3929 = vmatprep.subr.mxu0 0.0
  %3930 = vmatpush2.msra.mxu0 %v3808
  %3931 = vmatprep.subr.mxu0 0.0
  %3932 = vmatpush2.msra.mxu0 %v3807
  %3933 = vmatprep.subr.mxu0 0.0
  %3934 = vmatpush2.msra.mxu0 %v3806
  %3935 = vmatprep.subr.mxu0 0.0
  %3936 = vmatpush2.msra.mxu0 %v3805
  %3937 = vmatprep.mubr.f32.mxu0 %v3837
  %3938 = vmatmul.mubr.f32.gmra.mxu0 %v3813
  %v3939 = vpop.f32.mrf.mxu0
  %v3940 = vadd.f32 0.0, %v3939
  %v3941 = vpop.f32.mrf.mxu0
  %3942 = vmatprep.mubr.f32.mxu0 %v3840
  %3943 = vmatmul.mubr.f32.gmra.mxu0 %v3815
  %v3944 = vpop.f32.mrf.mxu0
  %v3945 = vadd.f32 0.0, %v3944
  %v3946 = vpop.f32.mrf.mxu0
  %3947 = vmatprep.mubr.f32.mxu0 %v3843
  %3948 = vmatmul.mubr.f32.gmra.mxu0 %v3817
  %v3949 = vpop.f32.mrf.mxu0
  %v3950 = vadd.f32 0.0, %v3949
  %v3951 = vpop.f32.mrf.mxu0
  %3952 = vmatprep.mubr.f32.mxu0 %v3846
  %3953 = vmatmul.mubr.f32.gmra.mxu0 %v3819
  %v3954 = vpop.f32.mrf.mxu0
  %v3955 = vadd.f32 0.0, %v3954
  %v3956 = vpop.f32.mrf.mxu0
  %3957 = vmatprep.mubr.f32.mxu0 %v3849
  %3958 = vmatmul.mubr.f32.gmra.mxu0 %v3821
  %v3959 = vpop.f32.mrf.mxu0
  %v3960 = vadd.f32 0.0, %v3959
  %v3961 = vpop.f32.mrf.mxu0
  %3962 = vmatprep.mubr.f32.mxu0 %v3852
  %3963 = vmatmul.mubr.f32.gmra.mxu0 %v3823
  %v3964 = vpop.f32.mrf.mxu0
  %v3965 = vadd.f32 0.0, %v3964
  %v3966 = vpop.f32.mrf.mxu0
  %3967 = vmatprep.mubr.f32.mxu0 %v3855
  %3968 = vmatmul.mubr.f32.gmra.mxu0 %v3825
  %v3969 = vpop.f32.mrf.mxu0
  %v3970 = vadd.f32 0.0, %v3969
  %v3971 = vpop.f32.mrf.mxu0
  %3972 = vmatprep.mubr.f32.mxu0 %v3858
  %3973 = vmatmul.mubr.f32.gmra.mxu0 %v3827
  %v3974 = vpop.f32.mrf.mxu0
  %v3975 = vadd.f32 0.0, %v3974
  %v3976 = vpop.f32.mrf.mxu0
  %3977 = vmatprep.mubr.f32.mxu0 %v3861
  %3978 = vmatmul.mubr.f32.gmra.mxu0 %v3829
  %v3979 = vpop.f32.mrf.mxu0
  %v3980 = vadd.f32 0.0, %v3979
  %v3981 = vpop.f32.mrf.mxu0
  %3982 = vmatprep.mubr.f32.mxu0 %v3864
  %3983 = vmatmul.mubr.f32.gmra.mxu0 %v3831
  %v3984 = vpop.f32.mrf.mxu0
  %v3985 = vadd.f32 0.0, %v3984
  %v3986 = vpop.f32.mrf.mxu0
  %3987 = vmatprep.mubr.f32.mxu0 %v3867
  %3988 = vmatmul.mubr.f32.gmra.mxu0 %v3833
  %v3989 = vpop.f32.mrf.mxu0
  %v3990 = vadd.f32 0.0, %v3989
  %v3991 = vpop.f32.mrf.mxu0
  %3992 = vdwg.mxu0
  %3993 = vst [vmem:[#allocation3] sm:$0xff] %v3940
  %3994 = vst [vmem:[#allocation3 + $0x8] sm:$0xff] %v3945
  %3995 = vst [vmem:[#allocation3 + $0x10] sm:$0xff] %v3950
  %3996 = vst [vmem:[#allocation3 + $0x18] sm:$0xff] %v3955
  %3997 = vst [vmem:[#allocation3 + $0x20] sm:$0xff] %v3960
  %3998 = vst [vmem:[#allocation3 + $0x28] sm:$0xff] %v3965
  %3999 = vst [vmem:[#allocation3 + $0x30] sm:$0xff] %v3970
  %4000 = vst [vmem:[#allocation3 + $0x38] sm:$0xff] %v3975
  %4001 = vst [vmem:[#allocation3 + $0x40] sm:$0xff] %v3980
  %4002 = vst [vmem:[#allocation3 + $0x48] sm:$0xff] %v3985
  %4003 = vst [vmem:[#allocation3 + $0x50] sm:$0x3f] %v3990
  %v4004 = vld [vmem:[#allocation3] sm:$0xff]
  %v4005 = vld [vmem:[#allocation3 + $0x8] sm:$0xff]
  %v4006 = vld [vmem:[#allocation3 + $0x10] sm:$0xff]
  %v4007 = vld [vmem:[#allocation3 + $0x18] sm:$0xff]
  %v4008 = vld [vmem:[#allocation3 + $0x20] sm:$0xff]
  %v4009 = vld [vmem:[#allocation3 + $0x28] sm:$0xff]
  %v4010 = vld [vmem:[#allocation3 + $0x30] sm:$0xff]
  %v4011 = vld [vmem:[#allocation3 + $0x38] sm:$0xff]
  %v4012 = vld [vmem:[#allocation3 + $0x40] sm:$0xff]
  %v4013 = vpack.c.bf16 %v4005, %v4004
  %v4014 = vpack.c.bf16 %v4007, %v4006
  %v4015 = vpack.c.bf16 %v4009, %v4008
  %v4016 = vpack.c.bf16 %v4011, %v4010
  %v4017 = vpack.c.bf16 %v4012, %v4012
  %v4018 = vld [vmem:[#allocation3 + $0x1] sm:$0xff]
  %v4019 = vld [vmem:[#allocation3 + $0x9] sm:$0xff]
  %v4020 = vld [vmem:[#allocation3 + $0x11] sm:$0xff]
  %v4021 = vld [vmem:[#allocation3 + $0x19] sm:$0xff]
  %v4022 = vld [vmem:[#allocation3 + $0x21] sm:$0xff]
  %v4023 = vld [vmem:[#allocation3 + $0x29] sm:$0xff]
  %v4024 = vld [vmem:[#allocation3 + $0x31] sm:$0xff]
  %v4025 = vld [vmem:[#allocation3 + $0x39] sm:$0xff]
  %v4026 = vld [vmem:[#allocation3 + $0x41] sm:$0xff]
  %v4027 = vpack.c.bf16 %v4019, %v4018
  %v4028 = vpack.c.bf16 %v4021, %v4020
  %v4029 = vpack.c.bf16 %v4023, %v4022
  %v4030 = vpack.c.bf16 %v4025, %v4024
  %v4031 = vpack.c.bf16 %v4026, %v4026
  %v4032 = vld [vmem:[#allocation3 + $0x2] sm:$0xff]
  %v4033 = vld [vmem:[#allocation3 + $0xa] sm:$0xff]
  %v4034 = vld [vmem:[#allocation3 + $0x12] sm:$0xff]
  %v4035 = vld [vmem:[#allocation3 + $0x1a] sm:$0xff]
  %v4036 = vld [vmem:[#allocation3 + $0x22] sm:$0xff]
  %v4037 = vld [vmem:[#allocation3 + $0x2a] sm:$0xff]
  %v4038 = vld [vmem:[#allocation3 + $0x32] sm:$0xff]
  %v4039 = vld [vmem:[#allocation3 + $0x3a] sm:$0xff]
  %v4040 = vld [vmem:[#allocation3 + $0x42] sm:$0xff]
  %v4041 = vpack.c.bf16 %v4033, %v4032
  %v4042 = vpack.c.bf16 %v4035, %v4034
  %v4043 = vpack.c.bf16 %v4037, %v4036
  %v4044 = vpack.c.bf16 %v4039, %v4038
  %v4045 = vpack.c.bf16 %v4040, %v4040
  %v4046 = vld [vmem:[#allocation3 + $0x6] sm:$0xff]
  %v4047 = vld [vmem:[#allocation3 + $0xe] sm:$0xff]
  %v4048 = vld [vmem:[#allocation3 + $0x16] sm:$0xff]
  %v4049 = vld [vmem:[#allocation3 + $0x1e] sm:$0xff]
  %v4050 = vld [vmem:[#allocation3 + $0x26] sm:$0xff]
  %v4051 = vld [vmem:[#allocation3 + $0x2e] sm:$0xff]
  %v4052 = vld [vmem:[#allocation3 + $0x36] sm:$0xff]
  %v4053 = vld [vmem:[#allocation3 + $0x3e] sm:$0xff]
  %v4054 = vld [vmem:[#allocation3 + $0x46] sm:$0xff]
  %v4055 = vpack.c.bf16 %v4047, %v4046
  %v4056 = vpack.c.bf16 %v4049, %v4048
  %v4057 = vpack.c.bf16 %v4051, %v4050
  %v4058 = vpack.c.bf16 %v4053, %v4052
  %v4059 = vpack.c.bf16 %v4054, %v4054
  %v4060 = vld [vmem:[#allocation3 + $0x7] sm:$0xff]
  %v4061 = vld [vmem:[#allocation3 + $0xf] sm:$0xff]
  %v4062 = vld [vmem:[#allocation3 + $0x17] sm:$0xff]
  %v4063 = vld [vmem:[#allocation3 + $0x1f] sm:$0xff]
  %v4064 = vld [vmem:[#allocation3 + $0x27] sm:$0xff]
  %v4065 = vld [vmem:[#allocation3 + $0x2f] sm:$0xff]
  %v4066 = vld [vmem:[#allocation3 + $0x37] sm:$0xff]
  %v4067 = vld [vmem:[#allocation3 + $0x3f] sm:$0xff]
  %v4068 = vld [vmem:[#allocation3 + $0x47] sm:$0xff]
  %v4069 = vpack.c.bf16 %v4061, %v4060
  %v4070 = vpack.c.bf16 %v4063, %v4062
  %v4071 = vpack.c.bf16 %v4065, %v4064
  %v4072 = vpack.c.bf16 %v4067, %v4066
  %v4073 = vpack.c.bf16 %v4068, %v4068
  %v4074 = vld [vmem:[#allocation3 + $0x48] sm:$0xff]
  %v4075 = vpack.c.bf16 %v4006, %v4005
  %v4076 = vpack.c.bf16 %v4008, %v4007
  %v4077 = vpack.c.bf16 %v4010, %v4009
  %v4078 = vpack.c.bf16 %v4012, %v4011
  %v4079 = vpack.c.bf16 %v4074, %v4074
  %v4080 = vld [vmem:[#allocation3 + $0xc] sm:$0xff]
  %v4081 = vld [vmem:[#allocation3 + $0x14] sm:$0xff]
  %v4082 = vld [vmem:[#allocation3 + $0x1c] sm:$0xff]
  %v4083 = vld [vmem:[#allocation3 + $0x24] sm:$0xff]
  %v4084 = vld [vmem:[#allocation3 + $0x2c] sm:$0xff]
  %v4085 = vld [vmem:[#allocation3 + $0x34] sm:$0xff]
  %v4086 = vld [vmem:[#allocation3 + $0x3c] sm:$0xff]
  %v4087 = vld [vmem:[#allocation3 + $0x44] sm:$0xff]
  %v4088 = vld [vmem:[#allocation3 + $0x4c] sm:$0xff]
  %v4089 = vpack.c.bf16 %v4081, %v4080
  %v4090 = vpack.c.bf16 %v4083, %v4082
  %v4091 = vpack.c.bf16 %v4085, %v4084
  %v4092 = vpack.c.bf16 %v4087, %v4086
  %v4093 = vpack.c.bf16 %v4088, %v4088
  %v4094 = vld [vmem:[#allocation3 + $0xd] sm:$0xff]
  %v4095 = vld [vmem:[#allocation3 + $0x15] sm:$0xff]
  %v4096 = vld [vmem:[#allocation3 + $0x1d] sm:$0xff]
  %v4097 = vld [vmem:[#allocation3 + $0x25] sm:$0xff]
  %v4098 = vld [vmem:[#allocation3 + $0x2d] sm:$0xff]
  %v4099 = vld [vmem:[#allocation3 + $0x35] sm:$0xff]
  %v4100 = vld [vmem:[#allocation3 + $0x3d] sm:$0xff]
  %v4101 = vld [vmem:[#allocation3 + $0x45] sm:$0xff]
  %v4102 = vld [vmem:[#allocation3 + $0x4d] sm:$0xff]
  %v4103 = vpack.c.bf16 %v4095, %v4094
  %v4104 = vpack.c.bf16 %v4097, %v4096
  %v4105 = vpack.c.bf16 %v4099, %v4098
  %v4106 = vpack.c.bf16 %v4101, %v4100
  %v4107 = vpack.c.bf16 %v4102, %v4102
  %v4108 = vld [vmem:[#allocation3 + $0xe] sm:$0xff]
  %v4109 = vld [vmem:[#allocation3 + $0x16] sm:$0xff]
  %v4110 = vld [vmem:[#allocation3 + $0x1e] sm:$0xff]
  %v4111 = vld [vmem:[#allocation3 + $0x26] sm:$0xff]
  %v4112 = vld [vmem:[#allocation3 + $0x2e] sm:$0xff]
  %v4113 = vld [vmem:[#allocation3 + $0x36] sm:$0xff]
  %v4114 = vld [vmem:[#allocation3 + $0x3e] sm:$0xff]
  %v4115 = vld [vmem:[#allocation3 + $0x46] sm:$0xff]
  %v4116 = vld [vmem:[#allocation3 + $0x4e] sm:$0xff]
  %v4117 = vpack.c.bf16 %v4109, %v4108
  %v4118 = vpack.c.bf16 %v4111, %v4110
  %v4119 = vpack.c.bf16 %v4113, %v4112
  %v4120 = vpack.c.bf16 %v4115, %v4114
  %v4121 = vpack.c.bf16 %v4116, %v4116
  %v4122 = vld [vmem:[%s9] sm:$0xf]
  %v4123 = vld [vmem:[%s9 + $0x4] sm:$0xf]
  %v4124 = vld [vmem:[%s9 + $0x8] sm:$0xf]
  %v4125 = vld [vmem:[%s9 + $0xc] sm:$0xf]
  %v4126 = vld [vmem:[%s9 + $0x10] sm:$0xf]
  %v4127 = vld [vmem:[%s9 + $0x14] sm:$0xf]
  %v4128 = vld [vmem:[%s9 + $0x18] sm:$0xf]
  %v4129 = vld [vmem:[%s9 + $0x1c] sm:$0xf]
  %v4130 = vld [vmem:[%s9 + $0x20] sm:$0xf]
  %v4131 = vld [vmem:[%s9 + $0x24] sm:$0xf]
  %v4132 = vld [vmem:[%s9 + $0x28] sm:$0xf]
  %v4133 = vld [vmem:[%s9 + $0x2c] sm:$0xf]
  %v4134 = vld [vmem:[%s9 + $0x30] sm:$0xf]
  %v4135 = vld [vmem:[%s9 + $0x34] sm:$0xf]
  %v4136 = vld [vmem:[%s9 + $0x38] sm:$0xf]
  %v4137 = vld [vmem:[%s9 + $0x3c] sm:$0xf]
  %v4138 = vld [vmem:[%s9 + $0x40] sm:$0xf]
  %v4139 = vld [vmem:[%s9 + $0x44] sm:$0xf]
  %v4140 = vld [vmem:[%s9 + $0x48] sm:$0xf]
  %v4141 = vld [vmem:[%s9 + $0x4c] sm:$0xf]
  %v4142 = vld [vmem:[%s9 + $0x50] sm:$0xf]
  %v4143 = vld [vmem:[%s9 + $0x54] sm:$0xf]
  %v4144 = vld [vmem:[%s9 + $0x58] sm:$0xf]
  %v4145 = vld [vmem:[%s9 + $0x5c] sm:$0xf]
  %v4146 = vld [vmem:[%s9 + $0x60] sm:$0xf]
  %v4147 = vld [vmem:[%s9 + $0x64] sm:$0xf]
  %v4148 = vld [vmem:[%s9 + $0x68] sm:$0xf]
  %v4149 = vld [vmem:[%s9 + $0x6c] sm:$0xf]
  %v4150 = vld [vmem:[%s9 + $0x70] sm:$0xf]
  %v4151 = vld [vmem:[%s9 + $0x74] sm:$0xf]
  %v4152 = vld [vmem:[%s9 + $0x78] sm:$0xf]
  %v4153 = vld [vmem:[%s9 + $0x7c] sm:$0xf]
  %v4154 = vld [vmem:[%s9 + $0x80] sm:$0xf]
  %v4155 = vld [vmem:[%s9 + $0x84] sm:$0xf]
  %v4156 = vld [vmem:[%s9 + $0x88] sm:$0xf]
  %v4157 = vld [vmem:[%s9 + $0x8c] sm:$0xf]
  %v4158 = vld [vmem:[%s9 + $0x90] sm:$0xf]
  %v4159 = vld [vmem:[%s9 + $0x94] sm:$0xf]
  %v4160 = vld [vmem:[%s9 + $0x98] sm:$0xf]
  %v4161 = vld [vmem:[%s9 + $0x9c] sm:$0xf]
  %v4162 = vld [vmem:[%s9 + $0xa0] sm:$0xf]
  %v4163 = vld [vmem:[%s9 + $0xa4] sm:$0xf]
  %v4164 = vld [vmem:[%s9 + $0xa8] sm:$0xf]
  %v4165 = vld [vmem:[%s9 + $0xac] sm:$0xf]
  %v4166 = vld [vmem:[%s9 + $0xb0] sm:$0xf]
  %v4167 = vld [vmem:[%s9 + $0xb4] sm:$0xf]
  %v4168 = vld [vmem:[%s9 + $0xb8] sm:$0xf]
  %v4169 = vld [vmem:[%s9 + $0xbc] sm:$0xf]
  %v4170 = vld [vmem:[%s9 + $0xc0] sm:$0xf]
  %v4171 = vld [vmem:[%s9 + $0xc4] sm:$0xf]
  %v4172 = vld [vmem:[%s9 + $0xc8] sm:$0xf]
  %v4173 = vld [vmem:[%s9 + $0xcc] sm:$0xf]
  %v4174 = vld [vmem:[%s9 + $0xd0] sm:$0xf]
  %v4175 = vld [vmem:[%s9 + $0xd4] sm:$0xf]
  %v4176 = vld [vmem:[%s9 + $0xd8] sm:$0xf]
  %v4177 = vld [vmem:[%s9 + $0xdc] sm:$0xf]
  %v4178 = vld [vmem:[%s9 + $0xe0] sm:$0xf]
  %v4179 = vld [vmem:[%s9 + $0xe4] sm:$0xf]
  %v4180 = vld [vmem:[%s9 + $0xe8] sm:$0xf]
  %v4181 = vld [vmem:[%s9 + $0xec] sm:$0xf]
  %v4182 = vld [vmem:[%s9 + $0xf0] sm:$0xf]
  %v4183 = vld [vmem:[%s9 + $0xf4] sm:$0xf]
  %v4184 = vld [vmem:[%s9 + $0xf8] sm:$0xf]
  %v4185 = vld [vmem:[%s9 + $0xfc] sm:$0xf]
  %v4186 = vld [vmem:[%s9 + $0x100] sm:$0xf]
  %v4187 = vld [vmem:[%s9 + $0x104] sm:$0xf]
  %v4188 = vld [vmem:[%s9 + $0x108] sm:$0xf]
  %v4189 = vld [vmem:[%s9 + $0x10c] sm:$0xf]
  %v4190 = vld [vmem:[%s9 + $0x110] sm:$0xf]
  %v4191 = vld [vmem:[%s9 + $0x114] sm:$0xf]
  %v4192 = vld [vmem:[%s9 + $0x118] sm:$0xf]
  %v4193 = vld [vmem:[%s9 + $0x11c] sm:$0xf]
  %v4194 = vld [vmem:[%s9 + $0x120] sm:$0xf]
  %v4195 = vld [vmem:[%s9 + $0x124] sm:$0xf]
  %v4196 = vld [vmem:[%s9 + $0x128] sm:$0xf]
  %v4197 = vld [vmem:[%s9 + $0x12c] sm:$0xf]
  %v4198 = vld [vmem:[%s9 + $0x130] sm:$0xf]
  %v4199 = vld [vmem:[%s9 + $0x134] sm:$0xf]
  %v4200 = vld [vmem:[%s9 + $0x138] sm:$0xf]
  %v4201 = vld [vmem:[%s9 + $0x13c] sm:$0xf]
  %v4202 = vld [vmem:[%s9 + $0x140] sm:$0xf]
  %v4203 = vld [vmem:[%s9 + $0x144] sm:$0xf]
  %v4204 = vld [vmem:[%s9 + $0x148] sm:$0xf]
  %v4205 = vld [vmem:[%s9 + $0x14c] sm:$0xf]
  %v4206 = vld [vmem:[%s9 + $0x150] sm:$0xf]
  %v4207 = vld [vmem:[%s9 + $0x154] sm:$0xf]
  %v4208 = vld [vmem:[%s9 + $0x158] sm:$0xf]
  %v4209 = vld [vmem:[%s9 + $0x15c] sm:$0xf]
  %v4210 = vld [vmem:[%s9 + $0x160] sm:$0xf]
  %v4211 = vld [vmem:[%s9 + $0x164] sm:$0xf]
  %v4212 = vld [vmem:[%s9 + $0x168] sm:$0xf]
  %v4213 = vld [vmem:[%s9 + $0x16c] sm:$0xf]
  %v4214 = vld [vmem:[%s9 + $0x170] sm:$0xf]
  %v4215 = vld [vmem:[%s9 + $0x174] sm:$0xf]
  %v4216 = vld [vmem:[%s9 + $0x178] sm:$0xf]
  %v4217 = vld [vmem:[%s9 + $0x17c] sm:$0xf]
  %v4218 = vld [vmem:[%s9 + $0x180] sm:$0xf]
  %v4219 = vld [vmem:[%s9 + $0x184] sm:$0xf]
  %v4220 = vld [vmem:[%s9 + $0x188] sm:$0xf]
  %v4221 = vld [vmem:[%s9 + $0x18c] sm:$0xf]
  %v4222 = vld [vmem:[%s9 + $0x190] sm:$0xf]
  %v4223 = vld [vmem:[%s9 + $0x194] sm:$0xf]
  %v4224 = vld [vmem:[%s9 + $0x198] sm:$0xf]
  %v4225 = vld [vmem:[%s9 + $0x19c] sm:$0xf]
  %v4226 = vld [vmem:[%s9 + $0x1a0] sm:$0xf]
  %v4227 = vld [vmem:[%s9 + $0x1a4] sm:$0xf]
  %v4228 = vld [vmem:[%s9 + $0x1a8] sm:$0xf]
  %v4229 = vld [vmem:[%s9 + $0x1ac] sm:$0xf]
  %v4230 = vld [vmem:[%s9 + $0x1b0] sm:$0xf]
  %v4231 = vld [vmem:[%s9 + $0x1b4] sm:$0xf]
  %v4232 = vld [vmem:[%s9 + $0x1b8] sm:$0xf]
  %v4233 = vld [vmem:[%s9 + $0x1bc] sm:$0xf]
  %v4234 = vld [vmem:[%s9 + $0x1c0] sm:$0xf]
  %v4235 = vld [vmem:[%s9 + $0x1c4] sm:$0xf]
  %v4236 = vld [vmem:[%s9 + $0x1c8] sm:$0xf]
  %v4237 = vld [vmem:[%s9 + $0x1cc] sm:$0xf]
  %v4238 = vld [vmem:[%s9 + $0x1d0] sm:$0xf]
  %v4239 = vld [vmem:[%s9 + $0x1d4] sm:$0xf]
  %v4240 = vld [vmem:[%s9 + $0x1d8] sm:$0xf]
  %v4241 = vld [vmem:[%s9 + $0x1dc] sm:$0xf]
  %v4242 = vld [vmem:[%s9 + $0x1e0] sm:$0xf]
  %v4243 = vld [vmem:[%s9 + $0x1e4] sm:$0xf]
  %v4244 = vld [vmem:[%s9 + $0x1e8] sm:$0xf]
  %v4245 = vld [vmem:[%s9 + $0x1ec] sm:$0xf]
  %v4246 = vld [vmem:[%s9 + $0x1f0] sm:$0xf]
  %v4247 = vld [vmem:[%s9 + $0x1f4] sm:$0xf]
  %v4248 = vld [vmem:[%s9 + $0x1f8] sm:$0xf]
  %v4249 = vld [vmem:[%s9 + $0x1fc] sm:$0xf]
  %v4250 = vld [vmem:[%s9 + $0x200] sm:$0xf]
  %v4251 = vld [vmem:[%s9 + $0x204] sm:$0xf]
  %v4252 = vld [vmem:[%s9 + $0x208] sm:$0xf]
  %v4253 = vld [vmem:[%s9 + $0x20c] sm:$0xf]
  %v4254 = vld [vmem:[%s9 + $0x210] sm:$0xf]
  %v4255 = vld [vmem:[%s9 + $0x214] sm:$0xf]
  %v4256 = vld [vmem:[%s9 + $0x218] sm:$0xf]
  %v4257 = vld [vmem:[%s9 + $0x21c] sm:$0xf]
  %v4258 = vld [vmem:[%s9 + $0x220] sm:$0xf]
  %v4259 = vld [vmem:[%s9 + $0x224] sm:$0xf]
  %v4260 = vld [vmem:[%s9 + $0x228] sm:$0xf]
  %v4261 = vld [vmem:[%s9 + $0x22c] sm:$0xf]
  %v4262 = vld [vmem:[%s9 + $0x230] sm:$0xf]
  %v4263 = vld [vmem:[%s9 + $0x234] sm:$0xf]
  %v4264 = vld [vmem:[%s9 + $0x238] sm:$0xf]
  %v4265 = vld [vmem:[%s9 + $0x23c] sm:$0xf]
  %v4410 = vunpack.c.l.b16 %v4122
  %v4411 = vunpack.c.l.b16 %v4123
  %v4412 = vunpack.c.l.b16 %v4124
  %v4413 = vunpack.c.l.b16 %v4125
  %v4414 = vunpack.c.l.b16 %v4126
  %v4415 = vunpack.c.l.b16 %v4127
  %v4416 = vunpack.c.l.b16 %v4128
  %v4417 = vunpack.c.l.b16 %v4129
  %v4418 = vunpack.c.l.b16 %v4130
  %v4419 = vunpack.c.l.b16 %v4131
  %v4420 = vunpack.c.l.b16 %v4132
  %v4421 = vunpack.c.l.b16 %v4133
  %v4422 = vunpack.c.l.b16 %v4134
  %v4423 = vunpack.c.l.b16 %v4135
  %v4424 = vunpack.c.l.b16 %v4136
  %v4425 = vunpack.c.l.b16 %v4137
  %v4426 = vunpack.c.l.b16 %v4138
  %v4427 = vunpack.c.l.b16 %v4139
  %v4428 = vunpack.c.l.b16 %v4140
  %v4429 = vunpack.c.l.b16 %v4141
  %v4430 = vunpack.c.l.b16 %v4142
  %v4431 = vunpack.c.l.b16 %v4143
  %v4432 = vunpack.c.l.b16 %v4144
  %v4433 = vunpack.c.l.b16 %v4145
  %v4434 = vunpack.c.l.b16 %v4146
  %v4435 = vunpack.c.l.b16 %v4147
  %v4436 = vunpack.c.l.b16 %v4148
  %v4437 = vunpack.c.l.b16 %v4149
  %v4438 = vunpack.c.l.b16 %v4150
  %v4439 = vunpack.c.l.b16 %v4151
  %v4440 = vunpack.c.l.b16 %v4152
  %v4441 = vunpack.c.l.b16 %v4153
  %v4442 = vunpack.c.l.b16 %v4154
  %v4443 = vunpack.c.l.b16 %v4155
  %v4444 = vunpack.c.l.b16 %v4156
  %v4445 = vunpack.c.l.b16 %v4157
  %v4446 = vunpack.c.l.b16 %v4158
  %v4447 = vunpack.c.l.b16 %v4159
  %v4448 = vunpack.c.l.b16 %v4160
  %v4449 = vunpack.c.l.b16 %v4161
  %v4450 = vunpack.c.l.b16 %v4162
  %v4451 = vunpack.c.l.b16 %v4163
  %v4452 = vunpack.c.l.b16 %v4164
  %v4453 = vunpack.c.l.b16 %v4165
  %v4454 = vunpack.c.l.b16 %v4166
  %v4455 = vunpack.c.l.b16 %v4167
  %v4456 = vunpack.c.l.b16 %v4168
  %v4457 = vunpack.c.l.b16 %v4169
  %v4458 = vunpack.c.l.b16 %v4170
  %v4459 = vunpack.c.l.b16 %v4171
  %v4460 = vunpack.c.l.b16 %v4172
  %v4461 = vunpack.c.l.b16 %v4173
  %v4462 = vunpack.c.l.b16 %v4174
  %v4463 = vunpack.c.l.b16 %v4175
  %v4464 = vunpack.c.l.b16 %v4176
  %v4465 = vunpack.c.l.b16 %v4177
  %v4466 = vunpack.c.l.b16 %v4178
  %v4467 = vunpack.c.l.b16 %v4179
  %v4468 = vunpack.c.l.b16 %v4180
  %v4469 = vunpack.c.l.b16 %v4181
  %v4470 = vunpack.c.l.b16 %v4182
  %v4471 = vunpack.c.l.b16 %v4183
  %v4472 = vunpack.c.l.b16 %v4184
  %v4473 = vunpack.c.l.b16 %v4185
  %v4474 = vunpack.c.l.b16 %v4186
  %v4475 = vunpack.c.l.b16 %v4187
  %v4476 = vunpack.c.l.b16 %v4188
  %v4477 = vunpack.c.l.b16 %v4189
  %v4478 = vunpack.c.l.b16 %v4190
  %v4479 = vunpack.c.l.b16 %v4191
  %v4480 = vunpack.c.l.b16 %v4192
  %v4481 = vunpack.c.l.b16 %v4193
  %v4482 = vunpack.c.l.b16 %v4194
  %v4483 = vunpack.c.l.b16 %v4195
  %v4484 = vunpack.c.l.b16 %v4196
  %v4485 = vunpack.c.l.b16 %v4197
  %v4486 = vunpack.c.l.b16 %v4198
  %v4487 = vunpack.c.l.b16 %v4199
  %v4488 = vunpack.c.l.b16 %v4200
  %v4489 = vunpack.c.l.b16 %v4201
  %v4490 = vunpack.c.l.b16 %v4202
  %v4491 = vunpack.c.l.b16 %v4203
  %v4492 = vunpack.c.l.b16 %v4204
  %v4493 = vunpack.c.l.b16 %v4205
  %v4494 = vunpack.c.l.b16 %v4206
  %v4495 = vunpack.c.l.b16 %v4207
  %v4496 = vunpack.c.l.b16 %v4208
  %v4497 = vunpack.c.l.b16 %v4209
  %v4498 = vunpack.c.l.b16 %v4210
  %v4499 = vunpack.c.l.b16 %v4211
  %v4500 = vunpack.c.l.b16 %v4212
  %v4501 = vunpack.c.l.b16 %v4213
  %v4502 = vunpack.c.l.b16 %v4214
  %v4503 = vunpack.c.l.b16 %v4215
  %v4504 = vunpack.c.l.b16 %v4216
  %v4505 = vunpack.c.l.b16 %v4217
  %v4506 = vunpack.c.l.b16 %v4218
  %v4507 = vunpack.c.l.b16 %v4219
  %v4508 = vunpack.c.l.b16 %v4220
  %v4509 = vunpack.c.l.b16 %v4221
  %v4510 = vunpack.c.l.b16 %v4222
  %v4511 = vunpack.c.l.b16 %v4223
  %v4512 = vunpack.c.l.b16 %v4224
  %v4513 = vunpack.c.l.b16 %v4225
  %v4514 = vunpack.c.l.b16 %v4226
  %v4515 = vunpack.c.l.b16 %v4227
  %v4516 = vunpack.c.l.b16 %v4228
  %v4517 = vunpack.c.l.b16 %v4229
  %v4518 = vunpack.c.l.b16 %v4230
  %v4519 = vunpack.c.l.b16 %v4231
  %v4520 = vunpack.c.l.b16 %v4232
  %v4521 = vunpack.c.l.b16 %v4233
  %v4522 = vunpack.c.l.b16 %v4234
  %v4523 = vunpack.c.l.b16 %v4235
  %v4524 = vunpack.c.l.b16 %v4236
  %v4525 = vunpack.c.l.b16 %v4237
  %v4526 = vunpack.c.l.b16 %v4238
  %v4527 = vunpack.c.l.b16 %v4239
  %v4528 = vunpack.c.l.b16 %v4240
  %v4529 = vunpack.c.l.b16 %v4241
  %v4530 = vunpack.c.l.b16 %v4242
  %v4531 = vunpack.c.l.b16 %v4243
  %v4532 = vunpack.c.l.b16 %v4244
  %v4533 = vunpack.c.l.b16 %v4245
  %v4534 = vunpack.c.l.b16 %v4246
  %v4535 = vunpack.c.l.b16 %v4247
  %v4536 = vunpack.c.l.b16 %v4248
  %v4537 = vunpack.c.l.b16 %v4249
  %v4538 = vunpack.c.l.b16 %v4250
  %v4539 = vunpack.c.l.b16 %v4251
  %v4540 = vunpack.c.l.b16 %v4252
  %v4541 = vunpack.c.l.b16 %v4253
  %v4542 = vunpack.c.l.b16 %v4254
  %v4543 = vunpack.c.l.b16 %v4255
  %v4544 = vunpack.c.l.b16 %v4256
  %v4545 = vunpack.c.l.b16 %v4257
  %v4546 = vunpack.c.l.b16 %v4258
  %v4547 = vunpack.c.l.b16 %v4259
  %v4548 = vunpack.c.l.b16 %v4260
  %v4549 = vunpack.c.l.b16 %v4261
  %v4550 = vunpack.c.l.b16 %v4262
  %v4551 = vunpack.c.l.b16 %v4263
  %v4552 = vunpack.c.l.b16 %v4264
  %v4553 = vunpack.c.l.b16 %v4265
  %v4554 = vpack.c.b16 %v4411, %v4410
  %v4555 = vpack.c.b16 %v4413, %v4412
  %v4556 = vpack.c.b16 %v4415, %v4414
  %v4557 = vpack.c.b16 %v4417, %v4416
  %v4558 = vpack.c.b16 %v4419, %v4418
  %v4559 = vpack.c.b16 %v4421, %v4420
  %v4560 = vpack.c.b16 %v4423, %v4422
  %v4561 = vpack.c.b16 %v4425, %v4424
  %v4562 = vpack.c.b16 %v4427, %v4426
  %v4563 = vpack.c.b16 %v4429, %v4428
  %v4564 = vpack.c.b16 %v4431, %v4430
  %v4565 = vpack.c.b16 %v4433, %v4432
  %v4566 = vpack.c.b16 %v4435, %v4434
  %v4567 = vpack.c.b16 %v4437, %v4436
  %v4568 = vpack.c.b16 %v4439, %v4438
  %v4569 = vpack.c.b16 %v4441, %v4440
  %v4570 = vpack.c.b16 %v4443, %v4442
  %v4571 = vpack.c.b16 %v4445, %v4444
  %v4572 = vpack.c.b16 %v4447, %v4446
  %v4573 = vpack.c.b16 %v4449, %v4448
  %v4574 = vpack.c.b16 %v4451, %v4450
  %v4575 = vpack.c.b16 %v4453, %v4452
  %v4576 = vpack.c.b16 %v4455, %v4454
  %v4577 = vpack.c.b16 %v4457, %v4456
  %v4578 = vpack.c.b16 %v4459, %v4458
  %v4579 = vpack.c.b16 %v4461, %v4460
  %v4580 = vpack.c.b16 %v4463, %v4462
  %v4581 = vpack.c.b16 %v4465, %v4464
  %v4582 = vpack.c.b16 %v4467, %v4466
  %v4583 = vpack.c.b16 %v4469, %v4468
  %v4584 = vpack.c.b16 %v4471, %v4470
  %v4585 = vpack.c.b16 %v4473, %v4472
  %v4586 = vpack.c.b16 %v4475, %v4474
  %v4587 = vpack.c.b16 %v4477, %v4476
  %v4588 = vpack.c.b16 %v4479, %v4478
  %v4589 = vpack.c.b16 %v4481, %v4480
  %v4590 = vpack.c.b16 %v4483, %v4482
  %v4591 = vpack.c.b16 %v4485, %v4484
  %v4592 = vpack.c.b16 %v4487, %v4486
  %v4593 = vpack.c.b16 %v4489, %v4488
  %v4594 = vpack.c.b16 %v4491, %v4490
  %v4595 = vpack.c.b16 %v4493, %v4492
  %v4596 = vpack.c.b16 %v4495, %v4494
  %v4597 = vpack.c.b16 %v4497, %v4496
  %v4598 = vpack.c.b16 %v4499, %v4498
  %v4599 = vpack.c.b16 %v4501, %v4500
  %v4600 = vpack.c.b16 %v4503, %v4502
  %v4601 = vpack.c.b16 %v4505, %v4504
  %v4602 = vpack.c.b16 %v4507, %v4506
  %v4603 = vpack.c.b16 %v4509, %v4508
  %v4604 = vpack.c.b16 %v4511, %v4510
  %v4605 = vpack.c.b16 %v4513, %v4512
  %v4606 = vpack.c.b16 %v4515, %v4514
  %v4607 = vpack.c.b16 %v4517, %v4516
  %v4608 = vpack.c.b16 %v4519, %v4518
  %v4609 = vpack.c.b16 %v4521, %v4520
  %v4610 = vpack.c.b16 %v4523, %v4522
  %v4611 = vpack.c.b16 %v4525, %v4524
  %v4612 = vpack.c.b16 %v4527, %v4526
  %v4613 = vpack.c.b16 %v4529, %v4528
  %v4614 = vpack.c.b16 %v4531, %v4530
  %v4615 = vpack.c.b16 %v4533, %v4532
  %v4616 = vpack.c.b16 %v4535, %v4534
  %v4617 = vpack.c.b16 %v4537, %v4536
  %v4618 = vpack.c.b16 %v4539, %v4538
  %v4619 = vpack.c.b16 %v4541, %v4540
  %v4620 = vpack.c.b16 %v4543, %v4542
  %v4621 = vpack.c.b16 %v4545, %v4544
  %v4622 = vpack.c.b16 %v4547, %v4546
  %v4623 = vpack.c.b16 %v4549, %v4548
  %v4624 = vpack.c.b16 %v4551, %v4550
  %v4625 = vpack.c.b16 %v4553, %v4552
  %4698 = vmatprep.subr.bf16.mxu0 0
  %4699 = vmatpush1.bf16.msra.mxu0 %v4561
  %4700 = vmatprep.subr.bf16.mxu0 0
  %4701 = vmatpush1.bf16.msra.mxu0 %v4560
  %4702 = vmatprep.subr.bf16.mxu0 0
  %4703 = vmatpush1.bf16.msra.mxu0 %v4559
  %4704 = vmatprep.subr.bf16.mxu0 0
  %4705 = vmatpush1.bf16.msra.mxu0 %v4558
  %4706 = vmatprep.subr.bf16.mxu0 0
  %4707 = vmatpush1.bf16.msra.mxu0 %v4557
  %4708 = vmatprep.subr.bf16.mxu0 0
  %4709 = vmatpush1.bf16.msra.mxu0 %v4556
  %4710 = vmatprep.subr.bf16.mxu0 0
  %4711 = vmatpush1.bf16.msra.mxu0 %v4555
  %4712 = vmatprep.subr.bf16.mxu0 0
  %4713 = vmatpush1.bf16.msra.mxu0 %v4554
  %4714 = vmatprep.subr.bf16.mxu0 0
  %4715 = vmatpush2.bf16.msra.mxu0 %v4569
  %4716 = vmatprep.subr.bf16.mxu0 0
  %4717 = vmatpush2.bf16.msra.mxu0 %v4568
  %4718 = vmatprep.subr.bf16.mxu0 0
  %4719 = vmatpush2.bf16.msra.mxu0 %v4567
  %4720 = vmatprep.subr.bf16.mxu0 0
  %4721 = vmatpush2.bf16.msra.mxu0 %v4566
  %4722 = vmatprep.subr.bf16.mxu0 0
  %4723 = vmatpush2.bf16.msra.mxu0 %v4565
  %4724 = vmatprep.subr.bf16.mxu0 0
  %4725 = vmatpush2.bf16.msra.mxu0 %v4564
  %4726 = vmatprep.subr.bf16.mxu0 0
  %4727 = vmatpush2.bf16.msra.mxu0 %v4563
  %4728 = vmatprep.subr.bf16.mxu0 0
  %4729 = vmatpush2.bf16.msra.mxu0 %v4562
  %4730 = vmatprep.mubr.bf16.mxu0 %v4027
  %4731 = vmatmul.mubr.bf16.gmra.mxu0 %v4013
  %v4732 = vpop.f32.mrf.mxu0
  %v4733 = vadd.f32 0.0, %v4732
  %v4734 = vpop.f32.mrf.mxu0
  %v4735 = vpop.f32.mrf.mxu0
  %v4736 = vadd.f32 0.0, %v4735
  %v4737 = vpop.f32.mrf.mxu0
  %4738 = vmatprep.mubr.bf16.mxu0 %v4028
  %4739 = vmatmul.mubr.bf16.gmra.mxu0 %v4014
  %v4740 = vpop.f32.mrf.mxu0
  %v4741 = vadd.f32 0.0, %v4740
  %v4742 = vpop.f32.mrf.mxu0
  %v4743 = vpop.f32.mrf.mxu0
  %v4744 = vadd.f32 0.0, %v4743
  %v4745 = vpop.f32.mrf.mxu0
  %4746 = vmatprep.mubr.bf16.mxu0 %v4029
  %4747 = vmatmul.mubr.bf16.gmra.mxu0 %v4015
  %v4748 = vpop.f32.mrf.mxu0
  %v4749 = vadd.f32 0.0, %v4748
  %v4750 = vpop.f32.mrf.mxu0
  %v4751 = vpop.f32.mrf.mxu0
  %v4752 = vadd.f32 0.0, %v4751
  %v4753 = vpop.f32.mrf.mxu0
  %4754 = vmatprep.mubr.bf16.mxu0 %v4030
  %4755 = vmatmul.mubr.bf16.gmra.mxu0 %v4016
  %v4756 = vpop.f32.mrf.mxu0
  %v4757 = vadd.f32 0.0, %v4756
  %v4758 = vpop.f32.mrf.mxu0
  %v4759 = vpop.f32.mrf.mxu0
  %v4760 = vadd.f32 0.0, %v4759
  %v4761 = vpop.f32.mrf.mxu0
  %4762 = vmatprep.mubr.bf16.mxu0 %v4031
  %4763 = vmatmul.mubr.bf16.gmra.mxu0 %v4017
  %v4764 = vpop.f32.mrf.mxu0
  %v4765 = vadd.f32 0.0, %v4764
  %v4766 = vpop.f32.mrf.mxu0
  %v4767 = vpop.f32.mrf.mxu0
  %v4768 = vpop.f32.mrf.mxu0
  %4769 = vdwg.mxu0
  %4770 = vmatprep.subr.bf16.mxu0 0
  %4771 = vmatpush1.bf16.msra.mxu0 %v4577
  %4772 = vmatprep.subr.bf16.mxu0 0
  %4773 = vmatpush1.bf16.msra.mxu0 %v4576
  %4774 = vmatprep.subr.bf16.mxu0 0
  %4775 = vmatpush1.bf16.msra.mxu0 %v4575
  %4776 = vmatprep.subr.bf16.mxu0 0
  %4777 = vmatpush1.bf16.msra.mxu0 %v4574
  %4778 = vmatprep.subr.bf16.mxu0 0
  %4779 = vmatpush1.bf16.msra.mxu0 %v4573
  %4780 = vmatprep.subr.bf16.mxu0 0
  %4781 = vmatpush1.bf16.msra.mxu0 %v4572
  %4782 = vmatprep.subr.bf16.mxu0 0
  %4783 = vmatpush1.bf16.msra.mxu0 %v4571
  %4784 = vmatprep.subr.bf16.mxu0 0
  %4785 = vmatpush1.bf16.msra.mxu0 %v4570
  %4786 = vmatprep.subr.bf16.mxu0 0
  %4787 = vmatpush2.bf16.msra.mxu0 %v4585
  %4788 = vmatprep.subr.bf16.mxu0 0
  %4789 = vmatpush2.bf16.msra.mxu0 %v4584
  %4790 = vmatprep.subr.bf16.mxu0 0
  %4791 = vmatpush2.bf16.msra.mxu0 %v4583
  %4792 = vmatprep.subr.bf16.mxu0 0
  %4793 = vmatpush2.bf16.msra.mxu0 %v4582
  %4794 = vmatprep.subr.bf16.mxu0 0
  %4795 = vmatpush2.bf16.msra.mxu0 %v4581
  %4796 = vmatprep.subr.bf16.mxu0 0
  %4797 = vmatpush2.bf16.msra.mxu0 %v4580
  %4798 = vmatprep.subr.bf16.mxu0 0
  %4799 = vmatpush2.bf16.msra.mxu0 %v4579
  %4800 = vmatprep.subr.bf16.mxu0 0
  %4801 = vmatpush2.bf16.msra.mxu0 %v4578
  %4802 = vmatprep.mubr.bf16.mxu0 %v4055
  %4803 = vmatmul.mubr.bf16.gmra.mxu0 %v4041
  %v4804 = vpop.f32.mrf.mxu0
  %v4805 = vadd.f32 %v4733, %v4804
  %v4806 = vpop.f32.mrf.mxu0
  %v4807 = vpop.f32.mrf.mxu0
  %v4808 = vadd.f32 %v4736, %v4807
  %v4809 = vpop.f32.mrf.mxu0
  %4810 = vmatprep.mubr.bf16.mxu0 %v4056
  %4811 = vmatmul.mubr.bf16.gmra.mxu0 %v4042
  %v4812 = vpop.f32.mrf.mxu0
  %v4813 = vadd.f32 %v4741, %v4812
  %v4814 = vpop.f32.mrf.mxu0
  %v4815 = vpop.f32.mrf.mxu0
  %v4816 = vadd.f32 %v4744, %v4815
  %v4817 = vpop.f32.mrf.mxu0
  %4818 = vmatprep.mubr.bf16.mxu0 %v4057
  %4819 = vmatmul.mubr.bf16.gmra.mxu0 %v4043
  %v4820 = vpop.f32.mrf.mxu0
  %v4821 = vadd.f32 %v4749, %v4820
  %v4822 = vpop.f32.mrf.mxu0
  %v4823 = vpop.f32.mrf.mxu0
  %v4824 = vadd.f32 %v4752, %v4823
  %v4825 = vpop.f32.mrf.mxu0
  %4826 = vmatprep.mubr.bf16.mxu0 %v4058
  %4827 = vmatmul.mubr.bf16.gmra.mxu0 %v4044
  %v4828 = vpop.f32.mrf.mxu0
  %v4829 = vadd.f32 %v4757, %v4828
  %v4830 = vpop.f32.mrf.mxu0
  %v4831 = vpop.f32.mrf.mxu0
  %v4832 = vadd.f32 %v4760, %v4831
  %v4833 = vpop.f32.mrf.mxu0
  %4834 = vmatprep.mubr.bf16.mxu0 %v4059
  %4835 = vmatmul.mubr.bf16.gmra.mxu0 %v4045
  %v4836 = vpop.f32.mrf.mxu0
  %v4837 = vadd.f32 %v4765, %v4836
  %v4838 = vpop.f32.mrf.mxu0
  %v4839 = vpop.f32.mrf.mxu0
  %v4840 = vpop.f32.mrf.mxu0
  %4841 = vdwg.mxu0
  %4842 = vmatprep.subr.bf16.mxu0 0
  %4843 = vmatpush1.bf16.msra.mxu0 %v4593
  %4844 = vmatprep.subr.bf16.mxu0 0
  %4845 = vmatpush1.bf16.msra.mxu0 %v4592
  %4846 = vmatprep.subr.bf16.mxu0 0
  %4847 = vmatpush1.bf16.msra.mxu0 %v4591
  %4848 = vmatprep.subr.bf16.mxu0 0
  %4849 = vmatpush1.bf16.msra.mxu0 %v4590
  %4850 = vmatprep.subr.bf16.mxu0 0
  %4851 = vmatpush1.bf16.msra.mxu0 %v4589
  %4852 = vmatprep.subr.bf16.mxu0 0
  %4853 = vmatpush1.bf16.msra.mxu0 %v4588
  %4854 = vmatprep.subr.bf16.mxu0 0
  %4855 = vmatpush1.bf16.msra.mxu0 %v4587
  %4856 = vmatprep.subr.bf16.mxu0 0
  %4857 = vmatpush1.bf16.msra.mxu0 %v4586
  %4858 = vmatprep.subr.bf16.mxu0 0
  %4859 = vmatpush2.bf16.msra.mxu0 %v4601
  %4860 = vmatprep.subr.bf16.mxu0 0
  %4861 = vmatpush2.bf16.msra.mxu0 %v4600
  %4862 = vmatprep.subr.bf16.mxu0 0
  %4863 = vmatpush2.bf16.msra.mxu0 %v4599
  %4864 = vmatprep.subr.bf16.mxu0 0
  %4865 = vmatpush2.bf16.msra.mxu0 %v4598
  %4866 = vmatprep.subr.bf16.mxu0 0
  %4867 = vmatpush2.bf16.msra.mxu0 %v4597
  %4868 = vmatprep.subr.bf16.mxu0 0
  %4869 = vmatpush2.bf16.msra.mxu0 %v4596
  %4870 = vmatprep.subr.bf16.mxu0 0
  %4871 = vmatpush2.bf16.msra.mxu0 %v4595
  %4872 = vmatprep.subr.bf16.mxu0 0
  %4873 = vmatpush2.bf16.msra.mxu0 %v4594
  %4874 = vmatprep.mubr.bf16.mxu0 %v4075
  %4875 = vmatmul.mubr.bf16.gmra.mxu0 %v4069
  %v4876 = vpop.f32.mrf.mxu0
  %v4877 = vadd.f32 %v4805, %v4876
  %v4878 = vpop.f32.mrf.mxu0
  %v4879 = vpop.f32.mrf.mxu0
  %v4880 = vadd.f32 %v4808, %v4879
  %v4881 = vpop.f32.mrf.mxu0
  %4882 = vmatprep.mubr.bf16.mxu0 %v4076
  %4883 = vmatmul.mubr.bf16.gmra.mxu0 %v4070
  %v4884 = vpop.f32.mrf.mxu0
  %v4885 = vadd.f32 %v4813, %v4884
  %v4886 = vpop.f32.mrf.mxu0
  %v4887 = vpop.f32.mrf.mxu0
  %v4888 = vadd.f32 %v4816, %v4887
  %v4889 = vpop.f32.mrf.mxu0
  %4890 = vmatprep.mubr.bf16.mxu0 %v4077
  %4891 = vmatmul.mubr.bf16.gmra.mxu0 %v4071
  %v4892 = vpop.f32.mrf.mxu0
  %v4893 = vadd.f32 %v4821, %v4892
  %v4894 = vpop.f32.mrf.mxu0
  %v4895 = vpop.f32.mrf.mxu0
  %v4896 = vadd.f32 %v4824, %v4895
  %v4897 = vpop.f32.mrf.mxu0
  %4898 = vmatprep.mubr.bf16.mxu0 %v4078
  %4899 = vmatmul.mubr.bf16.gmra.mxu0 %v4072
  %v4900 = vpop.f32.mrf.mxu0
  %v4901 = vadd.f32 %v4829, %v4900
  %v4902 = vpop.f32.mrf.mxu0
  %v4903 = vpop.f32.mrf.mxu0
  %v4904 = vadd.f32 %v4832, %v4903
  %v4905 = vpop.f32.mrf.mxu0
  %4906 = vmatprep.mubr.bf16.mxu0 %v4079
  %4907 = vmatmul.mubr.bf16.gmra.mxu0 %v4073
  %v4908 = vpop.f32.mrf.mxu0
  %v4909 = vadd.f32 %v4837, %v4908
  %v4910 = vpop.f32.mrf.mxu0
  %v4911 = vpop.f32.mrf.mxu0
  %v4912 = vpop.f32.mrf.mxu0
  %4913 = vdwg.mxu0
  %4914 = vmatprep.subr.bf16.mxu0 0
  %4915 = vmatpush1.bf16.msra.mxu0 %v4609
  %4916 = vmatprep.subr.bf16.mxu0 0
  %4917 = vmatpush1.bf16.msra.mxu0 %v4608
  %4918 = vmatprep.subr.bf16.mxu0 0
  %4919 = vmatpush1.bf16.msra.mxu0 %v4607
  %4920 = vmatprep.subr.bf16.mxu0 0
  %4921 = vmatpush1.bf16.msra.mxu0 %v4606
  %4922 = vmatprep.subr.bf16.mxu0 0
  %4923 = vmatpush1.bf16.msra.mxu0 %v4605
  %4924 = vmatprep.subr.bf16.mxu0 0
  %4925 = vmatpush1.bf16.msra.mxu0 %v4604
  %4926 = vmatprep.subr.bf16.mxu0 0
  %4927 = vmatpush1.bf16.msra.mxu0 %v4603
  %4928 = vmatprep.subr.bf16.mxu0 0
  %4929 = vmatpush1.bf16.msra.mxu0 %v4602
  %4930 = vmatprep.subr.bf16.mxu0 0
  %4931 = vmatpush2.bf16.msra.mxu0 %v4617
  %4932 = vmatprep.subr.bf16.mxu0 0
  %4933 = vmatpush2.bf16.msra.mxu0 %v4616
  %4934 = vmatprep.subr.bf16.mxu0 0
  %4935 = vmatpush2.bf16.msra.mxu0 %v4615
  %4936 = vmatprep.subr.bf16.mxu0 0
  %4937 = vmatpush2.bf16.msra.mxu0 %v4614
  %4938 = vmatprep.subr.bf16.mxu0 0
  %4939 = vmatpush2.bf16.msra.mxu0 %v4613
  %4940 = vmatprep.subr.bf16.mxu0 0
  %4941 = vmatpush2.bf16.msra.mxu0 %v4612
  %4942 = vmatprep.subr.bf16.mxu0 0
  %4943 = vmatpush2.bf16.msra.mxu0 %v4611
  %4944 = vmatprep.subr.bf16.mxu0 0
  %4945 = vmatpush2.bf16.msra.mxu0 %v4610
  %4946 = vmatprep.mubr.bf16.mxu0 %v4103
  %4947 = vmatmul.mubr.bf16.gmra.mxu0 %v4089
  %v4948 = vpop.f32.mrf.mxu0
  %v4949 = vadd.f32 %v4877, %v4948
  %v4950 = vpop.f32.mrf.mxu0
  %v4951 = vpop.f32.mrf.mxu0
  %v4952 = vadd.f32 %v4880, %v4951
  %v4953 = vpop.f32.mrf.mxu0
  %4954 = vmatprep.mubr.bf16.mxu0 %v4104
  %4955 = vmatmul.mubr.bf16.gmra.mxu0 %v4090
  %v4956 = vpop.f32.mrf.mxu0
  %v4957 = vadd.f32 %v4885, %v4956
  %v4958 = vpop.f32.mrf.mxu0
  %v4959 = vpop.f32.mrf.mxu0
  %v4960 = vadd.f32 %v4888, %v4959
  %v4961 = vpop.f32.mrf.mxu0
  %4962 = vmatprep.mubr.bf16.mxu0 %v4105
  %4963 = vmatmul.mubr.bf16.gmra.mxu0 %v4091
  %v4964 = vpop.f32.mrf.mxu0
  %v4965 = vadd.f32 %v4893, %v4964
  %v4966 = vpop.f32.mrf.mxu0
  %v4967 = vpop.f32.mrf.mxu0
  %v4968 = vadd.f32 %v4896, %v4967
  %v4969 = vpop.f32.mrf.mxu0
  %4970 = vmatprep.mubr.bf16.mxu0 %v4106
  %4971 = vmatmul.mubr.bf16.gmra.mxu0 %v4092
  %v4972 = vpop.f32.mrf.mxu0
  %v4973 = vadd.f32 %v4901, %v4972
  %v4974 = vpop.f32.mrf.mxu0
  %v4975 = vpop.f32.mrf.mxu0
  %v4976 = vadd.f32 %v4904, %v4975
  %v4977 = vpop.f32.mrf.mxu0
  %4978 = vmatprep.mubr.bf16.mxu0 %v4107
  %4979 = vmatmul.mubr.bf16.gmra.mxu0 %v4093
  %v4980 = vpop.f32.mrf.mxu0
  %v4981 = vadd.f32 %v4909, %v4980
  %v4982 = vpop.f32.mrf.mxu0
  %v4983 = vpop.f32.mrf.mxu0
  %v4984 = vpop.f32.mrf.mxu0
  %4985 = vdwg.mxu0
  %4986 = vmatprep.subr.bf16.mxu0 0
  %4987 = vmatpush1.bf16.msra.mxu0 %v4625
  %4988 = vmatprep.subr.bf16.mxu0 0
  %4989 = vmatpush1.bf16.msra.mxu0 %v4624
  %4990 = vmatprep.subr.bf16.mxu0 0
  %4991 = vmatpush1.bf16.msra.mxu0 %v4623
  %4992 = vmatprep.subr.bf16.mxu0 0
  %4993 = vmatpush1.bf16.msra.mxu0 %v4622
  %4994 = vmatprep.subr.bf16.mxu0 0
  %4995 = vmatpush1.bf16.msra.mxu0 %v4621
  %4996 = vmatprep.subr.bf16.mxu0 0
  %4997 = vmatpush1.bf16.msra.mxu0 %v4620
  %4998 = vmatprep.subr.bf16.mxu0 0
  %4999 = vmatpush1.bf16.msra.mxu0 %v4619
  %5000 = vmatprep.subr.bf16.mxu0 0
  %5001 = vmatpush1.bf16.msra.mxu0 %v4618
  %5002 = vmatprep.subr.bf16.mxu0 0
  %5003 = vmatpush2.bf16.msra.mxu0 0
  %5004 = vmatprep.subr.bf16.mxu0 0
  %5005 = vmatpush2.bf16.msra.mxu0 0
  %5006 = vmatprep.subr.bf16.mxu0 0
  %5007 = vmatpush2.bf16.msra.mxu0 0
  %5008 = vmatprep.subr.bf16.mxu0 0
  %5009 = vmatpush2.bf16.msra.mxu0 0
  %5010 = vmatprep.subr.bf16.mxu0 0
  %5011 = vmatpush2.bf16.msra.mxu0 0
  %5012 = vmatprep.subr.bf16.mxu0 0
  %5013 = vmatpush2.bf16.msra.mxu0 0
  %5014 = vmatprep.subr.bf16.mxu0 0
  %5015 = vmatpush2.bf16.msra.mxu0 0
  %5016 = vmatprep.subr.bf16.mxu0 0
  %5017 = vmatpush2.bf16.msra.mxu0 0
  %5018 = vmatprep.mubr.bf16.mxu0 0
  %5019 = vmatmul.mubr.bf16.gmra.mxu0 %v4117
  %v5020 = vpop.f32.mrf.mxu0
  %v5021 = vadd.f32 %v4949, %v5020
  %v5022 = vpop.f32.mrf.mxu0
  %v5023 = vpop.f32.mrf.mxu0
  %v5024 = vadd.f32 %v4952, %v5023
  %v5025 = vpop.f32.mrf.mxu0
  %5026 = vmatprep.mubr.bf16.mxu0 0
  %5027 = vmatmul.mubr.bf16.gmra.mxu0 %v4118
  %v5028 = vpop.f32.mrf.mxu0
  %v5029 = vadd.f32 %v4957, %v5028
  %v5030 = vpop.f32.mrf.mxu0
  %v5031 = vpop.f32.mrf.mxu0
  %v5032 = vadd.f32 %v4960, %v5031
  %v5033 = vpop.f32.mrf.mxu0
  %5034 = vmatprep.mubr.bf16.mxu0 0
  %5035 = vmatmul.mubr.bf16.gmra.mxu0 %v4119
  %v5036 = vpop.f32.mrf.mxu0
  %v5037 = vadd.f32 %v4965, %v5036
  %v5038 = vpop.f32.mrf.mxu0
  %v5039 = vpop.f32.mrf.mxu0
  %v5040 = vadd.f32 %v4968, %v5039
  %v5041 = vpop.f32.mrf.mxu0
  %5042 = vmatprep.mubr.bf16.mxu0 0
  %5043 = vmatmul.mubr.bf16.gmra.mxu0 %v4120
  %v5044 = vpop.f32.mrf.mxu0
  %v5045 = vadd.f32 %v4973, %v5044
  %v5046 = vpop.f32.mrf.mxu0
  %v5047 = vpop.f32.mrf.mxu0
  %v5048 = vadd.f32 %v4976, %v5047
  %v5049 = vpop.f32.mrf.mxu0
  %5050 = vmatprep.mubr.bf16.mxu0 0
  %5051 = vmatmul.mubr.bf16.gmra.mxu0 %v4121
  %v5052 = vpop.f32.mrf.mxu0
  %v5053 = vadd.f32 %v4981, %v5052
  %v5054 = vpop.f32.mrf.mxu0
  %v5055 = vpop.f32.mrf.mxu0
  %v5056 = vpop.f32.mrf.mxu0
  %5057 = vdwg.mxu0
  %v5058 = vld [vmem:[%s10] sm:$0x1]
  %v5060 = vlaneseq
  %v5061 = vshrl.u32 %v5060, 7
  %v5062 = vsub.s32 0, %v5061
  %v5063 = vrot.slane %v5058, %v5062
  %v5065 = vmul.f32 %v5021, %v5063
  %v5066 = vmul.f32 %v5024, %v5063
  %v5067 = vmul.f32 %v5029, %v5063
  %v5068 = vmul.f32 %v5032, %v5063
  %v5069 = vmul.f32 %v5037, %v5063
  %v5070 = vmul.f32 %v5040, %v5063
  %v5071 = vmul.f32 %v5045, %v5063
  %v5072 = vmul.f32 %v5048, %v5063
  %v5073 = vmul.f32 %v5053, %v5063
  %v5074 = vld [vmem:[%s11] sm:$0x1]
  %v5076 = vlaneseq
  %v5077 = vshrl.u32 %v5076, 7
  %v5078 = vsub.s32 0, %v5077
  %v5079 = vrot.slane %v5074, %v5078
  %v5081 = vadd.f32 %v5065, %v5079
  %v5082 = vadd.f32 %v5066, %v5079
  %v5083 = vadd.f32 %v5067, %v5079
  %v5084 = vadd.f32 %v5068, %v5079
  %v5085 = vadd.f32 %v5069, %v5079
  %v5086 = vadd.f32 %v5070, %v5079
  %v5087 = vadd.f32 %v5071, %v5079
  %v5088 = vadd.f32 %v5072, %v5079
  %v5089 = vadd.f32 %v5073, %v5079
  %v5090 = vmax.f32 %v5081, 0.0
  %v5091 = vmax.f32 %v5082, 0.0
  %v5092 = vmax.f32 %v5083, 0.0
  %v5093 = vmax.f32 %v5084, 0.0
  %v5094 = vmax.f32 %v5085, 0.0
  %v5095 = vmax.f32 %v5086, 0.0
  %v5096 = vmax.f32 %v5087, 0.0
  %v5097 = vmax.f32 %v5088, 0.0
  %v5098 = vmax.f32 %v5089, 0.0
  %5099 = vst [vmem:[#allocation7] sm:$0xff] %v5090
  %5100 = vst [vmem:[#allocation7 + $0x8] sm:$0xff] %v5091
  %5101 = vst [vmem:[#allocation7 + $0x10] sm:$0xff] %v5092
  %5102 = vst [vmem:[#allocation7 + $0x18] sm:$0xff] %v5093
  %5103 = vst [vmem:[#allocation7 + $0x20] sm:$0xff] %v5094
  %5104 = vst [vmem:[#allocation7 + $0x28] sm:$0xff] %v5095
  %5105 = vst [vmem:[#allocation7 + $0x30] sm:$0xff] %v5096
  %5106 = vst [vmem:[#allocation7 + $0x38] sm:$0xff] %v5097
  %5107 = vst [vmem:[#allocation7 + $0x40] sm:$0xff] %v5098
  %v5108 = vld [vmem:[#allocation7] sm:$0xff]
  %v5109 = vld [vmem:[#allocation7 + $0x8] sm:$0xff]
  %v5110 = vld [vmem:[#allocation7 + $0x10] sm:$0xff]
  %v5111 = vld [vmem:[#allocation7 + $0x18] sm:$0xff]
  %v5112 = vld [vmem:[#allocation7 + $0x20] sm:$0xff]
  %v5113 = vld [vmem:[#allocation7 + $0x28] sm:$0xff]
  %v5114 = vld [vmem:[#allocation7 + $0x30] sm:$0xff]
  %v5115 = vld [vmem:[#allocation7 + $0x38] sm:$0xff]
  %v5116 = vld [vmem:[#allocation7 + $0x40] sm:$0x1]
  %v5117 = vld [vmem:[#allocation7 + $0x1] sm:$0xff]
  %v5118 = vld [vmem:[#allocation7 + $0x9] sm:$0xff]
  %v5119 = vld [vmem:[#allocation7 + $0x11] sm:$0xff]
  %v5120 = vld [vmem:[#allocation7 + $0x19] sm:$0xff]
  %v5121 = vld [vmem:[#allocation7 + $0x21] sm:$0xff]
  %v5122 = vld [vmem:[#allocation7 + $0x29] sm:$0xff]
  %v5123 = vld [vmem:[#allocation7 + $0x31] sm:$0xff]
  %v5124 = vld [vmem:[#allocation7 + $0x39] sm:$0xff]
  %v5125 = vld [vmem:[#allocation7 + $0x41] sm:$0x1]
  %v5126 = vmax.f32 %v5108, %v5117
  %v5127 = vmax.f32 %v5109, %v5118
  %v5128 = vmax.f32 %v5110, %v5119
  %v5129 = vmax.f32 %v5111, %v5120
  %v5130 = vmax.f32 %v5112, %v5121
  %v5131 = vmax.f32 %v5113, %v5122
  %v5132 = vmax.f32 %v5114, %v5123
  %v5133 = vmax.f32 %v5115, %v5124
  %v5134 = vmax.f32 %v5116, %v5125
  %v5135 = vld [vmem:[#allocation7 + $0x6] sm:$0xff]
  %v5136 = vld [vmem:[#allocation7 + $0xe] sm:$0xff]
  %v5137 = vld [vmem:[#allocation7 + $0x16] sm:$0xff]
  %v5138 = vld [vmem:[#allocation7 + $0x1e] sm:$0xff]
  %v5139 = vld [vmem:[#allocation7 + $0x26] sm:$0xff]
  %v5140 = vld [vmem:[#allocation7 + $0x2e] sm:$0xff]
  %v5141 = vld [vmem:[#allocation7 + $0x36] sm:$0xff]
  %v5142 = vld [vmem:[#allocation7 + $0x3e] sm:$0xff]
  %v5143 = vld [vmem:[#allocation7 + $0x46] sm:$0x1]
  %v5144 = vld [vmem:[#allocation7 + $0x7] sm:$0xff]
  %v5145 = vld [vmem:[#allocation7 + $0xf] sm:$0xff]
  %v5146 = vld [vmem:[#allocation7 + $0x17] sm:$0xff]
  %v5147 = vld [vmem:[#allocation7 + $0x1f] sm:$0xff]
  %v5148 = vld [vmem:[#allocation7 + $0x27] sm:$0xff]
  %v5149 = vld [vmem:[#allocation7 + $0x2f] sm:$0xff]
  %v5150 = vld [vmem:[#allocation7 + $0x37] sm:$0xff]
  %v5151 = vld [vmem:[#allocation7 + $0x3f] sm:$0xff]
  %v5152 = vld [vmem:[#allocation7 + $0x47] sm:$0x1]
  %v5153 = vmax.f32 %v5135, %v5144
  %v5154 = vmax.f32 %v5136, %v5145
  %v5155 = vmax.f32 %v5137, %v5146
  %v5156 = vmax.f32 %v5138, %v5147
  %v5157 = vmax.f32 %v5139, %v5148
  %v5158 = vmax.f32 %v5140, %v5149
  %v5159 = vmax.f32 %v5141, %v5150
  %v5160 = vmax.f32 %v5142, %v5151
  %v5161 = vmax.f32 %v5143, %v5152
  %v5162 = vmax.f32 %v5126, %v5153
  %v5163 = vmax.f32 %v5127, %v5154
  %v5164 = vmax.f32 %v5128, %v5155
  %v5165 = vmax.f32 %v5129, %v5156
  %v5166 = vmax.f32 %v5130, %v5157
  %v5167 = vmax.f32 %v5131, %v5158
  %v5168 = vmax.f32 %v5132, %v5159
  %v5169 = vmax.f32 %v5133, %v5160
  %v5170 = vmax.f32 %v5134, %v5161
  %v5171 = vld [vmem:[%s12] sm:$0xff]
  %v5172 = vld [vmem:[%s12 + $0x8] sm:$0xff]
  %v5173 = vld [vmem:[%s12 + $0x10] sm:$0xff]
  %v5174 = vld [vmem:[%s12 + $0x18] sm:$0xff]
  %v5175 = vld [vmem:[%s12 + $0x20] sm:$0xff]
  %v5176 = vld [vmem:[%s12 + $0x28] sm:$0x3]
  %vm5177 = vcmask 531456
  %v5179 = vsel %vm5177, %v5171, 0
  %v5182 = vsel %vm5177, %v5172, 0
  %v5185 = vsel %vm5177, %v5173, 0
  %v5188 = vsel %vm5177, %v5174, 0
  %v5191 = vsel %vm5177, %v5175, 0
  %v5194 = vsel %vm5177, %v5176, 0
  %v5197 = vsel %vm404, %v5170, 0
  %5199 = vmatprep.subr.mxu0 0.0
  %5200 = vmatpush1.msra.mxu0 0.0
  %5201 = vmatprep.subr.mxu0 0.0
  %5202 = vmatpush1.msra.mxu0 0.0
  %5203 = vmatprep.subr.mxu0 0.0
  %5204 = vmatpush1.msra.mxu0 0.0
  %5205 = vmatprep.subr.mxu0 0.0
  %5206 = vmatpush1.msra.mxu0 0.0
  %5207 = vmatprep.subr.mxu0 0.0
  %5208 = vmatpush1.msra.mxu0 0.0
  %5209 = vmatprep.subr.mxu0 0.0
  %5210 = vmatpush1.msra.mxu0 0.0
  %5211 = vmatprep.subr.mxu0 0.0
  %5212 = vmatpush1.msra.mxu0 0.0
  %5213 = vmatprep.subr.mxu0 0.0
  %5214 = vmatpush1.msra.mxu0 %v5197
  %5215 = vmatprep.subr.mxu0 0.0
  %5216 = vmatpush1.msra.mxu0 %v5169
  %5217 = vmatprep.subr.mxu0 0.0
  %5218 = vmatpush1.msra.mxu0 %v5168
  %5219 = vmatprep.subr.mxu0 0.0
  %5220 = vmatpush1.msra.mxu0 %v5167
  %5221 = vmatprep.subr.mxu0 0.0
  %5222 = vmatpush1.msra.mxu0 %v5166
  %5223 = vmatprep.subr.mxu0 0.0
  %5224 = vmatpush1.msra.mxu0 %v5165
  %5225 = vmatprep.subr.mxu0 0.0
  %5226 = vmatpush1.msra.mxu0 %v5164
  %5227 = vmatprep.subr.mxu0 0.0
  %5228 = vmatpush1.msra.mxu0 %v5163
  %5229 = vmatprep.subr.mxu0 0.0
  %5230 = vmatpush1.msra.mxu0 %v5162
  %5231 = vmatprep.subr.mxu0 0.0
  %5232 = vmatpush2.msra.mxu0 0.0
  %5233 = vmatprep.subr.mxu0 0.0
  %5234 = vmatpush2.msra.mxu0 0.0
  %5235 = vmatprep.subr.mxu0 0.0
  %5236 = vmatpush2.msra.mxu0 0.0
  %5237 = vmatprep.subr.mxu0 0.0
  %5238 = vmatpush2.msra.mxu0 0.0
  %5239 = vmatprep.subr.mxu0 0.0
  %5240 = vmatpush2.msra.mxu0 0.0
  %5241 = vmatprep.subr.mxu0 0.0
  %5242 = vmatpush2.msra.mxu0 0.0
  %5243 = vmatprep.subr.mxu0 0.0
  %5244 = vmatpush2.msra.mxu0 0.0
  %5245 = vmatprep.subr.mxu0 0.0
  %5246 = vmatpush2.msra.mxu0 0.0
  %5247 = vmatprep.subr.mxu0 0.0
  %5248 = vmatpush2.msra.mxu0 0.0
  %5249 = vmatprep.subr.mxu0 0.0
  %5250 = vmatpush2.msra.mxu0 0.0
  %5251 = vmatprep.subr.mxu0 0.0
  %5252 = vmatpush2.msra.mxu0 0.0
  %5253 = vmatprep.subr.mxu0 0.0
  %5254 = vmatpush2.msra.mxu0 0.0
  %5255 = vmatprep.subr.mxu0 0.0
  %5256 = vmatpush2.msra.mxu0 0.0
  %5257 = vmatprep.subr.mxu0 0.0
  %5258 = vmatpush2.msra.mxu0 0.0
  %5259 = vmatprep.subr.mxu0 0.0
  %5260 = vmatpush2.msra.mxu0 0.0
  %5261 = vmatprep.subr.mxu0 0.0
  %5262 = vmatpush2.msra.mxu0 0.0
  %5263 = vmatprep.mubr.f32.mxu0 0.0
  %5264 = vmatmul.mubr.f32.gmra.mxu0 %v5179
  %v5265 = vpop.f32.mrf.mxu0
  %v5266 = vadd.f32 0.0, %v5265
  %v5267 = vpop.f32.mrf.mxu0
  %5268 = vmatprep.mubr.f32.mxu0 0.0
  %5269 = vmatmul.mubr.f32.gmra.mxu0 %v5182
  %v5270 = vpop.f32.mrf.mxu0
  %v5271 = vadd.f32 0.0, %v5270
  %v5272 = vpop.f32.mrf.mxu0
  %5273 = vmatprep.mubr.f32.mxu0 0.0
  %5274 = vmatmul.mubr.f32.gmra.mxu0 %v5185
  %v5275 = vpop.f32.mrf.mxu0
  %v5276 = vadd.f32 0.0, %v5275
  %v5277 = vpop.f32.mrf.mxu0
  %5278 = vmatprep.mubr.f32.mxu0 0.0
  %5279 = vmatmul.mubr.f32.gmra.mxu0 %v5188
  %v5280 = vpop.f32.mrf.mxu0
  %v5281 = vadd.f32 0.0, %v5280
  %v5282 = vpop.f32.mrf.mxu0
  %5283 = vmatprep.mubr.f32.mxu0 0.0
  %5284 = vmatmul.mubr.f32.gmra.mxu0 %v5191
  %v5285 = vpop.f32.mrf.mxu0
  %v5286 = vadd.f32 0.0, %v5285
  %v5287 = vpop.f32.mrf.mxu0
  %5288 = vmatprep.mubr.f32.mxu0 0.0
  %5289 = vmatmul.mubr.f32.gmra.mxu0 %v5194
  %v5290 = vpop.f32.mrf.mxu0
  %v5291 = vadd.f32 0.0, %v5290
  %v5292 = vpop.f32.mrf.mxu0
  %5293 = vdwg.mxu0
  %5294 = vst [vmem:[#allocation4] sm:$0xff] %v5266
  %5295 = vst [vmem:[#allocation4 + $0x8] sm:$0xff] %v5271
  %5296 = vst [vmem:[#allocation4 + $0x10] sm:$0xff] %v5276
  %5297 = vst [vmem:[#allocation4 + $0x18] sm:$0xff] %v5281
  %5298 = vst [vmem:[#allocation4 + $0x20] sm:$0xff] %v5286
  %5299 = vst [vmem:[#allocation4 + $0x28] sm:$0x3] %v5291
  %v5300 = vld [vmem:[#allocation4] sm:$0xff]
  %v5301 = vld [vmem:[#allocation4 + $0x8] sm:$0xff]
  %v5302 = vld [vmem:[#allocation4 + $0x10] sm:$0xff]
  %v5303 = vld [vmem:[#allocation4 + $0x18] sm:$0xff]
  %v5304 = vpack.c.bf16 %v5301, %v5300
  %v5305 = vpack.c.bf16 %v5303, %v5302
  %v5306 = vld [vmem:[#allocation4 + $0x1] sm:$0xff]
  %v5307 = vld [vmem:[#allocation4 + $0x9] sm:$0xff]
  %v5308 = vld [vmem:[#allocation4 + $0x11] sm:$0xff]
  %v5309 = vld [vmem:[#allocation4 + $0x19] sm:$0xff]
  %v5310 = vpack.c.bf16 %v5307, %v5306
  %v5311 = vpack.c.bf16 %v5309, %v5308
  %v5312 = vld [vmem:[#allocation4 + $0x2] sm:$0xff]
  %v5313 = vld [vmem:[#allocation4 + $0xa] sm:$0xff]
  %v5314 = vld [vmem:[#allocation4 + $0x12] sm:$0xff]
  %v5315 = vld [vmem:[#allocation4 + $0x1a] sm:$0xff]
  %v5316 = vpack.c.bf16 %v5313, %v5312
  %v5317 = vpack.c.bf16 %v5315, %v5314
  %v5318 = vld [vmem:[#allocation4 + $0x4] sm:$0xff]
  %v5319 = vld [vmem:[#allocation4 + $0xc] sm:$0xff]
  %v5320 = vld [vmem:[#allocation4 + $0x14] sm:$0xff]
  %v5321 = vld [vmem:[#allocation4 + $0x1c] sm:$0xff]
  %v5322 = vpack.c.bf16 %v5319, %v5318
  %v5323 = vpack.c.bf16 %v5321, %v5320
  %v5324 = vld [vmem:[#allocation4 + $0x5] sm:$0xff]
  %v5325 = vld [vmem:[#allocation4 + $0xd] sm:$0xff]
  %v5326 = vld [vmem:[#allocation4 + $0x15] sm:$0xff]
  %v5327 = vld [vmem:[#allocation4 + $0x1d] sm:$0xff]
  %v5328 = vpack.c.bf16 %v5325, %v5324
  %v5329 = vpack.c.bf16 %v5327, %v5326
  %v5330 = vld [vmem:[#allocation4 + $0x6] sm:$0xff]
  %v5331 = vld [vmem:[#allocation4 + $0xe] sm:$0xff]
  %v5332 = vld [vmem:[#allocation4 + $0x16] sm:$0xff]
  %v5333 = vld [vmem:[#allocation4 + $0x1e] sm:$0xff]
  %v5334 = vpack.c.bf16 %v5331, %v5330
  %v5335 = vpack.c.bf16 %v5333, %v5332
  %v5336 = vld [vmem:[#allocation4 + $0x20] sm:$0xff]
  %v5337 = vpack.c.bf16 %v5302, %v5301
  %v5338 = vpack.c.bf16 %v5336, %v5303
  %v5339 = vld [vmem:[#allocation4 + $0x21] sm:$0xff]
  %v5340 = vpack.c.bf16 %v5308, %v5307
  %v5341 = vpack.c.bf16 %v5339, %v5309
  %v5342 = vld [vmem:[#allocation4 + $0xa] sm:$0xff]
  %v5343 = vld [vmem:[#allocation4 + $0x12] sm:$0xff]
  %v5344 = vld [vmem:[#allocation4 + $0x1a] sm:$0xff]
  %v5345 = vld [vmem:[#allocation4 + $0x22] sm:$0xff]
  %v5346 = vpack.c.bf16 %v5343, %v5342
  %v5347 = vpack.c.bf16 %v5345, %v5344
  %v5348 = vld [vmem:[%s13] sm:$0xff]
  %v5349 = vld [vmem:[%s13 + $0x8] sm:$0xff]
  %v5350 = vld [vmem:[%s13 + $0x10] sm:$0xff]
  %v5351 = vld [vmem:[%s13 + $0x18] sm:$0xff]
  %v5352 = vld [vmem:[%s13 + $0x20] sm:$0xff]
  %v5353 = vld [vmem:[%s13 + $0x28] sm:$0xff]
  %v5354 = vld [vmem:[%s13 + $0x30] sm:$0xff]
  %v5355 = vld [vmem:[%s13 + $0x38] sm:$0xff]
  %v5356 = vld [vmem:[%s13 + $0x40] sm:$0xff]
  %v5357 = vld [vmem:[%s13 + $0x48] sm:$0xff]
  %v5358 = vld [vmem:[%s13 + $0x50] sm:$0xff]
  %v5359 = vld [vmem:[%s13 + $0x58] sm:$0xff]
  %v5360 = vld [vmem:[%s13 + $0x60] sm:$0xff]
  %v5361 = vld [vmem:[%s13 + $0x68] sm:$0xff]
  %v5362 = vld [vmem:[%s13 + $0x70] sm:$0xff]
  %v5363 = vld [vmem:[%s13 + $0x78] sm:$0xff]
  %v5364 = vld [vmem:[%s13 + $0x80] sm:$0xff]
  %v5365 = vld [vmem:[%s13 + $0x88] sm:$0xff]
  %v5366 = vld [vmem:[%s13 + $0x90] sm:$0xff]
  %v5367 = vld [vmem:[%s13 + $0x98] sm:$0xff]
  %v5368 = vld [vmem:[%s13 + $0xa0] sm:$0xff]
  %v5369 = vld [vmem:[%s13 + $0xa8] sm:$0xff]
  %v5370 = vld [vmem:[%s13 + $0xb0] sm:$0xff]
  %v5371 = vld [vmem:[%s13 + $0xb8] sm:$0xff]
  %v5372 = vld [vmem:[%s13 + $0xc0] sm:$0xff]
  %v5373 = vld [vmem:[%s13 + $0xc8] sm:$0xff]
  %v5374 = vld [vmem:[%s13 + $0xd0] sm:$0xff]
  %v5375 = vld [vmem:[%s13 + $0xd8] sm:$0xff]
  %v5376 = vld [vmem:[%s13 + $0xe0] sm:$0xff]
  %v5377 = vld [vmem:[%s13 + $0xe8] sm:$0xff]
  %v5378 = vld [vmem:[%s13 + $0xf0] sm:$0xff]
  %v5379 = vld [vmem:[%s13 + $0xf8] sm:$0xff]
  %v5380 = vld [vmem:[%s13 + $0x100] sm:$0xff]
  %v5381 = vld [vmem:[%s13 + $0x108] sm:$0xff]
  %v5382 = vld [vmem:[%s13 + $0x110] sm:$0xff]
  %v5383 = vld [vmem:[%s13 + $0x118] sm:$0xff]
  %v5384 = vld [vmem:[%s13 + $0x120] sm:$0xff]
  %v5385 = vld [vmem:[%s13 + $0x128] sm:$0xff]
  %v5386 = vld [vmem:[%s13 + $0x130] sm:$0xff]
  %v5387 = vld [vmem:[%s13 + $0x138] sm:$0xff]
  %v5388 = vld [vmem:[%s13 + $0x140] sm:$0xff]
  %v5389 = vld [vmem:[%s13 + $0x148] sm:$0xff]
  %v5390 = vld [vmem:[%s13 + $0x150] sm:$0xff]
  %v5391 = vld [vmem:[%s13 + $0x158] sm:$0xff]
  %v5392 = vld [vmem:[%s13 + $0x160] sm:$0xff]
  %v5393 = vld [vmem:[%s13 + $0x168] sm:$0xff]
  %v5394 = vld [vmem:[%s13 + $0x170] sm:$0xff]
  %v5395 = vld [vmem:[%s13 + $0x178] sm:$0xff]
  %v5396 = vld [vmem:[%s13 + $0x180] sm:$0xff]
  %v5397 = vld [vmem:[%s13 + $0x188] sm:$0xff]
  %v5398 = vld [vmem:[%s13 + $0x190] sm:$0xff]
  %v5399 = vld [vmem:[%s13 + $0x198] sm:$0xff]
  %v5400 = vld [vmem:[%s13 + $0x1a0] sm:$0xff]
  %v5401 = vld [vmem:[%s13 + $0x1a8] sm:$0xff]
  %v5402 = vld [vmem:[%s13 + $0x1b0] sm:$0xff]
  %v5403 = vld [vmem:[%s13 + $0x1b8] sm:$0xff]
  %v5404 = vld [vmem:[%s13 + $0x1c0] sm:$0xff]
  %v5405 = vld [vmem:[%s13 + $0x1c8] sm:$0xff]
  %v5406 = vld [vmem:[%s13 + $0x1d0] sm:$0xff]
  %v5407 = vld [vmem:[%s13 + $0x1d8] sm:$0xff]
  %v5408 = vld [vmem:[%s13 + $0x1e0] sm:$0xff]
  %v5409 = vld [vmem:[%s13 + $0x1e8] sm:$0xff]
  %v5410 = vld [vmem:[%s13 + $0x1f0] sm:$0xff]
  %v5411 = vld [vmem:[%s13 + $0x1f8] sm:$0xff]
  %v5412 = vld [vmem:[%s13 + $0x200] sm:$0xff]
  %v5413 = vld [vmem:[%s13 + $0x208] sm:$0xff]
  %v5414 = vld [vmem:[%s13 + $0x210] sm:$0xff]
  %v5415 = vld [vmem:[%s13 + $0x218] sm:$0xff]
  %v5416 = vld [vmem:[%s13 + $0x220] sm:$0xff]
  %v5417 = vld [vmem:[%s13 + $0x228] sm:$0xff]
  %v5418 = vld [vmem:[%s13 + $0x230] sm:$0xff]
  %v5419 = vld [vmem:[%s13 + $0x238] sm:$0xff]
  %v5420 = vld [vmem:[%s13 + $0x240] sm:$0xff]
  %v5421 = vld [vmem:[%s13 + $0x248] sm:$0xff]
  %v5422 = vld [vmem:[%s13 + $0x250] sm:$0xff]
  %v5423 = vld [vmem:[%s13 + $0x258] sm:$0xff]
  %v5424 = vld [vmem:[%s13 + $0x260] sm:$0xff]
  %v5425 = vld [vmem:[%s13 + $0x268] sm:$0xff]
  %v5426 = vld [vmem:[%s13 + $0x270] sm:$0xff]
  %v5427 = vld [vmem:[%s13 + $0x278] sm:$0xff]
  %v5428 = vld [vmem:[%s13 + $0x280] sm:$0xff]
  %v5429 = vld [vmem:[%s13 + $0x288] sm:$0xff]
  %v5430 = vld [vmem:[%s13 + $0x290] sm:$0xff]
  %v5431 = vld [vmem:[%s13 + $0x298] sm:$0xff]
  %v5432 = vld [vmem:[%s13 + $0x2a0] sm:$0xff]
  %v5433 = vld [vmem:[%s13 + $0x2a8] sm:$0xff]
  %v5434 = vld [vmem:[%s13 + $0x2b0] sm:$0xff]
  %v5435 = vld [vmem:[%s13 + $0x2b8] sm:$0xff]
  %v5436 = vld [vmem:[%s13 + $0x2c0] sm:$0xff]
  %v5437 = vld [vmem:[%s13 + $0x2c8] sm:$0xff]
  %v5438 = vld [vmem:[%s13 + $0x2d0] sm:$0xff]
  %v5439 = vld [vmem:[%s13 + $0x2d8] sm:$0xff]
  %v5440 = vld [vmem:[%s13 + $0x2e0] sm:$0xff]
  %v5441 = vld [vmem:[%s13 + $0x2e8] sm:$0xff]
  %v5442 = vld [vmem:[%s13 + $0x2f0] sm:$0xff]
  %v5443 = vld [vmem:[%s13 + $0x2f8] sm:$0xff]
  %v5444 = vld [vmem:[%s13 + $0x300] sm:$0xff]
  %v5445 = vld [vmem:[%s13 + $0x308] sm:$0xff]
  %v5446 = vld [vmem:[%s13 + $0x310] sm:$0xff]
  %v5447 = vld [vmem:[%s13 + $0x318] sm:$0xff]
  %v5448 = vld [vmem:[%s13 + $0x320] sm:$0xff]
  %v5449 = vld [vmem:[%s13 + $0x328] sm:$0xff]
  %v5450 = vld [vmem:[%s13 + $0x330] sm:$0xff]
  %v5451 = vld [vmem:[%s13 + $0x338] sm:$0xff]
  %v5452 = vld [vmem:[%s13 + $0x340] sm:$0xff]
  %v5453 = vld [vmem:[%s13 + $0x348] sm:$0xff]
  %v5454 = vld [vmem:[%s13 + $0x350] sm:$0xff]
  %v5455 = vld [vmem:[%s13 + $0x358] sm:$0xff]
  %v5456 = vld [vmem:[%s13 + $0x360] sm:$0xff]
  %v5457 = vld [vmem:[%s13 + $0x368] sm:$0xff]
  %v5458 = vld [vmem:[%s13 + $0x370] sm:$0xff]
  %v5459 = vld [vmem:[%s13 + $0x378] sm:$0xff]
  %v5460 = vld [vmem:[%s13 + $0x380] sm:$0xff]
  %v5461 = vld [vmem:[%s13 + $0x388] sm:$0xff]
  %v5462 = vld [vmem:[%s13 + $0x390] sm:$0xff]
  %v5463 = vld [vmem:[%s13 + $0x398] sm:$0xff]
  %v5464 = vld [vmem:[%s13 + $0x3a0] sm:$0xff]
  %v5465 = vld [vmem:[%s13 + $0x3a8] sm:$0xff]
  %v5466 = vld [vmem:[%s13 + $0x3b0] sm:$0xff]
  %v5467 = vld [vmem:[%s13 + $0x3b8] sm:$0xff]
  %v5468 = vld [vmem:[%s13 + $0x3c0] sm:$0xff]
  %v5469 = vld [vmem:[%s13 + $0x3c8] sm:$0xff]
  %v5470 = vld [vmem:[%s13 + $0x3d0] sm:$0xff]
  %v5471 = vld [vmem:[%s13 + $0x3d8] sm:$0xff]
  %v5472 = vld [vmem:[%s13 + $0x3e0] sm:$0xff]
  %v5473 = vld [vmem:[%s13 + $0x3e8] sm:$0xff]
  %v5474 = vld [vmem:[%s13 + $0x3f0] sm:$0xff]
  %v5475 = vld [vmem:[%s13 + $0x3f8] sm:$0xff]
  %v5476 = vld [vmem:[%s13 + $0x400] sm:$0xff]
  %v5477 = vld [vmem:[%s13 + $0x408] sm:$0xff]
  %v5478 = vld [vmem:[%s13 + $0x410] sm:$0xff]
  %v5479 = vld [vmem:[%s13 + $0x418] sm:$0xff]
  %v5480 = vld [vmem:[%s13 + $0x420] sm:$0xff]
  %v5481 = vld [vmem:[%s13 + $0x428] sm:$0xff]
  %v5482 = vld [vmem:[%s13 + $0x430] sm:$0xff]
  %v5483 = vld [vmem:[%s13 + $0x438] sm:$0xff]
  %v5484 = vld [vmem:[%s13 + $0x440] sm:$0xff]
  %v5485 = vld [vmem:[%s13 + $0x448] sm:$0xff]
  %v5486 = vld [vmem:[%s13 + $0x450] sm:$0xff]
  %v5487 = vld [vmem:[%s13 + $0x458] sm:$0xff]
  %v5488 = vld [vmem:[%s13 + $0x460] sm:$0xff]
  %v5489 = vld [vmem:[%s13 + $0x468] sm:$0xff]
  %v5490 = vld [vmem:[%s13 + $0x470] sm:$0xff]
  %v5491 = vld [vmem:[%s13 + $0x478] sm:$0xff]
  %v5636 = vunpack.c.l.b16 %v5348
  %v5637 = vunpack.c.h.b16 %v5348
  %v5638 = vunpack.c.l.b16 %v5349
  %v5639 = vunpack.c.h.b16 %v5349
  %v5640 = vunpack.c.l.b16 %v5350
  %v5641 = vunpack.c.h.b16 %v5350
  %v5642 = vunpack.c.l.b16 %v5351
  %v5643 = vunpack.c.h.b16 %v5351
  %v5644 = vunpack.c.l.b16 %v5352
  %v5645 = vunpack.c.h.b16 %v5352
  %v5646 = vunpack.c.l.b16 %v5353
  %v5647 = vunpack.c.h.b16 %v5353
  %v5648 = vunpack.c.l.b16 %v5354
  %v5649 = vunpack.c.h.b16 %v5354
  %v5650 = vunpack.c.l.b16 %v5355
  %v5651 = vunpack.c.h.b16 %v5355
  %v5652 = vunpack.c.l.b16 %v5356
  %v5653 = vunpack.c.h.b16 %v5356
  %v5654 = vunpack.c.l.b16 %v5357
  %v5655 = vunpack.c.h.b16 %v5357
  %v5656 = vunpack.c.l.b16 %v5358
  %v5657 = vunpack.c.h.b16 %v5358
  %v5658 = vunpack.c.l.b16 %v5359
  %v5659 = vunpack.c.h.b16 %v5359
  %v5660 = vunpack.c.l.b16 %v5360
  %v5661 = vunpack.c.h.b16 %v5360
  %v5662 = vunpack.c.l.b16 %v5361
  %v5663 = vunpack.c.h.b16 %v5361
  %v5664 = vunpack.c.l.b16 %v5362
  %v5665 = vunpack.c.h.b16 %v5362
  %v5666 = vunpack.c.l.b16 %v5363
  %v5667 = vunpack.c.h.b16 %v5363
  %v5668 = vunpack.c.l.b16 %v5364
  %v5669 = vunpack.c.h.b16 %v5364
  %v5670 = vunpack.c.l.b16 %v5365
  %v5671 = vunpack.c.h.b16 %v5365
  %v5672 = vunpack.c.l.b16 %v5366
  %v5673 = vunpack.c.h.b16 %v5366
  %v5674 = vunpack.c.l.b16 %v5367
  %v5675 = vunpack.c.h.b16 %v5367
  %v5676 = vunpack.c.l.b16 %v5368
  %v5677 = vunpack.c.h.b16 %v5368
  %v5678 = vunpack.c.l.b16 %v5369
  %v5679 = vunpack.c.h.b16 %v5369
  %v5680 = vunpack.c.l.b16 %v5370
  %v5681 = vunpack.c.h.b16 %v5370
  %v5682 = vunpack.c.l.b16 %v5371
  %v5683 = vunpack.c.h.b16 %v5371
  %v5684 = vunpack.c.l.b16 %v5372
  %v5685 = vunpack.c.h.b16 %v5372
  %v5686 = vunpack.c.l.b16 %v5373
  %v5687 = vunpack.c.h.b16 %v5373
  %v5688 = vunpack.c.l.b16 %v5374
  %v5689 = vunpack.c.h.b16 %v5374
  %v5690 = vunpack.c.l.b16 %v5375
  %v5691 = vunpack.c.h.b16 %v5375
  %v5692 = vunpack.c.l.b16 %v5376
  %v5693 = vunpack.c.h.b16 %v5376
  %v5694 = vunpack.c.l.b16 %v5377
  %v5695 = vunpack.c.h.b16 %v5377
  %v5696 = vunpack.c.l.b16 %v5378
  %v5697 = vunpack.c.h.b16 %v5378
  %v5698 = vunpack.c.l.b16 %v5379
  %v5699 = vunpack.c.h.b16 %v5379
  %v5700 = vunpack.c.l.b16 %v5380
  %v5701 = vunpack.c.h.b16 %v5380
  %v5702 = vunpack.c.l.b16 %v5381
  %v5703 = vunpack.c.h.b16 %v5381
  %v5704 = vunpack.c.l.b16 %v5382
  %v5705 = vunpack.c.h.b16 %v5382
  %v5706 = vunpack.c.l.b16 %v5383
  %v5707 = vunpack.c.h.b16 %v5383
  %v5708 = vunpack.c.l.b16 %v5384
  %v5709 = vunpack.c.h.b16 %v5384
  %v5710 = vunpack.c.l.b16 %v5385
  %v5711 = vunpack.c.h.b16 %v5385
  %v5712 = vunpack.c.l.b16 %v5386
  %v5713 = vunpack.c.h.b16 %v5386
  %v5714 = vunpack.c.l.b16 %v5387
  %v5715 = vunpack.c.h.b16 %v5387
  %v5716 = vunpack.c.l.b16 %v5388
  %v5717 = vunpack.c.h.b16 %v5388
  %v5718 = vunpack.c.l.b16 %v5389
  %v5719 = vunpack.c.h.b16 %v5389
  %v5720 = vunpack.c.l.b16 %v5390
  %v5721 = vunpack.c.h.b16 %v5390
  %v5722 = vunpack.c.l.b16 %v5391
  %v5723 = vunpack.c.h.b16 %v5391
  %v5724 = vunpack.c.l.b16 %v5392
  %v5725 = vunpack.c.h.b16 %v5392
  %v5726 = vunpack.c.l.b16 %v5393
  %v5727 = vunpack.c.h.b16 %v5393
  %v5728 = vunpack.c.l.b16 %v5394
  %v5729 = vunpack.c.h.b16 %v5394
  %v5730 = vunpack.c.l.b16 %v5395
  %v5731 = vunpack.c.h.b16 %v5395
  %v5732 = vunpack.c.l.b16 %v5396
  %v5733 = vunpack.c.h.b16 %v5396
  %v5734 = vunpack.c.l.b16 %v5397
  %v5735 = vunpack.c.h.b16 %v5397
  %v5736 = vunpack.c.l.b16 %v5398
  %v5737 = vunpack.c.h.b16 %v5398
  %v5738 = vunpack.c.l.b16 %v5399
  %v5739 = vunpack.c.h.b16 %v5399
  %v5740 = vunpack.c.l.b16 %v5400
  %v5741 = vunpack.c.h.b16 %v5400
  %v5742 = vunpack.c.l.b16 %v5401
  %v5743 = vunpack.c.h.b16 %v5401
  %v5744 = vunpack.c.l.b16 %v5402
  %v5745 = vunpack.c.h.b16 %v5402
  %v5746 = vunpack.c.l.b16 %v5403
  %v5747 = vunpack.c.h.b16 %v5403
  %v5748 = vunpack.c.l.b16 %v5404
  %v5749 = vunpack.c.h.b16 %v5404
  %v5750 = vunpack.c.l.b16 %v5405
  %v5751 = vunpack.c.h.b16 %v5405
  %v5752 = vunpack.c.l.b16 %v5406
  %v5753 = vunpack.c.h.b16 %v5406
  %v5754 = vunpack.c.l.b16 %v5407
  %v5755 = vunpack.c.h.b16 %v5407
  %v5756 = vunpack.c.l.b16 %v5408
  %v5757 = vunpack.c.h.b16 %v5408
  %v5758 = vunpack.c.l.b16 %v5409
  %v5759 = vunpack.c.h.b16 %v5409
  %v5760 = vunpack.c.l.b16 %v5410
  %v5761 = vunpack.c.h.b16 %v5410
  %v5762 = vunpack.c.l.b16 %v5411
  %v5763 = vunpack.c.h.b16 %v5411
  %v5764 = vunpack.c.l.b16 %v5412
  %v5765 = vunpack.c.h.b16 %v5412
  %v5766 = vunpack.c.l.b16 %v5413
  %v5767 = vunpack.c.h.b16 %v5413
  %v5768 = vunpack.c.l.b16 %v5414
  %v5769 = vunpack.c.h.b16 %v5414
  %v5770 = vunpack.c.l.b16 %v5415
  %v5771 = vunpack.c.h.b16 %v5415
  %v5772 = vunpack.c.l.b16 %v5416
  %v5773 = vunpack.c.h.b16 %v5416
  %v5774 = vunpack.c.l.b16 %v5417
  %v5775 = vunpack.c.h.b16 %v5417
  %v5776 = vunpack.c.l.b16 %v5418
  %v5777 = vunpack.c.h.b16 %v5418
  %v5778 = vunpack.c.l.b16 %v5419
  %v5779 = vunpack.c.h.b16 %v5419
  %v5780 = vunpack.c.l.b16 %v5420
  %v5781 = vunpack.c.h.b16 %v5420
  %v5782 = vunpack.c.l.b16 %v5421
  %v5783 = vunpack.c.h.b16 %v5421
  %v5784 = vunpack.c.l.b16 %v5422
  %v5785 = vunpack.c.h.b16 %v5422
  %v5786 = vunpack.c.l.b16 %v5423
  %v5787 = vunpack.c.h.b16 %v5423
  %v5788 = vunpack.c.l.b16 %v5424
  %v5789 = vunpack.c.h.b16 %v5424
  %v5790 = vunpack.c.l.b16 %v5425
  %v5791 = vunpack.c.h.b16 %v5425
  %v5792 = vunpack.c.l.b16 %v5426
  %v5793 = vunpack.c.h.b16 %v5426
  %v5794 = vunpack.c.l.b16 %v5427
  %v5795 = vunpack.c.h.b16 %v5427
  %v5796 = vunpack.c.l.b16 %v5428
  %v5797 = vunpack.c.h.b16 %v5428
  %v5798 = vunpack.c.l.b16 %v5429
  %v5799 = vunpack.c.h.b16 %v5429
  %v5800 = vunpack.c.l.b16 %v5430
  %v5801 = vunpack.c.h.b16 %v5430
  %v5802 = vunpack.c.l.b16 %v5431
  %v5803 = vunpack.c.h.b16 %v5431
  %v5804 = vunpack.c.l.b16 %v5432
  %v5805 = vunpack.c.h.b16 %v5432
  %v5806 = vunpack.c.l.b16 %v5433
  %v5807 = vunpack.c.h.b16 %v5433
  %v5808 = vunpack.c.l.b16 %v5434
  %v5809 = vunpack.c.h.b16 %v5434
  %v5810 = vunpack.c.l.b16 %v5435
  %v5811 = vunpack.c.h.b16 %v5435
  %v5812 = vunpack.c.l.b16 %v5436
  %v5813 = vunpack.c.h.b16 %v5436
  %v5814 = vunpack.c.l.b16 %v5437
  %v5815 = vunpack.c.h.b16 %v5437
  %v5816 = vunpack.c.l.b16 %v5438
  %v5817 = vunpack.c.h.b16 %v5438
  %v5818 = vunpack.c.l.b16 %v5439
  %v5819 = vunpack.c.h.b16 %v5439
  %v5820 = vunpack.c.l.b16 %v5440
  %v5821 = vunpack.c.h.b16 %v5440
  %v5822 = vunpack.c.l.b16 %v5441
  %v5823 = vunpack.c.h.b16 %v5441
  %v5824 = vunpack.c.l.b16 %v5442
  %v5825 = vunpack.c.h.b16 %v5442
  %v5826 = vunpack.c.l.b16 %v5443
  %v5827 = vunpack.c.h.b16 %v5443
  %v5828 = vunpack.c.l.b16 %v5444
  %v5829 = vunpack.c.h.b16 %v5444
  %v5830 = vunpack.c.l.b16 %v5445
  %v5831 = vunpack.c.h.b16 %v5445
  %v5832 = vunpack.c.l.b16 %v5446
  %v5833 = vunpack.c.h.b16 %v5446
  %v5834 = vunpack.c.l.b16 %v5447
  %v5835 = vunpack.c.h.b16 %v5447
  %v5836 = vunpack.c.l.b16 %v5448
  %v5837 = vunpack.c.h.b16 %v5448
  %v5838 = vunpack.c.l.b16 %v5449
  %v5839 = vunpack.c.h.b16 %v5449
  %v5840 = vunpack.c.l.b16 %v5450
  %v5841 = vunpack.c.h.b16 %v5450
  %v5842 = vunpack.c.l.b16 %v5451
  %v5843 = vunpack.c.h.b16 %v5451
  %v5844 = vunpack.c.l.b16 %v5452
  %v5845 = vunpack.c.h.b16 %v5452
  %v5846 = vunpack.c.l.b16 %v5453
  %v5847 = vunpack.c.h.b16 %v5453
  %v5848 = vunpack.c.l.b16 %v5454
  %v5849 = vunpack.c.h.b16 %v5454
  %v5850 = vunpack.c.l.b16 %v5455
  %v5851 = vunpack.c.h.b16 %v5455
  %v5852 = vunpack.c.l.b16 %v5456
  %v5853 = vunpack.c.h.b16 %v5456
  %v5854 = vunpack.c.l.b16 %v5457
  %v5855 = vunpack.c.h.b16 %v5457
  %v5856 = vunpack.c.l.b16 %v5458
  %v5857 = vunpack.c.h.b16 %v5458
  %v5858 = vunpack.c.l.b16 %v5459
  %v5859 = vunpack.c.h.b16 %v5459
  %v5860 = vunpack.c.l.b16 %v5460
  %v5861 = vunpack.c.h.b16 %v5460
  %v5862 = vunpack.c.l.b16 %v5461
  %v5863 = vunpack.c.h.b16 %v5461
  %v5864 = vunpack.c.l.b16 %v5462
  %v5865 = vunpack.c.h.b16 %v5462
  %v5866 = vunpack.c.l.b16 %v5463
  %v5867 = vunpack.c.h.b16 %v5463
  %v5868 = vunpack.c.l.b16 %v5464
  %v5869 = vunpack.c.h.b16 %v5464
  %v5870 = vunpack.c.l.b16 %v5465
  %v5871 = vunpack.c.h.b16 %v5465
  %v5872 = vunpack.c.l.b16 %v5466
  %v5873 = vunpack.c.h.b16 %v5466
  %v5874 = vunpack.c.l.b16 %v5467
  %v5875 = vunpack.c.h.b16 %v5467
  %v5876 = vunpack.c.l.b16 %v5468
  %v5877 = vunpack.c.h.b16 %v5468
  %v5878 = vunpack.c.l.b16 %v5469
  %v5879 = vunpack.c.h.b16 %v5469
  %v5880 = vunpack.c.l.b16 %v5470
  %v5881 = vunpack.c.h.b16 %v5470
  %v5882 = vunpack.c.l.b16 %v5471
  %v5883 = vunpack.c.h.b16 %v5471
  %v5884 = vunpack.c.l.b16 %v5472
  %v5885 = vunpack.c.h.b16 %v5472
  %v5886 = vunpack.c.l.b16 %v5473
  %v5887 = vunpack.c.h.b16 %v5473
  %v5888 = vunpack.c.l.b16 %v5474
  %v5889 = vunpack.c.h.b16 %v5474
  %v5890 = vunpack.c.l.b16 %v5475
  %v5891 = vunpack.c.h.b16 %v5475
  %v5892 = vunpack.c.l.b16 %v5476
  %v5893 = vunpack.c.h.b16 %v5476
  %v5894 = vunpack.c.l.b16 %v5477
  %v5895 = vunpack.c.h.b16 %v5477
  %v5896 = vunpack.c.l.b16 %v5478
  %v5897 = vunpack.c.h.b16 %v5478
  %v5898 = vunpack.c.l.b16 %v5479
  %v5899 = vunpack.c.h.b16 %v5479
  %v5900 = vunpack.c.l.b16 %v5480
  %v5901 = vunpack.c.h.b16 %v5480
  %v5902 = vunpack.c.l.b16 %v5481
  %v5903 = vunpack.c.h.b16 %v5481
  %v5904 = vunpack.c.l.b16 %v5482
  %v5905 = vunpack.c.h.b16 %v5482
  %v5906 = vunpack.c.l.b16 %v5483
  %v5907 = vunpack.c.h.b16 %v5483
  %v5908 = vunpack.c.l.b16 %v5484
  %v5909 = vunpack.c.h.b16 %v5484
  %v5910 = vunpack.c.l.b16 %v5485
  %v5911 = vunpack.c.h.b16 %v5485
  %v5912 = vunpack.c.l.b16 %v5486
  %v5913 = vunpack.c.h.b16 %v5486
  %v5914 = vunpack.c.l.b16 %v5487
  %v5915 = vunpack.c.h.b16 %v5487
  %v5916 = vunpack.c.l.b16 %v5488
  %v5917 = vunpack.c.h.b16 %v5488
  %v5918 = vunpack.c.l.b16 %v5489
  %v5919 = vunpack.c.h.b16 %v5489
  %v5920 = vunpack.c.l.b16 %v5490
  %v5921 = vunpack.c.h.b16 %v5490
  %v5922 = vunpack.c.l.b16 %v5491
  %v5923 = vunpack.c.h.b16 %v5491
  %v5924 = vpack.c.b16 %v5638, %v5636
  %v5925 = vpack.c.b16 %v5639, %v5637
  %v5926 = vpack.c.b16 %v5642, %v5640
  %v5927 = vpack.c.b16 %v5643, %v5641
  %v5928 = vpack.c.b16 %v5646, %v5644
  %v5929 = vpack.c.b16 %v5647, %v5645
  %v5930 = vpack.c.b16 %v5650, %v5648
  %v5931 = vpack.c.b16 %v5651, %v5649
  %v5932 = vpack.c.b16 %v5654, %v5652
  %v5933 = vpack.c.b16 %v5655, %v5653
  %v5934 = vpack.c.b16 %v5658, %v5656
  %v5935 = vpack.c.b16 %v5659, %v5657
  %v5936 = vpack.c.b16 %v5662, %v5660
  %v5937 = vpack.c.b16 %v5663, %v5661
  %v5938 = vpack.c.b16 %v5666, %v5664
  %v5939 = vpack.c.b16 %v5667, %v5665
  %v5940 = vpack.c.b16 %v5670, %v5668
  %v5941 = vpack.c.b16 %v5671, %v5669
  %v5942 = vpack.c.b16 %v5674, %v5672
  %v5943 = vpack.c.b16 %v5675, %v5673
  %v5944 = vpack.c.b16 %v5678, %v5676
  %v5945 = vpack.c.b16 %v5679, %v5677
  %v5946 = vpack.c.b16 %v5682, %v5680
  %v5947 = vpack.c.b16 %v5683, %v5681
  %v5948 = vpack.c.b16 %v5686, %v5684
  %v5949 = vpack.c.b16 %v5687, %v5685
  %v5950 = vpack.c.b16 %v5690, %v5688
  %v5951 = vpack.c.b16 %v5691, %v5689
  %v5952 = vpack.c.b16 %v5694, %v5692
  %v5953 = vpack.c.b16 %v5695, %v5693
  %v5954 = vpack.c.b16 %v5698, %v5696
  %v5955 = vpack.c.b16 %v5699, %v5697
  %v5956 = vpack.c.b16 %v5702, %v5700
  %v5957 = vpack.c.b16 %v5703, %v5701
  %v5958 = vpack.c.b16 %v5706, %v5704
  %v5959 = vpack.c.b16 %v5707, %v5705
  %v5960 = vpack.c.b16 %v5710, %v5708
  %v5961 = vpack.c.b16 %v5711, %v5709
  %v5962 = vpack.c.b16 %v5714, %v5712
  %v5963 = vpack.c.b16 %v5715, %v5713
  %v5964 = vpack.c.b16 %v5718, %v5716
  %v5965 = vpack.c.b16 %v5719, %v5717
  %v5966 = vpack.c.b16 %v5722, %v5720
  %v5967 = vpack.c.b16 %v5723, %v5721
  %v5968 = vpack.c.b16 %v5726, %v5724
  %v5969 = vpack.c.b16 %v5727, %v5725
  %v5970 = vpack.c.b16 %v5730, %v5728
  %v5971 = vpack.c.b16 %v5731, %v5729
  %v5972 = vpack.c.b16 %v5734, %v5732
  %v5973 = vpack.c.b16 %v5735, %v5733
  %v5974 = vpack.c.b16 %v5738, %v5736
  %v5975 = vpack.c.b16 %v5739, %v5737
  %v5976 = vpack.c.b16 %v5742, %v5740
  %v5977 = vpack.c.b16 %v5743, %v5741
  %v5978 = vpack.c.b16 %v5746, %v5744
  %v5979 = vpack.c.b16 %v5747, %v5745
  %v5980 = vpack.c.b16 %v5750, %v5748
  %v5981 = vpack.c.b16 %v5751, %v5749
  %v5982 = vpack.c.b16 %v5754, %v5752
  %v5983 = vpack.c.b16 %v5755, %v5753
  %v5984 = vpack.c.b16 %v5758, %v5756
  %v5985 = vpack.c.b16 %v5759, %v5757
  %v5986 = vpack.c.b16 %v5762, %v5760
  %v5987 = vpack.c.b16 %v5763, %v5761
  %v5988 = vpack.c.b16 %v5766, %v5764
  %v5989 = vpack.c.b16 %v5767, %v5765
  %v5990 = vpack.c.b16 %v5770, %v5768
  %v5991 = vpack.c.b16 %v5771, %v5769
  %v5992 = vpack.c.b16 %v5774, %v5772
  %v5993 = vpack.c.b16 %v5775, %v5773
  %v5994 = vpack.c.b16 %v5778, %v5776
  %v5995 = vpack.c.b16 %v5779, %v5777
  %v5996 = vpack.c.b16 %v5782, %v5780
  %v5997 = vpack.c.b16 %v5783, %v5781
  %v5998 = vpack.c.b16 %v5786, %v5784
  %v5999 = vpack.c.b16 %v5787, %v5785
  %v6000 = vpack.c.b16 %v5790, %v5788
  %v6001 = vpack.c.b16 %v5791, %v5789
  %v6002 = vpack.c.b16 %v5794, %v5792
  %v6003 = vpack.c.b16 %v5795, %v5793
  %v6004 = vpack.c.b16 %v5798, %v5796
  %v6005 = vpack.c.b16 %v5799, %v5797
  %v6006 = vpack.c.b16 %v5802, %v5800
  %v6007 = vpack.c.b16 %v5803, %v5801
  %v6008 = vpack.c.b16 %v5806, %v5804
  %v6009 = vpack.c.b16 %v5807, %v5805
  %v6010 = vpack.c.b16 %v5810, %v5808
  %v6011 = vpack.c.b16 %v5811, %v5809
  %v6012 = vpack.c.b16 %v5814, %v5812
  %v6013 = vpack.c.b16 %v5815, %v5813
  %v6014 = vpack.c.b16 %v5818, %v5816
  %v6015 = vpack.c.b16 %v5819, %v5817
  %v6016 = vpack.c.b16 %v5822, %v5820
  %v6017 = vpack.c.b16 %v5823, %v5821
  %v6018 = vpack.c.b16 %v5826, %v5824
  %v6019 = vpack.c.b16 %v5827, %v5825
  %v6020 = vpack.c.b16 %v5830, %v5828
  %v6021 = vpack.c.b16 %v5831, %v5829
  %v6022 = vpack.c.b16 %v5834, %v5832
  %v6023 = vpack.c.b16 %v5835, %v5833
  %v6024 = vpack.c.b16 %v5838, %v5836
  %v6025 = vpack.c.b16 %v5839, %v5837
  %v6026 = vpack.c.b16 %v5842, %v5840
  %v6027 = vpack.c.b16 %v5843, %v5841
  %v6028 = vpack.c.b16 %v5846, %v5844
  %v6029 = vpack.c.b16 %v5847, %v5845
  %v6030 = vpack.c.b16 %v5850, %v5848
  %v6031 = vpack.c.b16 %v5851, %v5849
  %v6032 = vpack.c.b16 %v5854, %v5852
  %v6033 = vpack.c.b16 %v5855, %v5853
  %v6034 = vpack.c.b16 %v5858, %v5856
  %v6035 = vpack.c.b16 %v5859, %v5857
  %v6036 = vpack.c.b16 %v5862, %v5860
  %v6037 = vpack.c.b16 %v5863, %v5861
  %v6038 = vpack.c.b16 %v5866, %v5864
  %v6039 = vpack.c.b16 %v5867, %v5865
  %v6040 = vpack.c.b16 %v5870, %v5868
  %v6041 = vpack.c.b16 %v5871, %v5869
  %v6042 = vpack.c.b16 %v5874, %v5872
  %v6043 = vpack.c.b16 %v5875, %v5873
  %v6044 = vpack.c.b16 %v5878, %v5876
  %v6045 = vpack.c.b16 %v5879, %v5877
  %v6046 = vpack.c.b16 %v5882, %v5880
  %v6047 = vpack.c.b16 %v5883, %v5881
  %v6048 = vpack.c.b16 %v5886, %v5884
  %v6049 = vpack.c.b16 %v5887, %v5885
  %v6050 = vpack.c.b16 %v5890, %v5888
  %v6051 = vpack.c.b16 %v5891, %v5889
  %v6052 = vpack.c.b16 %v5894, %v5892
  %v6053 = vpack.c.b16 %v5895, %v5893
  %v6054 = vpack.c.b16 %v5898, %v5896
  %v6055 = vpack.c.b16 %v5899, %v5897
  %v6056 = vpack.c.b16 %v5902, %v5900
  %v6057 = vpack.c.b16 %v5903, %v5901
  %v6058 = vpack.c.b16 %v5906, %v5904
  %v6059 = vpack.c.b16 %v5907, %v5905
  %v6060 = vpack.c.b16 %v5910, %v5908
  %v6061 = vpack.c.b16 %v5911, %v5909
  %v6062 = vpack.c.b16 %v5914, %v5912
  %v6063 = vpack.c.b16 %v5915, %v5913
  %v6064 = vpack.c.b16 %v5918, %v5916
  %v6065 = vpack.c.b16 %v5919, %v5917
  %v6066 = vpack.c.b16 %v5922, %v5920
  %v6067 = vpack.c.b16 %v5923, %v5921
  %6212 = vmatprep.subr.bf16.mxu0 %v5939
  %6213 = vmatpush1.bf16.msra.mxu0 %v5938
  %6214 = vmatprep.subr.bf16.mxu0 %v5937
  %6215 = vmatpush1.bf16.msra.mxu0 %v5936
  %6216 = vmatprep.subr.bf16.mxu0 %v5935
  %6217 = vmatpush1.bf16.msra.mxu0 %v5934
  %6218 = vmatprep.subr.bf16.mxu0 %v5933
  %6219 = vmatpush1.bf16.msra.mxu0 %v5932
  %6220 = vmatprep.subr.bf16.mxu0 %v5931
  %6221 = vmatpush1.bf16.msra.mxu0 %v5930
  %6222 = vmatprep.subr.bf16.mxu0 %v5929
  %6223 = vmatpush1.bf16.msra.mxu0 %v5928
  %6224 = vmatprep.subr.bf16.mxu0 %v5927
  %6225 = vmatpush1.bf16.msra.mxu0 %v5926
  %6226 = vmatprep.subr.bf16.mxu0 %v5925
  %6227 = vmatpush1.bf16.msra.mxu0 %v5924
  %6228 = vmatprep.subr.bf16.mxu0 %v5955
  %6229 = vmatpush2.bf16.msra.mxu0 %v5954
  %6230 = vmatprep.subr.bf16.mxu0 %v5953
  %6231 = vmatpush2.bf16.msra.mxu0 %v5952
  %6232 = vmatprep.subr.bf16.mxu0 %v5951
  %6233 = vmatpush2.bf16.msra.mxu0 %v5950
  %6234 = vmatprep.subr.bf16.mxu0 %v5949
  %6235 = vmatpush2.bf16.msra.mxu0 %v5948
  %6236 = vmatprep.subr.bf16.mxu0 %v5947
  %6237 = vmatpush2.bf16.msra.mxu0 %v5946
  %6238 = vmatprep.subr.bf16.mxu0 %v5945
  %6239 = vmatpush2.bf16.msra.mxu0 %v5944
  %6240 = vmatprep.subr.bf16.mxu0 %v5943
  %6241 = vmatpush2.bf16.msra.mxu0 %v5942
  %6242 = vmatprep.subr.bf16.mxu0 %v5941
  %6243 = vmatpush2.bf16.msra.mxu0 %v5940
  %6244 = vmatprep.mubr.bf16.mxu0 %v5310
  %6245 = vmatmul.mubr.bf16.gmra.mxu0 %v5304
  %v6246 = vpop.f32.mrf.mxu0
  %v6247 = vadd.f32 0.0, %v6246
  %v6248 = vpop.f32.mrf.mxu0
  %v6249 = vadd.f32 0.0, %v6248
  %v6250 = vpop.f32.mrf.mxu0
  %v6251 = vadd.f32 0.0, %v6250
  %v6252 = vpop.f32.mrf.mxu0
  %v6253 = vadd.f32 0.0, %v6252
  %6254 = vmatprep.mubr.bf16.mxu0 %v5311
  %6255 = vmatmul.mubr.bf16.gmra.mxu0 %v5305
  %v6256 = vpop.f32.mrf.mxu0
  %v6257 = vadd.f32 0.0, %v6256
  %v6258 = vpop.f32.mrf.mxu0
  %v6259 = vadd.f32 0.0, %v6258
  %v6260 = vpop.f32.mrf.mxu0
  %v6261 = vadd.f32 0.0, %v6260
  %v6262 = vpop.f32.mrf.mxu0
  %v6263 = vadd.f32 0.0, %v6262
  %6264 = vdwg.mxu0
  %6265 = vmatprep.subr.bf16.mxu0 %v5971
  %6266 = vmatpush1.bf16.msra.mxu0 %v5970
  %6267 = vmatprep.subr.bf16.mxu0 %v5969
  %6268 = vmatpush1.bf16.msra.mxu0 %v5968
  %6269 = vmatprep.subr.bf16.mxu0 %v5967
  %6270 = vmatpush1.bf16.msra.mxu0 %v5966
  %6271 = vmatprep.subr.bf16.mxu0 %v5965
  %6272 = vmatpush1.bf16.msra.mxu0 %v5964
  %6273 = vmatprep.subr.bf16.mxu0 %v5963
  %6274 = vmatpush1.bf16.msra.mxu0 %v5962
  %6275 = vmatprep.subr.bf16.mxu0 %v5961
  %6276 = vmatpush1.bf16.msra.mxu0 %v5960
  %6277 = vmatprep.subr.bf16.mxu0 %v5959
  %6278 = vmatpush1.bf16.msra.mxu0 %v5958
  %6279 = vmatprep.subr.bf16.mxu0 %v5957
  %6280 = vmatpush1.bf16.msra.mxu0 %v5956
  %6281 = vmatprep.subr.bf16.mxu0 %v5987
  %6282 = vmatpush2.bf16.msra.mxu0 %v5986
  %6283 = vmatprep.subr.bf16.mxu0 %v5985
  %6284 = vmatpush2.bf16.msra.mxu0 %v5984
  %6285 = vmatprep.subr.bf16.mxu0 %v5983
  %6286 = vmatpush2.bf16.msra.mxu0 %v5982
  %6287 = vmatprep.subr.bf16.mxu0 %v5981
  %6288 = vmatpush2.bf16.msra.mxu0 %v5980
  %6289 = vmatprep.subr.bf16.mxu0 %v5979
  %6290 = vmatpush2.bf16.msra.mxu0 %v5978
  %6291 = vmatprep.subr.bf16.mxu0 %v5977
  %6292 = vmatpush2.bf16.msra.mxu0 %v5976
  %6293 = vmatprep.subr.bf16.mxu0 %v5975
  %6294 = vmatpush2.bf16.msra.mxu0 %v5974
  %6295 = vmatprep.subr.bf16.mxu0 %v5973
  %6296 = vmatpush2.bf16.msra.mxu0 %v5972
  %6297 = vmatprep.mubr.bf16.mxu0 %v5322
  %6298 = vmatmul.mubr.bf16.gmra.mxu0 %v5316
  %v6299 = vpop.f32.mrf.mxu0
  %v6300 = vadd.f32 %v6247, %v6299
  %v6301 = vpop.f32.mrf.mxu0
  %v6302 = vadd.f32 %v6249, %v6301
  %v6303 = vpop.f32.mrf.mxu0
  %v6304 = vadd.f32 %v6251, %v6303
  %v6305 = vpop.f32.mrf.mxu0
  %v6306 = vadd.f32 %v6253, %v6305
  %6307 = vmatprep.mubr.bf16.mxu0 %v5323
  %6308 = vmatmul.mubr.bf16.gmra.mxu0 %v5317
  %v6309 = vpop.f32.mrf.mxu0
  %v6310 = vadd.f32 %v6257, %v6309
  %v6311 = vpop.f32.mrf.mxu0
  %v6312 = vadd.f32 %v6259, %v6311
  %v6313 = vpop.f32.mrf.mxu0
  %v6314 = vadd.f32 %v6261, %v6313
  %v6315 = vpop.f32.mrf.mxu0
  %v6316 = vadd.f32 %v6263, %v6315
  %6317 = vdwg.mxu0
  %6318 = vmatprep.subr.bf16.mxu0 %v6003
  %6319 = vmatpush1.bf16.msra.mxu0 %v6002
  %6320 = vmatprep.subr.bf16.mxu0 %v6001
  %6321 = vmatpush1.bf16.msra.mxu0 %v6000
  %6322 = vmatprep.subr.bf16.mxu0 %v5999
  %6323 = vmatpush1.bf16.msra.mxu0 %v5998
  %6324 = vmatprep.subr.bf16.mxu0 %v5997
  %6325 = vmatpush1.bf16.msra.mxu0 %v5996
  %6326 = vmatprep.subr.bf16.mxu0 %v5995
  %6327 = vmatpush1.bf16.msra.mxu0 %v5994
  %6328 = vmatprep.subr.bf16.mxu0 %v5993
  %6329 = vmatpush1.bf16.msra.mxu0 %v5992
  %6330 = vmatprep.subr.bf16.mxu0 %v5991
  %6331 = vmatpush1.bf16.msra.mxu0 %v5990
  %6332 = vmatprep.subr.bf16.mxu0 %v5989
  %6333 = vmatpush1.bf16.msra.mxu0 %v5988
  %6334 = vmatprep.subr.bf16.mxu0 %v6019
  %6335 = vmatpush2.bf16.msra.mxu0 %v6018
  %6336 = vmatprep.subr.bf16.mxu0 %v6017
  %6337 = vmatpush2.bf16.msra.mxu0 %v6016
  %6338 = vmatprep.subr.bf16.mxu0 %v6015
  %6339 = vmatpush2.bf16.msra.mxu0 %v6014
  %6340 = vmatprep.subr.bf16.mxu0 %v6013
  %6341 = vmatpush2.bf16.msra.mxu0 %v6012
  %6342 = vmatprep.subr.bf16.mxu0 %v6011
  %6343 = vmatpush2.bf16.msra.mxu0 %v6010
  %6344 = vmatprep.subr.bf16.mxu0 %v6009
  %6345 = vmatpush2.bf16.msra.mxu0 %v6008
  %6346 = vmatprep.subr.bf16.mxu0 %v6007
  %6347 = vmatpush2.bf16.msra.mxu0 %v6006
  %6348 = vmatprep.subr.bf16.mxu0 %v6005
  %6349 = vmatpush2.bf16.msra.mxu0 %v6004
  %6350 = vmatprep.mubr.bf16.mxu0 %v5334
  %6351 = vmatmul.mubr.bf16.gmra.mxu0 %v5328
  %v6352 = vpop.f32.mrf.mxu0
  %v6353 = vadd.f32 %v6300, %v6352
  %v6354 = vpop.f32.mrf.mxu0
  %v6355 = vadd.f32 %v6302, %v6354
  %v6356 = vpop.f32.mrf.mxu0
  %v6357 = vadd.f32 %v6304, %v6356
  %v6358 = vpop.f32.mrf.mxu0
  %v6359 = vadd.f32 %v6306, %v6358
  %6360 = vmatprep.mubr.bf16.mxu0 %v5335
  %6361 = vmatmul.mubr.bf16.gmra.mxu0 %v5329
  %v6362 = vpop.f32.mrf.mxu0
  %v6363 = vadd.f32 %v6310, %v6362
  %v6364 = vpop.f32.mrf.mxu0
  %v6365 = vadd.f32 %v6312, %v6364
  %v6366 = vpop.f32.mrf.mxu0
  %v6367 = vadd.f32 %v6314, %v6366
  %v6368 = vpop.f32.mrf.mxu0
  %v6369 = vadd.f32 %v6316, %v6368
  %6370 = vdwg.mxu0
  %6371 = vmatprep.subr.bf16.mxu0 %v6035
  %6372 = vmatpush1.bf16.msra.mxu0 %v6034
  %6373 = vmatprep.subr.bf16.mxu0 %v6033
  %6374 = vmatpush1.bf16.msra.mxu0 %v6032
  %6375 = vmatprep.subr.bf16.mxu0 %v6031
  %6376 = vmatpush1.bf16.msra.mxu0 %v6030
  %6377 = vmatprep.subr.bf16.mxu0 %v6029
  %6378 = vmatpush1.bf16.msra.mxu0 %v6028
  %6379 = vmatprep.subr.bf16.mxu0 %v6027
  %6380 = vmatpush1.bf16.msra.mxu0 %v6026
  %6381 = vmatprep.subr.bf16.mxu0 %v6025
  %6382 = vmatpush1.bf16.msra.mxu0 %v6024
  %6383 = vmatprep.subr.bf16.mxu0 %v6023
  %6384 = vmatpush1.bf16.msra.mxu0 %v6022
  %6385 = vmatprep.subr.bf16.mxu0 %v6021
  %6386 = vmatpush1.bf16.msra.mxu0 %v6020
  %6387 = vmatprep.subr.bf16.mxu0 %v6051
  %6388 = vmatpush2.bf16.msra.mxu0 %v6050
  %6389 = vmatprep.subr.bf16.mxu0 %v6049
  %6390 = vmatpush2.bf16.msra.mxu0 %v6048
  %6391 = vmatprep.subr.bf16.mxu0 %v6047
  %6392 = vmatpush2.bf16.msra.mxu0 %v6046
  %6393 = vmatprep.subr.bf16.mxu0 %v6045
  %6394 = vmatpush2.bf16.msra.mxu0 %v6044
  %6395 = vmatprep.subr.bf16.mxu0 %v6043
  %6396 = vmatpush2.bf16.msra.mxu0 %v6042
  %6397 = vmatprep.subr.bf16.mxu0 %v6041
  %6398 = vmatpush2.bf16.msra.mxu0 %v6040
  %6399 = vmatprep.subr.bf16.mxu0 %v6039
  %6400 = vmatpush2.bf16.msra.mxu0 %v6038
  %6401 = vmatprep.subr.bf16.mxu0 %v6037
  %6402 = vmatpush2.bf16.msra.mxu0 %v6036
  %6403 = vmatprep.mubr.bf16.mxu0 %v5340
  %6404 = vmatmul.mubr.bf16.gmra.mxu0 %v5337
  %v6405 = vpop.f32.mrf.mxu0
  %v6406 = vadd.f32 %v6353, %v6405
  %v6407 = vpop.f32.mrf.mxu0
  %v6408 = vadd.f32 %v6355, %v6407
  %v6409 = vpop.f32.mrf.mxu0
  %v6410 = vadd.f32 %v6357, %v6409
  %v6411 = vpop.f32.mrf.mxu0
  %v6412 = vadd.f32 %v6359, %v6411
  %6413 = vmatprep.mubr.bf16.mxu0 %v5341
  %6414 = vmatmul.mubr.bf16.gmra.mxu0 %v5338
  %v6415 = vpop.f32.mrf.mxu0
  %v6416 = vadd.f32 %v6363, %v6415
  %v6417 = vpop.f32.mrf.mxu0
  %v6418 = vadd.f32 %v6365, %v6417
  %v6419 = vpop.f32.mrf.mxu0
  %v6420 = vadd.f32 %v6367, %v6419
  %v6421 = vpop.f32.mrf.mxu0
  %v6422 = vadd.f32 %v6369, %v6421
  %6423 = vdwg.mxu0
  %6424 = vmatprep.subr.bf16.mxu0 %v6067
  %6425 = vmatpush1.bf16.msra.mxu0 %v6066
  %6426 = vmatprep.subr.bf16.mxu0 %v6065
  %6427 = vmatpush1.bf16.msra.mxu0 %v6064
  %6428 = vmatprep.subr.bf16.mxu0 %v6063
  %6429 = vmatpush1.bf16.msra.mxu0 %v6062
  %6430 = vmatprep.subr.bf16.mxu0 %v6061
  %6431 = vmatpush1.bf16.msra.mxu0 %v6060
  %6432 = vmatprep.subr.bf16.mxu0 %v6059
  %6433 = vmatpush1.bf16.msra.mxu0 %v6058
  %6434 = vmatprep.subr.bf16.mxu0 %v6057
  %6435 = vmatpush1.bf16.msra.mxu0 %v6056
  %6436 = vmatprep.subr.bf16.mxu0 %v6055
  %6437 = vmatpush1.bf16.msra.mxu0 %v6054
  %6438 = vmatprep.subr.bf16.mxu0 %v6053
  %6439 = vmatpush1.bf16.msra.mxu0 %v6052
  %6440 = vmatprep.subr.bf16.mxu0 0
  %6441 = vmatpush2.bf16.msra.mxu0 0
  %6442 = vmatprep.subr.bf16.mxu0 0
  %6443 = vmatpush2.bf16.msra.mxu0 0
  %6444 = vmatprep.subr.bf16.mxu0 0
  %6445 = vmatpush2.bf16.msra.mxu0 0
  %6446 = vmatprep.subr.bf16.mxu0 0
  %6447 = vmatpush2.bf16.msra.mxu0 0
  %6448 = vmatprep.subr.bf16.mxu0 0
  %6449 = vmatpush2.bf16.msra.mxu0 0
  %6450 = vmatprep.subr.bf16.mxu0 0
  %6451 = vmatpush2.bf16.msra.mxu0 0
  %6452 = vmatprep.subr.bf16.mxu0 0
  %6453 = vmatpush2.bf16.msra.mxu0 0
  %6454 = vmatprep.subr.bf16.mxu0 0
  %6455 = vmatpush2.bf16.msra.mxu0 0
  %6456 = vmatprep.mubr.bf16.mxu0 0
  %6457 = vmatmul.mubr.bf16.gmra.mxu0 %v5346
  %v6458 = vpop.f32.mrf.mxu0
  %v6459 = vadd.f32 %v6406, %v6458
  %v6460 = vpop.f32.mrf.mxu0
  %v6461 = vadd.f32 %v6408, %v6460
  %v6462 = vpop.f32.mrf.mxu0
  %v6463 = vadd.f32 %v6410, %v6462
  %v6464 = vpop.f32.mrf.mxu0
  %v6465 = vadd.f32 %v6412, %v6464
  %6466 = vmatprep.mubr.bf16.mxu0 0
  %6467 = vmatmul.mubr.bf16.gmra.mxu0 %v5347
  %v6468 = vpop.f32.mrf.mxu0
  %v6469 = vadd.f32 %v6416, %v6468
  %v6470 = vpop.f32.mrf.mxu0
  %v6471 = vadd.f32 %v6418, %v6470
  %v6472 = vpop.f32.mrf.mxu0
  %v6473 = vadd.f32 %v6420, %v6472
  %v6474 = vpop.f32.mrf.mxu0
  %v6475 = vadd.f32 %v6422, %v6474
  %6476 = vdwg.mxu0
  %v6477 = vld [vmem:[%s14] sm:$0x3]
  %v6479 = vlaneseq
  %v6480 = vshrl.u32 %v6479, 7
  %v6481 = vsub.s32 0, %v6480
  %v6482 = vrot.slane %v6477, %v6481
  %v6483 = vlaneseq
  %v6484 = vshrl.u32 %v6483, 7
  %v6485 = vsub.s32 1, %v6484
  %v6486 = vrot.slane %v6477, %v6485
  %v6489 = vmul.f32 %v6459, %v6482
  %v6490 = vmul.f32 %v6461, %v6486
  %v6491 = vmul.f32 %v6463, %v6482
  %v6492 = vmul.f32 %v6465, %v6486
  %v6493 = vmul.f32 %v6469, %v6482
  %v6494 = vmul.f32 %v6471, %v6486
  %v6495 = vmul.f32 %v6473, %v6482
  %v6496 = vmul.f32 %v6475, %v6486
  %v6497 = vld [vmem:[%s15] sm:$0x3]
  %v6499 = vlaneseq
  %v6500 = vshrl.u32 %v6499, 7
  %v6501 = vsub.s32 0, %v6500
  %v6502 = vrot.slane %v6497, %v6501
  %v6503 = vlaneseq
  %v6504 = vshrl.u32 %v6503, 7
  %v6505 = vsub.s32 1, %v6504
  %v6506 = vrot.slane %v6497, %v6505
  %v6509 = vadd.f32 %v6489, %v6502
  %v6510 = vadd.f32 %v6490, %v6506
  %v6511 = vadd.f32 %v6491, %v6502
  %v6512 = vadd.f32 %v6492, %v6506
  %v6513 = vadd.f32 %v6493, %v6502
  %v6514 = vadd.f32 %v6494, %v6506
  %v6515 = vadd.f32 %v6495, %v6502
  %v6516 = vadd.f32 %v6496, %v6506
  %v6517 = vmax.f32 %v6509, 0.0
  %v6518 = vmax.f32 %v6510, 0.0
  %v6519 = vmax.f32 %v6511, 0.0
  %v6520 = vmax.f32 %v6512, 0.0
  %v6521 = vmax.f32 %v6513, 0.0
  %v6522 = vmax.f32 %v6514, 0.0
  %v6523 = vmax.f32 %v6515, 0.0
  %v6524 = vmax.f32 %v6516, 0.0
  %6525 = vst [vmem:[#allocation8] sm:$0xff] %v6517
  %6526 = vst [vmem:[#allocation8 + $0x8] sm:$0xff] %v6518
  %6527 = vst [vmem:[#allocation8 + $0x10] sm:$0xff] %v6519
  %6528 = vst [vmem:[#allocation8 + $0x18] sm:$0xff] %v6520
  %6529 = vst [vmem:[#allocation8 + $0x20] sm:$0xff] %v6521
  %6530 = vst [vmem:[#allocation8 + $0x28] sm:$0xff] %v6522
  %6531 = vst [vmem:[#allocation8 + $0x30] sm:$0xff] %v6523
  %6532 = vst [vmem:[#allocation8 + $0x38] sm:$0xff] %v6524
  %v6533 = vld [vmem:[#allocation8] sm:$0xff]
  %v6534 = vld [vmem:[#allocation8 + $0x8] sm:$0xff]
  %v6535 = vld [vmem:[#allocation8 + $0x10] sm:$0xff]
  %v6536 = vld [vmem:[#allocation8 + $0x18] sm:$0xff]
  %v6537 = vld [vmem:[#allocation8 + $0x20] sm:$0xff]
  %v6538 = vld [vmem:[#allocation8 + $0x28] sm:$0xff]
  %v6539 = vld [vmem:[#allocation8 + $0x30] sm:$0x7]
  %v6540 = vld [vmem:[#allocation8 + $0x38] sm:$0x7]
  %v6541 = vld [vmem:[#allocation8] sm:$0xfe]
  %v6542 = vld [vmem:[#allocation8 + $0x8] sm:$0xfe]
  %v6543 = vld [vmem:[#allocation8 + $0x30] sm:$0xf]
  %v6544 = vld [vmem:[#allocation8 + $0x38] sm:$0xf]
  %v6553 = vrot.slane %v6541, 1
  %v6554 = vrot.slane %v6535, 1
  %v6555 = vsel %vm1539, %v6553, %v6554
  %v6556 = vrot.slane %v6542, 1
  %v6557 = vrot.slane %v6536, 1
  %v6558 = vsel %vm1539, %v6556, %v6557
  %v6559 = vrot.slane %v6537, 1
  %v6560 = vsel %vm1539, %v6554, %v6559
  %v6561 = vrot.slane %v6538, 1
  %v6562 = vsel %vm1539, %v6557, %v6561
  %v6563 = vrot.slane %v6543, 1
  %v6564 = vsel %vm1539, %v6559, %v6563
  %v6565 = vrot.slane %v6544, 1
  %v6566 = vsel %vm1539, %v6561, %v6565
  %v6575 = vmax.f32 %v6533, %v6555
  %v6576 = vmax.f32 %v6534, %v6558
  %v6577 = vmax.f32 %v6535, %v6560
  %v6578 = vmax.f32 %v6536, %v6562
  %v6579 = vmax.f32 %v6537, %v6564
  %v6580 = vmax.f32 %v6538, %v6566
  %v6581 = vmax.f32 %v6539, %v6563
  %v6582 = vmax.f32 %v6540, %v6565
  %v6583 = vld [vmem:[#allocation8] sm:$0xf0]
  %v6584 = vld [vmem:[#allocation8 + $0x8] sm:$0xf0]
  %v6585 = vld [vmem:[#allocation8 + $0x30] sm:$0x7f]
  %v6586 = vld [vmem:[#allocation8 + $0x38] sm:$0x7f]
  %v6587 = vld [vmem:[#allocation8] sm:$0xe0]
  %v6588 = vld [vmem:[#allocation8 + $0x8] sm:$0xe0]
  %v6589 = vld [vmem:[#allocation8 + $0x30] sm:$0xff]
  %v6590 = vld [vmem:[#allocation8 + $0x38] sm:$0xff]
  %v6595 = vrot.slane %v6587, 1
  %v6596 = vsel %vm1539, %v6595, %v6554
  %v6597 = vrot.slane %v6588, 1
  %v6598 = vsel %vm1539, %v6597, %v6557
  %v6599 = vrot.slane %v6589, 1
  %v6600 = vsel %vm1539, %v6559, %v6599
  %v6601 = vrot.slane %v6590, 1
  %v6602 = vsel %vm1539, %v6561, %v6601
  %v6609 = vmax.f32 %v6583, %v6596
  %v6610 = vmax.f32 %v6584, %v6598
  %v6611 = vmax.f32 %v6537, %v6600
  %v6612 = vmax.f32 %v6538, %v6602
  %v6613 = vmax.f32 %v6585, %v6599
  %v6614 = vmax.f32 %v6586, %v6601
  %vm6623 = vcmask 1043456
  %v6624 = vrot.slane %v6609, 4
  %v6625 = vrot.slane %v6577, 4
  %v6626 = vsel %vm6623, %v6624, %v6625
  %v6627 = vrot.slane %v6610, 4
  %v6628 = vrot.slane %v6578, 4
  %v6629 = vsel %vm6623, %v6627, %v6628
  %v6630 = vrot.slane %v6611, 4
  %v6631 = vsel %vm6623, %v6625, %v6630
  %v6632 = vrot.slane %v6612, 4
  %v6633 = vsel %vm6623, %v6628, %v6632
  %v6634 = vrot.slane %v6613, 4
  %v6635 = vsel %vm6623, %v6630, %v6634
  %v6636 = vrot.slane %v6614, 4
  %v6637 = vsel %vm6623, %v6632, %v6636
  %v6646 = vmax.f32 %v6575, %v6626
  %v6647 = vmax.f32 %v6576, %v6629
  %v6648 = vmax.f32 %v6577, %v6631
  %v6649 = vmax.f32 %v6578, %v6633
  %v6650 = vmax.f32 %v6579, %v6635
  %v6651 = vmax.f32 %v6580, %v6637
  %v6652 = vmax.f32 %v6581, %v6634
  %v6653 = vmax.f32 %v6582, %v6636
  %v6654 = vld [vmem:[%s16] sm:$0x3]
  %vm6655 = vcmask 220160
  %v6657 = vsel %vm6655, %v6654, 0
  %vm6659 = vcmask 1042432
  %v6661 = vsel %vm6659, %v6652, 0
  %v6664 = vsel %vm6659, %v6653, 0
  %6666 = vmatprep.subr.mxu0 0.0
  %6667 = vmatpush1.msra.mxu0 0.0
  %6668 = vmatprep.subr.mxu0 0.0
  %6669 = vmatpush1.msra.mxu0 0.0
  %6670 = vmatprep.subr.mxu0 0.0
  %6671 = vmatpush1.msra.mxu0 0.0
  %6672 = vmatprep.subr.mxu0 0.0
  %6673 = vmatpush1.msra.mxu0 0.0
  %6674 = vmatprep.subr.mxu0 0.0
  %6675 = vmatpush1.msra.mxu0 0.0
  %6676 = vmatprep.subr.mxu0 0.0
  %6677 = vmatpush1.msra.mxu0 0.0
  %6678 = vmatprep.subr.mxu0 0.0
  %6679 = vmatpush1.msra.mxu0 0.0
  %6680 = vmatprep.subr.mxu0 0.0
  %6681 = vmatpush1.msra.mxu0 0.0
  %6682 = vmatprep.subr.mxu0 0.0
  %6683 = vmatpush1.msra.mxu0 0.0
  %6684 = vmatprep.subr.mxu0 0.0
  %6685 = vmatpush1.msra.mxu0 0.0
  %6686 = vmatprep.subr.mxu0 0.0
  %6687 = vmatpush1.msra.mxu0 0.0
  %6688 = vmatprep.subr.mxu0 0.0
  %6689 = vmatpush1.msra.mxu0 0.0
  %6690 = vmatprep.subr.mxu0 %v6664
  %6691 = vmatpush1.msra.mxu0 %v6661
  %6692 = vmatprep.subr.mxu0 %v6651
  %6693 = vmatpush1.msra.mxu0 %v6650
  %6694 = vmatprep.subr.mxu0 %v6649
  %6695 = vmatpush1.msra.mxu0 %v6648
  %6696 = vmatprep.subr.mxu0 %v6647
  %6697 = vmatpush1.msra.mxu0 %v6646
  %6698 = vmatprep.subr.mxu0 0.0
  %6699 = vmatpush2.msra.mxu0 0.0
  %6700 = vmatprep.subr.mxu0 0.0
  %6701 = vmatpush2.msra.mxu0 0.0
  %6702 = vmatprep.subr.mxu0 0.0
  %6703 = vmatpush2.msra.mxu0 0.0
  %6704 = vmatprep.subr.mxu0 0.0
  %6705 = vmatpush2.msra.mxu0 0.0
  %6706 = vmatprep.subr.mxu0 0.0
  %6707 = vmatpush2.msra.mxu0 0.0
  %6708 = vmatprep.subr.mxu0 0.0
  %6709 = vmatpush2.msra.mxu0 0.0
  %6710 = vmatprep.subr.mxu0 0.0
  %6711 = vmatpush2.msra.mxu0 0.0
  %6712 = vmatprep.subr.mxu0 0.0
  %6713 = vmatpush2.msra.mxu0 0.0
  %6714 = vmatprep.subr.mxu0 0.0
  %6715 = vmatpush2.msra.mxu0 0.0
  %6716 = vmatprep.subr.mxu0 0.0
  %6717 = vmatpush2.msra.mxu0 0.0
  %6718 = vmatprep.subr.mxu0 0.0
  %6719 = vmatpush2.msra.mxu0 0.0
  %6720 = vmatprep.subr.mxu0 0.0
  %6721 = vmatpush2.msra.mxu0 0.0
  %6722 = vmatprep.subr.mxu0 0.0
  %6723 = vmatpush2.msra.mxu0 0.0
  %6724 = vmatprep.subr.mxu0 0.0
  %6725 = vmatpush2.msra.mxu0 0.0
  %6726 = vmatprep.subr.mxu0 0.0
  %6727 = vmatpush2.msra.mxu0 0.0
  %6728 = vmatprep.subr.mxu0 0.0
  %6729 = vmatpush2.msra.mxu0 0.0
  %6730 = vmatprep.mubr.f32.mxu0 0.0
  %6731 = vmatmul.mubr.f32.gmra.mxu0 %v6657
  %v6732 = vpop.f32.mrf.mxu0
  %v6733 = vadd.f32 0.0, %v6732
  %v6734 = vpop.f32.mrf.mxu0
  %v6735 = vadd.f32 0.0, %v6734
  %6736 = vdwg.mxu0
  %v6737 = vld [vmem:[%s17] sm:$0xff]
  %v6738 = vld [vmem:[%s17 + $0x8] sm:$0xff]
  %v6739 = vld [vmem:[%s17 + $0x10] sm:$0xff]
  %v6740 = vld [vmem:[%s17 + $0x18] sm:$0xff]
  %v6741 = vld [vmem:[%s17 + $0x20] sm:$0xff]
  %v6742 = vld [vmem:[%s17 + $0x28] sm:$0xff]
  %v6743 = vld [vmem:[%s17 + $0x30] sm:$0xff]
  %v6744 = vld [vmem:[%s17 + $0x38] sm:$0xff]
  %v6745 = vld [vmem:[%s17 + $0x40] sm:$0xff]
  %v6746 = vld [vmem:[%s17 + $0x48] sm:$0xff]
  %v6747 = vld [vmem:[%s17 + $0x50] sm:$0xff]
  %v6748 = vld [vmem:[%s17 + $0x58] sm:$0xff]
  %v6749 = vld [vmem:[%s17 + $0x60] sm:$0xff]
  %v6750 = vld [vmem:[%s17 + $0x68] sm:$0xff]
  %v6751 = vld [vmem:[%s17 + $0x70] sm:$0xff]
  %v6752 = vld [vmem:[%s17 + $0x78] sm:$0xff]
  %v6753 = vld [vmem:[%s17 + $0x80] sm:$0xff]
  %v6754 = vld [vmem:[%s17 + $0x88] sm:$0xff]
  %v6755 = vld [vmem:[%s17 + $0x90] sm:$0xff]
  %v6756 = vld [vmem:[%s17 + $0x98] sm:$0xff]
  %v6757 = vld [vmem:[%s17 + $0xa0] sm:$0xff]
  %v6758 = vld [vmem:[%s17 + $0xa8] sm:$0xff]
  %v6759 = vld [vmem:[%s17 + $0xb0] sm:$0xff]
  %v6760 = vld [vmem:[%s17 + $0xb8] sm:$0xff]
  %v6761 = vld [vmem:[%s17 + $0xc0] sm:$0xff]
  %v6762 = vld [vmem:[%s17 + $0xc8] sm:$0xff]
  %v6763 = vld [vmem:[%s17 + $0xd0] sm:$0xff]
  %v6764 = vld [vmem:[%s17 + $0xd8] sm:$0xff]
  %v6765 = vld [vmem:[%s17 + $0xe0] sm:$0xff]
  %v6766 = vld [vmem:[%s17 + $0xe8] sm:$0xff]
  %v6767 = vld [vmem:[%s17 + $0xf0] sm:$0xff]
  %v6768 = vld [vmem:[%s17 + $0xf8] sm:$0xff]
  %v6769 = vld [vmem:[%s18] sm:$0x1]
  %v6771 = vlaneseq
  %v6772 = vshrl.u32 %v6771, 7
  %v6773 = vsub.s32 0, %v6772
  %v6774 = vrot.slane %v6769, %v6773
  %6776 = vmatprep.subr.mxu0 0.0
  %6777 = vmatpush1.msra.mxu0 %v6752
  %6778 = vmatprep.subr.mxu0 0.0
  %6779 = vmatpush1.msra.mxu0 %v6751
  %6780 = vmatprep.subr.mxu0 0.0
  %6781 = vmatpush1.msra.mxu0 %v6750
  %6782 = vmatprep.subr.mxu0 0.0
  %6783 = vmatpush1.msra.mxu0 %v6749
  %6784 = vmatprep.subr.mxu0 0.0
  %6785 = vmatpush1.msra.mxu0 %v6748
  %6786 = vmatprep.subr.mxu0 0.0
  %6787 = vmatpush1.msra.mxu0 %v6747
  %6788 = vmatprep.subr.mxu0 0.0
  %6789 = vmatpush1.msra.mxu0 %v6746
  %6790 = vmatprep.subr.mxu0 0.0
  %6791 = vmatpush1.msra.mxu0 %v6745
  %6792 = vmatprep.subr.mxu0 0.0
  %6793 = vmatpush1.msra.mxu0 %v6744
  %6794 = vmatprep.subr.mxu0 0.0
  %6795 = vmatpush1.msra.mxu0 %v6743
  %6796 = vmatprep.subr.mxu0 0.0
  %6797 = vmatpush1.msra.mxu0 %v6742
  %6798 = vmatprep.subr.mxu0 0.0
  %6799 = vmatpush1.msra.mxu0 %v6741
  %6800 = vmatprep.subr.mxu0 0.0
  %6801 = vmatpush1.msra.mxu0 %v6740
  %6802 = vmatprep.subr.mxu0 0.0
  %6803 = vmatpush1.msra.mxu0 %v6739
  %6804 = vmatprep.subr.mxu0 0.0
  %6805 = vmatpush1.msra.mxu0 %v6738
  %6806 = vmatprep.subr.mxu0 0.0
  %6807 = vmatpush1.msra.mxu0 %v6737
  %6808 = vmatprep.subr.mxu0 0.0
  %6809 = vmatpush2.msra.mxu0 %v6768
  %6810 = vmatprep.subr.mxu0 0.0
  %6811 = vmatpush2.msra.mxu0 %v6767
  %6812 = vmatprep.subr.mxu0 0.0
  %6813 = vmatpush2.msra.mxu0 %v6766
  %6814 = vmatprep.subr.mxu0 0.0
  %6815 = vmatpush2.msra.mxu0 %v6765
  %6816 = vmatprep.subr.mxu0 0.0
  %6817 = vmatpush2.msra.mxu0 %v6764
  %6818 = vmatprep.subr.mxu0 0.0
  %6819 = vmatpush2.msra.mxu0 %v6763
  %6820 = vmatprep.subr.mxu0 0.0
  %6821 = vmatpush2.msra.mxu0 %v6762
  %6822 = vmatprep.subr.mxu0 0.0
  %6823 = vmatpush2.msra.mxu0 %v6761
  %6824 = vmatprep.subr.mxu0 0.0
  %6825 = vmatpush2.msra.mxu0 %v6760
  %6826 = vmatprep.subr.mxu0 0.0
  %6827 = vmatpush2.msra.mxu0 %v6759
  %6828 = vmatprep.subr.mxu0 0.0
  %6829 = vmatpush2.msra.mxu0 %v6758
  %6830 = vmatprep.subr.mxu0 0.0
  %6831 = vmatpush2.msra.mxu0 %v6757
  %6832 = vmatprep.subr.mxu0 0.0
  %6833 = vmatpush2.msra.mxu0 %v6756
  %6834 = vmatprep.subr.mxu0 0.0
  %6835 = vmatpush2.msra.mxu0 %v6755
  %6836 = vmatprep.subr.mxu0 0.0
  %6837 = vmatpush2.msra.mxu0 %v6754
  %6838 = vmatprep.subr.mxu0 0.0
  %6839 = vmatpush2.msra.mxu0 %v6753
  %6840 = vmatprep.mubr.f32.mxu0 %v6735
  %6841 = vmatmul.mubr.f32.gmra.mxu0 %v6733
  %v6842 = vpop.f32.mrf.mxu0
  %v6843 = vadd.f32 %v6774, %v6842
  %v6844 = vpop.f32.mrf.mxu0
  %6845 = vdwg.mxu0
  %v6846 = vmax.f32 %v6843, 0.0
  %v6847 = vld [vmem:[%s19] sm:$0xff]
  %v6848 = vld [vmem:[%s19 + $0x8] sm:$0xff]
  %v6849 = vld [vmem:[%s19 + $0x10] sm:$0xff]
  %v6850 = vld [vmem:[%s19 + $0x18] sm:$0xff]
  %v6851 = vld [vmem:[%s19 + $0x20] sm:$0xff]
  %v6852 = vld [vmem:[%s19 + $0x28] sm:$0xff]
  %v6853 = vld [vmem:[%s19 + $0x30] sm:$0xff]
  %v6854 = vld [vmem:[%s19 + $0x38] sm:$0xff]
  %v6855 = vld [vmem:[#allocation9] sm:$0x1]
  %v6857 = vlaneseq
  %v6858 = vshrl.u32 %v6857, 7
  %v6859 = vsub.s32 0, %v6858
  %v6860 = vrot.slane %v6855, %v6859
  %vm6862 = vcmask 523264
  %v6864 = vsel %vm6862, %v6846, 0
  %6866 = vmatprep.subr.mxu0 0.0
  %6867 = vmatpush1.msra.mxu0 0.0
  %6868 = vmatprep.subr.mxu0 0.0
  %6869 = vmatpush1.msra.mxu0 0.0
  %6870 = vmatprep.subr.mxu0 0.0
  %6871 = vmatpush1.msra.mxu0 0.0
  %6872 = vmatprep.subr.mxu0 0.0
  %6873 = vmatpush1.msra.mxu0 0.0
  %6874 = vmatprep.subr.mxu0 0.0
  %6875 = vmatpush1.msra.mxu0 0.0
  %6876 = vmatprep.subr.mxu0 0.0
  %6877 = vmatpush1.msra.mxu0 0.0
  %6878 = vmatprep.subr.mxu0 0.0
  %6879 = vmatpush1.msra.mxu0 0.0
  %6880 = vmatprep.subr.mxu0 0.0
  %6881 = vmatpush1.msra.mxu0 0.0
  %6882 = vmatprep.subr.mxu0 0.0
  %6883 = vmatpush1.msra.mxu0 %v6854
  %6884 = vmatprep.subr.mxu0 0.0
  %6885 = vmatpush1.msra.mxu0 %v6853
  %6886 = vmatprep.subr.mxu0 0.0
  %6887 = vmatpush1.msra.mxu0 %v6852
  %6888 = vmatprep.subr.mxu0 0.0
  %6889 = vmatpush1.msra.mxu0 %v6851
  %6890 = vmatprep.subr.mxu0 0.0
  %6891 = vmatpush1.msra.mxu0 %v6850
  %6892 = vmatprep.subr.mxu0 0.0
  %6893 = vmatpush1.msra.mxu0 %v6849
  %6894 = vmatprep.subr.mxu0 0.0
  %6895 = vmatpush1.msra.mxu0 %v6848
  %6896 = vmatprep.subr.mxu0 0.0
  %6897 = vmatpush1.msra.mxu0 %v6847
  %6898 = vmatprep.subr.mxu0 0.0
  %6899 = vmatpush2.msra.mxu0 0.0
  %6900 = vmatprep.subr.mxu0 0.0
  %6901 = vmatpush2.msra.mxu0 0.0
  %6902 = vmatprep.subr.mxu0 0.0
  %6903 = vmatpush2.msra.mxu0 0.0
  %6904 = vmatprep.subr.mxu0 0.0
  %6905 = vmatpush2.msra.mxu0 0.0
  %6906 = vmatprep.subr.mxu0 0.0
  %6907 = vmatpush2.msra.mxu0 0.0
  %6908 = vmatprep.subr.mxu0 0.0
  %6909 = vmatpush2.msra.mxu0 0.0
  %6910 = vmatprep.subr.mxu0 0.0
  %6911 = vmatpush2.msra.mxu0 0.0
  %6912 = vmatprep.subr.mxu0 0.0
  %6913 = vmatpush2.msra.mxu0 0.0
  %6914 = vmatprep.subr.mxu0 0.0
  %6915 = vmatpush2.msra.mxu0 0.0
  %6916 = vmatprep.subr.mxu0 0.0
  %6917 = vmatpush2.msra.mxu0 0.0
  %6918 = vmatprep.subr.mxu0 0.0
  %6919 = vmatpush2.msra.mxu0 0.0
  %6920 = vmatprep.subr.mxu0 0.0
  %6921 = vmatpush2.msra.mxu0 0.0
  %6922 = vmatprep.subr.mxu0 0.0
  %6923 = vmatpush2.msra.mxu0 0.0
  %6924 = vmatprep.subr.mxu0 0.0
  %6925 = vmatpush2.msra.mxu0 0.0
  %6926 = vmatprep.subr.mxu0 0.0
  %6927 = vmatpush2.msra.mxu0 0.0
  %6928 = vmatprep.subr.mxu0 0.0
  %6929 = vmatpush2.msra.mxu0 0.0
  %6930 = vmatprep.mubr.f32.mxu0 0.0
  %6931 = vmatmul.mubr.f32.gmra.mxu0 %v6864
  %v6932 = vpop.f32.mrf.mxu0
  %v6933 = vadd.f32 %v6860, %v6932
  %v6934 = vpop.f32.mrf.mxu0
  %6935 = vdwg.mxu0
  %v6936 = vxor.u32 %v6933, 2147483648
  %v6937 = vmul.f32 %v6936, 1.442695
  %v6938 = vpow.pop %v6937
  %v6939 = vadd.f32 %v6938, 1.0
  %v6940 = vrcp.pop %v6939
  %v6941 = vmul.f32 1.0, %v6940
  %vm6942 = vcmask 1024
  %6943 = vst.msk [vmem:[%s21] sm:$0x3] %vm6942, %v6941
  // Predicated region
  $region86: #{cnn_forward.1} parent=0 // pred_check
    _
  $region87: #{cnn_forward.1} parent=0 // pred_check_branch
    %6945 = sbr.rel (0) target = $region89
  $region88: #{cnn_forward.1} parent=0 // pred_region
    _
  $region89: #{cnn_forward.1} parent=0 // pred_fallthru
    _
  // Predicated region
  $region90: #{cnn_forward.1} parent=0 // pred_check
    _
  $region91: #{cnn_forward.1} parent=0 // pred_check_branch
    %6947 = sbr.rel (0) target = $region93
  $region92: #{cnn_forward.1} parent=0 // pred_region
    _
  $region93: #{cnn_forward.1} parent=0 // pred_fallthru
    _

</llo_original>
